<compile_context>
chip_gen: v5e
topology: v5e:2x2
jax: 0.10.0
libtpu: 0.0.40
codegen_flags: <defaults>
</compile_context>

<pallas_src>
import functools

import numpy as np
import jax
import jax.numpy as jnp
from jax.experimental import pallas as pl
from jax.experimental.pallas import tpu as pltpu

# ----------------------------- configuration --------------------------------
DIM = 3          # point dimension
C_DIM = 32       # latent code dimension
HIDDEN = 64      # hidden size
N_BLOCKS = 5     # number of ResnetBlockFC blocks
PADDING = 0.1    # ONet padding
PLANE_RES = 8    # H = W of the triplane feature maps
# module defaults: leaky=False (relu), pooling='max', sample_mode='bilinear'


# -------------------- fused sampling + decoder kernel ------------------------
def _fused_kernel(p_ref, feat_ref,
                  wp_ref, wc0_ref, bpc_ref, wc_ref, bc_ref,
                  w0a_ref, b0a_ref, w1a_ref, b1a_ref,
                  w0rt_ref, w0rb_ref, b0r_ref, w1r_ref, b1r_ref,
                  wsrt_ref, wsrb_ref, wout_ref, bout_ref,
                  out_ref, *, n_blocks, planes, H, W, padding):
    f32 = jnp.float32
    relu = lambda x: jnp.maximum(x, 0.0)
    _, GB, n, dim = p_ref.shape
    hidden = w0a_ref.shape[-1]
    HW = H * W
    M = GB * n

    p = p_ref[0].reshape(M, dim)                                   # (M, 3)

    # ---- fused tri-plane bilinear grid_sample (border, align_corners=True) ----
    idx_map = {'xz': (0, 2), 'xy': (0, 1), 'yz': (1, 2)}
    col = jax.lax.broadcasted_iota(jnp.int32, (M, len(planes) * HW), 1)
    interp = jnp.zeros((M, len(planes) * HW), f32)
    for k, plane in enumerate(planes):
        iu, iv = idx_map[plane]
        # normalize_coordinate() of ConvONet
        u = p[:, iu:iu + 1] / (1.0 + padding + 10e-4) + 0.5
        v = p[:, iv:iv + 1] / (1.0 + padding + 10e-4) + 0.5
        u = jnp.where(u >= 1.0, 1.0 - 10e-6, u)
        u = jnp.where(u < 0.0, 0.0, u)
        v = jnp.where(v >= 1.0, 1.0 - 10e-6, v)
        v = jnp.where(v < 0.0, 0.0, v)
        # align_corners=True pixel mapping + border clamp
        x = jnp.clip(u * (W - 1.0), 0.0, W - 1.0)
        y = jnp.clip(v * (H - 1.0), 0.0, H - 1.0)
        x0 = jnp.floor(x)
        y0 = jnp.floor(y)
        fx = x - x0
        fy = y - y0
        x0i = jnp.maximum(x0.astype(jnp.int32), 0)
        y0i = jnp.maximum(y0.astype(jnp.int32), 0)
        x1i = jnp.minimum(x0i + 1, W - 1)
        y1i = jnp.minimum(y0i + 1, H - 1)
        base = k * HW
        onehot = lambda yi, xi: (col == (base + yi * W + xi)).astype(f32)
        interp = (interp
                  + ((1.0 - fx) * (1.0 - fy)) * onehot(y0i, x0i)
                  + (fx * (1.0 - fy)) * onehot(y0i, x1i)
                  + ((1.0 - fx) * fy) * onehot(y1i, x0i)
                  + (fx * fy) * onehot(y1i, x1i))
    # single K = n_planes*H*W matmul yields the plane-summed latent code c
    c = jnp.dot(interp, feat_ref[0], preferred_element_type=f32)   # (M, c_dim)

    # ---- decoder --------------------------------------------------------------
    # net = fc_p(p) + fc_c[0](c)   (biases pre-folded into bpc)
    net = (jnp.dot(p, wp_ref[...], preferred_element_type=f32)
           + jnp.dot(c, wc0_ref[...], preferred_element_type=f32)
           + bpc_ref[...])                                         # (M, hidden)

    for i in range(n_blocks):
        if i == 0:
            # ResnetBlockFC(hidden): identity shortcut
            x = net
            h = jnp.dot(relu(x), w0a_ref[...], preferred_element_type=f32) + b0a_ref[...]
            dx = jnp.dot(relu(h), w1a_ref[...], preferred_element_type=f32) + b1a_ref[...]
            net = x + dx
        else:
            j = i - 1
            net = net + jnp.dot(c, wc_ref[j], preferred_element_type=f32) + bc_ref[j]
            # per-group max pool; concat([net, pooled]) expressed via split weights
            pooled = jnp.max(net.reshape(GB, n, hidden), axis=1)                    # (GB, hidden)
            h_top = jnp.dot(relu(net), w0rt_ref[j], preferred_element_type=f32) + b0r_ref[j]
            h_bot = jnp.dot(relu(pooled), w0rb_ref[j], preferred_element_type=f32)  # (GB, hidden)
            h = (h_top.reshape(GB, n, hidden) + h_bot[:, None, :]).reshape(M, hidden)
            dx = jnp.dot(relu(h), w1r_ref[j], preferred_element_type=f32) + b1r_ref[j]
            xs_top = jnp.dot(net, wsrt_ref[j], preferred_element_type=f32)          # shortcut (no bias)
            xs_bot = jnp.dot(pooled, wsrb_ref[j], preferred_element_type=f32)       # (GB, hidden)
            net = ((xs_top + dx).reshape(GB, n, hidden)
                   + xs_bot[:, None, :]).reshape(M, hidden)

    pooled = jnp.max(net.reshape(GB, n, hidden), axis=1)            # (GB, hidden)
    # (1, hidden) x (GB, hidden)^T -> (1, GB): lane-dense output row
    out_row = jax.lax.dot_general(
        wout_ref[...], relu(pooled),
        dimension_numbers=(((1,), (1,)), ((), ())),
        preferred_element_type=f32)
    out_ref[0, 0] = jnp.tanh(out_row + bout_ref[...])


def grasp_quality_estimator_forward(p, c_plane, params, padding=PADDING, target_rows=128):
    """Matches GraspQualityEstimator.forward for the xz/xy/yz tri-plane feature path."""
    squeeze = False
    if p.ndim == 3:
        squeeze = True
        p = p[None]
    b1, b2, n, dim = p.shape
    p = p.astype(jnp.float32)

    # TODO(synk): 3D 'grid' feature volumes (sample_grid_feature / trilinear grid_sample)
    # are not implemented; only the 'xz'/'xy'/'yz' plane path is.
    if 'grid' in c_plane:
        raise NotImplementedError("3D 'grid' feature volumes are not supported")
    planes = tuple(k for k in ('xz', 'xy', 'yz') if k in c_plane)
    assert planes, "need at least one of 'xz'/'xy'/'yz' in c_plane"

    c_dim = c_plane[planes[0]].shape[1]
    H, W = c_plane[planes[0]].shape[-2:]
    # (b1, c_dim, H, W) planes -> one (b1, n_planes*H*W, c_dim) channels-last slab
    feat = jnp.concatenate(
        [jnp.transpose(c_plane[k].astype(jnp.float32).reshape(b1, c_dim, H * W), (0, 2, 1))
         for k in planes], axis=1)

    hidden = params['wp'].shape[-1]
    n_blocks = params['wc'].shape[0]

    # groups per grid step: fill ~target_rows MXU rows (128 good for v5e; bump to 256 on v6e/v7x)
    GB = max(1, min(b2, target_rows // max(n, 1)))
    b2_pad = -(-b2 // GB) * GB
    if b2_pad != b2:
        p = jnp.pad(p, ((0, 0), (0, b2_pad - b2), (0, 0), (0, 0)))
    n_jb = b2_pad // GB

    # Weight prep (tiny, pure JAX): fold fc_p/fc_c[0] biases, split the (2*hidden -> hidden)
    # weights of blocks 1.. into [net | pooled] halves, transpose fc_out for the (1, GB) row.
    wprep = dict(
        wp=params['wp'], wc0=params['wc'][0], bpc=params['bp'] + params['bc'][0],
        wc=params['wc'][1:], bc=params['bc'][1:],
        w0a=params['w0a'], b0a=params['b0a'], w1a=params['w1a'], b1a=params['b1a'],
        w0rt=params['w0r'][:, :hidden, :], w0rb=params['w0r'][:, hidden:, :],
        b0r=params['b0r'], w1r=params['w1r'], b1r=params['b1r'],
        wsrt=params['wsr'][:, :hidden, :], wsrb=params['wsr'][:, hidden:, :],
        wout=params['wout'].T, bout=params['bout'])
    worder = ('wp', 'wc0', 'bpc', 'wc', 'bc', 'w0a', 'b0a', 'w1a', 'b1a',
              'w0rt', 'w0rb', 'b0r', 'w1r', 'b1r', 'wsrt', 'wsrb', 'wout', 'bout')
    wlist = [jnp.asarray(wprep[k], jnp.float32) for k in worder]

    def wspec(a):
        nd = a.ndim
        return pl.BlockSpec(a.shape, lambda i, j, _nd=nd: (0,) * _nd)

    kernel = functools.partial(_fused_kernel, n_blocks=n_blocks, planes=planes,
                               H=H, W=W, padding=padding)
    out = pl.pallas_call(
        kernel,
        out_shape=jax.ShapeDtypeStruct((b1, n_jb, 1, GB), jnp.float32),
        grid_spec=pltpu.PrefetchScalarGridSpec(
            num_scalar_prefetch=0,
            grid=(b1, n_jb),
            in_specs=[pl.BlockSpec((1, GB, n, dim), lambda i, j: (i, j, 0, 0)),
                      pl.BlockSpec((1, len(planes) * H * W, c_dim), lambda i, j: (i, 0, 0))]
                     + [wspec(w) for w in wlist],
            out_specs=pl.BlockSpec((1, 1, 1, GB), lambda i, j: (i, j, 0, 0)),
        ),
        compiler_params=pltpu.CompilerParams(
            dimension_semantics=("parallel", "parallel")),
    )(p, feat, *wlist)

    out = out.reshape(b1, b2_pad)[:, :b2]
    if squeeze:
        out = out[0]
    return out


# --------------------------- parameter init -----------------------------------
def init_params(key, dim=DIM, c_dim=C_DIM, hidden=HIDDEN, n_blocks=N_BLOCKS):
    keys = iter(jax.random.split(key, 32))

    def w(shape, fan_in, scale=1.0):
        return scale * jax.random.normal(next(keys), shape, jnp.float32) / np.sqrt(fan_in)

    return {
        'wp':  w((dim, hidden), dim),                              # fc_p
        'bp':  w((1, hidden), 1, 0.1),
        'wc':  w((n_blocks, c_dim, hidden), c_dim),                # fc_c[i]
        'bc':  w((n_blocks, 1, hidden), 1, 0.1),
        'w0a': w((hidden, hidden), hidden),                        # block 0 fc_0
        'b0a': w((1, hidden), 1, 0.1),
        'w1a': w((hidden, hidden), hidden),                        # block 0 fc_1
        'b1a': w((1, hidden), 1, 0.1),
        'w0r': w((n_blocks - 1, 2 * hidden, hidden), 2 * hidden),  # blocks 1.. fc_0
        'b0r': w((n_blocks - 1, 1, hidden), 1, 0.1),
        'w1r': w((n_blocks - 1, hidden, hidden), hidden),          # blocks 1.. fc_1
        'b1r': w((n_blocks - 1, 1, hidden), 1, 0.1),
        'wsr': w((n_blocks - 1, 2 * hidden, hidden), 2 * hidden),  # blocks 1.. shortcut (no bias)
        'wout': w((hidden, 1), hidden),                            # fc_out
        'bout': w((1, 1), 1, 0.1),
    }


# --------------------------- pure-JAX reference --------------------------------
def _normalized_plane_coords(p_flat, plane, padding):
    idx = {'xz': (0, 2), 'xy': (0, 1), 'yz': (1, 2)}[plane]
    xy = jnp.stack([p_flat[..., idx[0]], p_flat[..., idx[1]]], axis=-1)
    xy = xy / (1.0 + padding + 10e-4) + 0.5
    xy = jnp.where(xy >= 1.0, 1.0 - 10e-6, xy)
    xy = jnp.where(xy < 0.0, 0.0, xy)
    return xy[..., 0:1], xy[..., 1:2]


def _ref_grid_sample_plane(plane_nchw, u, v):
    b1, cdim, H, W = plane_nchw.shape
    x = u[..., 0] * (W - 1.0)
    y = v[..., 0] * (H - 1.0)
    x0 = jnp.floor(x).astype(jnp.int32)
    y0 = jnp.floor(y).astype(jnp.int32)
    x1 = jnp.minimum(x0 + 1, W - 1)
    y1 = jnp.minimum(y0 + 1, H - 1)
    fx = (x - x0.astype(jnp.float32))[..., None]
    fy = (y - y0.astype(jnp.float32))[..., None]

    def gather(yi, xi):
        return jax.vmap(lambda f, yy, xx: f[:, yy, xx].T)(plane_nchw, yi, xi)

    g00, g01 = gather(y0, x0), gather(y0, x1)
    g10, g11 = gather(y1, x0), gather(y1, x1)
    return (g00 * (1 - fx) * (1 - fy) + g01 * fx * (1 - fy)
            + g10 * (1 - fx) * fy + g11 * fx * fy)


def reference_forward(p, c_plane, params, padding=PADDING):
    hp = jax.lax.Precision.HIGHEST
    mm = lambda a, b: jnp.matmul(a, b, precision=hp)
    relu = lambda x: jnp.maximum(x, 0.0)

    squeeze = False
    if p.ndim == 3:
        squeeze = True
        p = p[None]
    b1, b2, n, dim = p.shape
    p_flat = p.reshape(b1, b2 * n, dim).astype(jnp.float32)

    c_dim = params['wc'].shape[1]
    c = jnp.zeros((b1, b2 * n, c_dim), jnp.float32)
    for plane in ('xz', 'xy', 'yz'):
        if plane in c_plane:
            u, v = _normalized_plane_coords(p_flat, plane, padding)
            c = c + _ref_grid_sample_plane(c_plane[plane], u, v)

    p4 = p_flat.reshape(b1, b2, n, dim)
    c4 = c.reshape(b1, b2, n, c_dim)

    n_blocks = params['wc'].shape[0]
    net = mm(p4, params['wp']) + params['bp']
    for i in range(n_blocks):
        net = net + mm(c4, params['wc'][i]) + params['bc'][i]
        if i == 0:
            x = net
            h = mm(relu(x), params['w0a']) + params['b0a']
            dx = mm(relu(h), params['w1a']) + params['b1a']
            net = x + dx
        else:
            j = i - 1
            pooled = jnp.max(net, axis=-2, keepdims=True)
            x = jnp.concatenate([net, jnp.broadcast_to(pooled, net.shape)], axis=-1)
            h = mm(relu(x), params['w0r'][j]) + params['b0r'][j]
            dx = mm(relu(h), params['w1r'][j]) + params['b1r'][j]
            net = mm(x, params['wsr'][j]) + dx
    net = jnp.max(net, axis=-2)
    out = (mm(relu(net), params['wout']) + params['bout'])[..., 0]
    if squeeze:
        out = out[0]
    return jnp.tanh(out)


# ------------------------------------ main -------------------------------------
if __name__ == "__main__":
    key = jax.random.PRNGKey(0)
    k_p, k_xz, k_xy, k_yz, k_params, k_p2 = jax.random.split(key, 6)

    params = init_params(k_params)
    H = W = PLANE_RES

    # Test 1: tri-plane, b1=2, b2=8, n=16  ->  GB=8, 128 rows/step, grid (2, 1)
    b1, b2, n = 2, 8, 16
    p = jax.random.uniform(k_p, (b1, b2, n, DIM), jnp.float32, minval=-0.5, maxval=0.5)
    c_plane = {
        'xz': jax.random.normal(k_xz, (b1, C_DIM, H, W), jnp.float32),
        'xy': jax.random.normal(k_xy, (b1, C_DIM, H, W), jnp.float32),
        'yz': jax.random.normal(k_yz, (b1, C_DIM, H, W), jnp.float32),
    }
    out = jax.block_until_ready(grasp_quality_estimator_forward(p, c_plane, params))
    ref = jax.block_until_ready(reference_forward(p, c_plane, params))
    assert out.shape == (b1, b2), out.shape
    if not np.allclose(np.asarray(out), np.asarray(ref), atol=2e-3, rtol=2e-3):
        raise AssertionError(f"Pallas vs reference mismatch (test 1):\n{out}\n{ref}")

    # Test 2: squeeze path (3-D p), plane subset, group padding (b2=12 -> pad to 16), grid (1, 2)
    b2_2, n2 = 12, 16
    p2 = jax.random.uniform(k_p2, (b2_2, n2, DIM), jnp.float32, minval=-0.6, maxval=0.6)
    c_plane2 = {'xz': c_plane['xz'][:1], 'xy': c_plane['xy'][:1]}
    out2 = jax.block_until_ready(grasp_quality_estimator_forward(p2, c_plane2, params))
    ref2 = jax.block_until_ready(reference_forward(p2, c_plane2, params))
    assert out2.shape == (b2_2,), out2.shape
    if not np.allclose(np.asarray(out2), np.asarray(ref2), atol=2e-3, rtol=2e-3):
        raise AssertionError(f"Pallas vs reference mismatch (test 2):\n{out2}\n{ref2}")

    print("KERNEL_OK")
</pallas_src>

<mosaic_0001>
module attributes {stable_mosaic.version = 11 : i64} {
  func.func @_fused_kernel(%arg0: i32, %arg1: i32, %arg2: memref<1x8x16x3xf32, #tpu.memory_space<vmem>>, %arg3: memref<1x192x32xf32, #tpu.memory_space<vmem>>, %arg4: memref<3x64xf32, #tpu.memory_space<vmem>>, %arg5: memref<32x64xf32, #tpu.memory_space<vmem>>, %arg6: memref<1x64xf32, #tpu.memory_space<vmem>>, %arg7: memref<4x32x64xf32, #tpu.memory_space<vmem>>, %arg8: memref<4x1x64xf32, #tpu.memory_space<vmem>>, %arg9: memref<64x64xf32, #tpu.memory_space<vmem>>, %arg10: memref<1x64xf32, #tpu.memory_space<vmem>>, %arg11: memref<64x64xf32, #tpu.memory_space<vmem>>, %arg12: memref<1x64xf32, #tpu.memory_space<vmem>>, %arg13: memref<4x64x64xf32, #tpu.memory_space<vmem>>, %arg14: memref<4x64x64xf32, #tpu.memory_space<vmem>>, %arg15: memref<4x1x64xf32, #tpu.memory_space<vmem>>, %arg16: memref<4x64x64xf32, #tpu.memory_space<vmem>>, %arg17: memref<4x1x64xf32, #tpu.memory_space<vmem>>, %arg18: memref<4x64x64xf32, #tpu.memory_space<vmem>>, %arg19: memref<4x64x64xf32, #tpu.memory_space<vmem>>, %arg20: memref<1x64xf32, #tpu.memory_space<vmem>>, %arg21: memref<1x1xf32, #tpu.memory_space<vmem>>, %arg22: memref<1x1x1x8xf32, #tpu.memory_space<vmem>>) attributes {dimension_semantics = [#tpu.dimension_semantics<parallel>, #tpu.dimension_semantics<parallel>], iteration_bounds = array<i64: 2, 1>, scalar_prefetch = 0 : i64, scratch_operands = 0 : i64, tpu.core_type = #tpu.core_type<tc>, window_params = [{transform_indices = @transform_0, window_bounds = array<i64: 1, 8, 16, 3>}, {transform_indices = @transform_1, window_bounds = array<i64: 1, 192, 32>}, {pipeline_mode = #tpu.pipeline_mode<synchronous>, transform_indices = @transform_2, window_bounds = array<i64: 3, 64>}, {pipeline_mode = #tpu.pipeline_mode<synchronous>, transform_indices = @transform_3, window_bounds = array<i64: 32, 64>}, {pipeline_mode = #tpu.pipeline_mode<synchronous>, transform_indices = @transform_4, window_bounds = array<i64: 1, 64>}, {pipeline_mode = #tpu.pipeline_mode<synchronous>, transform_indices = @transform_5, window_bounds = array<i64: 4, 32, 64>}, {pipeline_mode = #tpu.pipeline_mode<synchronous>, transform_indices = @transform_6, window_bounds = array<i64: 4, 1, 64>}, {pipeline_mode = #tpu.pipeline_mode<synchronous>, transform_indices = @transform_7, window_bounds = array<i64: 64, 64>}, {pipeline_mode = #tpu.pipeline_mode<synchronous>, transform_indices = @transform_8, window_bounds = array<i64: 1, 64>}, {pipeline_mode = #tpu.pipeline_mode<synchronous>, transform_indices = @transform_9, window_bounds = array<i64: 64, 64>}, {pipeline_mode = #tpu.pipeline_mode<synchronous>, transform_indices = @transform_10, window_bounds = array<i64: 1, 64>}, {pipeline_mode = #tpu.pipeline_mode<synchronous>, transform_indices = @transform_11, window_bounds = array<i64: 4, 64, 64>}, {pipeline_mode = #tpu.pipeline_mode<synchronous>, transform_indices = @transform_12, window_bounds = array<i64: 4, 64, 64>}, {pipeline_mode = #tpu.pipeline_mode<synchronous>, transform_indices = @transform_13, window_bounds = array<i64: 4, 1, 64>}, {pipeline_mode = #tpu.pipeline_mode<synchronous>, transform_indices = @transform_14, window_bounds = array<i64: 4, 64, 64>}, {pipeline_mode = #tpu.pipeline_mode<synchronous>, transform_indices = @transform_15, window_bounds = array<i64: 4, 1, 64>}, {pipeline_mode = #tpu.pipeline_mode<synchronous>, transform_indices = @transform_16, window_bounds = array<i64: 4, 64, 64>}, {pipeline_mode = #tpu.pipeline_mode<synchronous>, transform_indices = @transform_17, window_bounds = array<i64: 4, 64, 64>}, {pipeline_mode = #tpu.pipeline_mode<synchronous>, transform_indices = @transform_18, window_bounds = array<i64: 1, 64>}, {pipeline_mode = #tpu.pipeline_mode<synchronous>, transform_indices = @transform_19, window_bounds = array<i64: 1, 1>}, {transform_indices = @transform_20, window_bounds = array<i64: 1, 1, 1, 8>}]} {
    %c0 = arith.constant 0 : index
    %c0_0 = arith.constant 0 : index
    %c0_1 = arith.constant 0 : index
    %c0_2 = arith.constant 0 : index
    %0 = vector.load %arg2[%c0, %c0_0, %c0_1, %c0_2] : memref<1x8x16x3xf32, #tpu.memory_space<vmem>>, vector<1x8x16x3xf32>
    %1 = vector.shape_cast %0 : vector<1x8x16x3xf32> to vector<8x16x3xf32>
    %2 = vector.shape_cast %1 : vector<8x16x3xf32> to vector<128x3xf32>
    %3 = tpu.iota {dimensions = array<i32: 1>} : vector<128x192xi32>
    %cst = arith.constant 0.000000e+00 : f32
    %4 = vector.broadcast %cst : f32 to vector<128x192xf32>
    %5 = vector.extract_strided_slice %2 {offsets = [0, 0], sizes = [128, 1], strides = [1, 1]} : vector<128x3xf32> to vector<128x1xf32>
    %cst_3 = arith.constant 1.101000e+00 : f32
    %6 = vector.broadcast %cst_3 : f32 to vector<128x1xf32>
    %7 = arith.divf %5, %6 : vector<128x1xf32>
    %cst_4 = arith.constant 5.000000e-01 : f32
    %8 = vector.broadcast %cst_4 : f32 to vector<128x1xf32>
    %9 = arith.addf %7, %8 : vector<128x1xf32>
    %10 = vector.extract_strided_slice %2 {offsets = [0, 2], sizes = [128, 1], strides = [1, 1]} : vector<128x3xf32> to vector<128x1xf32>
    %cst_5 = arith.constant 1.101000e+00 : f32
    %11 = vector.broadcast %cst_5 : f32 to vector<128x1xf32>
    %12 = arith.divf %10, %11 : vector<128x1xf32>
    %cst_6 = arith.constant 5.000000e-01 : f32
    %13 = vector.broadcast %cst_6 : f32 to vector<128x1xf32>
    %14 = arith.addf %12, %13 : vector<128x1xf32>
    %cst_7 = arith.constant 1.000000e+00 : f32
    %15 = vector.broadcast %cst_7 : f32 to vector<128x1xf32>
    %16 = arith.cmpf oge, %9, %15 : vector<128x1xf32>
    %cst_8 = arith.constant 0.999989986 : f32
    %17 = vector.broadcast %cst_8 : f32 to vector<128x1xf32>
    %18 = arith.select %16, %17, %9 : vector<128x1xi1>, vector<128x1xf32>
    %cst_9 = arith.constant 0.000000e+00 : f32
    %19 = vector.broadcast %cst_9 : f32 to vector<128x1xf32>
    %20 = arith.cmpf olt, %18, %19 : vector<128x1xf32>
    %cst_10 = arith.constant 0.000000e+00 : f32
    %21 = vector.broadcast %cst_10 : f32 to vector<128x1xf32>
    %22 = arith.select %20, %21, %18 : vector<128x1xi1>, vector<128x1xf32>
    %cst_11 = arith.constant 1.000000e+00 : f32
    %23 = vector.broadcast %cst_11 : f32 to vector<128x1xf32>
    %24 = arith.cmpf oge, %14, %23 : vector<128x1xf32>
    %cst_12 = arith.constant 0.999989986 : f32
    %25 = vector.broadcast %cst_12 : f32 to vector<128x1xf32>
    %26 = arith.select %24, %25, %14 : vector<128x1xi1>, vector<128x1xf32>
    %cst_13 = arith.constant 0.000000e+00 : f32
    %27 = vector.broadcast %cst_13 : f32 to vector<128x1xf32>
    %28 = arith.cmpf olt, %26, %27 : vector<128x1xf32>
    %cst_14 = arith.constant 0.000000e+00 : f32
    %29 = vector.broadcast %cst_14 : f32 to vector<128x1xf32>
    %30 = arith.select %28, %29, %26 : vector<128x1xi1>, vector<128x1xf32>
    %cst_15 = arith.constant 7.000000e+00 : f32
    %31 = vector.broadcast %cst_15 : f32 to vector<128x1xf32>
    %32 = arith.mulf %22, %31 : vector<128x1xf32>
    %cst_16 = arith.constant 0.000000e+00 : f32
    %cst_17 = arith.constant 7.000000e+00 : f32
    %33 = vector.broadcast %cst_16 : f32 to vector<128x1xf32>
    %34 = arith.maximumf %33, %32 : vector<128x1xf32>
    %35 = vector.broadcast %cst_17 : f32 to vector<128x1xf32>
    %36 = arith.minimumf %35, %34 : vector<128x1xf32>
    %cst_18 = arith.constant 7.000000e+00 : f32
    %37 = vector.broadcast %cst_18 : f32 to vector<128x1xf32>
    %38 = arith.mulf %30, %37 : vector<128x1xf32>
    %cst_19 = arith.constant 0.000000e+00 : f32
    %cst_20 = arith.constant 7.000000e+00 : f32
    %39 = vector.broadcast %cst_19 : f32 to vector<128x1xf32>
    %40 = arith.maximumf %39, %38 : vector<128x1xf32>
    %41 = vector.broadcast %cst_20 : f32 to vector<128x1xf32>
    %42 = arith.minimumf %41, %40 : vector<128x1xf32>
    %43 = math.floor %36 : vector<128x1xf32>
    %44 = math.floor %42 : vector<128x1xf32>
    %45 = arith.subf %36, %43 : vector<128x1xf32>
    %46 = arith.subf %42, %44 : vector<128x1xf32>
    %47 = arith.fptosi %43 : vector<128x1xf32> to vector<128x1xi32>
    %c0_i32 = arith.constant 0 : i32
    %48 = vector.broadcast %c0_i32 : i32 to vector<128x1xi32>
    %49 = arith.maxsi %47, %48 : vector<128x1xi32>
    %50 = arith.fptosi %44 : vector<128x1xf32> to vector<128x1xi32>
    %c0_i32_21 = arith.constant 0 : i32
    %51 = vector.broadcast %c0_i32_21 : i32 to vector<128x1xi32>
    %52 = arith.maxsi %50, %51 : vector<128x1xi32>
    %c1_i32 = arith.constant 1 : i32
    %53 = vector.broadcast %c1_i32 : i32 to vector<128x1xi32>
    %54 = arith.addi %49, %53 : vector<128x1xi32>
    %c7_i32 = arith.constant 7 : i32
    %55 = vector.broadcast %c7_i32 : i32 to vector<128x1xi32>
    %56 = arith.minsi %54, %55 : vector<128x1xi32>
    %c1_i32_22 = arith.constant 1 : i32
    %57 = vector.broadcast %c1_i32_22 : i32 to vector<128x1xi32>
    %58 = arith.addi %52, %57 : vector<128x1xi32>
    %c7_i32_23 = arith.constant 7 : i32
    %59 = vector.broadcast %c7_i32_23 : i32 to vector<128x1xi32>
    %60 = arith.minsi %58, %59 : vector<128x1xi32>
    %cst_24 = arith.constant 1.000000e+00 : f32
    %61 = vector.broadcast %cst_24 : f32 to vector<128x1xf32>
    %62 = arith.subf %61, %45 : vector<128x1xf32>
    %cst_25 = arith.constant 1.000000e+00 : f32
    %63 = vector.broadcast %cst_25 : f32 to vector<128x1xf32>
    %64 = arith.subf %63, %46 : vector<128x1xf32>
    %65 = arith.mulf %62, %64 : vector<128x1xf32>
    %c8_i32 = arith.constant 8 : i32
    %66 = vector.broadcast %c8_i32 : i32 to vector<128x1xi32>
    %67 = arith.muli %52, %66 : vector<128x1xi32>
    %c0_i32_26 = arith.constant 0 : i32
    %68 = vector.broadcast %c0_i32_26 : i32 to vector<128x1xi32>
    %69 = arith.addi %68, %67 : vector<128x1xi32>
    %70 = arith.addi %69, %49 : vector<128x1xi32>
    %71 = vector.broadcast %70 : vector<128x1xi32> to vector<128x192xi32>
    %72 = arith.cmpi eq, %3, %71 : vector<128x192xi32>
    %73 = arith.extui %72 : vector<128x192xi1> to vector<128x192xi32>
    %74 = arith.sitofp %73 : vector<128x192xi32> to vector<128x192xf32>
    %75 = vector.broadcast %65 : vector<128x1xf32> to vector<128x192xf32>
    %76 = arith.mulf %75, %74 : vector<128x192xf32>
    %77 = arith.addf %4, %76 : vector<128x192xf32>
    %cst_27 = arith.constant 1.000000e+00 : f32
    %78 = vector.broadcast %cst_27 : f32 to vector<128x1xf32>
    %79 = arith.subf %78, %46 : vector<128x1xf32>
    %80 = arith.mulf %45, %79 : vector<128x1xf32>
    %c8_i32_28 = arith.constant 8 : i32
    %81 = vector.broadcast %c8_i32_28 : i32 to vector<128x1xi32>
    %82 = arith.muli %52, %81 : vector<128x1xi32>
    %c0_i32_29 = arith.constant 0 : i32
    %83 = vector.broadcast %c0_i32_29 : i32 to vector<128x1xi32>
    %84 = arith.addi %83, %82 : vector<128x1xi32>
    %85 = arith.addi %84, %56 : vector<128x1xi32>
    %86 = vector.broadcast %85 : vector<128x1xi32> to vector<128x192xi32>
    %87 = arith.cmpi eq, %3, %86 : vector<128x192xi32>
    %88 = arith.extui %87 : vector<128x192xi1> to vector<128x192xi32>
    %89 = arith.sitofp %88 : vector<128x192xi32> to vector<128x192xf32>
    %90 = vector.broadcast %80 : vector<128x1xf32> to vector<128x192xf32>
    %91 = arith.mulf %90, %89 : vector<128x192xf32>
    %92 = arith.addf %77, %91 : vector<128x192xf32>
    %cst_30 = arith.constant 1.000000e+00 : f32
    %93 = vector.broadcast %cst_30 : f32 to vector<128x1xf32>
    %94 = arith.subf %93, %45 : vector<128x1xf32>
    %95 = arith.mulf %94, %46 : vector<128x1xf32>
    %c8_i32_31 = arith.constant 8 : i32
    %96 = vector.broadcast %c8_i32_31 : i32 to vector<128x1xi32>
    %97 = arith.muli %60, %96 : vector<128x1xi32>
    %c0_i32_32 = arith.constant 0 : i32
    %98 = vector.broadcast %c0_i32_32 : i32 to vector<128x1xi32>
    %99 = arith.addi %98, %97 : vector<128x1xi32>
    %100 = arith.addi %99, %49 : vector<128x1xi32>
    %101 = vector.broadcast %100 : vector<128x1xi32> to vector<128x192xi32>
    %102 = arith.cmpi eq, %3, %101 : vector<128x192xi32>
    %103 = arith.extui %102 : vector<128x192xi1> to vector<128x192xi32>
    %104 = arith.sitofp %103 : vector<128x192xi32> to vector<128x192xf32>
    %105 = vector.broadcast %95 : vector<128x1xf32> to vector<128x192xf32>
    %106 = arith.mulf %105, %104 : vector<128x192xf32>
    %107 = arith.addf %92, %106 : vector<128x192xf32>
    %108 = arith.mulf %45, %46 : vector<128x1xf32>
    %c8_i32_33 = arith.constant 8 : i32
    %109 = vector.broadcast %c8_i32_33 : i32 to vector<128x1xi32>
    %110 = arith.muli %60, %109 : vector<128x1xi32>
    %c0_i32_34 = arith.constant 0 : i32
    %111 = vector.broadcast %c0_i32_34 : i32 to vector<128x1xi32>
    %112 = arith.addi %111, %110 : vector<128x1xi32>
    %113 = arith.addi %112, %56 : vector<128x1xi32>
    %114 = vector.broadcast %113 : vector<128x1xi32> to vector<128x192xi32>
    %115 = arith.cmpi eq, %3, %114 : vector<128x192xi32>
    %116 = arith.extui %115 : vector<128x192xi1> to vector<128x192xi32>
    %117 = arith.sitofp %116 : vector<128x192xi32> to vector<128x192xf32>
    %118 = vector.broadcast %108 : vector<128x1xf32> to vector<128x192xf32>
    %119 = arith.mulf %118, %117 : vector<128x192xf32>
    %120 = arith.addf %107, %119 : vector<128x192xf32>
    %121 = vector.extract_strided_slice %2 {offsets = [0, 0], sizes = [128, 1], strides = [1, 1]} : vector<128x3xf32> to vector<128x1xf32>
    %cst_35 = arith.constant 1.101000e+00 : f32
    %122 = vector.broadcast %cst_35 : f32 to vector<128x1xf32>
    %123 = arith.divf %121, %122 : vector<128x1xf32>
    %cst_36 = arith.constant 5.000000e-01 : f32
    %124 = vector.broadcast %cst_36 : f32 to vector<128x1xf32>
    %125 = arith.addf %123, %124 : vector<128x1xf32>
    %126 = vector.extract_strided_slice %2 {offsets = [0, 1], sizes = [128, 1], strides = [1, 1]} : vector<128x3xf32> to vector<128x1xf32>
    %cst_37 = arith.constant 1.101000e+00 : f32
    %127 = vector.broadcast %cst_37 : f32 to vector<128x1xf32>
    %128 = arith.divf %126, %127 : vector<128x1xf32>
    %cst_38 = arith.constant 5.000000e-01 : f32
    %129 = vector.broadcast %cst_38 : f32 to vector<128x1xf32>
    %130 = arith.addf %128, %129 : vector<128x1xf32>
    %cst_39 = arith.constant 1.000000e+00 : f32
    %131 = vector.broadcast %cst_39 : f32 to vector<128x1xf32>
    %132 = arith.cmpf oge, %125, %131 : vector<128x1xf32>
    %cst_40 = arith.constant 0.999989986 : f32
    %133 = vector.broadcast %cst_40 : f32 to vector<128x1xf32>
    %134 = arith.select %132, %133, %125 : vector<128x1xi1>, vector<128x1xf32>
    %cst_41 = arith.constant 0.000000e+00 : f32
    %135 = vector.broadcast %cst_41 : f32 to vector<128x1xf32>
    %136 = arith.cmpf olt, %134, %135 : vector<128x1xf32>
    %cst_42 = arith.constant 0.000000e+00 : f32
    %137 = vector.broadcast %cst_42 : f32 to vector<128x1xf32>
    %138 = arith.select %136, %137, %134 : vector<128x1xi1>, vector<128x1xf32>
    %cst_43 = arith.constant 1.000000e+00 : f32
    %139 = vector.broadcast %cst_43 : f32 to vector<128x1xf32>
    %140 = arith.cmpf oge, %130, %139 : vector<128x1xf32>
    %cst_44 = arith.constant 0.999989986 : f32
    %141 = vector.broadcast %cst_44 : f32 to vector<128x1xf32>
    %142 = arith.select %140, %141, %130 : vector<128x1xi1>, vector<128x1xf32>
    %cst_45 = arith.constant 0.000000e+00 : f32
    %143 = vector.broadcast %cst_45 : f32 to vector<128x1xf32>
    %144 = arith.cmpf olt, %142, %143 : vector<128x1xf32>
    %cst_46 = arith.constant 0.000000e+00 : f32
    %145 = vector.broadcast %cst_46 : f32 to vector<128x1xf32>
    %146 = arith.select %144, %145, %142 : vector<128x1xi1>, vector<128x1xf32>
    %cst_47 = arith.constant 7.000000e+00 : f32
    %147 = vector.broadcast %cst_47 : f32 to vector<128x1xf32>
    %148 = arith.mulf %138, %147 : vector<128x1xf32>
    %cst_48 = arith.constant 0.000000e+00 : f32
    %cst_49 = arith.constant 7.000000e+00 : f32
    %149 = vector.broadcast %cst_48 : f32 to vector<128x1xf32>
    %150 = arith.maximumf %149, %148 : vector<128x1xf32>
    %151 = vector.broadcast %cst_49 : f32 to vector<128x1xf32>
    %152 = arith.minimumf %151, %150 : vector<128x1xf32>
    %cst_50 = arith.constant 7.000000e+00 : f32
    %153 = vector.broadcast %cst_50 : f32 to vector<128x1xf32>
    %154 = arith.mulf %146, %153 : vector<128x1xf32>
    %cst_51 = arith.constant 0.000000e+00 : f32
    %cst_52 = arith.constant 7.000000e+00 : f32
    %155 = vector.broadcast %cst_51 : f32 to vector<128x1xf32>
    %156 = arith.maximumf %155, %154 : vector<128x1xf32>
    %157 = vector.broadcast %cst_52 : f32 to vector<128x1xf32>
    %158 = arith.minimumf %157, %156 : vector<128x1xf32>
    %159 = math.floor %152 : vector<128x1xf32>
    %160 = math.floor %158 : vector<128x1xf32>
    %161 = arith.subf %152, %159 : vector<128x1xf32>
    %162 = arith.subf %158, %160 : vector<128x1xf32>
    %163 = arith.fptosi %159 : vector<128x1xf32> to vector<128x1xi32>
    %c0_i32_53 = arith.constant 0 : i32
    %164 = vector.broadcast %c0_i32_53 : i32 to vector<128x1xi32>
    %165 = arith.maxsi %163, %164 : vector<128x1xi32>
    %166 = arith.fptosi %160 : vector<128x1xf32> to vector<128x1xi32>
    %c0_i32_54 = arith.constant 0 : i32
    %167 = vector.broadcast %c0_i32_54 : i32 to vector<128x1xi32>
    %168 = arith.maxsi %166, %167 : vector<128x1xi32>
    %c1_i32_55 = arith.constant 1 : i32
    %169 = vector.broadcast %c1_i32_55 : i32 to vector<128x1xi32>
    %170 = arith.addi %165, %169 : vector<128x1xi32>
    %c7_i32_56 = arith.constant 7 : i32
    %171 = vector.broadcast %c7_i32_56 : i32 to vector<128x1xi32>
    %172 = arith.minsi %170, %171 : vector<128x1xi32>
    %c1_i32_57 = arith.constant 1 : i32
    %173 = vector.broadcast %c1_i32_57 : i32 to vector<128x1xi32>
    %174 = arith.addi %168, %173 : vector<128x1xi32>
    %c7_i32_58 = arith.constant 7 : i32
    %175 = vector.broadcast %c7_i32_58 : i32 to vector<128x1xi32>
    %176 = arith.minsi %174, %175 : vector<128x1xi32>
    %cst_59 = arith.constant 1.000000e+00 : f32
    %177 = vector.broadcast %cst_59 : f32 to vector<128x1xf32>
    %178 = arith.subf %177, %161 : vector<128x1xf32>
    %cst_60 = arith.constant 1.000000e+00 : f32
    %179 = vector.broadcast %cst_60 : f32 to vector<128x1xf32>
    %180 = arith.subf %179, %162 : vector<128x1xf32>
    %181 = arith.mulf %178, %180 : vector<128x1xf32>
    %c8_i32_61 = arith.constant 8 : i32
    %182 = vector.broadcast %c8_i32_61 : i32 to vector<128x1xi32>
    %183 = arith.muli %168, %182 : vector<128x1xi32>
    %c64_i32 = arith.constant 64 : i32
    %184 = vector.broadcast %c64_i32 : i32 to vector<128x1xi32>
    %185 = arith.addi %184, %183 : vector<128x1xi32>
    %186 = arith.addi %185, %165 : vector<128x1xi32>
    %187 = vector.broadcast %186 : vector<128x1xi32> to vector<128x192xi32>
    %188 = arith.cmpi eq, %3, %187 : vector<128x192xi32>
    %189 = arith.extui %188 : vector<128x192xi1> to vector<128x192xi32>
    %190 = arith.sitofp %189 : vector<128x192xi32> to vector<128x192xf32>
    %191 = vector.broadcast %181 : vector<128x1xf32> to vector<128x192xf32>
    %192 = arith.mulf %191, %190 : vector<128x192xf32>
    %193 = arith.addf %120, %192 : vector<128x192xf32>
    %cst_62 = arith.constant 1.000000e+00 : f32
    %194 = vector.broadcast %cst_62 : f32 to vector<128x1xf32>
    %195 = arith.subf %194, %162 : vector<128x1xf32>
    %196 = arith.mulf %161, %195 : vector<128x1xf32>
    %c8_i32_63 = arith.constant 8 : i32
    %197 = vector.broadcast %c8_i32_63 : i32 to vector<128x1xi32>
    %198 = arith.muli %168, %197 : vector<128x1xi32>
    %c64_i32_64 = arith.constant 64 : i32
    %199 = vector.broadcast %c64_i32_64 : i32 to vector<128x1xi32>
    %200 = arith.addi %199, %198 : vector<128x1xi32>
    %201 = arith.addi %200, %172 : vector<128x1xi32>
    %202 = vector.broadcast %201 : vector<128x1xi32> to vector<128x192xi32>
    %203 = arith.cmpi eq, %3, %202 : vector<128x192xi32>
    %204 = arith.extui %203 : vector<128x192xi1> to vector<128x192xi32>
    %205 = arith.sitofp %204 : vector<128x192xi32> to vector<128x192xf32>
    %206 = vector.broadcast %196 : vector<128x1xf32> to vector<128x192xf32>
    %207 = arith.mulf %206, %205 : vector<128x192xf32>
    %208 = arith.addf %193, %207 : vector<128x192xf32>
    %cst_65 = arith.constant 1.000000e+00 : f32
    %209 = vector.broadcast %cst_65 : f32 to vector<128x1xf32>
    %210 = arith.subf %209, %161 : vector<128x1xf32>
    %211 = arith.mulf %210, %162 : vector<128x1xf32>
    %c8_i32_66 = arith.constant 8 : i32
    %212 = vector.broadcast %c8_i32_66 : i32 to vector<128x1xi32>
    %213 = arith.muli %176, %212 : vector<128x1xi32>
    %c64_i32_67 = arith.constant 64 : i32
    %214 = vector.broadcast %c64_i32_67 : i32 to vector<128x1xi32>
    %215 = arith.addi %214, %213 : vector<128x1xi32>
    %216 = arith.addi %215, %165 : vector<128x1xi32>
    %217 = vector.broadcast %216 : vector<128x1xi32> to vector<128x192xi32>
    %218 = arith.cmpi eq, %3, %217 : vector<128x192xi32>
    %219 = arith.extui %218 : vector<128x192xi1> to vector<128x192xi32>
    %220 = arith.sitofp %219 : vector<128x192xi32> to vector<128x192xf32>
    %221 = vector.broadcast %211 : vector<128x1xf32> to vector<128x192xf32>
    %222 = arith.mulf %221, %220 : vector<128x192xf32>
    %223 = arith.addf %208, %222 : vector<128x192xf32>
    %224 = arith.mulf %161, %162 : vector<128x1xf32>
    %c8_i32_68 = arith.constant 8 : i32
    %225 = vector.broadcast %c8_i32_68 : i32 to vector<128x1xi32>
    %226 = arith.muli %176, %225 : vector<128x1xi32>
    %c64_i32_69 = arith.constant 64 : i32
    %227 = vector.broadcast %c64_i32_69 : i32 to vector<128x1xi32>
    %228 = arith.addi %227, %226 : vector<128x1xi32>
    %229 = arith.addi %228, %172 : vector<128x1xi32>
    %230 = vector.broadcast %229 : vector<128x1xi32> to vector<128x192xi32>
    %231 = arith.cmpi eq, %3, %230 : vector<128x192xi32>
    %232 = arith.extui %231 : vector<128x192xi1> to vector<128x192xi32>
    %233 = arith.sitofp %232 : vector<128x192xi32> to vector<128x192xf32>
    %234 = vector.broadcast %224 : vector<128x1xf32> to vector<128x192xf32>
    %235 = arith.mulf %234, %233 : vector<128x192xf32>
    %236 = arith.addf %223, %235 : vector<128x192xf32>
    %237 = vector.extract_strided_slice %2 {offsets = [0, 1], sizes = [128, 1], strides = [1, 1]} : vector<128x3xf32> to vector<128x1xf32>
    %cst_70 = arith.constant 1.101000e+00 : f32
    %238 = vector.broadcast %cst_70 : f32 to vector<128x1xf32>
    %239 = arith.divf %237, %238 : vector<128x1xf32>
    %cst_71 = arith.constant 5.000000e-01 : f32
    %240 = vector.broadcast %cst_71 : f32 to vector<128x1xf32>
    %241 = arith.addf %239, %240 : vector<128x1xf32>
    %242 = vector.extract_strided_slice %2 {offsets = [0, 2], sizes = [128, 1], strides = [1, 1]} : vector<128x3xf32> to vector<128x1xf32>
    %cst_72 = arith.constant 1.101000e+00 : f32
    %243 = vector.broadcast %cst_72 : f32 to vector<128x1xf32>
    %244 = arith.divf %242, %243 : vector<128x1xf32>
    %cst_73 = arith.constant 5.000000e-01 : f32
    %245 = vector.broadcast %cst_73 : f32 to vector<128x1xf32>
    %246 = arith.addf %244, %245 : vector<128x1xf32>
    %cst_74 = arith.constant 1.000000e+00 : f32
    %247 = vector.broadcast %cst_74 : f32 to vector<128x1xf32>
    %248 = arith.cmpf oge, %241, %247 : vector<128x1xf32>
    %cst_75 = arith.constant 0.999989986 : f32
    %249 = vector.broadcast %cst_75 : f32 to vector<128x1xf32>
    %250 = arith.select %248, %249, %241 : vector<128x1xi1>, vector<128x1xf32>
    %cst_76 = arith.constant 0.000000e+00 : f32
    %251 = vector.broadcast %cst_76 : f32 to vector<128x1xf32>
    %252 = arith.cmpf olt, %250, %251 : vector<128x1xf32>
    %cst_77 = arith.constant 0.000000e+00 : f32
    %253 = vector.broadcast %cst_77 : f32 to vector<128x1xf32>
    %254 = arith.select %252, %253, %250 : vector<128x1xi1>, vector<128x1xf32>
    %cst_78 = arith.constant 1.000000e+00 : f32
    %255 = vector.broadcast %cst_78 : f32 to vector<128x1xf32>
    %256 = arith.cmpf oge, %246, %255 : vector<128x1xf32>
    %cst_79 = arith.constant 0.999989986 : f32
    %257 = vector.broadcast %cst_79 : f32 to vector<128x1xf32>
    %258 = arith.select %256, %257, %246 : vector<128x1xi1>, vector<128x1xf32>
    %cst_80 = arith.constant 0.000000e+00 : f32
    %259 = vector.broadcast %cst_80 : f32 to vector<128x1xf32>
    %260 = arith.cmpf olt, %258, %259 : vector<128x1xf32>
    %cst_81 = arith.constant 0.000000e+00 : f32
    %261 = vector.broadcast %cst_81 : f32 to vector<128x1xf32>
    %262 = arith.select %260, %261, %258 : vector<128x1xi1>, vector<128x1xf32>
    %cst_82 = arith.constant 7.000000e+00 : f32
    %263 = vector.broadcast %cst_82 : f32 to vector<128x1xf32>
    %264 = arith.mulf %254, %263 : vector<128x1xf32>
    %cst_83 = arith.constant 0.000000e+00 : f32
    %cst_84 = arith.constant 7.000000e+00 : f32
    %265 = vector.broadcast %cst_83 : f32 to vector<128x1xf32>
    %266 = arith.maximumf %265, %264 : vector<128x1xf32>
    %267 = vector.broadcast %cst_84 : f32 to vector<128x1xf32>
    %268 = arith.minimumf %267, %266 : vector<128x1xf32>
    %cst_85 = arith.constant 7.000000e+00 : f32
    %269 = vector.broadcast %cst_85 : f32 to vector<128x1xf32>
    %270 = arith.mulf %262, %269 : vector<128x1xf32>
    %cst_86 = arith.constant 0.000000e+00 : f32
    %cst_87 = arith.constant 7.000000e+00 : f32
    %271 = vector.broadcast %cst_86 : f32 to vector<128x1xf32>
    %272 = arith.maximumf %271, %270 : vector<128x1xf32>
    %273 = vector.broadcast %cst_87 : f32 to vector<128x1xf32>
    %274 = arith.minimumf %273, %272 : vector<128x1xf32>
    %275 = math.floor %268 : vector<128x1xf32>
    %276 = math.floor %274 : vector<128x1xf32>
    %277 = arith.subf %268, %275 : vector<128x1xf32>
    %278 = arith.subf %274, %276 : vector<128x1xf32>
    %279 = arith.fptosi %275 : vector<128x1xf32> to vector<128x1xi32>
    %c0_i32_88 = arith.constant 0 : i32
    %280 = vector.broadcast %c0_i32_88 : i32 to vector<128x1xi32>
    %281 = arith.maxsi %279, %280 : vector<128x1xi32>
    %282 = arith.fptosi %276 : vector<128x1xf32> to vector<128x1xi32>
    %c0_i32_89 = arith.constant 0 : i32
    %283 = vector.broadcast %c0_i32_89 : i32 to vector<128x1xi32>
    %284 = arith.maxsi %282, %283 : vector<128x1xi32>
    %c1_i32_90 = arith.constant 1 : i32
    %285 = vector.broadcast %c1_i32_90 : i32 to vector<128x1xi32>
    %286 = arith.addi %281, %285 : vector<128x1xi32>
    %c7_i32_91 = arith.constant 7 : i32
    %287 = vector.broadcast %c7_i32_91 : i32 to vector<128x1xi32>
    %288 = arith.minsi %286, %287 : vector<128x1xi32>
    %c1_i32_92 = arith.constant 1 : i32
    %289 = vector.broadcast %c1_i32_92 : i32 to vector<128x1xi32>
    %290 = arith.addi %284, %289 : vector<128x1xi32>
    %c7_i32_93 = arith.constant 7 : i32
    %291 = vector.broadcast %c7_i32_93 : i32 to vector<128x1xi32>
    %292 = arith.minsi %290, %291 : vector<128x1xi32>
    %cst_94 = arith.constant 1.000000e+00 : f32
    %293 = vector.broadcast %cst_94 : f32 to vector<128x1xf32>
    %294 = arith.subf %293, %277 : vector<128x1xf32>
    %cst_95 = arith.constant 1.000000e+00 : f32
    %295 = vector.broadcast %cst_95 : f32 to vector<128x1xf32>
    %296 = arith.subf %295, %278 : vector<128x1xf32>
    %297 = arith.mulf %294, %296 : vector<128x1xf32>
    %c8_i32_96 = arith.constant 8 : i32
    %298 = vector.broadcast %c8_i32_96 : i32 to vector<128x1xi32>
    %299 = arith.muli %284, %298 : vector<128x1xi32>
    %c128_i32 = arith.constant 128 : i32
    %300 = vector.broadcast %c128_i32 : i32 to vector<128x1xi32>
    %301 = arith.addi %300, %299 : vector<128x1xi32>
    %302 = arith.addi %301, %281 : vector<128x1xi32>
    %303 = vector.broadcast %302 : vector<128x1xi32> to vector<128x192xi32>
    %304 = arith.cmpi eq, %3, %303 : vector<128x192xi32>
    %305 = arith.extui %304 : vector<128x192xi1> to vector<128x192xi32>
    %306 = arith.sitofp %305 : vector<128x192xi32> to vector<128x192xf32>
    %307 = vector.broadcast %297 : vector<128x1xf32> to vector<128x192xf32>
    %308 = arith.mulf %307, %306 : vector<128x192xf32>
    %309 = arith.addf %236, %308 : vector<128x192xf32>
    %cst_97 = arith.constant 1.000000e+00 : f32
    %310 = vector.broadcast %cst_97 : f32 to vector<128x1xf32>
    %311 = arith.subf %310, %278 : vector<128x1xf32>
    %312 = arith.mulf %277, %311 : vector<128x1xf32>
    %c8_i32_98 = arith.constant 8 : i32
    %313 = vector.broadcast %c8_i32_98 : i32 to vector<128x1xi32>
    %314 = arith.muli %284, %313 : vector<128x1xi32>
    %c128_i32_99 = arith.constant 128 : i32
    %315 = vector.broadcast %c128_i32_99 : i32 to vector<128x1xi32>
    %316 = arith.addi %315, %314 : vector<128x1xi32>
    %317 = arith.addi %316, %288 : vector<128x1xi32>
    %318 = vector.broadcast %317 : vector<128x1xi32> to vector<128x192xi32>
    %319 = arith.cmpi eq, %3, %318 : vector<128x192xi32>
    %320 = arith.extui %319 : vector<128x192xi1> to vector<128x192xi32>
    %321 = arith.sitofp %320 : vector<128x192xi32> to vector<128x192xf32>
    %322 = vector.broadcast %312 : vector<128x1xf32> to vector<128x192xf32>
    %323 = arith.mulf %322, %321 : vector<128x192xf32>
    %324 = arith.addf %309, %323 : vector<128x192xf32>
    %cst_100 = arith.constant 1.000000e+00 : f32
    %325 = vector.broadcast %cst_100 : f32 to vector<128x1xf32>
    %326 = arith.subf %325, %277 : vector<128x1xf32>
    %327 = arith.mulf %326, %278 : vector<128x1xf32>
    %c8_i32_101 = arith.constant 8 : i32
    %328 = vector.broadcast %c8_i32_101 : i32 to vector<128x1xi32>
    %329 = arith.muli %292, %328 : vector<128x1xi32>
    %c128_i32_102 = arith.constant 128 : i32
    %330 = vector.broadcast %c128_i32_102 : i32 to vector<128x1xi32>
    %331 = arith.addi %330, %329 : vector<128x1xi32>
    %332 = arith.addi %331, %281 : vector<128x1xi32>
    %333 = vector.broadcast %332 : vector<128x1xi32> to vector<128x192xi32>
    %334 = arith.cmpi eq, %3, %333 : vector<128x192xi32>
    %335 = arith.extui %334 : vector<128x192xi1> to vector<128x192xi32>
    %336 = arith.sitofp %335 : vector<128x192xi32> to vector<128x192xf32>
    %337 = vector.broadcast %327 : vector<128x1xf32> to vector<128x192xf32>
    %338 = arith.mulf %337, %336 : vector<128x192xf32>
    %339 = arith.addf %324, %338 : vector<128x192xf32>
    %340 = arith.mulf %277, %278 : vector<128x1xf32>
    %c8_i32_103 = arith.constant 8 : i32
    %341 = vector.broadcast %c8_i32_103 : i32 to vector<128x1xi32>
    %342 = arith.muli %292, %341 : vector<128x1xi32>
    %c128_i32_104 = arith.constant 128 : i32
    %343 = vector.broadcast %c128_i32_104 : i32 to vector<128x1xi32>
    %344 = arith.addi %343, %342 : vector<128x1xi32>
    %345 = arith.addi %344, %288 : vector<128x1xi32>
    %346 = vector.broadcast %345 : vector<128x1xi32> to vector<128x192xi32>
    %347 = arith.cmpi eq, %3, %346 : vector<128x192xi32>
    %348 = arith.extui %347 : vector<128x192xi1> to vector<128x192xi32>
    %349 = arith.sitofp %348 : vector<128x192xi32> to vector<128x192xf32>
    %350 = vector.broadcast %340 : vector<128x1xf32> to vector<128x192xf32>
    %351 = arith.mulf %350, %349 : vector<128x192xf32>
    %352 = arith.addf %339, %351 : vector<128x192xf32>
    %c0_105 = arith.constant 0 : index
    %c0_106 = arith.constant 0 : index
    %c0_107 = arith.constant 0 : index
    %353 = vector.load %arg3[%c0_105, %c0_106, %c0_107] : memref<1x192x32xf32, #tpu.memory_space<vmem>>, vector<1x192x32xf32>
    %354 = vector.shape_cast %353 : vector<1x192x32xf32> to vector<192x32xf32>
    %cst_108 = arith.constant dense<0.000000e+00> : vector<128x32xf32>
    %355 = tpu.matmul %352, %354, %cst_108 {dimension_numbers = #tpu.dot_dimension_numbers<[1], [0], [0], [1], [0, 0, 1, 1], [], []>} : vector<128x192xf32>, vector<192x32xf32>, vector<128x32xf32> -> vector<128x32xf32>
    %c0_109 = arith.constant 0 : index
    %c0_110 = arith.constant 0 : index
    %356 = vector.load %arg4[%c0_109, %c0_110] : memref<3x64xf32, #tpu.memory_space<vmem>>, vector<3x64xf32>
    %cst_111 = arith.constant dense<0.000000e+00> : vector<128x64xf32>
    %357 = tpu.matmul %2, %356, %cst_111 {dimension_numbers = #tpu.dot_dimension_numbers<[1], [0], [0], [1], [0, 0, 1, 1], [], []>} : vector<128x3xf32>, vector<3x64xf32>, vector<128x64xf32> -> vector<128x64xf32>
    %c0_112 = arith.constant 0 : index
    %c0_113 = arith.constant 0 : index
    %358 = vector.load %arg5[%c0_112, %c0_113] : memref<32x64xf32, #tpu.memory_space<vmem>>, vector<32x64xf32>
    %cst_114 = arith.constant dense<0.000000e+00> : vector<128x64xf32>
    %359 = tpu.matmul %355, %358, %cst_114 {dimension_numbers = #tpu.dot_dimension_numbers<[1], [0], [0], [1], [0, 0, 1, 1], [], []>} : vector<128x32xf32>, vector<32x64xf32>, vector<128x64xf32> -> vector<128x64xf32>
    %360 = arith.addf %357, %359 : vector<128x64xf32>
    %c0_115 = arith.constant 0 : index
    %c0_116 = arith.constant 0 : index
    %361 = vector.load %arg6[%c0_115, %c0_116] : memref<1x64xf32, #tpu.memory_space<vmem>>, vector<1x64xf32>
    %362 = vector.broadcast %361 : vector<1x64xf32> to vector<128x64xf32>
    %363 = arith.addf %360, %362 : vector<128x64xf32>
    %cst_117 = arith.constant 0.000000e+00 : f32
    %364 = vector.broadcast %cst_117 : f32 to vector<128x64xf32>
    %365 = arith.maximumf %363, %364 : vector<128x64xf32>
    %c0_118 = arith.constant 0 : index
    %c0_119 = arith.constant 0 : index
    %366 = vector.load %arg9[%c0_118, %c0_119] : memref<64x64xf32, #tpu.memory_space<vmem>>, vector<64x64xf32>
    %cst_120 = arith.constant dense<0.000000e+00> : vector<128x64xf32>
    %367 = tpu.matmul %365, %366, %cst_120 {dimension_numbers = #tpu.dot_dimension_numbers<[1], [0], [0], [1], [0, 0, 1, 1], [], []>} : vector<128x64xf32>, vector<64x64xf32>, vector<128x64xf32> -> vector<128x64xf32>
    %c0_121 = arith.constant 0 : index
    %c0_122 = arith.constant 0 : index
    %368 = vector.load %arg10[%c0_121, %c0_122] : memref<1x64xf32, #tpu.memory_space<vmem>>, vector<1x64xf32>
    %369 = vector.broadcast %368 : vector<1x64xf32> to vector<128x64xf32>
    %370 = arith.addf %367, %369 : vector<128x64xf32>
    %cst_123 = arith.constant 0.000000e+00 : f32
    %371 = vector.broadcast %cst_123 : f32 to vector<128x64xf32>
    %372 = arith.maximumf %370, %371 : vector<128x64xf32>
    %c0_124 = arith.constant 0 : index
    %c0_125 = arith.constant 0 : index
    %373 = vector.load %arg11[%c0_124, %c0_125] : memref<64x64xf32, #tpu.memory_space<vmem>>, vector<64x64xf32>
    %cst_126 = arith.constant dense<0.000000e+00> : vector<128x64xf32>
    %374 = tpu.matmul %372, %373, %cst_126 {dimension_numbers = #tpu.dot_dimension_numbers<[1], [0], [0], [1], [0, 0, 1, 1], [], []>} : vector<128x64xf32>, vector<64x64xf32>, vector<128x64xf32> -> vector<128x64xf32>
    %c0_127 = arith.constant 0 : index
    %c0_128 = arith.constant 0 : index
    %375 = vector.load %arg12[%c0_127, %c0_128] : memref<1x64xf32, #tpu.memory_space<vmem>>, vector<1x64xf32>
    %376 = vector.broadcast %375 : vector<1x64xf32> to vector<128x64xf32>
    %377 = arith.addf %374, %376 : vector<128x64xf32>
    %378 = arith.addf %363, %377 : vector<128x64xf32>
    %c0_129 = arith.constant 0 : index
    %c0_130 = arith.constant 0 : index
    %c0_131 = arith.constant 0 : index
    %379 = vector.load %arg7[%c0_129, %c0_130, %c0_131] : memref<4x32x64xf32, #tpu.memory_space<vmem>>, vector<1x32x64xf32>
    %380 = vector.shape_cast %379 : vector<1x32x64xf32> to vector<32x64xf32>
    %cst_132 = arith.constant dense<0.000000e+00> : vector<128x64xf32>
    %381 = tpu.matmul %355, %380, %cst_132 {dimension_numbers = #tpu.dot_dimension_numbers<[1], [0], [0], [1], [0, 0, 1, 1], [], []>} : vector<128x32xf32>, vector<32x64xf32>, vector<128x64xf32> -> vector<128x64xf32>
    %382 = arith.addf %378, %381 : vector<128x64xf32>
    %c0_133 = arith.constant 0 : index
    %c0_134 = arith.constant 0 : index
    %c0_135 = arith.constant 0 : index
    %383 = vector.load %arg8[%c0_133, %c0_134, %c0_135] : memref<4x1x64xf32, #tpu.memory_space<vmem>>, vector<1x1x64xf32>
    %384 = vector.shape_cast %383 : vector<1x1x64xf32> to vector<1x64xf32>
    %385 = vector.broadcast %384 : vector<1x64xf32> to vector<128x64xf32>
    %386 = arith.addf %382, %385 : vector<128x64xf32>
    %387 = vector.shape_cast %386 : vector<128x64xf32> to vector<8x16x64xf32>
    %cst_136 = arith.constant dense<0xFF800000> : vector<8x64xf32>
    %388 = vector.multi_reduction <maximumf>, %387, %cst_136 [1] : vector<8x16x64xf32> to vector<8x64xf32>
    %cst_137 = arith.constant 0.000000e+00 : f32
    %389 = vector.broadcast %cst_137 : f32 to vector<128x64xf32>
    %390 = arith.maximumf %386, %389 : vector<128x64xf32>
    %c0_138 = arith.constant 0 : index
    %c0_139 = arith.constant 0 : index
    %c0_140 = arith.constant 0 : index
    %391 = vector.load %arg13[%c0_138, %c0_139, %c0_140] : memref<4x64x64xf32, #tpu.memory_space<vmem>>, vector<1x64x64xf32>
    %392 = vector.shape_cast %391 : vector<1x64x64xf32> to vector<64x64xf32>
    %cst_141 = arith.constant dense<0.000000e+00> : vector<128x64xf32>
    %393 = tpu.matmul %390, %392, %cst_141 {dimension_numbers = #tpu.dot_dimension_numbers<[1], [0], [0], [1], [0, 0, 1, 1], [], []>} : vector<128x64xf32>, vector<64x64xf32>, vector<128x64xf32> -> vector<128x64xf32>
    %c0_142 = arith.constant 0 : index
    %c0_143 = arith.constant 0 : index
    %c0_144 = arith.constant 0 : index
    %394 = vector.load %arg15[%c0_142, %c0_143, %c0_144] : memref<4x1x64xf32, #tpu.memory_space<vmem>>, vector<1x1x64xf32>
    %395 = vector.shape_cast %394 : vector<1x1x64xf32> to vector<1x64xf32>
    %396 = vector.broadcast %395 : vector<1x64xf32> to vector<128x64xf32>
    %397 = arith.addf %393, %396 : vector<128x64xf32>
    %cst_145 = arith.constant 0.000000e+00 : f32
    %398 = vector.broadcast %cst_145 : f32 to vector<8x64xf32>
    %399 = arith.maximumf %388, %398 : vector<8x64xf32>
    %c0_146 = arith.constant 0 : index
    %c0_147 = arith.constant 0 : index
    %c0_148 = arith.constant 0 : index
    %400 = vector.load %arg14[%c0_146, %c0_147, %c0_148] : memref<4x64x64xf32, #tpu.memory_space<vmem>>, vector<1x64x64xf32>
    %401 = vector.shape_cast %400 : vector<1x64x64xf32> to vector<64x64xf32>
    %cst_149 = arith.constant dense<0.000000e+00> : vector<8x64xf32>
    %402 = tpu.matmul %399, %401, %cst_149 {dimension_numbers = #tpu.dot_dimension_numbers<[1], [0], [0], [1], [0, 0, 1, 1], [], []>} : vector<8x64xf32>, vector<64x64xf32>, vector<8x64xf32> -> vector<8x64xf32>
    %403 = vector.shape_cast %397 : vector<128x64xf32> to vector<8x16x64xf32>
    %404 = vector.shape_cast %402 : vector<8x64xf32> to vector<8x1x64xf32>
    %405 = vector.broadcast %404 : vector<8x1x64xf32> to vector<8x16x64xf32>
    %406 = arith.addf %403, %405 : vector<8x16x64xf32>
    %407 = vector.shape_cast %406 : vector<8x16x64xf32> to vector<128x64xf32>
    %cst_150 = arith.constant 0.000000e+00 : f32
    %408 = vector.broadcast %cst_150 : f32 to vector<128x64xf32>
    %409 = arith.maximumf %407, %408 : vector<128x64xf32>
    %c0_151 = arith.constant 0 : index
    %c0_152 = arith.constant 0 : index
    %c0_153 = arith.constant 0 : index
    %410 = vector.load %arg16[%c0_151, %c0_152, %c0_153] : memref<4x64x64xf32, #tpu.memory_space<vmem>>, vector<1x64x64xf32>
    %411 = vector.shape_cast %410 : vector<1x64x64xf32> to vector<64x64xf32>
    %cst_154 = arith.constant dense<0.000000e+00> : vector<128x64xf32>
    %412 = tpu.matmul %409, %411, %cst_154 {dimension_numbers = #tpu.dot_dimension_numbers<[1], [0], [0], [1], [0, 0, 1, 1], [], []>} : vector<128x64xf32>, vector<64x64xf32>, vector<128x64xf32> -> vector<128x64xf32>
    %c0_155 = arith.constant 0 : index
    %c0_156 = arith.constant 0 : index
    %c0_157 = arith.constant 0 : index
    %413 = vector.load %arg17[%c0_155, %c0_156, %c0_157] : memref<4x1x64xf32, #tpu.memory_space<vmem>>, vector<1x1x64xf32>
    %414 = vector.shape_cast %413 : vector<1x1x64xf32> to vector<1x64xf32>
    %415 = vector.broadcast %414 : vector<1x64xf32> to vector<128x64xf32>
    %416 = arith.addf %412, %415 : vector<128x64xf32>
    %c0_158 = arith.constant 0 : index
    %c0_159 = arith.constant 0 : index
    %c0_160 = arith.constant 0 : index
    %417 = vector.load %arg18[%c0_158, %c0_159, %c0_160] : memref<4x64x64xf32, #tpu.memory_space<vmem>>, vector<1x64x64xf32>
    %418 = vector.shape_cast %417 : vector<1x64x64xf32> to vector<64x64xf32>
    %cst_161 = arith.constant dense<0.000000e+00> : vector<128x64xf32>
    %419 = tpu.matmul %386, %418, %cst_161 {dimension_numbers = #tpu.dot_dimension_numbers<[1], [0], [0], [1], [0, 0, 1, 1], [], []>} : vector<128x64xf32>, vector<64x64xf32>, vector<128x64xf32> -> vector<128x64xf32>
    %c0_162 = arith.constant 0 : index
    %c0_163 = arith.constant 0 : index
    %c0_164 = arith.constant 0 : index
    %420 = vector.load %arg19[%c0_162, %c0_163, %c0_164] : memref<4x64x64xf32, #tpu.memory_space<vmem>>, vector<1x64x64xf32>
    %421 = vector.shape_cast %420 : vector<1x64x64xf32> to vector<64x64xf32>
    %cst_165 = arith.constant dense<0.000000e+00> : vector<8x64xf32>
    %422 = tpu.matmul %388, %421, %cst_165 {dimension_numbers = #tpu.dot_dimension_numbers<[1], [0], [0], [1], [0, 0, 1, 1], [], []>} : vector<8x64xf32>, vector<64x64xf32>, vector<8x64xf32> -> vector<8x64xf32>
    %423 = arith.addf %419, %416 : vector<128x64xf32>
    %424 = vector.shape_cast %423 : vector<128x64xf32> to vector<8x16x64xf32>
    %425 = vector.shape_cast %422 : vector<8x64xf32> to vector<8x1x64xf32>
    %426 = vector.broadcast %425 : vector<8x1x64xf32> to vector<8x16x64xf32>
    %427 = arith.addf %424, %426 : vector<8x16x64xf32>
    %428 = vector.shape_cast %427 : vector<8x16x64xf32> to vector<128x64xf32>
    %c1 = arith.constant 1 : index
    %c0_166 = arith.constant 0 : index
    %c0_167 = arith.constant 0 : index
    %429 = vector.load %arg7[%c1, %c0_166, %c0_167] : memref<4x32x64xf32, #tpu.memory_space<vmem>>, vector<1x32x64xf32>
    %430 = vector.shape_cast %429 : vector<1x32x64xf32> to vector<32x64xf32>
    %cst_168 = arith.constant dense<0.000000e+00> : vector<128x64xf32>
    %431 = tpu.matmul %355, %430, %cst_168 {dimension_numbers = #tpu.dot_dimension_numbers<[1], [0], [0], [1], [0, 0, 1, 1], [], []>} : vector<128x32xf32>, vector<32x64xf32>, vector<128x64xf32> -> vector<128x64xf32>
    %432 = arith.addf %428, %431 : vector<128x64xf32>
    %c1_169 = arith.constant 1 : index
    %c0_170 = arith.constant 0 : index
    %c0_171 = arith.constant 0 : index
    %433 = vector.load %arg8[%c1_169, %c0_170, %c0_171] : memref<4x1x64xf32, #tpu.memory_space<vmem>>, vector<1x1x64xf32>
    %434 = vector.shape_cast %433 : vector<1x1x64xf32> to vector<1x64xf32>
    %435 = vector.broadcast %434 : vector<1x64xf32> to vector<128x64xf32>
    %436 = arith.addf %432, %435 : vector<128x64xf32>
    %437 = vector.shape_cast %436 : vector<128x64xf32> to vector<8x16x64xf32>
    %cst_172 = arith.constant dense<0xFF800000> : vector<8x64xf32>
    %438 = vector.multi_reduction <maximumf>, %437, %cst_172 [1] : vector<8x16x64xf32> to vector<8x64xf32>
    %cst_173 = arith.constant 0.000000e+00 : f32
    %439 = vector.broadcast %cst_173 : f32 to vector<128x64xf32>
    %440 = arith.maximumf %436, %439 : vector<128x64xf32>
    %c1_174 = arith.constant 1 : index
    %c0_175 = arith.constant 0 : index
    %c0_176 = arith.constant 0 : index
    %441 = vector.load %arg13[%c1_174, %c0_175, %c0_176] : memref<4x64x64xf32, #tpu.memory_space<vmem>>, vector<1x64x64xf32>
    %442 = vector.shape_cast %441 : vector<1x64x64xf32> to vector<64x64xf32>
    %cst_177 = arith.constant dense<0.000000e+00> : vector<128x64xf32>
    %443 = tpu.matmul %440, %442, %cst_177 {dimension_numbers = #tpu.dot_dimension_numbers<[1], [0], [0], [1], [0, 0, 1, 1], [], []>} : vector<128x64xf32>, vector<64x64xf32>, vector<128x64xf32> -> vector<128x64xf32>
    %c1_178 = arith.constant 1 : index
    %c0_179 = arith.constant 0 : index
    %c0_180 = arith.constant 0 : index
    %444 = vector.load %arg15[%c1_178, %c0_179, %c0_180] : memref<4x1x64xf32, #tpu.memory_space<vmem>>, vector<1x1x64xf32>
    %445 = vector.shape_cast %444 : vector<1x1x64xf32> to vector<1x64xf32>
    %446 = vector.broadcast %445 : vector<1x64xf32> to vector<128x64xf32>
    %447 = arith.addf %443, %446 : vector<128x64xf32>
    %cst_181 = arith.constant 0.000000e+00 : f32
    %448 = vector.broadcast %cst_181 : f32 to vector<8x64xf32>
    %449 = arith.maximumf %438, %448 : vector<8x64xf32>
    %c1_182 = arith.constant 1 : index
    %c0_183 = arith.constant 0 : index
    %c0_184 = arith.constant 0 : index
    %450 = vector.load %arg14[%c1_182, %c0_183, %c0_184] : memref<4x64x64xf32, #tpu.memory_space<vmem>>, vector<1x64x64xf32>
    %451 = vector.shape_cast %450 : vector<1x64x64xf32> to vector<64x64xf32>
    %cst_185 = arith.constant dense<0.000000e+00> : vector<8x64xf32>
    %452 = tpu.matmul %449, %451, %cst_185 {dimension_numbers = #tpu.dot_dimension_numbers<[1], [0], [0], [1], [0, 0, 1, 1], [], []>} : vector<8x64xf32>, vector<64x64xf32>, vector<8x64xf32> -> vector<8x64xf32>
    %453 = vector.shape_cast %447 : vector<128x64xf32> to vector<8x16x64xf32>
    %454 = vector.shape_cast %452 : vector<8x64xf32> to vector<8x1x64xf32>
    %455 = vector.broadcast %454 : vector<8x1x64xf32> to vector<8x16x64xf32>
    %456 = arith.addf %453, %455 : vector<8x16x64xf32>
    %457 = vector.shape_cast %456 : vector<8x16x64xf32> to vector<128x64xf32>
    %cst_186 = arith.constant 0.000000e+00 : f32
    %458 = vector.broadcast %cst_186 : f32 to vector<128x64xf32>
    %459 = arith.maximumf %457, %458 : vector<128x64xf32>
    %c1_187 = arith.constant 1 : index
    %c0_188 = arith.constant 0 : index
    %c0_189 = arith.constant 0 : index
    %460 = vector.load %arg16[%c1_187, %c0_188, %c0_189] : memref<4x64x64xf32, #tpu.memory_space<vmem>>, vector<1x64x64xf32>
    %461 = vector.shape_cast %460 : vector<1x64x64xf32> to vector<64x64xf32>
    %cst_190 = arith.constant dense<0.000000e+00> : vector<128x64xf32>
    %462 = tpu.matmul %459, %461, %cst_190 {dimension_numbers = #tpu.dot_dimension_numbers<[1], [0], [0], [1], [0, 0, 1, 1], [], []>} : vector<128x64xf32>, vector<64x64xf32>, vector<128x64xf32> -> vector<128x64xf32>
    %c1_191 = arith.constant 1 : index
    %c0_192 = arith.constant 0 : index
    %c0_193 = arith.constant 0 : index
    %463 = vector.load %arg17[%c1_191, %c0_192, %c0_193] : memref<4x1x64xf32, #tpu.memory_space<vmem>>, vector<1x1x64xf32>
    %464 = vector.shape_cast %463 : vector<1x1x64xf32> to vector<1x64xf32>
    %465 = vector.broadcast %464 : vector<1x64xf32> to vector<128x64xf32>
    %466 = arith.addf %462, %465 : vector<128x64xf32>
    %c1_194 = arith.constant 1 : index
    %c0_195 = arith.constant 0 : index
    %c0_196 = arith.constant 0 : index
    %467 = vector.load %arg18[%c1_194, %c0_195, %c0_196] : memref<4x64x64xf32, #tpu.memory_space<vmem>>, vector<1x64x64xf32>
    %468 = vector.shape_cast %467 : vector<1x64x64xf32> to vector<64x64xf32>
    %cst_197 = arith.constant dense<0.000000e+00> : vector<128x64xf32>
    %469 = tpu.matmul %436, %468, %cst_197 {dimension_numbers = #tpu.dot_dimension_numbers<[1], [0], [0], [1], [0, 0, 1, 1], [], []>} : vector<128x64xf32>, vector<64x64xf32>, vector<128x64xf32> -> vector<128x64xf32>
    %c1_198 = arith.constant 1 : index
    %c0_199 = arith.constant 0 : index
    %c0_200 = arith.constant 0 : index
    %470 = vector.load %arg19[%c1_198, %c0_199, %c0_200] : memref<4x64x64xf32, #tpu.memory_space<vmem>>, vector<1x64x64xf32>
    %471 = vector.shape_cast %470 : vector<1x64x64xf32> to vector<64x64xf32>
    %cst_201 = arith.constant dense<0.000000e+00> : vector<8x64xf32>
    %472 = tpu.matmul %438, %471, %cst_201 {dimension_numbers = #tpu.dot_dimension_numbers<[1], [0], [0], [1], [0, 0, 1, 1], [], []>} : vector<8x64xf32>, vector<64x64xf32>, vector<8x64xf32> -> vector<8x64xf32>
    %473 = arith.addf %469, %466 : vector<128x64xf32>
    %474 = vector.shape_cast %473 : vector<128x64xf32> to vector<8x16x64xf32>
    %475 = vector.shape_cast %472 : vector<8x64xf32> to vector<8x1x64xf32>
    %476 = vector.broadcast %475 : vector<8x1x64xf32> to vector<8x16x64xf32>
    %477 = arith.addf %474, %476 : vector<8x16x64xf32>
    %478 = vector.shape_cast %477 : vector<8x16x64xf32> to vector<128x64xf32>
    %c2 = arith.constant 2 : index
    %c0_202 = arith.constant 0 : index
    %c0_203 = arith.constant 0 : index
    %479 = vector.load %arg7[%c2, %c0_202, %c0_203] : memref<4x32x64xf32, #tpu.memory_space<vmem>>, vector<1x32x64xf32>
    %480 = vector.shape_cast %479 : vector<1x32x64xf32> to vector<32x64xf32>
    %cst_204 = arith.constant dense<0.000000e+00> : vector<128x64xf32>
    %481 = tpu.matmul %355, %480, %cst_204 {dimension_numbers = #tpu.dot_dimension_numbers<[1], [0], [0], [1], [0, 0, 1, 1], [], []>} : vector<128x32xf32>, vector<32x64xf32>, vector<128x64xf32> -> vector<128x64xf32>
    %482 = arith.addf %478, %481 : vector<128x64xf32>
    %c2_205 = arith.constant 2 : index
    %c0_206 = arith.constant 0 : index
    %c0_207 = arith.constant 0 : index
    %483 = vector.load %arg8[%c2_205, %c0_206, %c0_207] : memref<4x1x64xf32, #tpu.memory_space<vmem>>, vector<1x1x64xf32>
    %484 = vector.shape_cast %483 : vector<1x1x64xf32> to vector<1x64xf32>
    %485 = vector.broadcast %484 : vector<1x64xf32> to vector<128x64xf32>
    %486 = arith.addf %482, %485 : vector<128x64xf32>
    %487 = vector.shape_cast %486 : vector<128x64xf32> to vector<8x16x64xf32>
    %cst_208 = arith.constant dense<0xFF800000> : vector<8x64xf32>
    %488 = vector.multi_reduction <maximumf>, %487, %cst_208 [1] : vector<8x16x64xf32> to vector<8x64xf32>
    %cst_209 = arith.constant 0.000000e+00 : f32
    %489 = vector.broadcast %cst_209 : f32 to vector<128x64xf32>
    %490 = arith.maximumf %486, %489 : vector<128x64xf32>
    %c2_210 = arith.constant 2 : index
    %c0_211 = arith.constant 0 : index
    %c0_212 = arith.constant 0 : index
    %491 = vector.load %arg13[%c2_210, %c0_211, %c0_212] : memref<4x64x64xf32, #tpu.memory_space<vmem>>, vector<1x64x64xf32>
    %492 = vector.shape_cast %491 : vector<1x64x64xf32> to vector<64x64xf32>
    %cst_213 = arith.constant dense<0.000000e+00> : vector<128x64xf32>
    %493 = tpu.matmul %490, %492, %cst_213 {dimension_numbers = #tpu.dot_dimension_numbers<[1], [0], [0], [1], [0, 0, 1, 1], [], []>} : vector<128x64xf32>, vector<64x64xf32>, vector<128x64xf32> -> vector<128x64xf32>
    %c2_214 = arith.constant 2 : index
    %c0_215 = arith.constant 0 : index
    %c0_216 = arith.constant 0 : index
    %494 = vector.load %arg15[%c2_214, %c0_215, %c0_216] : memref<4x1x64xf32, #tpu.memory_space<vmem>>, vector<1x1x64xf32>
    %495 = vector.shape_cast %494 : vector<1x1x64xf32> to vector<1x64xf32>
    %496 = vector.broadcast %495 : vector<1x64xf32> to vector<128x64xf32>
    %497 = arith.addf %493, %496 : vector<128x64xf32>
    %cst_217 = arith.constant 0.000000e+00 : f32
    %498 = vector.broadcast %cst_217 : f32 to vector<8x64xf32>
    %499 = arith.maximumf %488, %498 : vector<8x64xf32>
    %c2_218 = arith.constant 2 : index
    %c0_219 = arith.constant 0 : index
    %c0_220 = arith.constant 0 : index
    %500 = vector.load %arg14[%c2_218, %c0_219, %c0_220] : memref<4x64x64xf32, #tpu.memory_space<vmem>>, vector<1x64x64xf32>
    %501 = vector.shape_cast %500 : vector<1x64x64xf32> to vector<64x64xf32>
    %cst_221 = arith.constant dense<0.000000e+00> : vector<8x64xf32>
    %502 = tpu.matmul %499, %501, %cst_221 {dimension_numbers = #tpu.dot_dimension_numbers<[1], [0], [0], [1], [0, 0, 1, 1], [], []>} : vector<8x64xf32>, vector<64x64xf32>, vector<8x64xf32> -> vector<8x64xf32>
    %503 = vector.shape_cast %497 : vector<128x64xf32> to vector<8x16x64xf32>
    %504 = vector.shape_cast %502 : vector<8x64xf32> to vector<8x1x64xf32>
    %505 = vector.broadcast %504 : vector<8x1x64xf32> to vector<8x16x64xf32>
    %506 = arith.addf %503, %505 : vector<8x16x64xf32>
    %507 = vector.shape_cast %506 : vector<8x16x64xf32> to vector<128x64xf32>
    %cst_222 = arith.constant 0.000000e+00 : f32
    %508 = vector.broadcast %cst_222 : f32 to vector<128x64xf32>
    %509 = arith.maximumf %507, %508 : vector<128x64xf32>
    %c2_223 = arith.constant 2 : index
    %c0_224 = arith.constant 0 : index
    %c0_225 = arith.constant 0 : index
    %510 = vector.load %arg16[%c2_223, %c0_224, %c0_225] : memref<4x64x64xf32, #tpu.memory_space<vmem>>, vector<1x64x64xf32>
    %511 = vector.shape_cast %510 : vector<1x64x64xf32> to vector<64x64xf32>
    %cst_226 = arith.constant dense<0.000000e+00> : vector<128x64xf32>
    %512 = tpu.matmul %509, %511, %cst_226 {dimension_numbers = #tpu.dot_dimension_numbers<[1], [0], [0], [1], [0, 0, 1, 1], [], []>} : vector<128x64xf32>, vector<64x64xf32>, vector<128x64xf32> -> vector<128x64xf32>
    %c2_227 = arith.constant 2 : index
    %c0_228 = arith.constant 0 : index
    %c0_229 = arith.constant 0 : index
    %513 = vector.load %arg17[%c2_227, %c0_228, %c0_229] : memref<4x1x64xf32, #tpu.memory_space<vmem>>, vector<1x1x64xf32>
    %514 = vector.shape_cast %513 : vector<1x1x64xf32> to vector<1x64xf32>
    %515 = vector.broadcast %514 : vector<1x64xf32> to vector<128x64xf32>
    %516 = arith.addf %512, %515 : vector<128x64xf32>
    %c2_230 = arith.constant 2 : index
    %c0_231 = arith.constant 0 : index
    %c0_232 = arith.constant 0 : index
    %517 = vector.load %arg18[%c2_230, %c0_231, %c0_232] : memref<4x64x64xf32, #tpu.memory_space<vmem>>, vector<1x64x64xf32>
    %518 = vector.shape_cast %517 : vector<1x64x64xf32> to vector<64x64xf32>
    %cst_233 = arith.constant dense<0.000000e+00> : vector<128x64xf32>
    %519 = tpu.matmul %486, %518, %cst_233 {dimension_numbers = #tpu.dot_dimension_numbers<[1], [0], [0], [1], [0, 0, 1, 1], [], []>} : vector<128x64xf32>, vector<64x64xf32>, vector<128x64xf32> -> vector<128x64xf32>
    %c2_234 = arith.constant 2 : index
    %c0_235 = arith.constant 0 : index
    %c0_236 = arith.constant 0 : index
    %520 = vector.load %arg19[%c2_234, %c0_235, %c0_236] : memref<4x64x64xf32, #tpu.memory_space<vmem>>, vector<1x64x64xf32>
    %521 = vector.shape_cast %520 : vector<1x64x64xf32> to vector<64x64xf32>
    %cst_237 = arith.constant dense<0.000000e+00> : vector<8x64xf32>
    %522 = tpu.matmul %488, %521, %cst_237 {dimension_numbers = #tpu.dot_dimension_numbers<[1], [0], [0], [1], [0, 0, 1, 1], [], []>} : vector<8x64xf32>, vector<64x64xf32>, vector<8x64xf32> -> vector<8x64xf32>
    %523 = arith.addf %519, %516 : vector<128x64xf32>
    %524 = vector.shape_cast %523 : vector<128x64xf32> to vector<8x16x64xf32>
    %525 = vector.shape_cast %522 : vector<8x64xf32> to vector<8x1x64xf32>
    %526 = vector.broadcast %525 : vector<8x1x64xf32> to vector<8x16x64xf32>
    %527 = arith.addf %524, %526 : vector<8x16x64xf32>
    %528 = vector.shape_cast %527 : vector<8x16x64xf32> to vector<128x64xf32>
    %c3 = arith.constant 3 : index
    %c0_238 = arith.constant 0 : index
    %c0_239 = arith.constant 0 : index
    %529 = vector.load %arg7[%c3, %c0_238, %c0_239] : memref<4x32x64xf32, #tpu.memory_space<vmem>>, vector<1x32x64xf32>
    %530 = vector.shape_cast %529 : vector<1x32x64xf32> to vector<32x64xf32>
    %cst_240 = arith.constant dense<0.000000e+00> : vector<128x64xf32>
    %531 = tpu.matmul %355, %530, %cst_240 {dimension_numbers = #tpu.dot_dimension_numbers<[1], [0], [0], [1], [0, 0, 1, 1], [], []>} : vector<128x32xf32>, vector<32x64xf32>, vector<128x64xf32> -> vector<128x64xf32>
    %532 = arith.addf %528, %531 : vector<128x64xf32>
    %c3_241 = arith.constant 3 : index
    %c0_242 = arith.constant 0 : index
    %c0_243 = arith.constant 0 : index
    %533 = vector.load %arg8[%c3_241, %c0_242, %c0_243] : memref<4x1x64xf32, #tpu.memory_space<vmem>>, vector<1x1x64xf32>
    %534 = vector.shape_cast %533 : vector<1x1x64xf32> to vector<1x64xf32>
    %535 = vector.broadcast %534 : vector<1x64xf32> to vector<128x64xf32>
    %536 = arith.addf %532, %535 : vector<128x64xf32>
    %537 = vector.shape_cast %536 : vector<128x64xf32> to vector<8x16x64xf32>
    %cst_244 = arith.constant dense<0xFF800000> : vector<8x64xf32>
    %538 = vector.multi_reduction <maximumf>, %537, %cst_244 [1] : vector<8x16x64xf32> to vector<8x64xf32>
    %cst_245 = arith.constant 0.000000e+00 : f32
    %539 = vector.broadcast %cst_245 : f32 to vector<128x64xf32>
    %540 = arith.maximumf %536, %539 : vector<128x64xf32>
    %c3_246 = arith.constant 3 : index
    %c0_247 = arith.constant 0 : index
    %c0_248 = arith.constant 0 : index
    %541 = vector.load %arg13[%c3_246, %c0_247, %c0_248] : memref<4x64x64xf32, #tpu.memory_space<vmem>>, vector<1x64x64xf32>
    %542 = vector.shape_cast %541 : vector<1x64x64xf32> to vector<64x64xf32>
    %cst_249 = arith.constant dense<0.000000e+00> : vector<128x64xf32>
    %543 = tpu.matmul %540, %542, %cst_249 {dimension_numbers = #tpu.dot_dimension_numbers<[1], [0], [0], [1], [0, 0, 1, 1], [], []>} : vector<128x64xf32>, vector<64x64xf32>, vector<128x64xf32> -> vector<128x64xf32>
    %c3_250 = arith.constant 3 : index
    %c0_251 = arith.constant 0 : index
    %c0_252 = arith.constant 0 : index
    %544 = vector.load %arg15[%c3_250, %c0_251, %c0_252] : memref<4x1x64xf32, #tpu.memory_space<vmem>>, vector<1x1x64xf32>
    %545 = vector.shape_cast %544 : vector<1x1x64xf32> to vector<1x64xf32>
    %546 = vector.broadcast %545 : vector<1x64xf32> to vector<128x64xf32>
    %547 = arith.addf %543, %546 : vector<128x64xf32>
    %cst_253 = arith.constant 0.000000e+00 : f32
    %548 = vector.broadcast %cst_253 : f32 to vector<8x64xf32>
    %549 = arith.maximumf %538, %548 : vector<8x64xf32>
    %c3_254 = arith.constant 3 : index
    %c0_255 = arith.constant 0 : index
    %c0_256 = arith.constant 0 : index
    %550 = vector.load %arg14[%c3_254, %c0_255, %c0_256] : memref<4x64x64xf32, #tpu.memory_space<vmem>>, vector<1x64x64xf32>
    %551 = vector.shape_cast %550 : vector<1x64x64xf32> to vector<64x64xf32>
    %cst_257 = arith.constant dense<0.000000e+00> : vector<8x64xf32>
    %552 = tpu.matmul %549, %551, %cst_257 {dimension_numbers = #tpu.dot_dimension_numbers<[1], [0], [0], [1], [0, 0, 1, 1], [], []>} : vector<8x64xf32>, vector<64x64xf32>, vector<8x64xf32> -> vector<8x64xf32>
    %553 = vector.shape_cast %547 : vector<128x64xf32> to vector<8x16x64xf32>
    %554 = vector.shape_cast %552 : vector<8x64xf32> to vector<8x1x64xf32>
    %555 = vector.broadcast %554 : vector<8x1x64xf32> to vector<8x16x64xf32>
    %556 = arith.addf %553, %555 : vector<8x16x64xf32>
    %557 = vector.shape_cast %556 : vector<8x16x64xf32> to vector<128x64xf32>
    %cst_258 = arith.constant 0.000000e+00 : f32
    %558 = vector.broadcast %cst_258 : f32 to vector<128x64xf32>
    %559 = arith.maximumf %557, %558 : vector<128x64xf32>
    %c3_259 = arith.constant 3 : index
    %c0_260 = arith.constant 0 : index
    %c0_261 = arith.constant 0 : index
    %560 = vector.load %arg16[%c3_259, %c0_260, %c0_261] : memref<4x64x64xf32, #tpu.memory_space<vmem>>, vector<1x64x64xf32>
    %561 = vector.shape_cast %560 : vector<1x64x64xf32> to vector<64x64xf32>
    %cst_262 = arith.constant dense<0.000000e+00> : vector<128x64xf32>
    %562 = tpu.matmul %559, %561, %cst_262 {dimension_numbers = #tpu.dot_dimension_numbers<[1], [0], [0], [1], [0, 0, 1, 1], [], []>} : vector<128x64xf32>, vector<64x64xf32>, vector<128x64xf32> -> vector<128x64xf32>
    %c3_263 = arith.constant 3 : index
    %c0_264 = arith.constant 0 : index
    %c0_265 = arith.constant 0 : index
    %563 = vector.load %arg17[%c3_263, %c0_264, %c0_265] : memref<4x1x64xf32, #tpu.memory_space<vmem>>, vector<1x1x64xf32>
    %564 = vector.shape_cast %563 : vector<1x1x64xf32> to vector<1x64xf32>
    %565 = vector.broadcast %564 : vector<1x64xf32> to vector<128x64xf32>
    %566 = arith.addf %562, %565 : vector<128x64xf32>
    %c3_266 = arith.constant 3 : index
    %c0_267 = arith.constant 0 : index
    %c0_268 = arith.constant 0 : index
    %567 = vector.load %arg18[%c3_266, %c0_267, %c0_268] : memref<4x64x64xf32, #tpu.memory_space<vmem>>, vector<1x64x64xf32>
    %568 = vector.shape_cast %567 : vector<1x64x64xf32> to vector<64x64xf32>
    %cst_269 = arith.constant dense<0.000000e+00> : vector<128x64xf32>
    %569 = tpu.matmul %536, %568, %cst_269 {dimension_numbers = #tpu.dot_dimension_numbers<[1], [0], [0], [1], [0, 0, 1, 1], [], []>} : vector<128x64xf32>, vector<64x64xf32>, vector<128x64xf32> -> vector<128x64xf32>
    %c3_270 = arith.constant 3 : index
    %c0_271 = arith.constant 0 : index
    %c0_272 = arith.constant 0 : index
    %570 = vector.load %arg19[%c3_270, %c0_271, %c0_272] : memref<4x64x64xf32, #tpu.memory_space<vmem>>, vector<1x64x64xf32>
    %571 = vector.shape_cast %570 : vector<1x64x64xf32> to vector<64x64xf32>
    %cst_273 = arith.constant dense<0.000000e+00> : vector<8x64xf32>
    %572 = tpu.matmul %538, %571, %cst_273 {dimension_numbers = #tpu.dot_dimension_numbers<[1], [0], [0], [1], [0, 0, 1, 1], [], []>} : vector<8x64xf32>, vector<64x64xf32>, vector<8x64xf32> -> vector<8x64xf32>
    %573 = arith.addf %569, %566 : vector<128x64xf32>
    %574 = vector.shape_cast %573 : vector<128x64xf32> to vector<8x16x64xf32>
    %575 = vector.shape_cast %572 : vector<8x64xf32> to vector<8x1x64xf32>
    %576 = vector.broadcast %575 : vector<8x1x64xf32> to vector<8x16x64xf32>
    %577 = arith.addf %574, %576 : vector<8x16x64xf32>
    %578 = vector.shape_cast %577 : vector<8x16x64xf32> to vector<128x64xf32>
    %579 = vector.shape_cast %578 : vector<128x64xf32> to vector<8x16x64xf32>
    %cst_274 = arith.constant dense<0xFF800000> : vector<8x64xf32>
    %580 = vector.multi_reduction <maximumf>, %579, %cst_274 [1] : vector<8x16x64xf32> to vector<8x64xf32>
    %c0_275 = arith.constant 0 : index
    %c0_276 = arith.constant 0 : index
    %581 = vector.load %arg20[%c0_275, %c0_276] : memref<1x64xf32, #tpu.memory_space<vmem>>, vector<1x64xf32>
    %cst_277 = arith.constant 0.000000e+00 : f32
    %582 = vector.broadcast %cst_277 : f32 to vector<8x64xf32>
    %583 = arith.maximumf %580, %582 : vector<8x64xf32>
    %cst_278 = arith.constant dense<0.000000e+00> : vector<1x8xf32>
    %584 = tpu.matmul %581, %583, %cst_278 {dimension_numbers = #tpu.dot_dimension_numbers<[1], [1], [0], [0], [0, 0, 1, 0], [], []>} : vector<1x64xf32>, vector<8x64xf32>, vector<1x8xf32> -> vector<1x8xf32>
    %c0_279 = arith.constant 0 : index
    %c0_280 = arith.constant 0 : index
    %585 = vector.load %arg21[%c0_279, %c0_280] : memref<1x1xf32, #tpu.memory_space<vmem>>, vector<1x1xf32>
    %586 = vector.broadcast %585 : vector<1x1xf32> to vector<1x8xf32>
    %587 = arith.addf %584, %586 : vector<1x8xf32>
    %588 = math.tanh %587 : vector<1x8xf32>
    %c0_281 = arith.constant 0 : index
    %c0_282 = arith.constant 0 : index
    %c0_283 = arith.constant 0 : index
    %c0_284 = arith.constant 0 : index
    %589 = vector.load %arg22[%c0_281, %c0_282, %c0_283, %c0_284] : memref<1x1x1x8xf32, #tpu.memory_space<vmem>>, vector<1x1x1x8xf32>
    %590 = vector.shape_cast %589 : vector<1x1x1x8xf32> to vector<1x8xf32>
    %591 = vector.shape_cast %588 : vector<1x8xf32> to vector<1x1x1x8xf32>
    tpu.vector_store %arg22[%c0_281, %c0_282, %c0_283, %c0_284], %591 {strides = array<i32>} : memref<1x1x1x8xf32, #tpu.memory_space<vmem>>, vector<1x1x1x8xf32>,
    return
  }
  func.func @transform_0(%arg0: i32, %arg1: i32) -> (i32, i32, i32, i32) {
    %c0_i32 = arith.constant 0 : i32
    %c0_i32_0 = arith.constant 0 : i32
    %c0_i32_1 = arith.constant 0 : i32
    return %arg0, %arg1, %c0_i32, %c0_i32_0 : i32, i32, i32, i32
  }
  func.func @transform_1(%arg0: i32, %arg1: i32) -> (i32, i32, i32) {
    %c0_i32 = arith.constant 0 : i32
    %c0_i32_0 = arith.constant 0 : i32
    %c0_i32_1 = arith.constant 0 : i32
    return %arg0, %c0_i32, %c0_i32_0 : i32, i32, i32
  }
  func.func @transform_2(%arg0: i32, %arg1: i32) -> (i32, i32) {
    %c0_i32 = arith.constant 0 : i32
    %c0_i32_0 = arith.constant 0 : i32
    %c0_i32_1 = arith.constant 0 : i32
    return %c0_i32, %c0_i32_0 : i32, i32
  }
  func.func @transform_3(%arg0: i32, %arg1: i32) -> (i32, i32) {
    %c0_i32 = arith.constant 0 : i32
    %c0_i32_0 = arith.constant 0 : i32
    %c0_i32_1 = arith.constant 0 : i32
    return %c0_i32, %c0_i32_0 : i32, i32
  }
  func.func @transform_4(%arg0: i32, %arg1: i32) -> (i32, i32) {
    %c0_i32 = arith.constant 0 : i32
    %c0_i32_0 = arith.constant 0 : i32
    %c0_i32_1 = arith.constant 0 : i32
    return %c0_i32, %c0_i32_0 : i32, i32
  }
  func.func @transform_5(%arg0: i32, %arg1: i32) -> (i32, i32, i32) {
    %c0_i32 = arith.constant 0 : i32
    %c0_i32_0 = arith.constant 0 : i32
    %c0_i32_1 = arith.constant 0 : i32
    %c0_i32_2 = arith.constant 0 : i32
    return %c0_i32, %c0_i32_0, %c0_i32_1 : i32, i32, i32
  }
  func.func @transform_6(%arg0: i32, %arg1: i32) -> (i32, i32, i32) {
    %c0_i32 = arith.constant 0 : i32
    %c0_i32_0 = arith.constant 0 : i32
    %c0_i32_1 = arith.constant 0 : i32
    %c0_i32_2 = arith.constant 0 : i32
    return %c0_i32, %c0_i32_0, %c0_i32_1 : i32, i32, i32
  }
  func.func @transform_7(%arg0: i32, %arg1: i32) -> (i32, i32) {
    %c0_i32 = arith.constant 0 : i32
    %c0_i32_0 = arith.constant 0 : i32
    %c0_i32_1 = arith.constant 0 : i32
    return %c0_i32, %c0_i32_0 : i32, i32
  }
  func.func @transform_8(%arg0: i32, %arg1: i32) -> (i32, i32) {
    %c0_i32 = arith.constant 0 : i32
    %c0_i32_0 = arith.constant 0 : i32
    %c0_i32_1 = arith.constant 0 : i32
    return %c0_i32, %c0_i32_0 : i32, i32
  }
  func.func @transform_9(%arg0: i32, %arg1: i32) -> (i32, i32) {
    %c0_i32 = arith.constant 0 : i32
    %c0_i32_0 = arith.constant 0 : i32
    %c0_i32_1 = arith.constant 0 : i32
    return %c0_i32, %c0_i32_0 : i32, i32
  }
  func.func @transform_10(%arg0: i32, %arg1: i32) -> (i32, i32) {
    %c0_i32 = arith.constant 0 : i32
    %c0_i32_0 = arith.constant 0 : i32
    %c0_i32_1 = arith.constant 0 : i32
    return %c0_i32, %c0_i32_0 : i32, i32
  }
  func.func @transform_11(%arg0: i32, %arg1: i32) -> (i32, i32, i32) {
    %c0_i32 = arith.constant 0 : i32
    %c0_i32_0 = arith.constant 0 : i32
    %c0_i32_1 = arith.constant 0 : i32
    %c0_i32_2 = arith.constant 0 : i32
    return %c0_i32, %c0_i32_0, %c0_i32_1 : i32, i32, i32
  }
  func.func @transform_12(%arg0: i32, %arg1: i32) -> (i32, i32, i32) {
    %c0_i32 = arith.constant 0 : i32
    %c0_i32_0 = arith.constant 0 : i32
    %c0_i32_1 = arith.constant 0 : i32
    %c0_i32_2 = arith.constant 0 : i32
    return %c0_i32, %c0_i32_0, %c0_i32_1 : i32, i32, i32
  }
  func.func @transform_13(%arg0: i32, %arg1: i32) -> (i32, i32, i32) {
    %c0_i32 = arith.constant 0 : i32
    %c0_i32_0 = arith.constant 0 : i32
    %c0_i32_1 = arith.constant 0 : i32
    %c0_i32_2 = arith.constant 0 : i32
    return %c0_i32, %c0_i32_0, %c0_i32_1 : i32, i32, i32
  }
  func.func @transform_14(%arg0: i32, %arg1: i32) -> (i32, i32, i32) {
    %c0_i32 = arith.constant 0 : i32
    %c0_i32_0 = arith.constant 0 : i32
    %c0_i32_1 = arith.constant 0 : i32
    %c0_i32_2 = arith.constant 0 : i32
    return %c0_i32, %c0_i32_0, %c0_i32_1 : i32, i32, i32
  }
  func.func @transform_15(%arg0: i32, %arg1: i32) -> (i32, i32, i32) {
    %c0_i32 = arith.constant 0 : i32
    %c0_i32_0 = arith.constant 0 : i32
    %c0_i32_1 = arith.constant 0 : i32
    %c0_i32_2 = arith.constant 0 : i32
    return %c0_i32, %c0_i32_0, %c0_i32_1 : i32, i32, i32
  }
  func.func @transform_16(%arg0: i32, %arg1: i32) -> (i32, i32, i32) {
    %c0_i32 = arith.constant 0 : i32
    %c0_i32_0 = arith.constant 0 : i32
    %c0_i32_1 = arith.constant 0 : i32
    %c0_i32_2 = arith.constant 0 : i32
    return %c0_i32, %c0_i32_0, %c0_i32_1 : i32, i32, i32
  }
  func.func @transform_17(%arg0: i32, %arg1: i32) -> (i32, i32, i32) {
    %c0_i32 = arith.constant 0 : i32
    %c0_i32_0 = arith.constant 0 : i32
    %c0_i32_1 = arith.constant 0 : i32
    %c0_i32_2 = arith.constant 0 : i32
    return %c0_i32, %c0_i32_0, %c0_i32_1 : i32, i32, i32
  }
  func.func @transform_18(%arg0: i32, %arg1: i32) -> (i32, i32) {
    %c0_i32 = arith.constant 0 : i32
    %c0_i32_0 = arith.constant 0 : i32
    %c0_i32_1 = arith.constant 0 : i32
    return %c0_i32, %c0_i32_0 : i32, i32
  }
  func.func @transform_19(%arg0: i32, %arg1: i32) -> (i32, i32) {
    %c0_i32 = arith.constant 0 : i32
    %c0_i32_0 = arith.constant 0 : i32
    %c0_i32_1 = arith.constant 0 : i32
    return %c0_i32, %c0_i32_0 : i32, i32
  }
  func.func @transform_20(%arg0: i32, %arg1: i32) -> (i32, i32, i32, i32) {
    %c0_i32 = arith.constant 0 : i32
    %c0_i32_0 = arith.constant 0 : i32
    %c0_i32_1 = arith.constant 0 : i32
    return %arg0, %arg1, %c0_i32, %c0_i32_0 : i32, i32, i32, i32
  }
}

</mosaic_0001>

<llo_original>
// kernel: tpu_custom_call.1
$region0: #{tpu_custom_call.1}
  #allocation0 [shape = 'u32[]', space=smem, size = 0x4, offset = 0x4, fixed_abs, tag = 'smem constant byte address 0x4 - core index']
  #allocation1 [shape = 'u32[72,128]{1,0:T(1,128)}', space=vmem, size = 0x9000, scoped, tag = 'internal scratch']
  #allocation2 [shape = 'f32[1,1]{1,0:T(1,128)S(1)}', space=vmem, size = 0x200, scoped, tag = 'scoped memory for tpu_custom_call.1']
  %s0 = inlined_call_operand.vmem [shape: f32[2,8,16,3], index: 0, kind: input, shape index: {}]
  %s1 = inlined_call_operand.vmem [shape: f32[2,192,32], index: 1, kind: input, shape index: {}]
  %s2 = inlined_call_operand.vmem [shape: f32[3,64], index: 2, kind: input, shape index: {}]
  %s3 = inlined_call_operand.vmem [shape: f32[32,64], index: 3, kind: input, shape index: {}]
  %s4 = inlined_call_operand.hbm [shape: f32[1,64], index: 4, kind: input, shape index: {}]
  %s5 = inlined_call_operand.vmem [shape: f32[4,32,64], index: 5, kind: input, shape index: {}]
  %s6 = inlined_call_operand.vmem [shape: f32[4,1,64], index: 6, kind: input, shape index: {}]
  %s7 = inlined_call_operand.hbm [shape: f32[64,64], index: 7, kind: input, shape index: {}]
  %s8 = inlined_call_operand.vmem [shape: f32[1,64], index: 8, kind: input, shape index: {}]
  %s9 = inlined_call_operand.hbm [shape: f32[64,64], index: 9, kind: input, shape index: {}]
  %s10 = inlined_call_operand.vmem [shape: f32[1,64], index: 10, kind: input, shape index: {}]
  %s11 = inlined_call_operand.vmem [shape: f32[4,64,64], index: 11, kind: input, shape index: {}]
  %s12 = inlined_call_operand.vmem [shape: f32[4,64,64], index: 12, kind: input, shape index: {}]
  %s13 = inlined_call_operand.vmem [shape: f32[4,1,64], index: 13, kind: input, shape index: {}]
  %s14 = inlined_call_operand.hbm [shape: f32[4,64,64], index: 14, kind: input, shape index: {}]
  %s15 = inlined_call_operand.vmem [shape: f32[4,1,64], index: 15, kind: input, shape index: {}]
  %s16 = inlined_call_operand.hbm [shape: f32[4,64,64], index: 16, kind: input, shape index: {}]
  %s17 = inlined_call_operand.hbm [shape: f32[4,64,64], index: 17, kind: input, shape index: {}]
  %s18 = inlined_call_operand.vmem [shape: f32[1,64], index: 18, kind: input, shape index: {}]
  %s19 = inlined_call_operand.<no memory space> [shape: f32[1,1], index: 19, kind: input, shape index: {}]
  %s20 = inlined_call_operand.hbm [shape: f32[2,1,1,8], index: 20, kind: output, shape index: {}]
  %s21 = sld [smem:[#allocation0]]
  $region137: #{tpu_custom_call.1} parent=0
    _
  %s23 = ssub.s32 1, %s21
  %s24 = scalar_select 0, %s23, %s21
  %v25 = vstv %s19
  %26 = vst [vmem:[#allocation2] sm:$0x1] %v25
  $region1: #{tpu_custom_call.1} parent=0
    #allocation3 [shape = 'u8[512]{0}', space=vmem, size = 0x400, scoped, tag = 'input window, operand 4, single buffered']
    #allocation4 [shape = 's32[2]{0}', space=sflag, size = 0x8, scoped, tag = 'scoped memory for tpu_custom_call.1']
    #allocation5 [shape = 's32[2]{0}', space=sflag, size = 0x8, scoped, tag = 'scoped memory for tpu_custom_call.1']
    #allocation6 [shape = 'u8[32768]{0}', space=vmem, size = 0x8000, scoped, tag = 'input window, operand 7, single buffered']
    #allocation7 [shape = 's32[1]{0}', space=sflag, size = 0x4, scoped, tag = 'scoped memory for tpu_custom_call.1']
    #allocation8 [shape = 'u8[32768]{0}', space=vmem, size = 0x8000, scoped, tag = 'input window, operand 9, single buffered']
    #allocation9 [shape = 'u8[131072]{0}', space=vmem, size = 0x20000, scoped, tag = 'input window, operand 14, single buffered']
    #allocation10 [shape = 's32[1]{0}', space=sflag, size = 0x4, scoped, tag = 'scoped memory for tpu_custom_call.1']
    #allocation11 [shape = 'u8[131072]{0}', space=vmem, size = 0x20000, scoped, tag = 'input window, operand 16, single buffered']
    #allocation12 [shape = 'u8[131072]{0}', space=vmem, size = 0x20000, scoped, tag = 'input window, operand 17, single buffered']
    #allocation13 [shape = 's32[1]{0}', space=sflag, size = 0x4, scoped, tag = 'scoped memory for tpu_custom_call.1']
    #allocation14 [shape = 'u8[1024]{0}', space=vmem, size = 0x400, scoped, tag = 'output window, operand 0']
    %27 = vsyncpa [#allocation4], 0
    %28 = vsyncpa [#allocation7], 0
    %29 = vsyncpa [#allocation10], 0
    %30 = vsyncpa [#allocation13], 0
    %31 = vsyncpa [#allocation5], 0
    %s32 = scalar_lea.sflag [#allocation5], 1
    %33 = vsyncpa %s32, 0
    loop: start=0, step=1, limit=4
    $region2: #{tpu_custom_call.1} parent=1 // loop_pre_header
      _
    $region3: #{tpu_custom_call.1} parent=1 // loop_header
      %s35 = sphi 0, %s39
      %p36 = scmp.ge.s32.totalorder %s35, 4
      %s42 = sphi 0, %s54
      %s43 = sphi 0, %s50
      %s44 = sphi 0, %s42
      %s45 = sphi 0, %s43
      %s46 = sphi 0, %s44
      %s47 = sphi 0, %s45
      %s59 = sphi 0, %s61
      %s62 = sphi 0, %s59
      %s63 = sphi 0, %s62
      %s79 = sphi 0, %s63
      %s85 = sphi 0, %s87
      %s88 = sphi 0, %s85
      %s89 = sphi 0, %s88
      %s105 = sphi 0, %s89
      %s109 = sphi 0, %s109
      %s111 = sphi 0, %s109
      %s112 = sphi 0, %s111
      %s126 = sphi 0, %s112
      %s130 = sphi 0, %s130
      %s132 = sphi 0, %s130
      %s133 = sphi 0, %s132
      %s147 = sphi 0, %s133
      %s151 = sphi 0, %s151
      %s153 = sphi 0, %s151
      %s154 = sphi 0, %s153
      %s168 = sphi 0, %s154
      %s172 = sphi 0, %s172
      %s174 = sphi 0, %s172
      %s175 = sphi 0, %s174
      %s189 = sphi 0, %s175
      %s193 = sphi 0, %s193
      %s195 = sphi 0, %s193
      %s196 = sphi 0, %s195
      %s210 = sphi 0, %s196
      %s214 = sphi 0, %s214
      %s216 = sphi 0, %s214
      %s217 = sphi 0, %s216
      %s231 = sphi 0, %s217
      %s235 = sphi 0, %s235
      %s237 = sphi 0, %s235
      %s238 = sphi 0, %s237
      %s252 = sphi 0, %s238
      %s256 = sphi 0, %s256
      %s258 = sphi 0, %s256
      %s259 = sphi 0, %s258
      %s273 = sphi 0, %s259
      %s277 = sphi 0, %s277
      %s279 = sphi 0, %s277
      %s280 = sphi 0, %s279
      %s294 = sphi 0, %s280
      %s298 = sphi 0, %s298
      %s300 = sphi 0, %s298
      %s301 = sphi 0, %s300
      %s315 = sphi 0, %s301
      %s319 = sphi 0, %s319
      %s321 = sphi 0, %s319
      %s322 = sphi 0, %s321
      %s336 = sphi 0, %s322
      %s340 = sphi 0, %s340
      %s342 = sphi 0, %s340
      %s343 = sphi 0, %s342
      %s357 = sphi 0, %s343
      %s361 = sphi 0, %s361
      %s363 = sphi 0, %s361
      %s364 = sphi 0, %s363
      %s378 = sphi 0, %s364
      %s382 = sphi 0, %s382
      %s384 = sphi 0, %s382
      %s385 = sphi 0, %s384
      %s399 = sphi 0, %s385
      %s403 = sphi 0, %s403
      %s405 = sphi 0, %s403
      %s406 = sphi 0, %s405
      %s420 = sphi 0, %s406
      %s424 = sphi 0, %s424
      %s426 = sphi 0, %s424
      %s427 = sphi 0, %s426
      %s441 = sphi 0, %s427
      %s445 = sphi 0, %s445
      %s447 = sphi 0, %s445
      %s448 = sphi 0, %s447
      %s462 = sphi 0, %s448
      %s466 = sphi 0, %s466
      %s468 = sphi 0, %s466
      %s469 = sphi 0, %s468
      %s483 = sphi 0, %s469
      %s491 = sphi 0, %s493
      %s494 = sphi 0, %s491
      %s495 = sphi 0, %s494
      %s511 = sphi 0, %s495
    $region4: #{tpu_custom_call.1} parent=1 // loop_header_branch
      %38 = sbr.rel (%p36) target = $region8
    $region5: #{tpu_custom_call.1} parent=1 // loop_body
      %s40 = ssub.s32 %s35, 1
      %s41 = ssub.s32 %s35, 2
      %s48 = sadd.s32 1, %s43
      %p49 = scmp.ge.s32.totalorder %s48, 1
      %s50 = scalar_select %p49, 0, %s48
      %s51 = sadd.s32 1, %s42
      %s52 = scalar_select %p49, %s51, %s42
      %p53 = scmp.ge.s32.totalorder %s52, 2
      %s54 = scalar_select %p53, 0, %s52
      %s55 = ssub.s32 %s42, %s54
      %s56 = ssub.s32 %s43, %s50
      %s57 = sor.u32 %s55, %s56
      %p58 = scmp.eq.s32.totalorder %s57, 0
      %s60 = sadd.s32 %s59, 1
      %s61 = scalar_select %p58, %s59, %s60
      %p64 = pneg %p58
      %p65 = scmp.eq.s32.totalorder %s35, 1
      %p66 = por %p64, %p65
      %p67 = scmp.ne.s32.totalorder %s59, %s62
      %p68 = scmp.eq.s32.totalorder %s35, 0
      %p69 = por %p67, %p68
      %p70 = scmp.ne.s32.totalorder %s59, %s62
      %p71 = scmp.eq.s32.totalorder %s40, 1
      %p72 = por %p70, %p71
      %p73 = scmp.ne.s32.totalorder %s62, %s63
      %p74 = scmp.eq.s32.totalorder %s40, 0
      %p75 = por %p73, %p74
      %p76 = scmp.ne.s32.totalorder %s62, %s63
      %p77 = scmp.eq.s32.totalorder %s41, 1
      %p78 = por %p76, %p77
      %p80 = scmp.ne.s32.totalorder %s63, %s79
      %p81 = scmp.eq.s32.totalorder %s41, 0
      %p82 = por %p80, %p81
      %s83 = ssub.s32 %s42, %s54
      %p84 = scmp.eq.s32.totalorder %s83, 0
      %s86 = sadd.s32 %s85, 1
      %s87 = scalar_select %p84, %s85, %s86
      %p90 = pneg %p84
      %p91 = scmp.eq.s32.totalorder %s35, 1
      %p92 = por %p90, %p91
      %p93 = scmp.ne.s32.totalorder %s85, %s88
      %p94 = scmp.eq.s32.totalorder %s35, 0
      %p95 = por %p93, %p94
      %p96 = scmp.ne.s32.totalorder %s85, %s88
      %p97 = scmp.eq.s32.totalorder %s40, 1
      %p98 = por %p96, %p97
      %p99 = scmp.ne.s32.totalorder %s88, %s89
      %p100 = scmp.eq.s32.totalorder %s40, 0
      %p101 = por %p99, %p100
      %p102 = scmp.ne.s32.totalorder %s88, %s89
      %p103 = scmp.eq.s32.totalorder %s41, 1
      %p104 = por %p102, %p103
      %p106 = scmp.ne.s32.totalorder %s89, %s105
      %p107 = scmp.eq.s32.totalorder %s41, 0
      %p108 = por %p106, %p107
      %s110 = sadd.s32 %s109, 1
      %p113 = scmp.eq.s32.totalorder %s35, 1
      %p114 = scmp.ne.s32.totalorder %s109, %s111
      %p115 = scmp.eq.s32.totalorder %s35, 0
      %p116 = por %p114, %p115
      %p117 = scmp.ne.s32.totalorder %s109, %s111
      %p118 = scmp.eq.s32.totalorder %s40, 1
      %p119 = por %p117, %p118
      %p120 = scmp.ne.s32.totalorder %s111, %s112
      %p121 = scmp.eq.s32.totalorder %s40, 0
      %p122 = por %p120, %p121
      %p123 = scmp.ne.s32.totalorder %s111, %s112
      %p124 = scmp.eq.s32.totalorder %s41, 1
      %p125 = por %p123, %p124
      %p127 = scmp.ne.s32.totalorder %s112, %s126
      %p128 = scmp.eq.s32.totalorder %s41, 0
      %p129 = por %p127, %p128
      %s131 = sadd.s32 %s130, 1
      %p134 = scmp.eq.s32.totalorder %s35, 1
      %p135 = scmp.ne.s32.totalorder %s130, %s132
      %p136 = scmp.eq.s32.totalorder %s35, 0
      %p137 = por %p135, %p136
      %p138 = scmp.ne.s32.totalorder %s130, %s132
      %p139 = scmp.eq.s32.totalorder %s40, 1
      %p140 = por %p138, %p139
      %p141 = scmp.ne.s32.totalorder %s132, %s133
      %p142 = scmp.eq.s32.totalorder %s40, 0
      %p143 = por %p141, %p142
      %p144 = scmp.ne.s32.totalorder %s132, %s133
      %p145 = scmp.eq.s32.totalorder %s41, 1
      %p146 = por %p144, %p145
      %p148 = scmp.ne.s32.totalorder %s133, %s147
      %p149 = scmp.eq.s32.totalorder %s41, 0
      %p150 = por %p148, %p149
      %s152 = sadd.s32 %s151, 1
      %p155 = scmp.eq.s32.totalorder %s35, 1
      %p156 = scmp.ne.s32.totalorder %s151, %s153
      %p157 = scmp.eq.s32.totalorder %s35, 0
      %p158 = por %p156, %p157
      %p159 = scmp.ne.s32.totalorder %s151, %s153
      %p160 = scmp.eq.s32.totalorder %s40, 1
      %p161 = por %p159, %p160
      %p162 = scmp.ne.s32.totalorder %s153, %s154
      %p163 = scmp.eq.s32.totalorder %s40, 0
      %p164 = por %p162, %p163
      %p165 = scmp.ne.s32.totalorder %s153, %s154
      %p166 = scmp.eq.s32.totalorder %s41, 1
      %p167 = por %p165, %p166
      %p169 = scmp.ne.s32.totalorder %s154, %s168
      %p170 = scmp.eq.s32.totalorder %s41, 0
      %p171 = por %p169, %p170
      %s173 = sadd.s32 %s172, 1
      %p176 = scmp.eq.s32.totalorder %s35, 1
      %p177 = scmp.ne.s32.totalorder %s172, %s174
      %p178 = scmp.eq.s32.totalorder %s35, 0
      %p179 = por %p177, %p178
      %p180 = scmp.ne.s32.totalorder %s172, %s174
      %p181 = scmp.eq.s32.totalorder %s40, 1
      %p182 = por %p180, %p181
      %p183 = scmp.ne.s32.totalorder %s174, %s175
      %p184 = scmp.eq.s32.totalorder %s40, 0
      %p185 = por %p183, %p184
      %p186 = scmp.ne.s32.totalorder %s174, %s175
      %p187 = scmp.eq.s32.totalorder %s41, 1
      %p188 = por %p186, %p187
      %p190 = scmp.ne.s32.totalorder %s175, %s189
      %p191 = scmp.eq.s32.totalorder %s41, 0
      %p192 = por %p190, %p191
      %s194 = sadd.s32 %s193, 1
      %p197 = scmp.eq.s32.totalorder %s35, 1
      %p198 = scmp.ne.s32.totalorder %s193, %s195
      %p199 = scmp.eq.s32.totalorder %s35, 0
      %p200 = por %p198, %p199
      %p201 = scmp.ne.s32.totalorder %s193, %s195
      %p202 = scmp.eq.s32.totalorder %s40, 1
      %p203 = por %p201, %p202
      %p204 = scmp.ne.s32.totalorder %s195, %s196
      %p205 = scmp.eq.s32.totalorder %s40, 0
      %p206 = por %p204, %p205
      %p207 = scmp.ne.s32.totalorder %s195, %s196
      %p208 = scmp.eq.s32.totalorder %s41, 1
      %p209 = por %p207, %p208
      %p211 = scmp.ne.s32.totalorder %s196, %s210
      %p212 = scmp.eq.s32.totalorder %s41, 0
      %p213 = por %p211, %p212
      %s215 = sadd.s32 %s214, 1
      %p218 = scmp.eq.s32.totalorder %s35, 1
      %p219 = scmp.ne.s32.totalorder %s214, %s216
      %p220 = scmp.eq.s32.totalorder %s35, 0
      %p221 = por %p219, %p220
      %p222 = scmp.ne.s32.totalorder %s214, %s216
      %p223 = scmp.eq.s32.totalorder %s40, 1
      %p224 = por %p222, %p223
      %p225 = scmp.ne.s32.totalorder %s216, %s217
      %p226 = scmp.eq.s32.totalorder %s40, 0
      %p227 = por %p225, %p226
      %p228 = scmp.ne.s32.totalorder %s216, %s217
      %p229 = scmp.eq.s32.totalorder %s41, 1
      %p230 = por %p228, %p229
      %p232 = scmp.ne.s32.totalorder %s217, %s231
      %p233 = scmp.eq.s32.totalorder %s41, 0
      %p234 = por %p232, %p233
      %s236 = sadd.s32 %s235, 1
      %p239 = scmp.eq.s32.totalorder %s35, 1
      %p240 = scmp.ne.s32.totalorder %s235, %s237
      %p241 = scmp.eq.s32.totalorder %s35, 0
      %p242 = por %p240, %p241
      %p243 = scmp.ne.s32.totalorder %s235, %s237
      %p244 = scmp.eq.s32.totalorder %s40, 1
      %p245 = por %p243, %p244
      %p246 = scmp.ne.s32.totalorder %s237, %s238
      %p247 = scmp.eq.s32.totalorder %s40, 0
      %p248 = por %p246, %p247
      %p249 = scmp.ne.s32.totalorder %s237, %s238
      %p250 = scmp.eq.s32.totalorder %s41, 1
      %p251 = por %p249, %p250
      %p253 = scmp.ne.s32.totalorder %s238, %s252
      %p254 = scmp.eq.s32.totalorder %s41, 0
      %p255 = por %p253, %p254
      %s257 = sadd.s32 %s256, 1
      %p260 = scmp.eq.s32.totalorder %s35, 1
      %p261 = scmp.ne.s32.totalorder %s256, %s258
      %p262 = scmp.eq.s32.totalorder %s35, 0
      %p263 = por %p261, %p262
      %p264 = scmp.ne.s32.totalorder %s256, %s258
      %p265 = scmp.eq.s32.totalorder %s40, 1
      %p266 = por %p264, %p265
      %p267 = scmp.ne.s32.totalorder %s258, %s259
      %p268 = scmp.eq.s32.totalorder %s40, 0
      %p269 = por %p267, %p268
      %p270 = scmp.ne.s32.totalorder %s258, %s259
      %p271 = scmp.eq.s32.totalorder %s41, 1
      %p272 = por %p270, %p271
      %p274 = scmp.ne.s32.totalorder %s259, %s273
      %p275 = scmp.eq.s32.totalorder %s41, 0
      %p276 = por %p274, %p275
      %s278 = sadd.s32 %s277, 1
      %p281 = scmp.eq.s32.totalorder %s35, 1
      %p282 = scmp.ne.s32.totalorder %s277, %s279
      %p283 = scmp.eq.s32.totalorder %s35, 0
      %p284 = por %p282, %p283
      %p285 = scmp.ne.s32.totalorder %s277, %s279
      %p286 = scmp.eq.s32.totalorder %s40, 1
      %p287 = por %p285, %p286
      %p288 = scmp.ne.s32.totalorder %s279, %s280
      %p289 = scmp.eq.s32.totalorder %s40, 0
      %p290 = por %p288, %p289
      %p291 = scmp.ne.s32.totalorder %s279, %s280
      %p292 = scmp.eq.s32.totalorder %s41, 1
      %p293 = por %p291, %p292
      %p295 = scmp.ne.s32.totalorder %s280, %s294
      %p296 = scmp.eq.s32.totalorder %s41, 0
      %p297 = por %p295, %p296
      %s299 = sadd.s32 %s298, 1
      %p302 = scmp.eq.s32.totalorder %s35, 1
      %p303 = scmp.ne.s32.totalorder %s298, %s300
      %p304 = scmp.eq.s32.totalorder %s35, 0
      %p305 = por %p303, %p304
      %p306 = scmp.ne.s32.totalorder %s298, %s300
      %p307 = scmp.eq.s32.totalorder %s40, 1
      %p308 = por %p306, %p307
      %p309 = scmp.ne.s32.totalorder %s300, %s301
      %p310 = scmp.eq.s32.totalorder %s40, 0
      %p311 = por %p309, %p310
      %p312 = scmp.ne.s32.totalorder %s300, %s301
      %p313 = scmp.eq.s32.totalorder %s41, 1
      %p314 = por %p312, %p313
      %p316 = scmp.ne.s32.totalorder %s301, %s315
      %p317 = scmp.eq.s32.totalorder %s41, 0
      %p318 = por %p316, %p317
      %s320 = sadd.s32 %s319, 1
      %p323 = scmp.eq.s32.totalorder %s35, 1
      %p324 = scmp.ne.s32.totalorder %s319, %s321
      %p325 = scmp.eq.s32.totalorder %s35, 0
      %p326 = por %p324, %p325
      %p327 = scmp.ne.s32.totalorder %s319, %s321
      %p328 = scmp.eq.s32.totalorder %s40, 1
      %p329 = por %p327, %p328
      %p330 = scmp.ne.s32.totalorder %s321, %s322
      %p331 = scmp.eq.s32.totalorder %s40, 0
      %p332 = por %p330, %p331
      %p333 = scmp.ne.s32.totalorder %s321, %s322
      %p334 = scmp.eq.s32.totalorder %s41, 1
      %p335 = por %p333, %p334
      %p337 = scmp.ne.s32.totalorder %s322, %s336
      %p338 = scmp.eq.s32.totalorder %s41, 0
      %p339 = por %p337, %p338
      %s341 = sadd.s32 %s340, 1
      %p344 = scmp.eq.s32.totalorder %s35, 1
      %p345 = scmp.ne.s32.totalorder %s340, %s342
      %p346 = scmp.eq.s32.totalorder %s35, 0
      %p347 = por %p345, %p346
      %p348 = scmp.ne.s32.totalorder %s340, %s342
      %p349 = scmp.eq.s32.totalorder %s40, 1
      %p350 = por %p348, %p349
      %p351 = scmp.ne.s32.totalorder %s342, %s343
      %p352 = scmp.eq.s32.totalorder %s40, 0
      %p353 = por %p351, %p352
      %p354 = scmp.ne.s32.totalorder %s342, %s343
      %p355 = scmp.eq.s32.totalorder %s41, 1
      %p356 = por %p354, %p355
      %p358 = scmp.ne.s32.totalorder %s343, %s357
      %p359 = scmp.eq.s32.totalorder %s41, 0
      %p360 = por %p358, %p359
      %s362 = sadd.s32 %s361, 1
      %p365 = scmp.eq.s32.totalorder %s35, 1
      %p366 = scmp.ne.s32.totalorder %s361, %s363
      %p367 = scmp.eq.s32.totalorder %s35, 0
      %p368 = por %p366, %p367
      %p369 = scmp.ne.s32.totalorder %s361, %s363
      %p370 = scmp.eq.s32.totalorder %s40, 1
      %p371 = por %p369, %p370
      %p372 = scmp.ne.s32.totalorder %s363, %s364
      %p373 = scmp.eq.s32.totalorder %s40, 0
      %p374 = por %p372, %p373
      %p375 = scmp.ne.s32.totalorder %s363, %s364
      %p376 = scmp.eq.s32.totalorder %s41, 1
      %p377 = por %p375, %p376
      %p379 = scmp.ne.s32.totalorder %s364, %s378
      %p380 = scmp.eq.s32.totalorder %s41, 0
      %p381 = por %p379, %p380
      %s383 = sadd.s32 %s382, 1
      %p386 = scmp.eq.s32.totalorder %s35, 1
      %p387 = scmp.ne.s32.totalorder %s382, %s384
      %p388 = scmp.eq.s32.totalorder %s35, 0
      %p389 = por %p387, %p388
      %p390 = scmp.ne.s32.totalorder %s382, %s384
      %p391 = scmp.eq.s32.totalorder %s40, 1
      %p392 = por %p390, %p391
      %p393 = scmp.ne.s32.totalorder %s384, %s385
      %p394 = scmp.eq.s32.totalorder %s40, 0
      %p395 = por %p393, %p394
      %p396 = scmp.ne.s32.totalorder %s384, %s385
      %p397 = scmp.eq.s32.totalorder %s41, 1
      %p398 = por %p396, %p397
      %p400 = scmp.ne.s32.totalorder %s385, %s399
      %p401 = scmp.eq.s32.totalorder %s41, 0
      %p402 = por %p400, %p401
      %s404 = sadd.s32 %s403, 1
      %p407 = scmp.eq.s32.totalorder %s35, 1
      %p408 = scmp.ne.s32.totalorder %s403, %s405
      %p409 = scmp.eq.s32.totalorder %s35, 0
      %p410 = por %p408, %p409
      %p411 = scmp.ne.s32.totalorder %s403, %s405
      %p412 = scmp.eq.s32.totalorder %s40, 1
      %p413 = por %p411, %p412
      %p414 = scmp.ne.s32.totalorder %s405, %s406
      %p415 = scmp.eq.s32.totalorder %s40, 0
      %p416 = por %p414, %p415
      %p417 = scmp.ne.s32.totalorder %s405, %s406
      %p418 = scmp.eq.s32.totalorder %s41, 1
      %p419 = por %p417, %p418
      %p421 = scmp.ne.s32.totalorder %s406, %s420
      %p422 = scmp.eq.s32.totalorder %s41, 0
      %p423 = por %p421, %p422
      %s425 = sadd.s32 %s424, 1
      %p428 = scmp.eq.s32.totalorder %s35, 1
      %p429 = scmp.ne.s32.totalorder %s424, %s426
      %p430 = scmp.eq.s32.totalorder %s35, 0
      %p431 = por %p429, %p430
      %p432 = scmp.ne.s32.totalorder %s424, %s426
      %p433 = scmp.eq.s32.totalorder %s40, 1
      %p434 = por %p432, %p433
      %p435 = scmp.ne.s32.totalorder %s426, %s427
      %p436 = scmp.eq.s32.totalorder %s40, 0
      %p437 = por %p435, %p436
      %p438 = scmp.ne.s32.totalorder %s426, %s427
      %p439 = scmp.eq.s32.totalorder %s41, 1
      %p440 = por %p438, %p439
      %p442 = scmp.ne.s32.totalorder %s427, %s441
      %p443 = scmp.eq.s32.totalorder %s41, 0
      %p444 = por %p442, %p443
      %s446 = sadd.s32 %s445, 1
      %p449 = scmp.eq.s32.totalorder %s35, 1
      %p450 = scmp.ne.s32.totalorder %s445, %s447
      %p451 = scmp.eq.s32.totalorder %s35, 0
      %p452 = por %p450, %p451
      %p453 = scmp.ne.s32.totalorder %s445, %s447
      %p454 = scmp.eq.s32.totalorder %s40, 1
      %p455 = por %p453, %p454
      %p456 = scmp.ne.s32.totalorder %s447, %s448
      %p457 = scmp.eq.s32.totalorder %s40, 0
      %p458 = por %p456, %p457
      %p459 = scmp.ne.s32.totalorder %s447, %s448
      %p460 = scmp.eq.s32.totalorder %s41, 1
      %p461 = por %p459, %p460
      %p463 = scmp.ne.s32.totalorder %s448, %s462
      %p464 = scmp.eq.s32.totalorder %s41, 0
      %p465 = por %p463, %p464
      %s467 = sadd.s32 %s466, 1
      %p470 = scmp.eq.s32.totalorder %s35, 1
      %p471 = scmp.ne.s32.totalorder %s466, %s468
      %p472 = scmp.eq.s32.totalorder %s35, 0
      %p473 = por %p471, %p472
      %p474 = scmp.ne.s32.totalorder %s466, %s468
      %p475 = scmp.eq.s32.totalorder %s40, 1
      %p476 = por %p474, %p475
      %p477 = scmp.ne.s32.totalorder %s468, %s469
      %p478 = scmp.eq.s32.totalorder %s40, 0
      %p479 = por %p477, %p478
      %p480 = scmp.ne.s32.totalorder %s468, %s469
      %p481 = scmp.eq.s32.totalorder %s41, 1
      %p482 = por %p480, %p481
      %p484 = scmp.ne.s32.totalorder %s469, %s483
      %p485 = scmp.eq.s32.totalorder %s41, 0
      %p486 = por %p484, %p485
      %s487 = ssub.s32 %s42, %s54
      %s488 = ssub.s32 %s43, %s50
      %s489 = sor.u32 %s487, %s488
      %p490 = scmp.eq.s32.totalorder %s489, 0
      %s492 = sadd.s32 %s491, 1
      %s493 = scalar_select %p490, %s491, %s492
      %p496 = pneg %p490
      %p497 = scmp.eq.s32.totalorder %s35, 1
      %p498 = por %p496, %p497
      %p499 = scmp.ne.s32.totalorder %s491, %s494
      %p500 = scmp.eq.s32.totalorder %s35, 0
      %p501 = por %p499, %p500
      %p502 = scmp.ne.s32.totalorder %s491, %s494
      %p503 = scmp.eq.s32.totalorder %s40, 1
      %p504 = por %p502, %p503
      %p505 = scmp.ne.s32.totalorder %s494, %s495
      %p506 = scmp.eq.s32.totalorder %s40, 0
      %p507 = por %p505, %p506
      %p508 = scmp.ne.s32.totalorder %s494, %s495
      %p509 = scmp.eq.s32.totalorder %s41, 1
      %p510 = por %p508, %p509
      %p512 = scmp.ne.s32.totalorder %s495, %s511
      %p513 = scmp.eq.s32.totalorder %s41, 0
      %p514 = por %p512, %p513
      %p515 = scmp.le.s32.totalorder 1, %s35
      %p516 = scmp.lt.s32.totalorder %s35, 3
      %p517 = pnand %p515, %p516
      %p518 = pneg %p517
      // Predicated region
      $region9: #{tpu_custom_call.1} parent=5 // pred_check
        _
      $region10: #{tpu_custom_call.1} parent=5 // pred_check_branch
        %520 = sbr.rel (%p517) target = $region12
      $region11: #{tpu_custom_call.1} parent=5 // pred_region
        %s521 = ssub.s32 %s35, 1
        // Predicated region
        $region13: #{tpu_custom_call.1} parent=11 // pred_check
          %p522 = pneg %p122
        $region14: #{tpu_custom_call.1} parent=11 // pred_check_branch
          %524 = sbr.rel (%p522) target = $region16
        $region15: #{tpu_custom_call.1} parent=11 // pred_region
          _
        $region16: #{tpu_custom_call.1} parent=11 // pred_fallthru
          _
        // Predicated region
        $region17: #{tpu_custom_call.1} parent=11 // pred_check
          %p525 = pneg %p143
        $region18: #{tpu_custom_call.1} parent=11 // pred_check_branch
          %527 = sbr.rel (%p525) target = $region20
        $region19: #{tpu_custom_call.1} parent=11 // pred_region
          _
        $region20: #{tpu_custom_call.1} parent=11 // pred_fallthru
          _
        // Predicated region
        $region21: #{tpu_custom_call.1} parent=11 // pred_check
          %p528 = pneg %p164
        $region22: #{tpu_custom_call.1} parent=11 // pred_check_branch
          %530 = sbr.rel (%p528) target = $region24
        $region23: #{tpu_custom_call.1} parent=11 // pred_region
          %532 = vsyncadd [#allocation4], 0
          %s534 = sshll.u32 %s4, 4
          %s535 = int_to_ptr.hbm [resolvable:$true] %s534
          %s536 = sshll.u32 [#allocation3], 4
          %s537 = int_to_ptr.vmem [resolvable:$true] %s536
          %539 = dma.hbm_to_vmem [thread:$0]  %s535, 16, %s537, [#allocation4]
        $region24: #{tpu_custom_call.1} parent=11 // pred_fallthru
          _
        // Predicated region
        $region25: #{tpu_custom_call.1} parent=11 // pred_check
          %p540 = pneg %p185
        $region26: #{tpu_custom_call.1} parent=11 // pred_check_branch
          %542 = sbr.rel (%p540) target = $region28
        $region27: #{tpu_custom_call.1} parent=11 // pred_region
          _
        $region28: #{tpu_custom_call.1} parent=11 // pred_fallthru
          _
        // Predicated region
        $region29: #{tpu_custom_call.1} parent=11 // pred_check
          %p543 = pneg %p206
        $region30: #{tpu_custom_call.1} parent=11 // pred_check_branch
          %545 = sbr.rel (%p543) target = $region32
        $region31: #{tpu_custom_call.1} parent=11 // pred_region
          _
        $region32: #{tpu_custom_call.1} parent=11 // pred_fallthru
          _
        // Predicated region
        $region33: #{tpu_custom_call.1} parent=11 // pred_check
          %p546 = pneg %p227
        $region34: #{tpu_custom_call.1} parent=11 // pred_check_branch
          %548 = sbr.rel (%p546) target = $region36
        $region35: #{tpu_custom_call.1} parent=11 // pred_region
          %550 = vsyncadd [#allocation7], 0
          %s551 = sshll.u32 %s7, 4
          %s552 = int_to_ptr.hbm [resolvable:$true] %s551
          %s553 = sshll.u32 [#allocation6], 4
          %s554 = int_to_ptr.vmem [resolvable:$true] %s553
          %559 = dma.hbm_to_vmem [thread:$0]  %s552, 1024, %s554, [#allocation7], 128, 128, 8
        $region36: #{tpu_custom_call.1} parent=11 // pred_fallthru
          _
        // Predicated region
        $region37: #{tpu_custom_call.1} parent=11 // pred_check
          %p560 = pneg %p248
        $region38: #{tpu_custom_call.1} parent=11 // pred_check_branch
          %562 = sbr.rel (%p560) target = $region40
        $region39: #{tpu_custom_call.1} parent=11 // pred_region
          _
        $region40: #{tpu_custom_call.1} parent=11 // pred_fallthru
          _
        // Predicated region
        $region41: #{tpu_custom_call.1} parent=11 // pred_check
          %p563 = pneg %p269
        $region42: #{tpu_custom_call.1} parent=11 // pred_check_branch
          %565 = sbr.rel (%p563) target = $region44
        $region43: #{tpu_custom_call.1} parent=11 // pred_region
          %567 = vsyncadd [#allocation7], 0
          %s568 = sshll.u32 %s9, 4
          %s569 = int_to_ptr.hbm [resolvable:$true] %s568
          %s570 = sshll.u32 [#allocation8], 4
          %s571 = int_to_ptr.vmem [resolvable:$true] %s570
          %576 = dma.hbm_to_vmem [thread:$0]  %s569, 1024, %s571, [#allocation7], 128, 128, 8
        $region44: #{tpu_custom_call.1} parent=11 // pred_fallthru
          _
        // Predicated region
        $region45: #{tpu_custom_call.1} parent=11 // pred_check
          %p577 = pneg %p290
        $region46: #{tpu_custom_call.1} parent=11 // pred_check_branch
          %579 = sbr.rel (%p577) target = $region48
        $region47: #{tpu_custom_call.1} parent=11 // pred_region
          _
        $region48: #{tpu_custom_call.1} parent=11 // pred_fallthru
          _
        // Predicated region
        $region49: #{tpu_custom_call.1} parent=11 // pred_check
          %p580 = pneg %p311
        $region50: #{tpu_custom_call.1} parent=11 // pred_check_branch
          %582 = sbr.rel (%p580) target = $region52
        $region51: #{tpu_custom_call.1} parent=11 // pred_region
          _
        $region52: #{tpu_custom_call.1} parent=11 // pred_fallthru
          _
        // Predicated region
        $region53: #{tpu_custom_call.1} parent=11 // pred_check
          %p583 = pneg %p332
        $region54: #{tpu_custom_call.1} parent=11 // pred_check_branch
          %585 = sbr.rel (%p583) target = $region56
        $region55: #{tpu_custom_call.1} parent=11 // pred_region
          _
        $region56: #{tpu_custom_call.1} parent=11 // pred_fallthru
          _
        // Predicated region
        $region57: #{tpu_custom_call.1} parent=11 // pred_check
          %p586 = pneg %p353
        $region58: #{tpu_custom_call.1} parent=11 // pred_check_branch
          %588 = sbr.rel (%p586) target = $region60
        $region59: #{tpu_custom_call.1} parent=11 // pred_region
          _
        $region60: #{tpu_custom_call.1} parent=11 // pred_fallthru
          _
        // Predicated region
        $region61: #{tpu_custom_call.1} parent=11 // pred_check
          %p589 = pneg %p374
        $region62: #{tpu_custom_call.1} parent=11 // pred_check_branch
          %591 = sbr.rel (%p589) target = $region64
        $region63: #{tpu_custom_call.1} parent=11 // pred_region
          %593 = vsyncadd [#allocation10], 0
          %s594 = sshll.u32 %s14, 4
          %s595 = int_to_ptr.hbm [resolvable:$true] %s594
          %s596 = sshll.u32 [#allocation9], 4
          %s597 = int_to_ptr.vmem [resolvable:$true] %s596
          %602 = dma.hbm_to_vmem [thread:$0]  %s595, 4096, %s597, [#allocation10], 128, 128, 8
        $region64: #{tpu_custom_call.1} parent=11 // pred_fallthru
          _
        // Predicated region
        $region65: #{tpu_custom_call.1} parent=11 // pred_check
          %p603 = pneg %p395
        $region66: #{tpu_custom_call.1} parent=11 // pred_check_branch
          %605 = sbr.rel (%p603) target = $region68
        $region67: #{tpu_custom_call.1} parent=11 // pred_region
          _
        $region68: #{tpu_custom_call.1} parent=11 // pred_fallthru
          _
        // Predicated region
        $region69: #{tpu_custom_call.1} parent=11 // pred_check
          %p606 = pneg %p416
        $region70: #{tpu_custom_call.1} parent=11 // pred_check_branch
          %608 = sbr.rel (%p606) target = $region72
        $region71: #{tpu_custom_call.1} parent=11 // pred_region
          %610 = vsyncadd [#allocation10], 0
          %s611 = sshll.u32 %s16, 4
          %s612 = int_to_ptr.hbm [resolvable:$true] %s611
          %s613 = sshll.u32 [#allocation11], 4
          %s614 = int_to_ptr.vmem [resolvable:$true] %s613
          %619 = dma.hbm_to_vmem [thread:$0]  %s612, 4096, %s614, [#allocation10], 128, 128, 8
        $region72: #{tpu_custom_call.1} parent=11 // pred_fallthru
          _
        // Predicated region
        $region73: #{tpu_custom_call.1} parent=11 // pred_check
          %p620 = pneg %p437
        $region74: #{tpu_custom_call.1} parent=11 // pred_check_branch
          %622 = sbr.rel (%p620) target = $region76
        $region75: #{tpu_custom_call.1} parent=11 // pred_region
          %624 = vsyncadd [#allocation13], 0
          %s625 = sshll.u32 %s17, 4
          %s626 = int_to_ptr.hbm [resolvable:$true] %s625
          %s627 = sshll.u32 [#allocation12], 4
          %s628 = int_to_ptr.vmem [resolvable:$true] %s627
          %633 = dma.hbm_to_vmem [thread:$0]  %s626, 4096, %s628, [#allocation13], 128, 128, 8
        $region76: #{tpu_custom_call.1} parent=11 // pred_fallthru
          _
        // Predicated region
        $region77: #{tpu_custom_call.1} parent=11 // pred_check
          %p634 = pneg %p458
        $region78: #{tpu_custom_call.1} parent=11 // pred_check_branch
          %636 = sbr.rel (%p634) target = $region80
        $region79: #{tpu_custom_call.1} parent=11 // pred_region
          _
        $region80: #{tpu_custom_call.1} parent=11 // pred_fallthru
          _
        // Predicated region
        $region81: #{tpu_custom_call.1} parent=11 // pred_check
          %p637 = pneg %p479
        $region82: #{tpu_custom_call.1} parent=11 // pred_check_branch
          %639 = sbr.rel (%p637) target = $region84
        $region83: #{tpu_custom_call.1} parent=11 // pred_region
          _
        $region84: #{tpu_custom_call.1} parent=11 // pred_fallthru
          _
      $region12: #{tpu_custom_call.1} parent=5 // pred_fallthru
        _
      %p640 = scmp.lt.s32.totalorder %s35, 2
      // Predicated region
      $region85: #{tpu_custom_call.1} parent=5 // pred_check
        %p641 = pneg %p640
      $region86: #{tpu_custom_call.1} parent=5 // pred_check_branch
        %643 = sbr.rel (%p641) target = $region88
      $region87: #{tpu_custom_call.1} parent=5 // pred_region
        // Predicated region
        $region89: #{tpu_custom_call.1} parent=87 // pred_check
          %p644 = pneg %p69
        $region90: #{tpu_custom_call.1} parent=87 // pred_check_branch
          %646 = sbr.rel (%p644) target = $region92
        $region91: #{tpu_custom_call.1} parent=87 // pred_region
          %s647 = smul.u32 8, %s43
          %p648 = scmp.lt.s32.totalorder %s42, 1
          %s649 = scalar_select %p648, %s42, 1
          %p650 = scmp.lt.s32.totalorder %s647, 7
          %s651 = scalar_select %p650, %s647, 7
          %s652 = smul.addr %s651, 2
          %s653 = smul.addr %s649, 16
          %s654 = sadd.s32 %s652, %s653
          %s655 = smul.addr %s654, 8
          %s656 = scalar_lea.vmem %s0, %s655
          %s657 = smul.u32 8, %s43
        $region92: #{tpu_custom_call.1} parent=87 // pred_fallthru
          _
        // Predicated region
        $region93: #{tpu_custom_call.1} parent=87 // pred_check
          %p658 = pneg %p95
        $region94: #{tpu_custom_call.1} parent=87 // pred_check_branch
          %660 = sbr.rel (%p658) target = $region96
        $region95: #{tpu_custom_call.1} parent=87 // pred_region
          %p661 = scmp.lt.s32.totalorder %s42, 1
          %s662 = scalar_select %p661, %s42, 1
          %s663 = smul.addr %s662, 24
          %s664 = smul.addr %s663, 8
          %s665 = scalar_lea.vmem %s1, %s664
        $region96: #{tpu_custom_call.1} parent=87 // pred_fallthru
          _
      $region88: #{tpu_custom_call.1} parent=5 // pred_fallthru
        _
      %p666 = scmp.le.s32.totalorder 1, %s35
      %p667 = scmp.lt.s32.totalorder %s35, 3
      %p668 = pnand %p666, %p667
      %p669 = pneg %p668
      // Predicated region
      $region97: #{tpu_custom_call.1} parent=5 // pred_check
        _
      $region98: #{tpu_custom_call.1} parent=5 // pred_check_branch
        %671 = sbr.rel (%p668) target = $region100
      $region99: #{tpu_custom_call.1} parent=5 // pred_region
        %s672 = ssub.s32 %s35, 1
        // Predicated region
        $region101: #{tpu_custom_call.1} parent=99 // pred_check
          %p673 = pneg %p164
        $region102: #{tpu_custom_call.1} parent=99 // pred_check_branch
          %675 = sbr.rel (%p673) target = $region104
        $region103: #{tpu_custom_call.1} parent=99 // pred_region
          %677 = dma.done [#allocation4], 16
        $region104: #{tpu_custom_call.1} parent=99 // pred_fallthru
          _
        // Predicated region
        $region105: #{tpu_custom_call.1} parent=99 // pred_check
          %p678 = pneg %p227
        $region106: #{tpu_custom_call.1} parent=99 // pred_check_branch
          %680 = sbr.rel (%p678) target = $region108
        $region107: #{tpu_custom_call.1} parent=99 // pred_region
          %682 = dma.done [#allocation7], 1024
        $region108: #{tpu_custom_call.1} parent=99 // pred_fallthru
          _
        // Predicated region
        $region109: #{tpu_custom_call.1} parent=99 // pred_check
          %p683 = pneg %p269
        $region110: #{tpu_custom_call.1} parent=99 // pred_check_branch
          %685 = sbr.rel (%p683) target = $region112
        $region111: #{tpu_custom_call.1} parent=99 // pred_region
          %687 = dma.done [#allocation7], 1024
        $region112: #{tpu_custom_call.1} parent=99 // pred_fallthru
          _
        // Predicated region
        $region113: #{tpu_custom_call.1} parent=99 // pred_check
          %p688 = pneg %p374
        $region114: #{tpu_custom_call.1} parent=99 // pred_check_branch
          %690 = sbr.rel (%p688) target = $region116
        $region115: #{tpu_custom_call.1} parent=99 // pred_region
          %692 = dma.done [#allocation10], 4096
        $region116: #{tpu_custom_call.1} parent=99 // pred_fallthru
          _
        // Predicated region
        $region117: #{tpu_custom_call.1} parent=99 // pred_check
          %p693 = pneg %p416
        $region118: #{tpu_custom_call.1} parent=99 // pred_check_branch
          %695 = sbr.rel (%p693) target = $region120
        $region119: #{tpu_custom_call.1} parent=99 // pred_region
          %697 = dma.done [#allocation10], 4096
        $region120: #{tpu_custom_call.1} parent=99 // pred_fallthru
          _
        // Predicated region
        $region121: #{tpu_custom_call.1} parent=99 // pred_check
          %p698 = pneg %p437
        $region122: #{tpu_custom_call.1} parent=99 // pred_check_branch
          %700 = sbr.rel (%p698) target = $region124
        $region123: #{tpu_custom_call.1} parent=99 // pred_region
          %702 = dma.done [#allocation13], 4096
        $region124: #{tpu_custom_call.1} parent=99 // pred_fallthru
          _
        %s703 = smul.u32 8, %s45
        %p704 = scmp.lt.s32.totalorder %s44, 1
        %s705 = scalar_select %p704, %s44, 1
        %p706 = scmp.lt.s32.totalorder %s703, 7
        %s707 = scalar_select %p706, %s703, 7
        %s708 = smul.addr %s707, 2
        %s709 = smul.addr %s705, 16
        %s710 = sadd.s32 %s708, %s709
        %s711 = smul.addr %s710, 8
        %s712 = scalar_lea.vmem %s0, %s711
        %p713 = pneg %p75
        %p714 = pneg %p72
        %p715 = scmp.lt.s32.totalorder %s44, 1
        %s716 = scalar_select %p715, %s44, 1
        %s717 = smul.addr %s716, 24
        %s718 = smul.addr %s717, 8
        %s719 = scalar_lea.vmem %s1, %s718
        %p720 = pneg %p101
        %p721 = pneg %p98
        %p722 = pneg %p122
        %p723 = pneg %p119
        %p724 = pneg %p143
        %p725 = pneg %p140
        %p726 = pneg %p164
        %p727 = pneg %p161
        %p728 = pneg %p185
        %p729 = pneg %p182
        %p730 = pneg %p206
        %p731 = pneg %p203
        %p732 = pneg %p227
        %p733 = pneg %p224
        %p734 = pneg %p248
        %p735 = pneg %p245
        %p736 = pneg %p269
        %p737 = pneg %p266
        %p738 = pneg %p290
        %p739 = pneg %p287
        %p740 = pneg %p311
        %p741 = pneg %p308
        %p742 = pneg %p332
        %p743 = pneg %p329
        %p744 = pneg %p353
        %p745 = pneg %p350
        %p746 = pneg %p374
        %p747 = pneg %p371
        %p748 = pneg %p395
        %p749 = pneg %p392
        %p750 = pneg %p416
        %p751 = pneg %p413
        %p752 = pneg %p437
        %p753 = pneg %p434
        %p754 = pneg %p458
        %p755 = pneg %p455
        %p756 = pneg %p479
        %p757 = pneg %p476
        %p758 = pneg %p507
        %p759 = pneg %p504
        %s760 = sand.u32 %s494, 1
        %s761 = scalar_lea.sflag [#allocation5], %s760
        %s762 = sand.u32 %s494, 1
        %s763 = scalar_lea.vmem [#allocation14], %s762
        %s764 = smul.u32 8, %s45
        %p765 = scmp.lt.s32.totalorder %s44, 1
        %s766 = scalar_select %p765, %s44, 1
        %p767 = scmp.lt.s32.totalorder %s764, 7
        %s768 = scalar_select %p767, %s764, 7
        %s769 = smul.addr %s768, 2
        %s770 = smul.addr %s766, 16
        %s771 = sadd.s32 %s769, %s770
        %s772 = smul.addr %s771, 8
        %s773 = scalar_lea.vmem %s0, %s772
        %s774 = smul.u32 8, %s45
        %p775 = scmp.lt.s32.totalorder %s44, 1
        %s776 = scalar_select %p775, %s44, 1
        %s777 = smul.addr %s776, 24
        %s778 = smul.addr %s777, 8
        %s779 = scalar_lea.vmem %s1, %s778
        %v780 = vld [vmem:[%s773] sm:$0xff]
        %v781 = vld [vmem:[%s773 + $0x8] sm:$0xff]
        %v782 = vld [vmem:[%s773 + $0x10] sm:$0xff]
        %v783 = vld [vmem:[%s773 + $0x18] sm:$0xff]
        %v784 = vld [vmem:[%s773 + $0x20] sm:$0xff]
        %v785 = vld [vmem:[%s773 + $0x28] sm:$0xff]
        %v786 = vld [vmem:[%s773 + $0x30] sm:$0xff]
        %v787 = vld [vmem:[%s773 + $0x38] sm:$0xff]
        %v788 = vld [vmem:[%s773 + $0x40] sm:$0xff]
        %v789 = vld [vmem:[%s773 + $0x48] sm:$0xff]
        %v790 = vld [vmem:[%s773 + $0x50] sm:$0xff]
        %v791 = vld [vmem:[%s773 + $0x58] sm:$0xff]
        %v792 = vld [vmem:[%s773 + $0x60] sm:$0xff]
        %v793 = vld [vmem:[%s773 + $0x68] sm:$0xff]
        %v794 = vld [vmem:[%s773 + $0x70] sm:$0xff]
        %v795 = vld [vmem:[%s773 + $0x78] sm:$0xff]
        %v796 = vlaneseq
        %v797 = vand.u32 %v796, 127
        %v798 = vadd.s32 %v797, 128
        %v799 = vrcp.pop 1.101
        %v800 = vmul.f32 1.101, %v799
        %v801 = vsub.f32 1.0, %v800
        %v802 = vmul.f32 %v799, %v801
        %v803 = vadd.f32 %v799, %v802
        %vm804 = vweird.f32 %v799
        %v805 = vsel %vm804, %v799, %v803
        %v806 = vmul.f32 %v780, %v805
        %v807 = vmul.f32 %v781, %v805
        %v808 = vmul.f32 %v782, %v805
        %v809 = vmul.f32 %v783, %v805
        %v810 = vmul.f32 %v784, %v805
        %v811 = vmul.f32 %v785, %v805
        %v812 = vmul.f32 %v786, %v805
        %v813 = vmul.f32 %v787, %v805
        %v814 = vmul.f32 %v788, %v805
        %v815 = vmul.f32 %v789, %v805
        %v816 = vmul.f32 %v790, %v805
        %v817 = vmul.f32 %v791, %v805
        %v818 = vmul.f32 %v792, %v805
        %v819 = vmul.f32 %v793, %v805
        %v820 = vmul.f32 %v794, %v805
        %v821 = vmul.f32 %v795, %v805
        %v822 = vadd.f32 %v806, 0.5
        %v823 = vadd.f32 %v807, 0.5
        %v824 = vadd.f32 %v808, 0.5
        %v825 = vadd.f32 %v809, 0.5
        %v826 = vadd.f32 %v810, 0.5
        %v827 = vadd.f32 %v811, 0.5
        %v828 = vadd.f32 %v812, 0.5
        %v829 = vadd.f32 %v813, 0.5
        %v830 = vadd.f32 %v814, 0.5
        %v831 = vadd.f32 %v815, 0.5
        %v832 = vadd.f32 %v816, 0.5
        %v833 = vadd.f32 %v817, 0.5
        %v834 = vadd.f32 %v818, 0.5
        %v835 = vadd.f32 %v819, 0.5
        %v836 = vadd.f32 %v820, 0.5
        %v837 = vadd.f32 %v821, 0.5
        %vm838 = vcmp.ge.f32.partialorder %v822, 1.0
        %vm839 = vcmp.ge.f32.partialorder %v823, 1.0
        %vm840 = vcmp.ge.f32.partialorder %v824, 1.0
        %vm841 = vcmp.ge.f32.partialorder %v825, 1.0
        %vm842 = vcmp.ge.f32.partialorder %v826, 1.0
        %vm843 = vcmp.ge.f32.partialorder %v827, 1.0
        %vm844 = vcmp.ge.f32.partialorder %v828, 1.0
        %vm845 = vcmp.ge.f32.partialorder %v829, 1.0
        %vm846 = vcmp.ge.f32.partialorder %v830, 1.0
        %vm847 = vcmp.ge.f32.partialorder %v831, 1.0
        %vm848 = vcmp.ge.f32.partialorder %v832, 1.0
        %vm849 = vcmp.ge.f32.partialorder %v833, 1.0
        %vm850 = vcmp.ge.f32.partialorder %v834, 1.0
        %vm851 = vcmp.ge.f32.partialorder %v835, 1.0
        %vm852 = vcmp.ge.f32.partialorder %v836, 1.0
        %vm853 = vcmp.ge.f32.partialorder %v837, 1.0
        %v854 = vsel %vm838, 0.99999, %v822
        %v855 = vsel %vm839, 0.99999, %v823
        %v856 = vsel %vm840, 0.99999, %v824
        %v857 = vsel %vm841, 0.99999, %v825
        %v858 = vsel %vm842, 0.99999, %v826
        %v859 = vsel %vm843, 0.99999, %v827
        %v860 = vsel %vm844, 0.99999, %v828
        %v861 = vsel %vm845, 0.99999, %v829
        %v862 = vsel %vm846, 0.99999, %v830
        %v863 = vsel %vm847, 0.99999, %v831
        %v864 = vsel %vm848, 0.99999, %v832
        %v865 = vsel %vm849, 0.99999, %v833
        %v866 = vsel %vm850, 0.99999, %v834
        %v867 = vsel %vm851, 0.99999, %v835
        %v868 = vsel %vm852, 0.99999, %v836
        %v869 = vsel %vm853, 0.99999, %v837
        %vm870 = vcmp.lt.f32.partialorder %v854, 0.0
        %vm871 = vcmp.lt.f32.partialorder %v855, 0.0
        %vm872 = vcmp.lt.f32.partialorder %v856, 0.0
        %vm873 = vcmp.lt.f32.partialorder %v857, 0.0
        %vm874 = vcmp.lt.f32.partialorder %v858, 0.0
        %vm875 = vcmp.lt.f32.partialorder %v859, 0.0
        %vm876 = vcmp.lt.f32.partialorder %v860, 0.0
        %vm877 = vcmp.lt.f32.partialorder %v861, 0.0
        %vm878 = vcmp.lt.f32.partialorder %v862, 0.0
        %vm879 = vcmp.lt.f32.partialorder %v863, 0.0
        %vm880 = vcmp.lt.f32.partialorder %v864, 0.0
        %vm881 = vcmp.lt.f32.partialorder %v865, 0.0
        %vm882 = vcmp.lt.f32.partialorder %v866, 0.0
        %vm883 = vcmp.lt.f32.partialorder %v867, 0.0
        %vm884 = vcmp.lt.f32.partialorder %v868, 0.0
        %vm885 = vcmp.lt.f32.partialorder %v869, 0.0
        %v886 = vsel %vm870, 0.0, %v854
        %v887 = vsel %vm871, 0.0, %v855
        %v888 = vsel %vm872, 0.0, %v856
        %v889 = vsel %vm873, 0.0, %v857
        %v890 = vsel %vm874, 0.0, %v858
        %v891 = vsel %vm875, 0.0, %v859
        %v892 = vsel %vm876, 0.0, %v860
        %v893 = vsel %vm877, 0.0, %v861
        %v894 = vsel %vm878, 0.0, %v862
        %v895 = vsel %vm879, 0.0, %v863
        %v896 = vsel %vm880, 0.0, %v864
        %v897 = vsel %vm881, 0.0, %v865
        %v898 = vsel %vm882, 0.0, %v866
        %v899 = vsel %vm883, 0.0, %v867
        %v900 = vsel %vm884, 0.0, %v868
        %v901 = vsel %vm885, 0.0, %v869
        %v902 = vmul.f32 %v886, 7.0
        %v903 = vmul.f32 %v887, 7.0
        %v904 = vmul.f32 %v888, 7.0
        %v905 = vmul.f32 %v889, 7.0
        %v906 = vmul.f32 %v890, 7.0
        %v907 = vmul.f32 %v891, 7.0
        %v908 = vmul.f32 %v892, 7.0
        %v909 = vmul.f32 %v893, 7.0
        %v910 = vmul.f32 %v894, 7.0
        %v911 = vmul.f32 %v895, 7.0
        %v912 = vmul.f32 %v896, 7.0
        %v913 = vmul.f32 %v897, 7.0
        %v914 = vmul.f32 %v898, 7.0
        %v915 = vmul.f32 %v899, 7.0
        %v916 = vmul.f32 %v900, 7.0
        %v917 = vmul.f32 %v901, 7.0
        %v918 = vmax.f32 %v902, 0.0
        %v919 = vmax.f32 %v903, 0.0
        %v920 = vmax.f32 %v904, 0.0
        %v921 = vmax.f32 %v905, 0.0
        %v922 = vmax.f32 %v906, 0.0
        %v923 = vmax.f32 %v907, 0.0
        %v924 = vmax.f32 %v908, 0.0
        %v925 = vmax.f32 %v909, 0.0
        %v926 = vmax.f32 %v910, 0.0
        %v927 = vmax.f32 %v911, 0.0
        %v928 = vmax.f32 %v912, 0.0
        %v929 = vmax.f32 %v913, 0.0
        %v930 = vmax.f32 %v914, 0.0
        %v931 = vmax.f32 %v915, 0.0
        %v932 = vmax.f32 %v916, 0.0
        %v933 = vmax.f32 %v917, 0.0
        %v934 = vmin.f32 %v918, 7.0
        %v935 = vmin.f32 %v919, 7.0
        %v936 = vmin.f32 %v920, 7.0
        %v937 = vmin.f32 %v921, 7.0
        %v938 = vmin.f32 %v922, 7.0
        %v939 = vmin.f32 %v923, 7.0
        %v940 = vmin.f32 %v924, 7.0
        %v941 = vmin.f32 %v925, 7.0
        %v942 = vmin.f32 %v926, 7.0
        %v943 = vmin.f32 %v927, 7.0
        %v944 = vmin.f32 %v928, 7.0
        %v945 = vmin.f32 %v929, 7.0
        %v946 = vmin.f32 %v930, 7.0
        %v947 = vmin.f32 %v931, 7.0
        %v948 = vmin.f32 %v932, 7.0
        %v949 = vmin.f32 %v933, 7.0
        %v950 = vfloor.f32 %v934
        %v951 = vfloor.f32 %v935
        %v952 = vfloor.f32 %v936
        %v953 = vfloor.f32 %v937
        %v954 = vfloor.f32 %v938
        %v955 = vfloor.f32 %v939
        %v956 = vfloor.f32 %v940
        %v957 = vfloor.f32 %v941
        %v958 = vfloor.f32 %v942
        %v959 = vfloor.f32 %v943
        %v960 = vfloor.f32 %v944
        %v961 = vfloor.f32 %v945
        %v962 = vfloor.f32 %v946
        %v963 = vfloor.f32 %v947
        %v964 = vfloor.f32 %v948
        %v965 = vfloor.f32 %v949
        %v966 = vsub.f32 %v934, %v950
        %v967 = vsub.f32 %v935, %v951
        %v968 = vsub.f32 %v936, %v952
        %v969 = vsub.f32 %v937, %v953
        %v970 = vsub.f32 %v938, %v954
        %v971 = vsub.f32 %v939, %v955
        %v972 = vsub.f32 %v940, %v956
        %v973 = vsub.f32 %v941, %v957
        %v974 = vsub.f32 %v942, %v958
        %v975 = vsub.f32 %v943, %v959
        %v976 = vsub.f32 %v944, %v960
        %v977 = vsub.f32 %v945, %v961
        %v978 = vsub.f32 %v946, %v962
        %v979 = vsub.f32 %v947, %v963
        %v980 = vsub.f32 %v948, %v964
        %v981 = vsub.f32 %v949, %v965
        %v982 = vcvt.f32.s32.to.zero.pseudo %v950
        %v983 = vcvt.f32.s32.to.zero.pseudo %v951
        %v984 = vcvt.f32.s32.to.zero.pseudo %v952
        %v985 = vcvt.f32.s32.to.zero.pseudo %v953
        %v986 = vcvt.f32.s32.to.zero.pseudo %v954
        %v987 = vcvt.f32.s32.to.zero.pseudo %v955
        %v988 = vcvt.f32.s32.to.zero.pseudo %v956
        %v989 = vcvt.f32.s32.to.zero.pseudo %v957
        %v990 = vcvt.f32.s32.to.zero.pseudo %v958
        %v991 = vcvt.f32.s32.to.zero.pseudo %v959
        %v992 = vcvt.f32.s32.to.zero.pseudo %v960
        %v993 = vcvt.f32.s32.to.zero.pseudo %v961
        %v994 = vcvt.f32.s32.to.zero.pseudo %v962
        %v995 = vcvt.f32.s32.to.zero.pseudo %v963
        %v996 = vcvt.f32.s32.to.zero.pseudo %v964
        %v997 = vcvt.f32.s32.to.zero.pseudo %v965
        %vm998 = vcmp.gt.s32.totalorder %v982, 0
        %v999 = vsel %vm998, %v982, 0
        %vm1000 = vcmp.gt.s32.totalorder %v983, 0
        %v1001 = vsel %vm1000, %v983, 0
        %vm1002 = vcmp.gt.s32.totalorder %v984, 0
        %v1003 = vsel %vm1002, %v984, 0
        %vm1004 = vcmp.gt.s32.totalorder %v985, 0
        %v1005 = vsel %vm1004, %v985, 0
        %vm1006 = vcmp.gt.s32.totalorder %v986, 0
        %v1007 = vsel %vm1006, %v986, 0
        %vm1008 = vcmp.gt.s32.totalorder %v987, 0
        %v1009 = vsel %vm1008, %v987, 0
        %vm1010 = vcmp.gt.s32.totalorder %v988, 0
        %v1011 = vsel %vm1010, %v988, 0
        %vm1012 = vcmp.gt.s32.totalorder %v989, 0
        %v1013 = vsel %vm1012, %v989, 0
        %vm1014 = vcmp.gt.s32.totalorder %v990, 0
        %v1015 = vsel %vm1014, %v990, 0
        %vm1016 = vcmp.gt.s32.totalorder %v991, 0
        %v1017 = vsel %vm1016, %v991, 0
        %vm1018 = vcmp.gt.s32.totalorder %v992, 0
        %v1019 = vsel %vm1018, %v992, 0
        %vm1020 = vcmp.gt.s32.totalorder %v993, 0
        %v1021 = vsel %vm1020, %v993, 0
        %vm1022 = vcmp.gt.s32.totalorder %v994, 0
        %v1023 = vsel %vm1022, %v994, 0
        %vm1024 = vcmp.gt.s32.totalorder %v995, 0
        %v1025 = vsel %vm1024, %v995, 0
        %vm1026 = vcmp.gt.s32.totalorder %v996, 0
        %v1027 = vsel %vm1026, %v996, 0
        %vm1028 = vcmp.gt.s32.totalorder %v997, 0
        %v1029 = vsel %vm1028, %v997, 0
        %v1030 = vadd.s32 %v999, 1
        %v1031 = vadd.s32 %v1001, 1
        %v1032 = vadd.s32 %v1003, 1
        %v1033 = vadd.s32 %v1005, 1
        %v1034 = vadd.s32 %v1007, 1
        %v1035 = vadd.s32 %v1009, 1
        %v1036 = vadd.s32 %v1011, 1
        %v1037 = vadd.s32 %v1013, 1
        %v1038 = vadd.s32 %v1015, 1
        %v1039 = vadd.s32 %v1017, 1
        %v1040 = vadd.s32 %v1019, 1
        %v1041 = vadd.s32 %v1021, 1
        %v1042 = vadd.s32 %v1023, 1
        %v1043 = vadd.s32 %v1025, 1
        %v1044 = vadd.s32 %v1027, 1
        %v1045 = vadd.s32 %v1029, 1
        %vm1046 = vcmp.lt.s32.totalorder %v1030, 7
        %v1047 = vsel %vm1046, %v1030, 7
        %vm1048 = vcmp.lt.s32.totalorder %v1031, 7
        %v1049 = vsel %vm1048, %v1031, 7
        %vm1050 = vcmp.lt.s32.totalorder %v1032, 7
        %v1051 = vsel %vm1050, %v1032, 7
        %vm1052 = vcmp.lt.s32.totalorder %v1033, 7
        %v1053 = vsel %vm1052, %v1033, 7
        %vm1054 = vcmp.lt.s32.totalorder %v1034, 7
        %v1055 = vsel %vm1054, %v1034, 7
        %vm1056 = vcmp.lt.s32.totalorder %v1035, 7
        %v1057 = vsel %vm1056, %v1035, 7
        %vm1058 = vcmp.lt.s32.totalorder %v1036, 7
        %v1059 = vsel %vm1058, %v1036, 7
        %vm1060 = vcmp.lt.s32.totalorder %v1037, 7
        %v1061 = vsel %vm1060, %v1037, 7
        %vm1062 = vcmp.lt.s32.totalorder %v1038, 7
        %v1063 = vsel %vm1062, %v1038, 7
        %vm1064 = vcmp.lt.s32.totalorder %v1039, 7
        %v1065 = vsel %vm1064, %v1039, 7
        %vm1066 = vcmp.lt.s32.totalorder %v1040, 7
        %v1067 = vsel %vm1066, %v1040, 7
        %vm1068 = vcmp.lt.s32.totalorder %v1041, 7
        %v1069 = vsel %vm1068, %v1041, 7
        %vm1070 = vcmp.lt.s32.totalorder %v1042, 7
        %v1071 = vsel %vm1070, %v1042, 7
        %vm1072 = vcmp.lt.s32.totalorder %v1043, 7
        %v1073 = vsel %vm1072, %v1043, 7
        %vm1074 = vcmp.lt.s32.totalorder %v1044, 7
        %v1075 = vsel %vm1074, %v1044, 7
        %vm1076 = vcmp.lt.s32.totalorder %v1045, 7
        %v1077 = vsel %vm1076, %v1045, 7
        %v1078 = vsub.f32 1.0, %v966
        %v1079 = vsub.f32 1.0, %v967
        %v1080 = vsub.f32 1.0, %v968
        %v1081 = vsub.f32 1.0, %v969
        %v1082 = vsub.f32 1.0, %v970
        %v1083 = vsub.f32 1.0, %v971
        %v1084 = vsub.f32 1.0, %v972
        %v1085 = vsub.f32 1.0, %v973
        %v1086 = vsub.f32 1.0, %v974
        %v1087 = vsub.f32 1.0, %v975
        %v1088 = vsub.f32 1.0, %v976
        %v1089 = vsub.f32 1.0, %v977
        %v1090 = vsub.f32 1.0, %v978
        %v1091 = vsub.f32 1.0, %v979
        %v1092 = vsub.f32 1.0, %v980
        %v1093 = vsub.f32 1.0, %v981
        %1110 = vrot.lane.b32.xlu0 %v1078, 126
        %v1111 = vpop.permute.xlu0 %1110
        %1112 = vrot.lane.b32.xlu0 %v1079, 126
        %v1113 = vpop.permute.xlu0 %1112
        %1114 = vrot.lane.b32.xlu0 %v1080, 126
        %v1115 = vpop.permute.xlu0 %1114
        %1116 = vrot.lane.b32.xlu0 %v1081, 126
        %v1117 = vpop.permute.xlu0 %1116
        %1118 = vrot.lane.b32.xlu0 %v1082, 126
        %v1119 = vpop.permute.xlu0 %1118
        %1120 = vrot.lane.b32.xlu0 %v1083, 126
        %v1121 = vpop.permute.xlu0 %1120
        %1122 = vrot.lane.b32.xlu0 %v1084, 126
        %v1123 = vpop.permute.xlu0 %1122
        %1124 = vrot.lane.b32.xlu0 %v1085, 126
        %v1125 = vpop.permute.xlu0 %1124
        %1126 = vrot.lane.b32.xlu0 %v1086, 126
        %v1127 = vpop.permute.xlu0 %1126
        %1128 = vrot.lane.b32.xlu0 %v1087, 126
        %v1129 = vpop.permute.xlu0 %1128
        %1130 = vrot.lane.b32.xlu0 %v1088, 126
        %v1131 = vpop.permute.xlu0 %1130
        %1132 = vrot.lane.b32.xlu0 %v1089, 126
        %v1133 = vpop.permute.xlu0 %1132
        %1134 = vrot.lane.b32.xlu0 %v1090, 126
        %v1135 = vpop.permute.xlu0 %1134
        %1136 = vrot.lane.b32.xlu0 %v1091, 126
        %v1137 = vpop.permute.xlu0 %1136
        %1138 = vrot.lane.b32.xlu0 %v1092, 126
        %v1139 = vpop.permute.xlu0 %1138
        %1140 = vrot.lane.b32.xlu0 %v1093, 126
        %v1141 = vpop.permute.xlu0 %1140
        %v1158 = vmul.f32 %v1078, %v1111
        %v1159 = vmul.f32 %v1079, %v1113
        %v1160 = vmul.f32 %v1080, %v1115
        %v1161 = vmul.f32 %v1081, %v1117
        %v1162 = vmul.f32 %v1082, %v1119
        %v1163 = vmul.f32 %v1083, %v1121
        %v1164 = vmul.f32 %v1084, %v1123
        %v1165 = vmul.f32 %v1085, %v1125
        %v1166 = vmul.f32 %v1086, %v1127
        %v1167 = vmul.f32 %v1087, %v1129
        %v1168 = vmul.f32 %v1088, %v1131
        %v1169 = vmul.f32 %v1089, %v1133
        %v1170 = vmul.f32 %v1090, %v1135
        %v1171 = vmul.f32 %v1091, %v1137
        %v1172 = vmul.f32 %v1092, %v1139
        %v1173 = vmul.f32 %v1093, %v1141
        %v1174 = vmul.u32 %v999, 8
        %v1175 = vmul.u32 %v1001, 8
        %v1176 = vmul.u32 %v1003, 8
        %v1177 = vmul.u32 %v1005, 8
        %v1178 = vmul.u32 %v1007, 8
        %v1179 = vmul.u32 %v1009, 8
        %v1180 = vmul.u32 %v1011, 8
        %v1181 = vmul.u32 %v1013, 8
        %v1182 = vmul.u32 %v1015, 8
        %v1183 = vmul.u32 %v1017, 8
        %v1184 = vmul.u32 %v1019, 8
        %v1185 = vmul.u32 %v1021, 8
        %v1186 = vmul.u32 %v1023, 8
        %v1187 = vmul.u32 %v1025, 8
        %v1188 = vmul.u32 %v1027, 8
        %v1189 = vmul.u32 %v1029, 8
        %1190 = vrot.lane.b32.xlu0 %v999, 2
        %v1191 = vpop.permute.xlu0 %1190
        %1192 = vrot.lane.b32.xlu0 %v1001, 2
        %v1193 = vpop.permute.xlu0 %1192
        %1194 = vrot.lane.b32.xlu0 %v1003, 2
        %v1195 = vpop.permute.xlu0 %1194
        %1196 = vrot.lane.b32.xlu0 %v1005, 2
        %v1197 = vpop.permute.xlu0 %1196
        %1198 = vrot.lane.b32.xlu0 %v1007, 2
        %v1199 = vpop.permute.xlu0 %1198
        %1200 = vrot.lane.b32.xlu0 %v1009, 2
        %v1201 = vpop.permute.xlu0 %1200
        %1202 = vrot.lane.b32.xlu0 %v1011, 2
        %v1203 = vpop.permute.xlu0 %1202
        %1204 = vrot.lane.b32.xlu0 %v1013, 2
        %v1205 = vpop.permute.xlu0 %1204
        %1206 = vrot.lane.b32.xlu0 %v1015, 2
        %v1207 = vpop.permute.xlu0 %1206
        %1208 = vrot.lane.b32.xlu0 %v1017, 2
        %v1209 = vpop.permute.xlu0 %1208
        %1210 = vrot.lane.b32.xlu0 %v1019, 2
        %v1211 = vpop.permute.xlu0 %1210
        %1212 = vrot.lane.b32.xlu0 %v1021, 2
        %v1213 = vpop.permute.xlu0 %1212
        %1214 = vrot.lane.b32.xlu0 %v1023, 2
        %v1215 = vpop.permute.xlu0 %1214
        %1216 = vrot.lane.b32.xlu0 %v1025, 2
        %v1217 = vpop.permute.xlu0 %1216
        %1218 = vrot.lane.b32.xlu0 %v1027, 2
        %v1219 = vpop.permute.xlu0 %1218
        %1220 = vrot.lane.b32.xlu0 %v1029, 2
        %v1221 = vpop.permute.xlu0 %1220
        %v1222 = vadd.s32 %v1174, %v1191
        %v1223 = vadd.s32 %v1175, %v1193
        %v1224 = vadd.s32 %v1176, %v1195
        %v1225 = vadd.s32 %v1177, %v1197
        %v1226 = vadd.s32 %v1178, %v1199
        %v1227 = vadd.s32 %v1179, %v1201
        %v1228 = vadd.s32 %v1180, %v1203
        %v1229 = vadd.s32 %v1181, %v1205
        %v1230 = vadd.s32 %v1182, %v1207
        %v1231 = vadd.s32 %v1183, %v1209
        %v1232 = vadd.s32 %v1184, %v1211
        %v1233 = vadd.s32 %v1185, %v1213
        %v1234 = vadd.s32 %v1186, %v1215
        %v1235 = vadd.s32 %v1187, %v1217
        %v1236 = vadd.s32 %v1188, %v1219
        %v1237 = vadd.s32 %v1189, %v1221
        %1238 = vset.pattern.permute.xlu0 2
        %1239 = vperm.xlu0 %1238, %v1222
        %v1240 = vpop.permute.xlu0 %1239
        %1241 = vset.pattern.permute.xlu0 2
        %1242 = vperm.xlu0 %1241, %v1223
        %v1243 = vpop.permute.xlu0 %1242
        %1244 = vset.pattern.permute.xlu0 2
        %1245 = vperm.xlu0 %1244, %v1224
        %v1246 = vpop.permute.xlu0 %1245
        %1247 = vset.pattern.permute.xlu0 2
        %1248 = vperm.xlu0 %1247, %v1225
        %v1249 = vpop.permute.xlu0 %1248
        %1250 = vset.pattern.permute.xlu0 2
        %1251 = vperm.xlu0 %1250, %v1226
        %v1252 = vpop.permute.xlu0 %1251
        %1253 = vset.pattern.permute.xlu0 2
        %1254 = vperm.xlu0 %1253, %v1227
        %v1255 = vpop.permute.xlu0 %1254
        %1256 = vset.pattern.permute.xlu0 2
        %1257 = vperm.xlu0 %1256, %v1228
        %v1258 = vpop.permute.xlu0 %1257
        %1259 = vset.pattern.permute.xlu0 2
        %1260 = vperm.xlu0 %1259, %v1229
        %v1261 = vpop.permute.xlu0 %1260
        %1262 = vset.pattern.permute.xlu0 2
        %1263 = vperm.xlu0 %1262, %v1230
        %v1264 = vpop.permute.xlu0 %1263
        %1265 = vset.pattern.permute.xlu0 2
        %1266 = vperm.xlu0 %1265, %v1231
        %v1267 = vpop.permute.xlu0 %1266
        %1268 = vset.pattern.permute.xlu0 2
        %1269 = vperm.xlu0 %1268, %v1232
        %v1270 = vpop.permute.xlu0 %1269
        %1271 = vset.pattern.permute.xlu0 2
        %1272 = vperm.xlu0 %1271, %v1233
        %v1273 = vpop.permute.xlu0 %1272
        %1274 = vset.pattern.permute.xlu0 2
        %1275 = vperm.xlu0 %1274, %v1234
        %v1276 = vpop.permute.xlu0 %1275
        %1277 = vset.pattern.permute.xlu0 2
        %1278 = vperm.xlu0 %1277, %v1235
        %v1279 = vpop.permute.xlu0 %1278
        %1280 = vset.pattern.permute.xlu0 2
        %1281 = vperm.xlu0 %1280, %v1236
        %v1282 = vpop.permute.xlu0 %1281
        %1283 = vset.pattern.permute.xlu0 2
        %1284 = vperm.xlu0 %1283, %v1237
        %v1285 = vpop.permute.xlu0 %1284
        %vm1286 = vcmp.eq.s32.totalorder %v797, %v1240
        %vm1287 = vcmp.eq.s32.totalorder %v798, %v1240
        %vm1288 = vcmp.eq.s32.totalorder %v797, %v1243
        %vm1289 = vcmp.eq.s32.totalorder %v798, %v1243
        %vm1290 = vcmp.eq.s32.totalorder %v797, %v1246
        %vm1291 = vcmp.eq.s32.totalorder %v798, %v1246
        %vm1292 = vcmp.eq.s32.totalorder %v797, %v1249
        %vm1293 = vcmp.eq.s32.totalorder %v798, %v1249
        %vm1294 = vcmp.eq.s32.totalorder %v797, %v1252
        %vm1295 = vcmp.eq.s32.totalorder %v798, %v1252
        %vm1296 = vcmp.eq.s32.totalorder %v797, %v1255
        %vm1297 = vcmp.eq.s32.totalorder %v798, %v1255
        %vm1298 = vcmp.eq.s32.totalorder %v797, %v1258
        %vm1299 = vcmp.eq.s32.totalorder %v798, %v1258
        %vm1300 = vcmp.eq.s32.totalorder %v797, %v1261
        %vm1301 = vcmp.eq.s32.totalorder %v798, %v1261
        %vm1302 = vcmp.eq.s32.totalorder %v797, %v1264
        %vm1303 = vcmp.eq.s32.totalorder %v798, %v1264
        %vm1304 = vcmp.eq.s32.totalorder %v797, %v1267
        %vm1305 = vcmp.eq.s32.totalorder %v798, %v1267
        %vm1306 = vcmp.eq.s32.totalorder %v797, %v1270
        %vm1307 = vcmp.eq.s32.totalorder %v798, %v1270
        %vm1308 = vcmp.eq.s32.totalorder %v797, %v1273
        %vm1309 = vcmp.eq.s32.totalorder %v798, %v1273
        %vm1310 = vcmp.eq.s32.totalorder %v797, %v1276
        %vm1311 = vcmp.eq.s32.totalorder %v798, %v1276
        %vm1312 = vcmp.eq.s32.totalorder %v797, %v1279
        %vm1313 = vcmp.eq.s32.totalorder %v798, %v1279
        %vm1314 = vcmp.eq.s32.totalorder %v797, %v1282
        %vm1315 = vcmp.eq.s32.totalorder %v798, %v1282
        %vm1316 = vcmp.eq.s32.totalorder %v797, %v1285
        %vm1317 = vcmp.eq.s32.totalorder %v798, %v1285
        %v1318 = vsel %vm1286, 1, 0
        %v1319 = vsel %vm1287, 1, 0
        %v1320 = vsel %vm1288, 1, 0
        %v1321 = vsel %vm1289, 1, 0
        %v1322 = vsel %vm1290, 1, 0
        %v1323 = vsel %vm1291, 1, 0
        %v1324 = vsel %vm1292, 1, 0
        %v1325 = vsel %vm1293, 1, 0
        %v1326 = vsel %vm1294, 1, 0
        %v1327 = vsel %vm1295, 1, 0
        %v1328 = vsel %vm1296, 1, 0
        %v1329 = vsel %vm1297, 1, 0
        %v1330 = vsel %vm1298, 1, 0
        %v1331 = vsel %vm1299, 1, 0
        %v1332 = vsel %vm1300, 1, 0
        %v1333 = vsel %vm1301, 1, 0
        %v1334 = vsel %vm1302, 1, 0
        %v1335 = vsel %vm1303, 1, 0
        %v1336 = vsel %vm1304, 1, 0
        %v1337 = vsel %vm1305, 1, 0
        %v1338 = vsel %vm1306, 1, 0
        %v1339 = vsel %vm1307, 1, 0
        %v1340 = vsel %vm1308, 1, 0
        %v1341 = vsel %vm1309, 1, 0
        %v1342 = vsel %vm1310, 1, 0
        %v1343 = vsel %vm1311, 1, 0
        %v1344 = vsel %vm1312, 1, 0
        %v1345 = vsel %vm1313, 1, 0
        %v1346 = vsel %vm1314, 1, 0
        %v1347 = vsel %vm1315, 1, 0
        %v1348 = vsel %vm1316, 1, 0
        %v1349 = vsel %vm1317, 1, 0
        %v1350 = vcvt.s32.f32 %v1318
        %v1351 = vcvt.s32.f32 %v1319
        %v1352 = vcvt.s32.f32 %v1320
        %v1353 = vcvt.s32.f32 %v1321
        %v1354 = vcvt.s32.f32 %v1322
        %v1355 = vcvt.s32.f32 %v1323
        %v1356 = vcvt.s32.f32 %v1324
        %v1357 = vcvt.s32.f32 %v1325
        %v1358 = vcvt.s32.f32 %v1326
        %v1359 = vcvt.s32.f32 %v1327
        %v1360 = vcvt.s32.f32 %v1328
        %v1361 = vcvt.s32.f32 %v1329
        %v1362 = vcvt.s32.f32 %v1330
        %v1363 = vcvt.s32.f32 %v1331
        %v1364 = vcvt.s32.f32 %v1332
        %v1365 = vcvt.s32.f32 %v1333
        %v1366 = vcvt.s32.f32 %v1334
        %v1367 = vcvt.s32.f32 %v1335
        %v1368 = vcvt.s32.f32 %v1336
        %v1369 = vcvt.s32.f32 %v1337
        %v1370 = vcvt.s32.f32 %v1338
        %v1371 = vcvt.s32.f32 %v1339
        %v1372 = vcvt.s32.f32 %v1340
        %v1373 = vcvt.s32.f32 %v1341
        %v1374 = vcvt.s32.f32 %v1342
        %v1375 = vcvt.s32.f32 %v1343
        %v1376 = vcvt.s32.f32 %v1344
        %v1377 = vcvt.s32.f32 %v1345
        %v1378 = vcvt.s32.f32 %v1346
        %v1379 = vcvt.s32.f32 %v1347
        %v1380 = vcvt.s32.f32 %v1348
        %v1381 = vcvt.s32.f32 %v1349
        %1383 = vset.pattern.permute.xlu0 0
        %1384 = vperm.xlu0 %1383, %v1158
        %v1385 = vpop.permute.xlu0 %1384
        %1388 = vset.pattern.permute.xlu0 0
        %1389 = vperm.xlu0 %1388, %v1159
        %v1390 = vpop.permute.xlu0 %1389
        %1393 = vset.pattern.permute.xlu0 0
        %1394 = vperm.xlu0 %1393, %v1160
        %v1395 = vpop.permute.xlu0 %1394
        %1398 = vset.pattern.permute.xlu0 0
        %1399 = vperm.xlu0 %1398, %v1161
        %v1400 = vpop.permute.xlu0 %1399
        %1403 = vset.pattern.permute.xlu0 0
        %1404 = vperm.xlu0 %1403, %v1162
        %v1405 = vpop.permute.xlu0 %1404
        %1408 = vset.pattern.permute.xlu0 0
        %1409 = vperm.xlu0 %1408, %v1163
        %v1410 = vpop.permute.xlu0 %1409
        %1413 = vset.pattern.permute.xlu0 0
        %1414 = vperm.xlu0 %1413, %v1164
        %v1415 = vpop.permute.xlu0 %1414
        %1418 = vset.pattern.permute.xlu0 0
        %1419 = vperm.xlu0 %1418, %v1165
        %v1420 = vpop.permute.xlu0 %1419
        %1423 = vset.pattern.permute.xlu0 0
        %1424 = vperm.xlu0 %1423, %v1166
        %v1425 = vpop.permute.xlu0 %1424
        %1428 = vset.pattern.permute.xlu0 0
        %1429 = vperm.xlu0 %1428, %v1167
        %v1430 = vpop.permute.xlu0 %1429
        %1433 = vset.pattern.permute.xlu0 0
        %1434 = vperm.xlu0 %1433, %v1168
        %v1435 = vpop.permute.xlu0 %1434
        %1438 = vset.pattern.permute.xlu0 0
        %1439 = vperm.xlu0 %1438, %v1169
        %v1440 = vpop.permute.xlu0 %1439
        %1443 = vset.pattern.permute.xlu0 0
        %1444 = vperm.xlu0 %1443, %v1170
        %v1445 = vpop.permute.xlu0 %1444
        %1448 = vset.pattern.permute.xlu0 0
        %1449 = vperm.xlu0 %1448, %v1171
        %v1450 = vpop.permute.xlu0 %1449
        %1453 = vset.pattern.permute.xlu0 0
        %1454 = vperm.xlu0 %1453, %v1172
        %v1455 = vpop.permute.xlu0 %1454
        %1458 = vset.pattern.permute.xlu0 0
        %1459 = vperm.xlu0 %1458, %v1173
        %v1460 = vpop.permute.xlu0 %1459
        %v1462 = vmul.f32 %v1385, %v1350
        %v1463 = vmul.f32 %v1385, %v1351
        %v1464 = vmul.f32 %v1390, %v1352
        %v1465 = vmul.f32 %v1390, %v1353
        %v1466 = vmul.f32 %v1395, %v1354
        %v1467 = vmul.f32 %v1395, %v1355
        %v1468 = vmul.f32 %v1400, %v1356
        %v1469 = vmul.f32 %v1400, %v1357
        %v1470 = vmul.f32 %v1405, %v1358
        %v1471 = vmul.f32 %v1405, %v1359
        %v1472 = vmul.f32 %v1410, %v1360
        %v1473 = vmul.f32 %v1410, %v1361
        %v1474 = vmul.f32 %v1415, %v1362
        %v1475 = vmul.f32 %v1415, %v1363
        %v1476 = vmul.f32 %v1420, %v1364
        %v1477 = vmul.f32 %v1420, %v1365
        %v1478 = vmul.f32 %v1425, %v1366
        %v1479 = vmul.f32 %v1425, %v1367
        %v1480 = vmul.f32 %v1430, %v1368
        %v1481 = vmul.f32 %v1430, %v1369
        %v1482 = vmul.f32 %v1435, %v1370
        %v1483 = vmul.f32 %v1435, %v1371
        %v1484 = vmul.f32 %v1440, %v1372
        %v1485 = vmul.f32 %v1440, %v1373
        %v1486 = vmul.f32 %v1445, %v1374
        %v1487 = vmul.f32 %v1445, %v1375
        %v1488 = vmul.f32 %v1450, %v1376
        %v1489 = vmul.f32 %v1450, %v1377
        %v1490 = vmul.f32 %v1455, %v1378
        %v1491 = vmul.f32 %v1455, %v1379
        %v1492 = vmul.f32 %v1460, %v1380
        %v1493 = vmul.f32 %v1460, %v1381
        %v1494 = vadd.f32 %v1462, 0.0
        %v1495 = vadd.f32 %v1463, 0.0
        %v1496 = vadd.f32 %v1464, 0.0
        %v1497 = vadd.f32 %v1465, 0.0
        %v1498 = vadd.f32 %v1466, 0.0
        %v1499 = vadd.f32 %v1467, 0.0
        %v1500 = vadd.f32 %v1468, 0.0
        %v1501 = vadd.f32 %v1469, 0.0
        %v1502 = vadd.f32 %v1470, 0.0
        %v1503 = vadd.f32 %v1471, 0.0
        %v1504 = vadd.f32 %v1472, 0.0
        %v1505 = vadd.f32 %v1473, 0.0
        %v1506 = vadd.f32 %v1474, 0.0
        %v1507 = vadd.f32 %v1475, 0.0
        %v1508 = vadd.f32 %v1476, 0.0
        %v1509 = vadd.f32 %v1477, 0.0
        %v1510 = vadd.f32 %v1478, 0.0
        %v1511 = vadd.f32 %v1479, 0.0
        %v1512 = vadd.f32 %v1480, 0.0
        %v1513 = vadd.f32 %v1481, 0.0
        %v1514 = vadd.f32 %v1482, 0.0
        %v1515 = vadd.f32 %v1483, 0.0
        %v1516 = vadd.f32 %v1484, 0.0
        %v1517 = vadd.f32 %v1485, 0.0
        %v1518 = vadd.f32 %v1486, 0.0
        %v1519 = vadd.f32 %v1487, 0.0
        %v1520 = vadd.f32 %v1488, 0.0
        %v1521 = vadd.f32 %v1489, 0.0
        %v1522 = vadd.f32 %v1490, 0.0
        %v1523 = vadd.f32 %v1491, 0.0
        %v1524 = vadd.f32 %v1492, 0.0
        %v1525 = vadd.f32 %v1493, 0.0
        %v1526 = vmul.f32 %v966, %v1111
        %v1527 = vmul.f32 %v967, %v1113
        %v1528 = vmul.f32 %v968, %v1115
        %v1529 = vmul.f32 %v969, %v1117
        %v1530 = vmul.f32 %v970, %v1119
        %v1531 = vmul.f32 %v971, %v1121
        %v1532 = vmul.f32 %v972, %v1123
        %v1533 = vmul.f32 %v973, %v1125
        %v1534 = vmul.f32 %v974, %v1127
        %v1535 = vmul.f32 %v975, %v1129
        %v1536 = vmul.f32 %v976, %v1131
        %v1537 = vmul.f32 %v977, %v1133
        %v1538 = vmul.f32 %v978, %v1135
        %v1539 = vmul.f32 %v979, %v1137
        %v1540 = vmul.f32 %v980, %v1139
        %v1541 = vmul.f32 %v981, %v1141
        %1542 = vrot.lane.b32.xlu0 %v1047, 2
        %v1543 = vpop.permute.xlu0 %1542
        %1544 = vrot.lane.b32.xlu0 %v1049, 2
        %v1545 = vpop.permute.xlu0 %1544
        %1546 = vrot.lane.b32.xlu0 %v1051, 2
        %v1547 = vpop.permute.xlu0 %1546
        %1548 = vrot.lane.b32.xlu0 %v1053, 2
        %v1549 = vpop.permute.xlu0 %1548
        %1550 = vrot.lane.b32.xlu0 %v1055, 2
        %v1551 = vpop.permute.xlu0 %1550
        %1552 = vrot.lane.b32.xlu0 %v1057, 2
        %v1553 = vpop.permute.xlu0 %1552
        %1554 = vrot.lane.b32.xlu0 %v1059, 2
        %v1555 = vpop.permute.xlu0 %1554
        %1556 = vrot.lane.b32.xlu0 %v1061, 2
        %v1557 = vpop.permute.xlu0 %1556
        %1558 = vrot.lane.b32.xlu0 %v1063, 2
        %v1559 = vpop.permute.xlu0 %1558
        %1560 = vrot.lane.b32.xlu0 %v1065, 2
        %v1561 = vpop.permute.xlu0 %1560
        %1562 = vrot.lane.b32.xlu0 %v1067, 2
        %v1563 = vpop.permute.xlu0 %1562
        %1564 = vrot.lane.b32.xlu0 %v1069, 2
        %v1565 = vpop.permute.xlu0 %1564
        %1566 = vrot.lane.b32.xlu0 %v1071, 2
        %v1567 = vpop.permute.xlu0 %1566
        %1568 = vrot.lane.b32.xlu0 %v1073, 2
        %v1569 = vpop.permute.xlu0 %1568
        %1570 = vrot.lane.b32.xlu0 %v1075, 2
        %v1571 = vpop.permute.xlu0 %1570
        %1572 = vrot.lane.b32.xlu0 %v1077, 2
        %v1573 = vpop.permute.xlu0 %1572
        %v1574 = vadd.s32 %v1174, %v1543
        %v1575 = vadd.s32 %v1175, %v1545
        %v1576 = vadd.s32 %v1176, %v1547
        %v1577 = vadd.s32 %v1177, %v1549
        %v1578 = vadd.s32 %v1178, %v1551
        %v1579 = vadd.s32 %v1179, %v1553
        %v1580 = vadd.s32 %v1180, %v1555
        %v1581 = vadd.s32 %v1181, %v1557
        %v1582 = vadd.s32 %v1182, %v1559
        %v1583 = vadd.s32 %v1183, %v1561
        %v1584 = vadd.s32 %v1184, %v1563
        %v1585 = vadd.s32 %v1185, %v1565
        %v1586 = vadd.s32 %v1186, %v1567
        %v1587 = vadd.s32 %v1187, %v1569
        %v1588 = vadd.s32 %v1188, %v1571
        %v1589 = vadd.s32 %v1189, %v1573
        %1590 = vset.pattern.permute.xlu0 2
        %1591 = vperm.xlu0 %1590, %v1574
        %v1592 = vpop.permute.xlu0 %1591
        %1593 = vset.pattern.permute.xlu0 2
        %1594 = vperm.xlu0 %1593, %v1575
        %v1595 = vpop.permute.xlu0 %1594
        %1596 = vset.pattern.permute.xlu0 2
        %1597 = vperm.xlu0 %1596, %v1576
        %v1598 = vpop.permute.xlu0 %1597
        %1599 = vset.pattern.permute.xlu0 2
        %1600 = vperm.xlu0 %1599, %v1577
        %v1601 = vpop.permute.xlu0 %1600
        %1602 = vset.pattern.permute.xlu0 2
        %1603 = vperm.xlu0 %1602, %v1578
        %v1604 = vpop.permute.xlu0 %1603
        %1605 = vset.pattern.permute.xlu0 2
        %1606 = vperm.xlu0 %1605, %v1579
        %v1607 = vpop.permute.xlu0 %1606
        %1608 = vset.pattern.permute.xlu0 2
        %1609 = vperm.xlu0 %1608, %v1580
        %v1610 = vpop.permute.xlu0 %1609
        %1611 = vset.pattern.permute.xlu0 2
        %1612 = vperm.xlu0 %1611, %v1581
        %v1613 = vpop.permute.xlu0 %1612
        %1614 = vset.pattern.permute.xlu0 2
        %1615 = vperm.xlu0 %1614, %v1582
        %v1616 = vpop.permute.xlu0 %1615
        %1617 = vset.pattern.permute.xlu0 2
        %1618 = vperm.xlu0 %1617, %v1583
        %v1619 = vpop.permute.xlu0 %1618
        %1620 = vset.pattern.permute.xlu0 2
        %1621 = vperm.xlu0 %1620, %v1584
        %v1622 = vpop.permute.xlu0 %1621
        %1623 = vset.pattern.permute.xlu0 2
        %1624 = vperm.xlu0 %1623, %v1585
        %v1625 = vpop.permute.xlu0 %1624
        %1626 = vset.pattern.permute.xlu0 2
        %1627 = vperm.xlu0 %1626, %v1586
        %v1628 = vpop.permute.xlu0 %1627
        %1629 = vset.pattern.permute.xlu0 2
        %1630 = vperm.xlu0 %1629, %v1587
        %v1631 = vpop.permute.xlu0 %1630
        %1632 = vset.pattern.permute.xlu0 2
        %1633 = vperm.xlu0 %1632, %v1588
        %v1634 = vpop.permute.xlu0 %1633
        %1635 = vset.pattern.permute.xlu0 2
        %1636 = vperm.xlu0 %1635, %v1589
        %v1637 = vpop.permute.xlu0 %1636
        %vm1638 = vcmp.eq.s32.totalorder %v797, %v1592
        %vm1639 = vcmp.eq.s32.totalorder %v798, %v1592
        %vm1640 = vcmp.eq.s32.totalorder %v797, %v1595
        %vm1641 = vcmp.eq.s32.totalorder %v798, %v1595
        %vm1642 = vcmp.eq.s32.totalorder %v797, %v1598
        %vm1643 = vcmp.eq.s32.totalorder %v798, %v1598
        %vm1644 = vcmp.eq.s32.totalorder %v797, %v1601
        %vm1645 = vcmp.eq.s32.totalorder %v798, %v1601
        %vm1646 = vcmp.eq.s32.totalorder %v797, %v1604
        %vm1647 = vcmp.eq.s32.totalorder %v798, %v1604
        %vm1648 = vcmp.eq.s32.totalorder %v797, %v1607
        %vm1649 = vcmp.eq.s32.totalorder %v798, %v1607
        %vm1650 = vcmp.eq.s32.totalorder %v797, %v1610
        %vm1651 = vcmp.eq.s32.totalorder %v798, %v1610
        %vm1652 = vcmp.eq.s32.totalorder %v797, %v1613
        %vm1653 = vcmp.eq.s32.totalorder %v798, %v1613
        %vm1654 = vcmp.eq.s32.totalorder %v797, %v1616
        %vm1655 = vcmp.eq.s32.totalorder %v798, %v1616
        %vm1656 = vcmp.eq.s32.totalorder %v797, %v1619
        %vm1657 = vcmp.eq.s32.totalorder %v798, %v1619
        %vm1658 = vcmp.eq.s32.totalorder %v797, %v1622
        %vm1659 = vcmp.eq.s32.totalorder %v798, %v1622
        %vm1660 = vcmp.eq.s32.totalorder %v797, %v1625
        %vm1661 = vcmp.eq.s32.totalorder %v798, %v1625
        %vm1662 = vcmp.eq.s32.totalorder %v797, %v1628
        %vm1663 = vcmp.eq.s32.totalorder %v798, %v1628
        %vm1664 = vcmp.eq.s32.totalorder %v797, %v1631
        %vm1665 = vcmp.eq.s32.totalorder %v798, %v1631
        %vm1666 = vcmp.eq.s32.totalorder %v797, %v1634
        %vm1667 = vcmp.eq.s32.totalorder %v798, %v1634
        %vm1668 = vcmp.eq.s32.totalorder %v797, %v1637
        %vm1669 = vcmp.eq.s32.totalorder %v798, %v1637
        %v1670 = vsel %vm1638, 1, 0
        %v1671 = vsel %vm1639, 1, 0
        %v1672 = vsel %vm1640, 1, 0
        %v1673 = vsel %vm1641, 1, 0
        %v1674 = vsel %vm1642, 1, 0
        %v1675 = vsel %vm1643, 1, 0
        %v1676 = vsel %vm1644, 1, 0
        %v1677 = vsel %vm1645, 1, 0
        %v1678 = vsel %vm1646, 1, 0
        %v1679 = vsel %vm1647, 1, 0
        %v1680 = vsel %vm1648, 1, 0
        %v1681 = vsel %vm1649, 1, 0
        %v1682 = vsel %vm1650, 1, 0
        %v1683 = vsel %vm1651, 1, 0
        %v1684 = vsel %vm1652, 1, 0
        %v1685 = vsel %vm1653, 1, 0
        %v1686 = vsel %vm1654, 1, 0
        %v1687 = vsel %vm1655, 1, 0
        %v1688 = vsel %vm1656, 1, 0
        %v1689 = vsel %vm1657, 1, 0
        %v1690 = vsel %vm1658, 1, 0
        %v1691 = vsel %vm1659, 1, 0
        %v1692 = vsel %vm1660, 1, 0
        %v1693 = vsel %vm1661, 1, 0
        %v1694 = vsel %vm1662, 1, 0
        %v1695 = vsel %vm1663, 1, 0
        %v1696 = vsel %vm1664, 1, 0
        %v1697 = vsel %vm1665, 1, 0
        %v1698 = vsel %vm1666, 1, 0
        %v1699 = vsel %vm1667, 1, 0
        %v1700 = vsel %vm1668, 1, 0
        %v1701 = vsel %vm1669, 1, 0
        %v1702 = vcvt.s32.f32 %v1670
        %v1703 = vcvt.s32.f32 %v1671
        %v1704 = vcvt.s32.f32 %v1672
        %v1705 = vcvt.s32.f32 %v1673
        %v1706 = vcvt.s32.f32 %v1674
        %v1707 = vcvt.s32.f32 %v1675
        %v1708 = vcvt.s32.f32 %v1676
        %v1709 = vcvt.s32.f32 %v1677
        %v1710 = vcvt.s32.f32 %v1678
        %v1711 = vcvt.s32.f32 %v1679
        %v1712 = vcvt.s32.f32 %v1680
        %v1713 = vcvt.s32.f32 %v1681
        %v1714 = vcvt.s32.f32 %v1682
        %v1715 = vcvt.s32.f32 %v1683
        %v1716 = vcvt.s32.f32 %v1684
        %v1717 = vcvt.s32.f32 %v1685
        %v1718 = vcvt.s32.f32 %v1686
        %v1719 = vcvt.s32.f32 %v1687
        %v1720 = vcvt.s32.f32 %v1688
        %v1721 = vcvt.s32.f32 %v1689
        %v1722 = vcvt.s32.f32 %v1690
        %v1723 = vcvt.s32.f32 %v1691
        %v1724 = vcvt.s32.f32 %v1692
        %v1725 = vcvt.s32.f32 %v1693
        %v1726 = vcvt.s32.f32 %v1694
        %v1727 = vcvt.s32.f32 %v1695
        %v1728 = vcvt.s32.f32 %v1696
        %v1729 = vcvt.s32.f32 %v1697
        %v1730 = vcvt.s32.f32 %v1698
        %v1731 = vcvt.s32.f32 %v1699
        %v1732 = vcvt.s32.f32 %v1700
        %v1733 = vcvt.s32.f32 %v1701
        %1735 = vset.pattern.permute.xlu0 0
        %1736 = vperm.xlu0 %1735, %v1526
        %v1737 = vpop.permute.xlu0 %1736
        %1740 = vset.pattern.permute.xlu0 0
        %1741 = vperm.xlu0 %1740, %v1527
        %v1742 = vpop.permute.xlu0 %1741
        %1745 = vset.pattern.permute.xlu0 0
        %1746 = vperm.xlu0 %1745, %v1528
        %v1747 = vpop.permute.xlu0 %1746
        %1750 = vset.pattern.permute.xlu0 0
        %1751 = vperm.xlu0 %1750, %v1529
        %v1752 = vpop.permute.xlu0 %1751
        %1755 = vset.pattern.permute.xlu0 0
        %1756 = vperm.xlu0 %1755, %v1530
        %v1757 = vpop.permute.xlu0 %1756
        %1760 = vset.pattern.permute.xlu0 0
        %1761 = vperm.xlu0 %1760, %v1531
        %v1762 = vpop.permute.xlu0 %1761
        %1765 = vset.pattern.permute.xlu0 0
        %1766 = vperm.xlu0 %1765, %v1532
        %v1767 = vpop.permute.xlu0 %1766
        %1770 = vset.pattern.permute.xlu0 0
        %1771 = vperm.xlu0 %1770, %v1533
        %v1772 = vpop.permute.xlu0 %1771
        %1775 = vset.pattern.permute.xlu0 0
        %1776 = vperm.xlu0 %1775, %v1534
        %v1777 = vpop.permute.xlu0 %1776
        %1780 = vset.pattern.permute.xlu0 0
        %1781 = vperm.xlu0 %1780, %v1535
        %v1782 = vpop.permute.xlu0 %1781
        %1785 = vset.pattern.permute.xlu0 0
        %1786 = vperm.xlu0 %1785, %v1536
        %v1787 = vpop.permute.xlu0 %1786
        %1790 = vset.pattern.permute.xlu0 0
        %1791 = vperm.xlu0 %1790, %v1537
        %v1792 = vpop.permute.xlu0 %1791
        %1795 = vset.pattern.permute.xlu0 0
        %1796 = vperm.xlu0 %1795, %v1538
        %v1797 = vpop.permute.xlu0 %1796
        %1800 = vset.pattern.permute.xlu0 0
        %1801 = vperm.xlu0 %1800, %v1539
        %v1802 = vpop.permute.xlu0 %1801
        %1805 = vset.pattern.permute.xlu0 0
        %1806 = vperm.xlu0 %1805, %v1540
        %v1807 = vpop.permute.xlu0 %1806
        %1810 = vset.pattern.permute.xlu0 0
        %1811 = vperm.xlu0 %1810, %v1541
        %v1812 = vpop.permute.xlu0 %1811
        %v1814 = vmul.f32 %v1737, %v1702
        %v1815 = vmul.f32 %v1737, %v1703
        %v1816 = vmul.f32 %v1742, %v1704
        %v1817 = vmul.f32 %v1742, %v1705
        %v1818 = vmul.f32 %v1747, %v1706
        %v1819 = vmul.f32 %v1747, %v1707
        %v1820 = vmul.f32 %v1752, %v1708
        %v1821 = vmul.f32 %v1752, %v1709
        %v1822 = vmul.f32 %v1757, %v1710
        %v1823 = vmul.f32 %v1757, %v1711
        %v1824 = vmul.f32 %v1762, %v1712
        %v1825 = vmul.f32 %v1762, %v1713
        %v1826 = vmul.f32 %v1767, %v1714
        %v1827 = vmul.f32 %v1767, %v1715
        %v1828 = vmul.f32 %v1772, %v1716
        %v1829 = vmul.f32 %v1772, %v1717
        %v1830 = vmul.f32 %v1777, %v1718
        %v1831 = vmul.f32 %v1777, %v1719
        %v1832 = vmul.f32 %v1782, %v1720
        %v1833 = vmul.f32 %v1782, %v1721
        %v1834 = vmul.f32 %v1787, %v1722
        %v1835 = vmul.f32 %v1787, %v1723
        %v1836 = vmul.f32 %v1792, %v1724
        %v1837 = vmul.f32 %v1792, %v1725
        %v1838 = vmul.f32 %v1797, %v1726
        %v1839 = vmul.f32 %v1797, %v1727
        %v1840 = vmul.f32 %v1802, %v1728
        %v1841 = vmul.f32 %v1802, %v1729
        %v1842 = vmul.f32 %v1807, %v1730
        %v1843 = vmul.f32 %v1807, %v1731
        %v1844 = vmul.f32 %v1812, %v1732
        %v1845 = vmul.f32 %v1812, %v1733
        %v1846 = vadd.f32 %v1494, %v1814
        %v1847 = vadd.f32 %v1495, %v1815
        %v1848 = vadd.f32 %v1496, %v1816
        %v1849 = vadd.f32 %v1497, %v1817
        %v1850 = vadd.f32 %v1498, %v1818
        %v1851 = vadd.f32 %v1499, %v1819
        %v1852 = vadd.f32 %v1500, %v1820
        %v1853 = vadd.f32 %v1501, %v1821
        %v1854 = vadd.f32 %v1502, %v1822
        %v1855 = vadd.f32 %v1503, %v1823
        %v1856 = vadd.f32 %v1504, %v1824
        %v1857 = vadd.f32 %v1505, %v1825
        %v1858 = vadd.f32 %v1506, %v1826
        %v1859 = vadd.f32 %v1507, %v1827
        %v1860 = vadd.f32 %v1508, %v1828
        %v1861 = vadd.f32 %v1509, %v1829
        %v1862 = vadd.f32 %v1510, %v1830
        %v1863 = vadd.f32 %v1511, %v1831
        %v1864 = vadd.f32 %v1512, %v1832
        %v1865 = vadd.f32 %v1513, %v1833
        %v1866 = vadd.f32 %v1514, %v1834
        %v1867 = vadd.f32 %v1515, %v1835
        %v1868 = vadd.f32 %v1516, %v1836
        %v1869 = vadd.f32 %v1517, %v1837
        %v1870 = vadd.f32 %v1518, %v1838
        %v1871 = vadd.f32 %v1519, %v1839
        %v1872 = vadd.f32 %v1520, %v1840
        %v1873 = vadd.f32 %v1521, %v1841
        %v1874 = vadd.f32 %v1522, %v1842
        %v1875 = vadd.f32 %v1523, %v1843
        %v1876 = vadd.f32 %v1524, %v1844
        %v1877 = vadd.f32 %v1525, %v1845
        %1894 = vrot.lane.b32.xlu0 %v966, 126
        %v1895 = vpop.permute.xlu0 %1894
        %1896 = vrot.lane.b32.xlu0 %v967, 126
        %v1897 = vpop.permute.xlu0 %1896
        %1898 = vrot.lane.b32.xlu0 %v968, 126
        %v1899 = vpop.permute.xlu0 %1898
        %1900 = vrot.lane.b32.xlu0 %v969, 126
        %v1901 = vpop.permute.xlu0 %1900
        %1902 = vrot.lane.b32.xlu0 %v970, 126
        %v1903 = vpop.permute.xlu0 %1902
        %1904 = vrot.lane.b32.xlu0 %v971, 126
        %v1905 = vpop.permute.xlu0 %1904
        %1906 = vrot.lane.b32.xlu0 %v972, 126
        %v1907 = vpop.permute.xlu0 %1906
        %1908 = vrot.lane.b32.xlu0 %v973, 126
        %v1909 = vpop.permute.xlu0 %1908
        %1910 = vrot.lane.b32.xlu0 %v974, 126
        %v1911 = vpop.permute.xlu0 %1910
        %1912 = vrot.lane.b32.xlu0 %v975, 126
        %v1913 = vpop.permute.xlu0 %1912
        %1914 = vrot.lane.b32.xlu0 %v976, 126
        %v1915 = vpop.permute.xlu0 %1914
        %1916 = vrot.lane.b32.xlu0 %v977, 126
        %v1917 = vpop.permute.xlu0 %1916
        %1918 = vrot.lane.b32.xlu0 %v978, 126
        %v1919 = vpop.permute.xlu0 %1918
        %1920 = vrot.lane.b32.xlu0 %v979, 126
        %v1921 = vpop.permute.xlu0 %1920
        %1922 = vrot.lane.b32.xlu0 %v980, 126
        %v1923 = vpop.permute.xlu0 %1922
        %1924 = vrot.lane.b32.xlu0 %v981, 126
        %v1925 = vpop.permute.xlu0 %1924
        %v1942 = vmul.f32 %v1078, %v1895
        %v1943 = vmul.f32 %v1079, %v1897
        %v1944 = vmul.f32 %v1080, %v1899
        %v1945 = vmul.f32 %v1081, %v1901
        %v1946 = vmul.f32 %v1082, %v1903
        %v1947 = vmul.f32 %v1083, %v1905
        %v1948 = vmul.f32 %v1084, %v1907
        %v1949 = vmul.f32 %v1085, %v1909
        %v1950 = vmul.f32 %v1086, %v1911
        %v1951 = vmul.f32 %v1087, %v1913
        %v1952 = vmul.f32 %v1088, %v1915
        %v1953 = vmul.f32 %v1089, %v1917
        %v1954 = vmul.f32 %v1090, %v1919
        %v1955 = vmul.f32 %v1091, %v1921
        %v1956 = vmul.f32 %v1092, %v1923
        %v1957 = vmul.f32 %v1093, %v1925
        %v1958 = vmul.u32 %v1047, 8
        %v1959 = vmul.u32 %v1049, 8
        %v1960 = vmul.u32 %v1051, 8
        %v1961 = vmul.u32 %v1053, 8
        %v1962 = vmul.u32 %v1055, 8
        %v1963 = vmul.u32 %v1057, 8
        %v1964 = vmul.u32 %v1059, 8
        %v1965 = vmul.u32 %v1061, 8
        %v1966 = vmul.u32 %v1063, 8
        %v1967 = vmul.u32 %v1065, 8
        %v1968 = vmul.u32 %v1067, 8
        %v1969 = vmul.u32 %v1069, 8
        %v1970 = vmul.u32 %v1071, 8
        %v1971 = vmul.u32 %v1073, 8
        %v1972 = vmul.u32 %v1075, 8
        %v1973 = vmul.u32 %v1077, 8
        %v1974 = vadd.s32 %v1958, %v1191
        %v1975 = vadd.s32 %v1959, %v1193
        %v1976 = vadd.s32 %v1960, %v1195
        %v1977 = vadd.s32 %v1961, %v1197
        %v1978 = vadd.s32 %v1962, %v1199
        %v1979 = vadd.s32 %v1963, %v1201
        %v1980 = vadd.s32 %v1964, %v1203
        %v1981 = vadd.s32 %v1965, %v1205
        %v1982 = vadd.s32 %v1966, %v1207
        %v1983 = vadd.s32 %v1967, %v1209
        %v1984 = vadd.s32 %v1968, %v1211
        %v1985 = vadd.s32 %v1969, %v1213
        %v1986 = vadd.s32 %v1970, %v1215
        %v1987 = vadd.s32 %v1971, %v1217
        %v1988 = vadd.s32 %v1972, %v1219
        %v1989 = vadd.s32 %v1973, %v1221
        %1990 = vset.pattern.permute.xlu0 2
        %1991 = vperm.xlu0 %1990, %v1974
        %v1992 = vpop.permute.xlu0 %1991
        %1993 = vset.pattern.permute.xlu0 2
        %1994 = vperm.xlu0 %1993, %v1975
        %v1995 = vpop.permute.xlu0 %1994
        %1996 = vset.pattern.permute.xlu0 2
        %1997 = vperm.xlu0 %1996, %v1976
        %v1998 = vpop.permute.xlu0 %1997
        %1999 = vset.pattern.permute.xlu0 2
        %2000 = vperm.xlu0 %1999, %v1977
        %v2001 = vpop.permute.xlu0 %2000
        %2002 = vset.pattern.permute.xlu0 2
        %2003 = vperm.xlu0 %2002, %v1978
        %v2004 = vpop.permute.xlu0 %2003
        %2005 = vset.pattern.permute.xlu0 2
        %2006 = vperm.xlu0 %2005, %v1979
        %v2007 = vpop.permute.xlu0 %2006
        %2008 = vset.pattern.permute.xlu0 2
        %2009 = vperm.xlu0 %2008, %v1980
        %v2010 = vpop.permute.xlu0 %2009
        %2011 = vset.pattern.permute.xlu0 2
        %2012 = vperm.xlu0 %2011, %v1981
        %v2013 = vpop.permute.xlu0 %2012
        %2014 = vset.pattern.permute.xlu0 2
        %2015 = vperm.xlu0 %2014, %v1982
        %v2016 = vpop.permute.xlu0 %2015
        %2017 = vset.pattern.permute.xlu0 2
        %2018 = vperm.xlu0 %2017, %v1983
        %v2019 = vpop.permute.xlu0 %2018
        %2020 = vset.pattern.permute.xlu0 2
        %2021 = vperm.xlu0 %2020, %v1984
        %v2022 = vpop.permute.xlu0 %2021
        %2023 = vset.pattern.permute.xlu0 2
        %2024 = vperm.xlu0 %2023, %v1985
        %v2025 = vpop.permute.xlu0 %2024
        %2026 = vset.pattern.permute.xlu0 2
        %2027 = vperm.xlu0 %2026, %v1986
        %v2028 = vpop.permute.xlu0 %2027
        %2029 = vset.pattern.permute.xlu0 2
        %2030 = vperm.xlu0 %2029, %v1987
        %v2031 = vpop.permute.xlu0 %2030
        %2032 = vset.pattern.permute.xlu0 2
        %2033 = vperm.xlu0 %2032, %v1988
        %v2034 = vpop.permute.xlu0 %2033
        %2035 = vset.pattern.permute.xlu0 2
        %2036 = vperm.xlu0 %2035, %v1989
        %v2037 = vpop.permute.xlu0 %2036
        %vm2038 = vcmp.eq.s32.totalorder %v797, %v1992
        %vm2039 = vcmp.eq.s32.totalorder %v798, %v1992
        %vm2040 = vcmp.eq.s32.totalorder %v797, %v1995
        %vm2041 = vcmp.eq.s32.totalorder %v798, %v1995
        %vm2042 = vcmp.eq.s32.totalorder %v797, %v1998
        %vm2043 = vcmp.eq.s32.totalorder %v798, %v1998
        %vm2044 = vcmp.eq.s32.totalorder %v797, %v2001
        %vm2045 = vcmp.eq.s32.totalorder %v798, %v2001
        %vm2046 = vcmp.eq.s32.totalorder %v797, %v2004
        %vm2047 = vcmp.eq.s32.totalorder %v798, %v2004
        %vm2048 = vcmp.eq.s32.totalorder %v797, %v2007
        %vm2049 = vcmp.eq.s32.totalorder %v798, %v2007
        %vm2050 = vcmp.eq.s32.totalorder %v797, %v2010
        %vm2051 = vcmp.eq.s32.totalorder %v798, %v2010
        %vm2052 = vcmp.eq.s32.totalorder %v797, %v2013
        %vm2053 = vcmp.eq.s32.totalorder %v798, %v2013
        %vm2054 = vcmp.eq.s32.totalorder %v797, %v2016
        %vm2055 = vcmp.eq.s32.totalorder %v798, %v2016
        %vm2056 = vcmp.eq.s32.totalorder %v797, %v2019
        %vm2057 = vcmp.eq.s32.totalorder %v798, %v2019
        %vm2058 = vcmp.eq.s32.totalorder %v797, %v2022
        %vm2059 = vcmp.eq.s32.totalorder %v798, %v2022
        %vm2060 = vcmp.eq.s32.totalorder %v797, %v2025
        %vm2061 = vcmp.eq.s32.totalorder %v798, %v2025
        %vm2062 = vcmp.eq.s32.totalorder %v797, %v2028
        %vm2063 = vcmp.eq.s32.totalorder %v798, %v2028
        %vm2064 = vcmp.eq.s32.totalorder %v797, %v2031
        %vm2065 = vcmp.eq.s32.totalorder %v798, %v2031
        %vm2066 = vcmp.eq.s32.totalorder %v797, %v2034
        %vm2067 = vcmp.eq.s32.totalorder %v798, %v2034
        %vm2068 = vcmp.eq.s32.totalorder %v797, %v2037
        %vm2069 = vcmp.eq.s32.totalorder %v798, %v2037
        %v2070 = vsel %vm2038, 1, 0
        %v2071 = vsel %vm2039, 1, 0
        %v2072 = vsel %vm2040, 1, 0
        %v2073 = vsel %vm2041, 1, 0
        %v2074 = vsel %vm2042, 1, 0
        %v2075 = vsel %vm2043, 1, 0
        %v2076 = vsel %vm2044, 1, 0
        %v2077 = vsel %vm2045, 1, 0
        %v2078 = vsel %vm2046, 1, 0
        %v2079 = vsel %vm2047, 1, 0
        %v2080 = vsel %vm2048, 1, 0
        %v2081 = vsel %vm2049, 1, 0
        %v2082 = vsel %vm2050, 1, 0
        %v2083 = vsel %vm2051, 1, 0
        %v2084 = vsel %vm2052, 1, 0
        %v2085 = vsel %vm2053, 1, 0
        %v2086 = vsel %vm2054, 1, 0
        %v2087 = vsel %vm2055, 1, 0
        %v2088 = vsel %vm2056, 1, 0
        %v2089 = vsel %vm2057, 1, 0
        %v2090 = vsel %vm2058, 1, 0
        %v2091 = vsel %vm2059, 1, 0
        %v2092 = vsel %vm2060, 1, 0
        %v2093 = vsel %vm2061, 1, 0
        %v2094 = vsel %vm2062, 1, 0
        %v2095 = vsel %vm2063, 1, 0
        %v2096 = vsel %vm2064, 1, 0
        %v2097 = vsel %vm2065, 1, 0
        %v2098 = vsel %vm2066, 1, 0
        %v2099 = vsel %vm2067, 1, 0
        %v2100 = vsel %vm2068, 1, 0
        %v2101 = vsel %vm2069, 1, 0
        %v2102 = vcvt.s32.f32 %v2070
        %v2103 = vcvt.s32.f32 %v2071
        %v2104 = vcvt.s32.f32 %v2072
        %v2105 = vcvt.s32.f32 %v2073
        %v2106 = vcvt.s32.f32 %v2074
        %v2107 = vcvt.s32.f32 %v2075
        %v2108 = vcvt.s32.f32 %v2076
        %v2109 = vcvt.s32.f32 %v2077
        %v2110 = vcvt.s32.f32 %v2078
        %v2111 = vcvt.s32.f32 %v2079
        %v2112 = vcvt.s32.f32 %v2080
        %v2113 = vcvt.s32.f32 %v2081
        %v2114 = vcvt.s32.f32 %v2082
        %v2115 = vcvt.s32.f32 %v2083
        %v2116 = vcvt.s32.f32 %v2084
        %v2117 = vcvt.s32.f32 %v2085
        %v2118 = vcvt.s32.f32 %v2086
        %v2119 = vcvt.s32.f32 %v2087
        %v2120 = vcvt.s32.f32 %v2088
        %v2121 = vcvt.s32.f32 %v2089
        %v2122 = vcvt.s32.f32 %v2090
        %v2123 = vcvt.s32.f32 %v2091
        %v2124 = vcvt.s32.f32 %v2092
        %v2125 = vcvt.s32.f32 %v2093
        %v2126 = vcvt.s32.f32 %v2094
        %v2127 = vcvt.s32.f32 %v2095
        %v2128 = vcvt.s32.f32 %v2096
        %v2129 = vcvt.s32.f32 %v2097
        %v2130 = vcvt.s32.f32 %v2098
        %v2131 = vcvt.s32.f32 %v2099
        %v2132 = vcvt.s32.f32 %v2100
        %v2133 = vcvt.s32.f32 %v2101
        %2135 = vset.pattern.permute.xlu0 0
        %2136 = vperm.xlu0 %2135, %v1942
        %v2137 = vpop.permute.xlu0 %2136
        %2140 = vset.pattern.permute.xlu0 0
        %2141 = vperm.xlu0 %2140, %v1943
        %v2142 = vpop.permute.xlu0 %2141
        %2145 = vset.pattern.permute.xlu0 0
        %2146 = vperm.xlu0 %2145, %v1944
        %v2147 = vpop.permute.xlu0 %2146
        %2150 = vset.pattern.permute.xlu0 0
        %2151 = vperm.xlu0 %2150, %v1945
        %v2152 = vpop.permute.xlu0 %2151
        %2155 = vset.pattern.permute.xlu0 0
        %2156 = vperm.xlu0 %2155, %v1946
        %v2157 = vpop.permute.xlu0 %2156
        %2160 = vset.pattern.permute.xlu0 0
        %2161 = vperm.xlu0 %2160, %v1947
        %v2162 = vpop.permute.xlu0 %2161
        %2165 = vset.pattern.permute.xlu0 0
        %2166 = vperm.xlu0 %2165, %v1948
        %v2167 = vpop.permute.xlu0 %2166
        %2170 = vset.pattern.permute.xlu0 0
        %2171 = vperm.xlu0 %2170, %v1949
        %v2172 = vpop.permute.xlu0 %2171
        %2175 = vset.pattern.permute.xlu0 0
        %2176 = vperm.xlu0 %2175, %v1950
        %v2177 = vpop.permute.xlu0 %2176
        %2180 = vset.pattern.permute.xlu0 0
        %2181 = vperm.xlu0 %2180, %v1951
        %v2182 = vpop.permute.xlu0 %2181
        %2185 = vset.pattern.permute.xlu0 0
        %2186 = vperm.xlu0 %2185, %v1952
        %v2187 = vpop.permute.xlu0 %2186
        %2190 = vset.pattern.permute.xlu0 0
        %2191 = vperm.xlu0 %2190, %v1953
        %v2192 = vpop.permute.xlu0 %2191
        %2195 = vset.pattern.permute.xlu0 0
        %2196 = vperm.xlu0 %2195, %v1954
        %v2197 = vpop.permute.xlu0 %2196
        %2200 = vset.pattern.permute.xlu0 0
        %2201 = vperm.xlu0 %2200, %v1955
        %v2202 = vpop.permute.xlu0 %2201
        %2205 = vset.pattern.permute.xlu0 0
        %2206 = vperm.xlu0 %2205, %v1956
        %v2207 = vpop.permute.xlu0 %2206
        %2210 = vset.pattern.permute.xlu0 0
        %2211 = vperm.xlu0 %2210, %v1957
        %v2212 = vpop.permute.xlu0 %2211
        %v2214 = vmul.f32 %v2137, %v2102
        %v2215 = vmul.f32 %v2137, %v2103
        %v2216 = vmul.f32 %v2142, %v2104
        %v2217 = vmul.f32 %v2142, %v2105
        %v2218 = vmul.f32 %v2147, %v2106
        %v2219 = vmul.f32 %v2147, %v2107
        %v2220 = vmul.f32 %v2152, %v2108
        %v2221 = vmul.f32 %v2152, %v2109
        %v2222 = vmul.f32 %v2157, %v2110
        %v2223 = vmul.f32 %v2157, %v2111
        %v2224 = vmul.f32 %v2162, %v2112
        %v2225 = vmul.f32 %v2162, %v2113
        %v2226 = vmul.f32 %v2167, %v2114
        %v2227 = vmul.f32 %v2167, %v2115
        %v2228 = vmul.f32 %v2172, %v2116
        %v2229 = vmul.f32 %v2172, %v2117
        %v2230 = vmul.f32 %v2177, %v2118
        %v2231 = vmul.f32 %v2177, %v2119
        %v2232 = vmul.f32 %v2182, %v2120
        %v2233 = vmul.f32 %v2182, %v2121
        %v2234 = vmul.f32 %v2187, %v2122
        %v2235 = vmul.f32 %v2187, %v2123
        %v2236 = vmul.f32 %v2192, %v2124
        %v2237 = vmul.f32 %v2192, %v2125
        %v2238 = vmul.f32 %v2197, %v2126
        %v2239 = vmul.f32 %v2197, %v2127
        %v2240 = vmul.f32 %v2202, %v2128
        %v2241 = vmul.f32 %v2202, %v2129
        %v2242 = vmul.f32 %v2207, %v2130
        %v2243 = vmul.f32 %v2207, %v2131
        %v2244 = vmul.f32 %v2212, %v2132
        %v2245 = vmul.f32 %v2212, %v2133
        %v2246 = vadd.f32 %v1846, %v2214
        %v2247 = vadd.f32 %v1847, %v2215
        %v2248 = vadd.f32 %v1848, %v2216
        %v2249 = vadd.f32 %v1849, %v2217
        %v2250 = vadd.f32 %v1850, %v2218
        %v2251 = vadd.f32 %v1851, %v2219
        %v2252 = vadd.f32 %v1852, %v2220
        %v2253 = vadd.f32 %v1853, %v2221
        %v2254 = vadd.f32 %v1854, %v2222
        %v2255 = vadd.f32 %v1855, %v2223
        %v2256 = vadd.f32 %v1856, %v2224
        %v2257 = vadd.f32 %v1857, %v2225
        %v2258 = vadd.f32 %v1858, %v2226
        %v2259 = vadd.f32 %v1859, %v2227
        %v2260 = vadd.f32 %v1860, %v2228
        %v2261 = vadd.f32 %v1861, %v2229
        %v2262 = vadd.f32 %v1862, %v2230
        %v2263 = vadd.f32 %v1863, %v2231
        %v2264 = vadd.f32 %v1864, %v2232
        %v2265 = vadd.f32 %v1865, %v2233
        %v2266 = vadd.f32 %v1866, %v2234
        %v2267 = vadd.f32 %v1867, %v2235
        %v2268 = vadd.f32 %v1868, %v2236
        %v2269 = vadd.f32 %v1869, %v2237
        %v2270 = vadd.f32 %v1870, %v2238
        %v2271 = vadd.f32 %v1871, %v2239
        %v2272 = vadd.f32 %v1872, %v2240
        %v2273 = vadd.f32 %v1873, %v2241
        %v2274 = vadd.f32 %v1874, %v2242
        %v2275 = vadd.f32 %v1875, %v2243
        %v2276 = vadd.f32 %v1876, %v2244
        %v2277 = vadd.f32 %v1877, %v2245
        %v2278 = vmul.f32 %v966, %v1895
        %v2279 = vmul.f32 %v967, %v1897
        %v2280 = vmul.f32 %v968, %v1899
        %v2281 = vmul.f32 %v969, %v1901
        %v2282 = vmul.f32 %v970, %v1903
        %v2283 = vmul.f32 %v971, %v1905
        %v2284 = vmul.f32 %v972, %v1907
        %v2285 = vmul.f32 %v973, %v1909
        %v2286 = vmul.f32 %v974, %v1911
        %v2287 = vmul.f32 %v975, %v1913
        %v2288 = vmul.f32 %v976, %v1915
        %v2289 = vmul.f32 %v977, %v1917
        %v2290 = vmul.f32 %v978, %v1919
        %v2291 = vmul.f32 %v979, %v1921
        %v2292 = vmul.f32 %v980, %v1923
        %v2293 = vmul.f32 %v981, %v1925
        %v2294 = vadd.s32 %v1958, %v1543
        %v2295 = vadd.s32 %v1959, %v1545
        %v2296 = vadd.s32 %v1960, %v1547
        %v2297 = vadd.s32 %v1961, %v1549
        %v2298 = vadd.s32 %v1962, %v1551
        %v2299 = vadd.s32 %v1963, %v1553
        %v2300 = vadd.s32 %v1964, %v1555
        %v2301 = vadd.s32 %v1965, %v1557
        %v2302 = vadd.s32 %v1966, %v1559
        %v2303 = vadd.s32 %v1967, %v1561
        %v2304 = vadd.s32 %v1968, %v1563
        %v2305 = vadd.s32 %v1969, %v1565
        %v2306 = vadd.s32 %v1970, %v1567
        %v2307 = vadd.s32 %v1971, %v1569
        %v2308 = vadd.s32 %v1972, %v1571
        %v2309 = vadd.s32 %v1973, %v1573
        %2310 = vset.pattern.permute.xlu0 2
        %2311 = vperm.xlu0 %2310, %v2294
        %v2312 = vpop.permute.xlu0 %2311
        %2313 = vset.pattern.permute.xlu0 2
        %2314 = vperm.xlu0 %2313, %v2295
        %v2315 = vpop.permute.xlu0 %2314
        %2316 = vset.pattern.permute.xlu0 2
        %2317 = vperm.xlu0 %2316, %v2296
        %v2318 = vpop.permute.xlu0 %2317
        %2319 = vset.pattern.permute.xlu0 2
        %2320 = vperm.xlu0 %2319, %v2297
        %v2321 = vpop.permute.xlu0 %2320
        %2322 = vset.pattern.permute.xlu0 2
        %2323 = vperm.xlu0 %2322, %v2298
        %v2324 = vpop.permute.xlu0 %2323
        %2325 = vset.pattern.permute.xlu0 2
        %2326 = vperm.xlu0 %2325, %v2299
        %v2327 = vpop.permute.xlu0 %2326
        %2328 = vset.pattern.permute.xlu0 2
        %2329 = vperm.xlu0 %2328, %v2300
        %v2330 = vpop.permute.xlu0 %2329
        %2331 = vset.pattern.permute.xlu0 2
        %2332 = vperm.xlu0 %2331, %v2301
        %v2333 = vpop.permute.xlu0 %2332
        %2334 = vset.pattern.permute.xlu0 2
        %2335 = vperm.xlu0 %2334, %v2302
        %v2336 = vpop.permute.xlu0 %2335
        %2337 = vset.pattern.permute.xlu0 2
        %2338 = vperm.xlu0 %2337, %v2303
        %v2339 = vpop.permute.xlu0 %2338
        %2340 = vset.pattern.permute.xlu0 2
        %2341 = vperm.xlu0 %2340, %v2304
        %v2342 = vpop.permute.xlu0 %2341
        %2343 = vset.pattern.permute.xlu0 2
        %2344 = vperm.xlu0 %2343, %v2305
        %v2345 = vpop.permute.xlu0 %2344
        %2346 = vset.pattern.permute.xlu0 2
        %2347 = vperm.xlu0 %2346, %v2306
        %v2348 = vpop.permute.xlu0 %2347
        %2349 = vset.pattern.permute.xlu0 2
        %2350 = vperm.xlu0 %2349, %v2307
        %v2351 = vpop.permute.xlu0 %2350
        %2352 = vset.pattern.permute.xlu0 2
        %2353 = vperm.xlu0 %2352, %v2308
        %v2354 = vpop.permute.xlu0 %2353
        %2355 = vset.pattern.permute.xlu0 2
        %2356 = vperm.xlu0 %2355, %v2309
        %v2357 = vpop.permute.xlu0 %2356
        %vm2358 = vcmp.eq.s32.totalorder %v797, %v2312
        %vm2359 = vcmp.eq.s32.totalorder %v798, %v2312
        %vm2360 = vcmp.eq.s32.totalorder %v797, %v2315
        %vm2361 = vcmp.eq.s32.totalorder %v798, %v2315
        %vm2362 = vcmp.eq.s32.totalorder %v797, %v2318
        %vm2363 = vcmp.eq.s32.totalorder %v798, %v2318
        %vm2364 = vcmp.eq.s32.totalorder %v797, %v2321
        %vm2365 = vcmp.eq.s32.totalorder %v798, %v2321
        %vm2366 = vcmp.eq.s32.totalorder %v797, %v2324
        %vm2367 = vcmp.eq.s32.totalorder %v798, %v2324
        %vm2368 = vcmp.eq.s32.totalorder %v797, %v2327
        %vm2369 = vcmp.eq.s32.totalorder %v798, %v2327
        %vm2370 = vcmp.eq.s32.totalorder %v797, %v2330
        %vm2371 = vcmp.eq.s32.totalorder %v798, %v2330
        %vm2372 = vcmp.eq.s32.totalorder %v797, %v2333
        %vm2373 = vcmp.eq.s32.totalorder %v798, %v2333
        %vm2374 = vcmp.eq.s32.totalorder %v797, %v2336
        %vm2375 = vcmp.eq.s32.totalorder %v798, %v2336
        %vm2376 = vcmp.eq.s32.totalorder %v797, %v2339
        %vm2377 = vcmp.eq.s32.totalorder %v798, %v2339
        %vm2378 = vcmp.eq.s32.totalorder %v797, %v2342
        %vm2379 = vcmp.eq.s32.totalorder %v798, %v2342
        %vm2380 = vcmp.eq.s32.totalorder %v797, %v2345
        %vm2381 = vcmp.eq.s32.totalorder %v798, %v2345
        %vm2382 = vcmp.eq.s32.totalorder %v797, %v2348
        %vm2383 = vcmp.eq.s32.totalorder %v798, %v2348
        %vm2384 = vcmp.eq.s32.totalorder %v797, %v2351
        %vm2385 = vcmp.eq.s32.totalorder %v798, %v2351
        %vm2386 = vcmp.eq.s32.totalorder %v797, %v2354
        %vm2387 = vcmp.eq.s32.totalorder %v798, %v2354
        %vm2388 = vcmp.eq.s32.totalorder %v797, %v2357
        %vm2389 = vcmp.eq.s32.totalorder %v798, %v2357
        %v2390 = vsel %vm2358, 1, 0
        %v2391 = vsel %vm2359, 1, 0
        %v2392 = vsel %vm2360, 1, 0
        %v2393 = vsel %vm2361, 1, 0
        %v2394 = vsel %vm2362, 1, 0
        %v2395 = vsel %vm2363, 1, 0
        %v2396 = vsel %vm2364, 1, 0
        %v2397 = vsel %vm2365, 1, 0
        %v2398 = vsel %vm2366, 1, 0
        %v2399 = vsel %vm2367, 1, 0
        %v2400 = vsel %vm2368, 1, 0
        %v2401 = vsel %vm2369, 1, 0
        %v2402 = vsel %vm2370, 1, 0
        %v2403 = vsel %vm2371, 1, 0
        %v2404 = vsel %vm2372, 1, 0
        %v2405 = vsel %vm2373, 1, 0
        %v2406 = vsel %vm2374, 1, 0
        %v2407 = vsel %vm2375, 1, 0
        %v2408 = vsel %vm2376, 1, 0
        %v2409 = vsel %vm2377, 1, 0
        %v2410 = vsel %vm2378, 1, 0
        %v2411 = vsel %vm2379, 1, 0
        %v2412 = vsel %vm2380, 1, 0
        %v2413 = vsel %vm2381, 1, 0
        %v2414 = vsel %vm2382, 1, 0
        %v2415 = vsel %vm2383, 1, 0
        %v2416 = vsel %vm2384, 1, 0
        %v2417 = vsel %vm2385, 1, 0
        %v2418 = vsel %vm2386, 1, 0
        %v2419 = vsel %vm2387, 1, 0
        %v2420 = vsel %vm2388, 1, 0
        %v2421 = vsel %vm2389, 1, 0
        %v2422 = vcvt.s32.f32 %v2390
        %v2423 = vcvt.s32.f32 %v2391
        %v2424 = vcvt.s32.f32 %v2392
        %v2425 = vcvt.s32.f32 %v2393
        %v2426 = vcvt.s32.f32 %v2394
        %v2427 = vcvt.s32.f32 %v2395
        %v2428 = vcvt.s32.f32 %v2396
        %v2429 = vcvt.s32.f32 %v2397
        %v2430 = vcvt.s32.f32 %v2398
        %v2431 = vcvt.s32.f32 %v2399
        %v2432 = vcvt.s32.f32 %v2400
        %v2433 = vcvt.s32.f32 %v2401
        %v2434 = vcvt.s32.f32 %v2402
        %v2435 = vcvt.s32.f32 %v2403
        %v2436 = vcvt.s32.f32 %v2404
        %v2437 = vcvt.s32.f32 %v2405
        %v2438 = vcvt.s32.f32 %v2406
        %v2439 = vcvt.s32.f32 %v2407
        %v2440 = vcvt.s32.f32 %v2408
        %v2441 = vcvt.s32.f32 %v2409
        %v2442 = vcvt.s32.f32 %v2410
        %v2443 = vcvt.s32.f32 %v2411
        %v2444 = vcvt.s32.f32 %v2412
        %v2445 = vcvt.s32.f32 %v2413
        %v2446 = vcvt.s32.f32 %v2414
        %v2447 = vcvt.s32.f32 %v2415
        %v2448 = vcvt.s32.f32 %v2416
        %v2449 = vcvt.s32.f32 %v2417
        %v2450 = vcvt.s32.f32 %v2418
        %v2451 = vcvt.s32.f32 %v2419
        %v2452 = vcvt.s32.f32 %v2420
        %v2453 = vcvt.s32.f32 %v2421
        %2455 = vset.pattern.permute.xlu0 0
        %2456 = vperm.xlu0 %2455, %v2278
        %v2457 = vpop.permute.xlu0 %2456
        %2460 = vset.pattern.permute.xlu0 0
        %2461 = vperm.xlu0 %2460, %v2279
        %v2462 = vpop.permute.xlu0 %2461
        %2465 = vset.pattern.permute.xlu0 0
        %2466 = vperm.xlu0 %2465, %v2280
        %v2467 = vpop.permute.xlu0 %2466
        %2470 = vset.pattern.permute.xlu0 0
        %2471 = vperm.xlu0 %2470, %v2281
        %v2472 = vpop.permute.xlu0 %2471
        %2475 = vset.pattern.permute.xlu0 0
        %2476 = vperm.xlu0 %2475, %v2282
        %v2477 = vpop.permute.xlu0 %2476
        %2480 = vset.pattern.permute.xlu0 0
        %2481 = vperm.xlu0 %2480, %v2283
        %v2482 = vpop.permute.xlu0 %2481
        %2485 = vset.pattern.permute.xlu0 0
        %2486 = vperm.xlu0 %2485, %v2284
        %v2487 = vpop.permute.xlu0 %2486
        %2490 = vset.pattern.permute.xlu0 0
        %2491 = vperm.xlu0 %2490, %v2285
        %v2492 = vpop.permute.xlu0 %2491
        %2495 = vset.pattern.permute.xlu0 0
        %2496 = vperm.xlu0 %2495, %v2286
        %v2497 = vpop.permute.xlu0 %2496
        %2500 = vset.pattern.permute.xlu0 0
        %2501 = vperm.xlu0 %2500, %v2287
        %v2502 = vpop.permute.xlu0 %2501
        %2505 = vset.pattern.permute.xlu0 0
        %2506 = vperm.xlu0 %2505, %v2288
        %v2507 = vpop.permute.xlu0 %2506
        %2510 = vset.pattern.permute.xlu0 0
        %2511 = vperm.xlu0 %2510, %v2289
        %v2512 = vpop.permute.xlu0 %2511
        %2515 = vset.pattern.permute.xlu0 0
        %2516 = vperm.xlu0 %2515, %v2290
        %v2517 = vpop.permute.xlu0 %2516
        %2520 = vset.pattern.permute.xlu0 0
        %2521 = vperm.xlu0 %2520, %v2291
        %v2522 = vpop.permute.xlu0 %2521
        %2525 = vset.pattern.permute.xlu0 0
        %2526 = vperm.xlu0 %2525, %v2292
        %v2527 = vpop.permute.xlu0 %2526
        %2530 = vset.pattern.permute.xlu0 0
        %2531 = vperm.xlu0 %2530, %v2293
        %v2532 = vpop.permute.xlu0 %2531
        %v2534 = vmul.f32 %v2457, %v2422
        %v2535 = vmul.f32 %v2457, %v2423
        %v2536 = vmul.f32 %v2462, %v2424
        %v2537 = vmul.f32 %v2462, %v2425
        %v2538 = vmul.f32 %v2467, %v2426
        %v2539 = vmul.f32 %v2467, %v2427
        %v2540 = vmul.f32 %v2472, %v2428
        %v2541 = vmul.f32 %v2472, %v2429
        %v2542 = vmul.f32 %v2477, %v2430
        %v2543 = vmul.f32 %v2477, %v2431
        %v2544 = vmul.f32 %v2482, %v2432
        %v2545 = vmul.f32 %v2482, %v2433
        %v2546 = vmul.f32 %v2487, %v2434
        %v2547 = vmul.f32 %v2487, %v2435
        %v2548 = vmul.f32 %v2492, %v2436
        %v2549 = vmul.f32 %v2492, %v2437
        %v2550 = vmul.f32 %v2497, %v2438
        %v2551 = vmul.f32 %v2497, %v2439
        %v2552 = vmul.f32 %v2502, %v2440
        %v2553 = vmul.f32 %v2502, %v2441
        %v2554 = vmul.f32 %v2507, %v2442
        %v2555 = vmul.f32 %v2507, %v2443
        %v2556 = vmul.f32 %v2512, %v2444
        %v2557 = vmul.f32 %v2512, %v2445
        %v2558 = vmul.f32 %v2517, %v2446
        %v2559 = vmul.f32 %v2517, %v2447
        %v2560 = vmul.f32 %v2522, %v2448
        %v2561 = vmul.f32 %v2522, %v2449
        %v2562 = vmul.f32 %v2527, %v2450
        %v2563 = vmul.f32 %v2527, %v2451
        %v2564 = vmul.f32 %v2532, %v2452
        %v2565 = vmul.f32 %v2532, %v2453
        %v2566 = vadd.f32 %v2246, %v2534
        %v2567 = vadd.f32 %v2247, %v2535
        %v2568 = vadd.f32 %v2248, %v2536
        %v2569 = vadd.f32 %v2249, %v2537
        %v2570 = vadd.f32 %v2250, %v2538
        %v2571 = vadd.f32 %v2251, %v2539
        %v2572 = vadd.f32 %v2252, %v2540
        %v2573 = vadd.f32 %v2253, %v2541
        %v2574 = vadd.f32 %v2254, %v2542
        %v2575 = vadd.f32 %v2255, %v2543
        %v2576 = vadd.f32 %v2256, %v2544
        %v2577 = vadd.f32 %v2257, %v2545
        %v2578 = vadd.f32 %v2258, %v2546
        %v2579 = vadd.f32 %v2259, %v2547
        %v2580 = vadd.f32 %v2260, %v2548
        %v2581 = vadd.f32 %v2261, %v2549
        %v2582 = vadd.f32 %v2262, %v2550
        %v2583 = vadd.f32 %v2263, %v2551
        %v2584 = vadd.f32 %v2264, %v2552
        %v2585 = vadd.f32 %v2265, %v2553
        %v2586 = vadd.f32 %v2266, %v2554
        %v2587 = vadd.f32 %v2267, %v2555
        %v2588 = vadd.f32 %v2268, %v2556
        %v2589 = vadd.f32 %v2269, %v2557
        %v2590 = vadd.f32 %v2270, %v2558
        %v2591 = vadd.f32 %v2271, %v2559
        %v2592 = vadd.f32 %v2272, %v2560
        %v2593 = vadd.f32 %v2273, %v2561
        %v2594 = vadd.f32 %v2274, %v2562
        %v2595 = vadd.f32 %v2275, %v2563
        %v2596 = vadd.f32 %v2276, %v2564
        %v2597 = vadd.f32 %v2277, %v2565
        %2598 = vrot.lane.b32.xlu0 %v1078, 127
        %v2599 = vpop.permute.xlu0 %2598
        %2600 = vrot.lane.b32.xlu0 %v1079, 127
        %v2601 = vpop.permute.xlu0 %2600
        %2602 = vrot.lane.b32.xlu0 %v1080, 127
        %v2603 = vpop.permute.xlu0 %2602
        %2604 = vrot.lane.b32.xlu0 %v1081, 127
        %v2605 = vpop.permute.xlu0 %2604
        %2606 = vrot.lane.b32.xlu0 %v1082, 127
        %v2607 = vpop.permute.xlu0 %2606
        %2608 = vrot.lane.b32.xlu0 %v1083, 127
        %v2609 = vpop.permute.xlu0 %2608
        %2610 = vrot.lane.b32.xlu0 %v1084, 127
        %v2611 = vpop.permute.xlu0 %2610
        %2612 = vrot.lane.b32.xlu0 %v1085, 127
        %v2613 = vpop.permute.xlu0 %2612
        %2614 = vrot.lane.b32.xlu0 %v1086, 127
        %v2615 = vpop.permute.xlu0 %2614
        %2616 = vrot.lane.b32.xlu0 %v1087, 127
        %v2617 = vpop.permute.xlu0 %2616
        %2618 = vrot.lane.b32.xlu0 %v1088, 127
        %v2619 = vpop.permute.xlu0 %2618
        %2620 = vrot.lane.b32.xlu0 %v1089, 127
        %v2621 = vpop.permute.xlu0 %2620
        %2622 = vrot.lane.b32.xlu0 %v1090, 127
        %v2623 = vpop.permute.xlu0 %2622
        %2624 = vrot.lane.b32.xlu0 %v1091, 127
        %v2625 = vpop.permute.xlu0 %2624
        %2626 = vrot.lane.b32.xlu0 %v1092, 127
        %v2627 = vpop.permute.xlu0 %2626
        %2628 = vrot.lane.b32.xlu0 %v1093, 127
        %v2629 = vpop.permute.xlu0 %2628
        %v2646 = vmul.f32 %v1078, %v2599
        %v2647 = vmul.f32 %v1079, %v2601
        %v2648 = vmul.f32 %v1080, %v2603
        %v2649 = vmul.f32 %v1081, %v2605
        %v2650 = vmul.f32 %v1082, %v2607
        %v2651 = vmul.f32 %v1083, %v2609
        %v2652 = vmul.f32 %v1084, %v2611
        %v2653 = vmul.f32 %v1085, %v2613
        %v2654 = vmul.f32 %v1086, %v2615
        %v2655 = vmul.f32 %v1087, %v2617
        %v2656 = vmul.f32 %v1088, %v2619
        %v2657 = vmul.f32 %v1089, %v2621
        %v2658 = vmul.f32 %v1090, %v2623
        %v2659 = vmul.f32 %v1091, %v2625
        %v2660 = vmul.f32 %v1092, %v2627
        %v2661 = vmul.f32 %v1093, %v2629
        %v2662 = vadd.s32 %v1174, 64
        %v2663 = vadd.s32 %v1175, 64
        %v2664 = vadd.s32 %v1176, 64
        %v2665 = vadd.s32 %v1177, 64
        %v2666 = vadd.s32 %v1178, 64
        %v2667 = vadd.s32 %v1179, 64
        %v2668 = vadd.s32 %v1180, 64
        %v2669 = vadd.s32 %v1181, 64
        %v2670 = vadd.s32 %v1182, 64
        %v2671 = vadd.s32 %v1183, 64
        %v2672 = vadd.s32 %v1184, 64
        %v2673 = vadd.s32 %v1185, 64
        %v2674 = vadd.s32 %v1186, 64
        %v2675 = vadd.s32 %v1187, 64
        %v2676 = vadd.s32 %v1188, 64
        %v2677 = vadd.s32 %v1189, 64
        %2678 = vrot.lane.b32.xlu0 %v999, 1
        %v2679 = vpop.permute.xlu0 %2678
        %2680 = vrot.lane.b32.xlu0 %v1001, 1
        %v2681 = vpop.permute.xlu0 %2680
        %2682 = vrot.lane.b32.xlu0 %v1003, 1
        %v2683 = vpop.permute.xlu0 %2682
        %2684 = vrot.lane.b32.xlu0 %v1005, 1
        %v2685 = vpop.permute.xlu0 %2684
        %2686 = vrot.lane.b32.xlu0 %v1007, 1
        %v2687 = vpop.permute.xlu0 %2686
        %2688 = vrot.lane.b32.xlu0 %v1009, 1
        %v2689 = vpop.permute.xlu0 %2688
        %2690 = vrot.lane.b32.xlu0 %v1011, 1
        %v2691 = vpop.permute.xlu0 %2690
        %2692 = vrot.lane.b32.xlu0 %v1013, 1
        %v2693 = vpop.permute.xlu0 %2692
        %2694 = vrot.lane.b32.xlu0 %v1015, 1
        %v2695 = vpop.permute.xlu0 %2694
        %2696 = vrot.lane.b32.xlu0 %v1017, 1
        %v2697 = vpop.permute.xlu0 %2696
        %2698 = vrot.lane.b32.xlu0 %v1019, 1
        %v2699 = vpop.permute.xlu0 %2698
        %2700 = vrot.lane.b32.xlu0 %v1021, 1
        %v2701 = vpop.permute.xlu0 %2700
        %2702 = vrot.lane.b32.xlu0 %v1023, 1
        %v2703 = vpop.permute.xlu0 %2702
        %2704 = vrot.lane.b32.xlu0 %v1025, 1
        %v2705 = vpop.permute.xlu0 %2704
        %2706 = vrot.lane.b32.xlu0 %v1027, 1
        %v2707 = vpop.permute.xlu0 %2706
        %2708 = vrot.lane.b32.xlu0 %v1029, 1
        %v2709 = vpop.permute.xlu0 %2708
        %v2710 = vadd.s32 %v2662, %v2679
        %v2711 = vadd.s32 %v2663, %v2681
        %v2712 = vadd.s32 %v2664, %v2683
        %v2713 = vadd.s32 %v2665, %v2685
        %v2714 = vadd.s32 %v2666, %v2687
        %v2715 = vadd.s32 %v2667, %v2689
        %v2716 = vadd.s32 %v2668, %v2691
        %v2717 = vadd.s32 %v2669, %v2693
        %v2718 = vadd.s32 %v2670, %v2695
        %v2719 = vadd.s32 %v2671, %v2697
        %v2720 = vadd.s32 %v2672, %v2699
        %v2721 = vadd.s32 %v2673, %v2701
        %v2722 = vadd.s32 %v2674, %v2703
        %v2723 = vadd.s32 %v2675, %v2705
        %v2724 = vadd.s32 %v2676, %v2707
        %v2725 = vadd.s32 %v2677, %v2709
        %2726 = vset.pattern.permute.xlu0 1
        %2727 = vperm.xlu0 %2726, %v2710
        %v2728 = vpop.permute.xlu0 %2727
        %2729 = vset.pattern.permute.xlu0 1
        %2730 = vperm.xlu0 %2729, %v2711
        %v2731 = vpop.permute.xlu0 %2730
        %2732 = vset.pattern.permute.xlu0 1
        %2733 = vperm.xlu0 %2732, %v2712
        %v2734 = vpop.permute.xlu0 %2733
        %2735 = vset.pattern.permute.xlu0 1
        %2736 = vperm.xlu0 %2735, %v2713
        %v2737 = vpop.permute.xlu0 %2736
        %2738 = vset.pattern.permute.xlu0 1
        %2739 = vperm.xlu0 %2738, %v2714
        %v2740 = vpop.permute.xlu0 %2739
        %2741 = vset.pattern.permute.xlu0 1
        %2742 = vperm.xlu0 %2741, %v2715
        %v2743 = vpop.permute.xlu0 %2742
        %2744 = vset.pattern.permute.xlu0 1
        %2745 = vperm.xlu0 %2744, %v2716
        %v2746 = vpop.permute.xlu0 %2745
        %2747 = vset.pattern.permute.xlu0 1
        %2748 = vperm.xlu0 %2747, %v2717
        %v2749 = vpop.permute.xlu0 %2748
        %2750 = vset.pattern.permute.xlu0 1
        %2751 = vperm.xlu0 %2750, %v2718
        %v2752 = vpop.permute.xlu0 %2751
        %2753 = vset.pattern.permute.xlu0 1
        %2754 = vperm.xlu0 %2753, %v2719
        %v2755 = vpop.permute.xlu0 %2754
        %2756 = vset.pattern.permute.xlu0 1
        %2757 = vperm.xlu0 %2756, %v2720
        %v2758 = vpop.permute.xlu0 %2757
        %2759 = vset.pattern.permute.xlu0 1
        %2760 = vperm.xlu0 %2759, %v2721
        %v2761 = vpop.permute.xlu0 %2760
        %2762 = vset.pattern.permute.xlu0 1
        %2763 = vperm.xlu0 %2762, %v2722
        %v2764 = vpop.permute.xlu0 %2763
        %2765 = vset.pattern.permute.xlu0 1
        %2766 = vperm.xlu0 %2765, %v2723
        %v2767 = vpop.permute.xlu0 %2766
        %2768 = vset.pattern.permute.xlu0 1
        %2769 = vperm.xlu0 %2768, %v2724
        %v2770 = vpop.permute.xlu0 %2769
        %2771 = vset.pattern.permute.xlu0 1
        %2772 = vperm.xlu0 %2771, %v2725
        %v2773 = vpop.permute.xlu0 %2772
        %vm2774 = vcmp.eq.s32.totalorder %v797, %v2728
        %vm2775 = vcmp.eq.s32.totalorder %v798, %v2728
        %vm2776 = vcmp.eq.s32.totalorder %v797, %v2731
        %vm2777 = vcmp.eq.s32.totalorder %v798, %v2731
        %vm2778 = vcmp.eq.s32.totalorder %v797, %v2734
        %vm2779 = vcmp.eq.s32.totalorder %v798, %v2734
        %vm2780 = vcmp.eq.s32.totalorder %v797, %v2737
        %vm2781 = vcmp.eq.s32.totalorder %v798, %v2737
        %vm2782 = vcmp.eq.s32.totalorder %v797, %v2740
        %vm2783 = vcmp.eq.s32.totalorder %v798, %v2740
        %vm2784 = vcmp.eq.s32.totalorder %v797, %v2743
        %vm2785 = vcmp.eq.s32.totalorder %v798, %v2743
        %vm2786 = vcmp.eq.s32.totalorder %v797, %v2746
        %vm2787 = vcmp.eq.s32.totalorder %v798, %v2746
        %vm2788 = vcmp.eq.s32.totalorder %v797, %v2749
        %vm2789 = vcmp.eq.s32.totalorder %v798, %v2749
        %vm2790 = vcmp.eq.s32.totalorder %v797, %v2752
        %vm2791 = vcmp.eq.s32.totalorder %v798, %v2752
        %vm2792 = vcmp.eq.s32.totalorder %v797, %v2755
        %vm2793 = vcmp.eq.s32.totalorder %v798, %v2755
        %vm2794 = vcmp.eq.s32.totalorder %v797, %v2758
        %vm2795 = vcmp.eq.s32.totalorder %v798, %v2758
        %vm2796 = vcmp.eq.s32.totalorder %v797, %v2761
        %vm2797 = vcmp.eq.s32.totalorder %v798, %v2761
        %vm2798 = vcmp.eq.s32.totalorder %v797, %v2764
        %vm2799 = vcmp.eq.s32.totalorder %v798, %v2764
        %vm2800 = vcmp.eq.s32.totalorder %v797, %v2767
        %vm2801 = vcmp.eq.s32.totalorder %v798, %v2767
        %vm2802 = vcmp.eq.s32.totalorder %v797, %v2770
        %vm2803 = vcmp.eq.s32.totalorder %v798, %v2770
        %vm2804 = vcmp.eq.s32.totalorder %v797, %v2773
        %vm2805 = vcmp.eq.s32.totalorder %v798, %v2773
        %v2806 = vsel %vm2774, 1, 0
        %v2807 = vsel %vm2775, 1, 0
        %v2808 = vsel %vm2776, 1, 0
        %v2809 = vsel %vm2777, 1, 0
        %v2810 = vsel %vm2778, 1, 0
        %v2811 = vsel %vm2779, 1, 0
        %v2812 = vsel %vm2780, 1, 0
        %v2813 = vsel %vm2781, 1, 0
        %v2814 = vsel %vm2782, 1, 0
        %v2815 = vsel %vm2783, 1, 0
        %v2816 = vsel %vm2784, 1, 0
        %v2817 = vsel %vm2785, 1, 0
        %v2818 = vsel %vm2786, 1, 0
        %v2819 = vsel %vm2787, 1, 0
        %v2820 = vsel %vm2788, 1, 0
        %v2821 = vsel %vm2789, 1, 0
        %v2822 = vsel %vm2790, 1, 0
        %v2823 = vsel %vm2791, 1, 0
        %v2824 = vsel %vm2792, 1, 0
        %v2825 = vsel %vm2793, 1, 0
        %v2826 = vsel %vm2794, 1, 0
        %v2827 = vsel %vm2795, 1, 0
        %v2828 = vsel %vm2796, 1, 0
        %v2829 = vsel %vm2797, 1, 0
        %v2830 = vsel %vm2798, 1, 0
        %v2831 = vsel %vm2799, 1, 0
        %v2832 = vsel %vm2800, 1, 0
        %v2833 = vsel %vm2801, 1, 0
        %v2834 = vsel %vm2802, 1, 0
        %v2835 = vsel %vm2803, 1, 0
        %v2836 = vsel %vm2804, 1, 0
        %v2837 = vsel %vm2805, 1, 0
        %v2838 = vcvt.s32.f32 %v2806
        %v2839 = vcvt.s32.f32 %v2807
        %v2840 = vcvt.s32.f32 %v2808
        %v2841 = vcvt.s32.f32 %v2809
        %v2842 = vcvt.s32.f32 %v2810
        %v2843 = vcvt.s32.f32 %v2811
        %v2844 = vcvt.s32.f32 %v2812
        %v2845 = vcvt.s32.f32 %v2813
        %v2846 = vcvt.s32.f32 %v2814
        %v2847 = vcvt.s32.f32 %v2815
        %v2848 = vcvt.s32.f32 %v2816
        %v2849 = vcvt.s32.f32 %v2817
        %v2850 = vcvt.s32.f32 %v2818
        %v2851 = vcvt.s32.f32 %v2819
        %v2852 = vcvt.s32.f32 %v2820
        %v2853 = vcvt.s32.f32 %v2821
        %v2854 = vcvt.s32.f32 %v2822
        %v2855 = vcvt.s32.f32 %v2823
        %v2856 = vcvt.s32.f32 %v2824
        %v2857 = vcvt.s32.f32 %v2825
        %v2858 = vcvt.s32.f32 %v2826
        %v2859 = vcvt.s32.f32 %v2827
        %v2860 = vcvt.s32.f32 %v2828
        %v2861 = vcvt.s32.f32 %v2829
        %v2862 = vcvt.s32.f32 %v2830
        %v2863 = vcvt.s32.f32 %v2831
        %v2864 = vcvt.s32.f32 %v2832
        %v2865 = vcvt.s32.f32 %v2833
        %v2866 = vcvt.s32.f32 %v2834
        %v2867 = vcvt.s32.f32 %v2835
        %v2868 = vcvt.s32.f32 %v2836
        %v2869 = vcvt.s32.f32 %v2837
        %2871 = vset.pattern.permute.xlu0 0
        %2872 = vperm.xlu0 %2871, %v2646
        %v2873 = vpop.permute.xlu0 %2872
        %2876 = vset.pattern.permute.xlu0 0
        %2877 = vperm.xlu0 %2876, %v2647
        %v2878 = vpop.permute.xlu0 %2877
        %2881 = vset.pattern.permute.xlu0 0
        %2882 = vperm.xlu0 %2881, %v2648
        %v2883 = vpop.permute.xlu0 %2882
        %2886 = vset.pattern.permute.xlu0 0
        %2887 = vperm.xlu0 %2886, %v2649
        %v2888 = vpop.permute.xlu0 %2887
        %2891 = vset.pattern.permute.xlu0 0
        %2892 = vperm.xlu0 %2891, %v2650
        %v2893 = vpop.permute.xlu0 %2892
        %2896 = vset.pattern.permute.xlu0 0
        %2897 = vperm.xlu0 %2896, %v2651
        %v2898 = vpop.permute.xlu0 %2897
        %2901 = vset.pattern.permute.xlu0 0
        %2902 = vperm.xlu0 %2901, %v2652
        %v2903 = vpop.permute.xlu0 %2902
        %2906 = vset.pattern.permute.xlu0 0
        %2907 = vperm.xlu0 %2906, %v2653
        %v2908 = vpop.permute.xlu0 %2907
        %2911 = vset.pattern.permute.xlu0 0
        %2912 = vperm.xlu0 %2911, %v2654
        %v2913 = vpop.permute.xlu0 %2912
        %2916 = vset.pattern.permute.xlu0 0
        %2917 = vperm.xlu0 %2916, %v2655
        %v2918 = vpop.permute.xlu0 %2917
        %2921 = vset.pattern.permute.xlu0 0
        %2922 = vperm.xlu0 %2921, %v2656
        %v2923 = vpop.permute.xlu0 %2922
        %2926 = vset.pattern.permute.xlu0 0
        %2927 = vperm.xlu0 %2926, %v2657
        %v2928 = vpop.permute.xlu0 %2927
        %2931 = vset.pattern.permute.xlu0 0
        %2932 = vperm.xlu0 %2931, %v2658
        %v2933 = vpop.permute.xlu0 %2932
        %2936 = vset.pattern.permute.xlu0 0
        %2937 = vperm.xlu0 %2936, %v2659
        %v2938 = vpop.permute.xlu0 %2937
        %2941 = vset.pattern.permute.xlu0 0
        %2942 = vperm.xlu0 %2941, %v2660
        %v2943 = vpop.permute.xlu0 %2942
        %2946 = vset.pattern.permute.xlu0 0
        %2947 = vperm.xlu0 %2946, %v2661
        %v2948 = vpop.permute.xlu0 %2947
        %v2950 = vmul.f32 %v2873, %v2838
        %v2951 = vmul.f32 %v2873, %v2839
        %v2952 = vmul.f32 %v2878, %v2840
        %v2953 = vmul.f32 %v2878, %v2841
        %v2954 = vmul.f32 %v2883, %v2842
        %v2955 = vmul.f32 %v2883, %v2843
        %v2956 = vmul.f32 %v2888, %v2844
        %v2957 = vmul.f32 %v2888, %v2845
        %v2958 = vmul.f32 %v2893, %v2846
        %v2959 = vmul.f32 %v2893, %v2847
        %v2960 = vmul.f32 %v2898, %v2848
        %v2961 = vmul.f32 %v2898, %v2849
        %v2962 = vmul.f32 %v2903, %v2850
        %v2963 = vmul.f32 %v2903, %v2851
        %v2964 = vmul.f32 %v2908, %v2852
        %v2965 = vmul.f32 %v2908, %v2853
        %v2966 = vmul.f32 %v2913, %v2854
        %v2967 = vmul.f32 %v2913, %v2855
        %v2968 = vmul.f32 %v2918, %v2856
        %v2969 = vmul.f32 %v2918, %v2857
        %v2970 = vmul.f32 %v2923, %v2858
        %v2971 = vmul.f32 %v2923, %v2859
        %v2972 = vmul.f32 %v2928, %v2860
        %v2973 = vmul.f32 %v2928, %v2861
        %v2974 = vmul.f32 %v2933, %v2862
        %v2975 = vmul.f32 %v2933, %v2863
        %v2976 = vmul.f32 %v2938, %v2864
        %v2977 = vmul.f32 %v2938, %v2865
        %v2978 = vmul.f32 %v2943, %v2866
        %v2979 = vmul.f32 %v2943, %v2867
        %v2980 = vmul.f32 %v2948, %v2868
        %v2981 = vmul.f32 %v2948, %v2869
        %v2982 = vadd.f32 %v2566, %v2950
        %v2983 = vadd.f32 %v2567, %v2951
        %v2984 = vadd.f32 %v2568, %v2952
        %v2985 = vadd.f32 %v2569, %v2953
        %v2986 = vadd.f32 %v2570, %v2954
        %v2987 = vadd.f32 %v2571, %v2955
        %v2988 = vadd.f32 %v2572, %v2956
        %v2989 = vadd.f32 %v2573, %v2957
        %v2990 = vadd.f32 %v2574, %v2958
        %v2991 = vadd.f32 %v2575, %v2959
        %v2992 = vadd.f32 %v2576, %v2960
        %v2993 = vadd.f32 %v2577, %v2961
        %v2994 = vadd.f32 %v2578, %v2962
        %v2995 = vadd.f32 %v2579, %v2963
        %v2996 = vadd.f32 %v2580, %v2964
        %v2997 = vadd.f32 %v2581, %v2965
        %v2998 = vadd.f32 %v2582, %v2966
        %v2999 = vadd.f32 %v2583, %v2967
        %v3000 = vadd.f32 %v2584, %v2968
        %v3001 = vadd.f32 %v2585, %v2969
        %v3002 = vadd.f32 %v2586, %v2970
        %v3003 = vadd.f32 %v2587, %v2971
        %v3004 = vadd.f32 %v2588, %v2972
        %v3005 = vadd.f32 %v2589, %v2973
        %v3006 = vadd.f32 %v2590, %v2974
        %v3007 = vadd.f32 %v2591, %v2975
        %v3008 = vadd.f32 %v2592, %v2976
        %v3009 = vadd.f32 %v2593, %v2977
        %v3010 = vadd.f32 %v2594, %v2978
        %v3011 = vadd.f32 %v2595, %v2979
        %v3012 = vadd.f32 %v2596, %v2980
        %v3013 = vadd.f32 %v2597, %v2981
        %v3014 = vmul.f32 %v966, %v2599
        %v3015 = vmul.f32 %v967, %v2601
        %v3016 = vmul.f32 %v968, %v2603
        %v3017 = vmul.f32 %v969, %v2605
        %v3018 = vmul.f32 %v970, %v2607
        %v3019 = vmul.f32 %v971, %v2609
        %v3020 = vmul.f32 %v972, %v2611
        %v3021 = vmul.f32 %v973, %v2613
        %v3022 = vmul.f32 %v974, %v2615
        %v3023 = vmul.f32 %v975, %v2617
        %v3024 = vmul.f32 %v976, %v2619
        %v3025 = vmul.f32 %v977, %v2621
        %v3026 = vmul.f32 %v978, %v2623
        %v3027 = vmul.f32 %v979, %v2625
        %v3028 = vmul.f32 %v980, %v2627
        %v3029 = vmul.f32 %v981, %v2629
        %3030 = vrot.lane.b32.xlu0 %v1047, 1
        %v3031 = vpop.permute.xlu0 %3030
        %3032 = vrot.lane.b32.xlu0 %v1049, 1
        %v3033 = vpop.permute.xlu0 %3032
        %3034 = vrot.lane.b32.xlu0 %v1051, 1
        %v3035 = vpop.permute.xlu0 %3034
        %3036 = vrot.lane.b32.xlu0 %v1053, 1
        %v3037 = vpop.permute.xlu0 %3036
        %3038 = vrot.lane.b32.xlu0 %v1055, 1
        %v3039 = vpop.permute.xlu0 %3038
        %3040 = vrot.lane.b32.xlu0 %v1057, 1
        %v3041 = vpop.permute.xlu0 %3040
        %3042 = vrot.lane.b32.xlu0 %v1059, 1
        %v3043 = vpop.permute.xlu0 %3042
        %3044 = vrot.lane.b32.xlu0 %v1061, 1
        %v3045 = vpop.permute.xlu0 %3044
        %3046 = vrot.lane.b32.xlu0 %v1063, 1
        %v3047 = vpop.permute.xlu0 %3046
        %3048 = vrot.lane.b32.xlu0 %v1065, 1
        %v3049 = vpop.permute.xlu0 %3048
        %3050 = vrot.lane.b32.xlu0 %v1067, 1
        %v3051 = vpop.permute.xlu0 %3050
        %3052 = vrot.lane.b32.xlu0 %v1069, 1
        %v3053 = vpop.permute.xlu0 %3052
        %3054 = vrot.lane.b32.xlu0 %v1071, 1
        %v3055 = vpop.permute.xlu0 %3054
        %3056 = vrot.lane.b32.xlu0 %v1073, 1
        %v3057 = vpop.permute.xlu0 %3056
        %3058 = vrot.lane.b32.xlu0 %v1075, 1
        %v3059 = vpop.permute.xlu0 %3058
        %3060 = vrot.lane.b32.xlu0 %v1077, 1
        %v3061 = vpop.permute.xlu0 %3060
        %v3062 = vadd.s32 %v2662, %v3031
        %v3063 = vadd.s32 %v2663, %v3033
        %v3064 = vadd.s32 %v2664, %v3035
        %v3065 = vadd.s32 %v2665, %v3037
        %v3066 = vadd.s32 %v2666, %v3039
        %v3067 = vadd.s32 %v2667, %v3041
        %v3068 = vadd.s32 %v2668, %v3043
        %v3069 = vadd.s32 %v2669, %v3045
        %v3070 = vadd.s32 %v2670, %v3047
        %v3071 = vadd.s32 %v2671, %v3049
        %v3072 = vadd.s32 %v2672, %v3051
        %v3073 = vadd.s32 %v2673, %v3053
        %v3074 = vadd.s32 %v2674, %v3055
        %v3075 = vadd.s32 %v2675, %v3057
        %v3076 = vadd.s32 %v2676, %v3059
        %v3077 = vadd.s32 %v2677, %v3061
        %3078 = vset.pattern.permute.xlu0 1
        %3079 = vperm.xlu0 %3078, %v3062
        %v3080 = vpop.permute.xlu0 %3079
        %3081 = vset.pattern.permute.xlu0 1
        %3082 = vperm.xlu0 %3081, %v3063
        %v3083 = vpop.permute.xlu0 %3082
        %3084 = vset.pattern.permute.xlu0 1
        %3085 = vperm.xlu0 %3084, %v3064
        %v3086 = vpop.permute.xlu0 %3085
        %3087 = vset.pattern.permute.xlu0 1
        %3088 = vperm.xlu0 %3087, %v3065
        %v3089 = vpop.permute.xlu0 %3088
        %3090 = vset.pattern.permute.xlu0 1
        %3091 = vperm.xlu0 %3090, %v3066
        %v3092 = vpop.permute.xlu0 %3091
        %3093 = vset.pattern.permute.xlu0 1
        %3094 = vperm.xlu0 %3093, %v3067
        %v3095 = vpop.permute.xlu0 %3094
        %3096 = vset.pattern.permute.xlu0 1
        %3097 = vperm.xlu0 %3096, %v3068
        %v3098 = vpop.permute.xlu0 %3097
        %3099 = vset.pattern.permute.xlu0 1
        %3100 = vperm.xlu0 %3099, %v3069
        %v3101 = vpop.permute.xlu0 %3100
        %3102 = vset.pattern.permute.xlu0 1
        %3103 = vperm.xlu0 %3102, %v3070
        %v3104 = vpop.permute.xlu0 %3103
        %3105 = vset.pattern.permute.xlu0 1
        %3106 = vperm.xlu0 %3105, %v3071
        %v3107 = vpop.permute.xlu0 %3106
        %3108 = vset.pattern.permute.xlu0 1
        %3109 = vperm.xlu0 %3108, %v3072
        %v3110 = vpop.permute.xlu0 %3109
        %3111 = vset.pattern.permute.xlu0 1
        %3112 = vperm.xlu0 %3111, %v3073
        %v3113 = vpop.permute.xlu0 %3112
        %3114 = vset.pattern.permute.xlu0 1
        %3115 = vperm.xlu0 %3114, %v3074
        %v3116 = vpop.permute.xlu0 %3115
        %3117 = vset.pattern.permute.xlu0 1
        %3118 = vperm.xlu0 %3117, %v3075
        %v3119 = vpop.permute.xlu0 %3118
        %3120 = vset.pattern.permute.xlu0 1
        %3121 = vperm.xlu0 %3120, %v3076
        %v3122 = vpop.permute.xlu0 %3121
        %3123 = vset.pattern.permute.xlu0 1
        %3124 = vperm.xlu0 %3123, %v3077
        %v3125 = vpop.permute.xlu0 %3124
        %vm3126 = vcmp.eq.s32.totalorder %v797, %v3080
        %vm3127 = vcmp.eq.s32.totalorder %v798, %v3080
        %vm3128 = vcmp.eq.s32.totalorder %v797, %v3083
        %vm3129 = vcmp.eq.s32.totalorder %v798, %v3083
        %vm3130 = vcmp.eq.s32.totalorder %v797, %v3086
        %vm3131 = vcmp.eq.s32.totalorder %v798, %v3086
        %vm3132 = vcmp.eq.s32.totalorder %v797, %v3089
        %vm3133 = vcmp.eq.s32.totalorder %v798, %v3089
        %vm3134 = vcmp.eq.s32.totalorder %v797, %v3092
        %vm3135 = vcmp.eq.s32.totalorder %v798, %v3092
        %vm3136 = vcmp.eq.s32.totalorder %v797, %v3095
        %vm3137 = vcmp.eq.s32.totalorder %v798, %v3095
        %vm3138 = vcmp.eq.s32.totalorder %v797, %v3098
        %vm3139 = vcmp.eq.s32.totalorder %v798, %v3098
        %vm3140 = vcmp.eq.s32.totalorder %v797, %v3101
        %vm3141 = vcmp.eq.s32.totalorder %v798, %v3101
        %vm3142 = vcmp.eq.s32.totalorder %v797, %v3104
        %vm3143 = vcmp.eq.s32.totalorder %v798, %v3104
        %vm3144 = vcmp.eq.s32.totalorder %v797, %v3107
        %vm3145 = vcmp.eq.s32.totalorder %v798, %v3107
        %vm3146 = vcmp.eq.s32.totalorder %v797, %v3110
        %vm3147 = vcmp.eq.s32.totalorder %v798, %v3110
        %vm3148 = vcmp.eq.s32.totalorder %v797, %v3113
        %vm3149 = vcmp.eq.s32.totalorder %v798, %v3113
        %vm3150 = vcmp.eq.s32.totalorder %v797, %v3116
        %vm3151 = vcmp.eq.s32.totalorder %v798, %v3116
        %vm3152 = vcmp.eq.s32.totalorder %v797, %v3119
        %vm3153 = vcmp.eq.s32.totalorder %v798, %v3119
        %vm3154 = vcmp.eq.s32.totalorder %v797, %v3122
        %vm3155 = vcmp.eq.s32.totalorder %v798, %v3122
        %vm3156 = vcmp.eq.s32.totalorder %v797, %v3125
        %vm3157 = vcmp.eq.s32.totalorder %v798, %v3125
        %v3158 = vsel %vm3126, 1, 0
        %v3159 = vsel %vm3127, 1, 0
        %v3160 = vsel %vm3128, 1, 0
        %v3161 = vsel %vm3129, 1, 0
        %v3162 = vsel %vm3130, 1, 0
        %v3163 = vsel %vm3131, 1, 0
        %v3164 = vsel %vm3132, 1, 0
        %v3165 = vsel %vm3133, 1, 0
        %v3166 = vsel %vm3134, 1, 0
        %v3167 = vsel %vm3135, 1, 0
        %v3168 = vsel %vm3136, 1, 0
        %v3169 = vsel %vm3137, 1, 0
        %v3170 = vsel %vm3138, 1, 0
        %v3171 = vsel %vm3139, 1, 0
        %v3172 = vsel %vm3140, 1, 0
        %v3173 = vsel %vm3141, 1, 0
        %v3174 = vsel %vm3142, 1, 0
        %v3175 = vsel %vm3143, 1, 0
        %v3176 = vsel %vm3144, 1, 0
        %v3177 = vsel %vm3145, 1, 0
        %v3178 = vsel %vm3146, 1, 0
        %v3179 = vsel %vm3147, 1, 0
        %v3180 = vsel %vm3148, 1, 0
        %v3181 = vsel %vm3149, 1, 0
        %v3182 = vsel %vm3150, 1, 0
        %v3183 = vsel %vm3151, 1, 0
        %v3184 = vsel %vm3152, 1, 0
        %v3185 = vsel %vm3153, 1, 0
        %v3186 = vsel %vm3154, 1, 0
        %v3187 = vsel %vm3155, 1, 0
        %v3188 = vsel %vm3156, 1, 0
        %v3189 = vsel %vm3157, 1, 0
        %v3190 = vcvt.s32.f32 %v3158
        %v3191 = vcvt.s32.f32 %v3159
        %v3192 = vcvt.s32.f32 %v3160
        %v3193 = vcvt.s32.f32 %v3161
        %v3194 = vcvt.s32.f32 %v3162
        %v3195 = vcvt.s32.f32 %v3163
        %v3196 = vcvt.s32.f32 %v3164
        %v3197 = vcvt.s32.f32 %v3165
        %v3198 = vcvt.s32.f32 %v3166
        %v3199 = vcvt.s32.f32 %v3167
        %v3200 = vcvt.s32.f32 %v3168
        %v3201 = vcvt.s32.f32 %v3169
        %v3202 = vcvt.s32.f32 %v3170
        %v3203 = vcvt.s32.f32 %v3171
        %v3204 = vcvt.s32.f32 %v3172
        %v3205 = vcvt.s32.f32 %v3173
        %v3206 = vcvt.s32.f32 %v3174
        %v3207 = vcvt.s32.f32 %v3175
        %v3208 = vcvt.s32.f32 %v3176
        %v3209 = vcvt.s32.f32 %v3177
        %v3210 = vcvt.s32.f32 %v3178
        %v3211 = vcvt.s32.f32 %v3179
        %v3212 = vcvt.s32.f32 %v3180
        %v3213 = vcvt.s32.f32 %v3181
        %v3214 = vcvt.s32.f32 %v3182
        %v3215 = vcvt.s32.f32 %v3183
        %v3216 = vcvt.s32.f32 %v3184
        %v3217 = vcvt.s32.f32 %v3185
        %v3218 = vcvt.s32.f32 %v3186
        %v3219 = vcvt.s32.f32 %v3187
        %v3220 = vcvt.s32.f32 %v3188
        %v3221 = vcvt.s32.f32 %v3189
        %3223 = vset.pattern.permute.xlu0 0
        %3224 = vperm.xlu0 %3223, %v3014
        %v3225 = vpop.permute.xlu0 %3224
        %3228 = vset.pattern.permute.xlu0 0
        %3229 = vperm.xlu0 %3228, %v3015
        %v3230 = vpop.permute.xlu0 %3229
        %3233 = vset.pattern.permute.xlu0 0
        %3234 = vperm.xlu0 %3233, %v3016
        %v3235 = vpop.permute.xlu0 %3234
        %3238 = vset.pattern.permute.xlu0 0
        %3239 = vperm.xlu0 %3238, %v3017
        %v3240 = vpop.permute.xlu0 %3239
        %3243 = vset.pattern.permute.xlu0 0
        %3244 = vperm.xlu0 %3243, %v3018
        %v3245 = vpop.permute.xlu0 %3244
        %3248 = vset.pattern.permute.xlu0 0
        %3249 = vperm.xlu0 %3248, %v3019
        %v3250 = vpop.permute.xlu0 %3249
        %3253 = vset.pattern.permute.xlu0 0
        %3254 = vperm.xlu0 %3253, %v3020
        %v3255 = vpop.permute.xlu0 %3254
        %3258 = vset.pattern.permute.xlu0 0
        %3259 = vperm.xlu0 %3258, %v3021
        %v3260 = vpop.permute.xlu0 %3259
        %3263 = vset.pattern.permute.xlu0 0
        %3264 = vperm.xlu0 %3263, %v3022
        %v3265 = vpop.permute.xlu0 %3264
        %3268 = vset.pattern.permute.xlu0 0
        %3269 = vperm.xlu0 %3268, %v3023
        %v3270 = vpop.permute.xlu0 %3269
        %3273 = vset.pattern.permute.xlu0 0
        %3274 = vperm.xlu0 %3273, %v3024
        %v3275 = vpop.permute.xlu0 %3274
        %3278 = vset.pattern.permute.xlu0 0
        %3279 = vperm.xlu0 %3278, %v3025
        %v3280 = vpop.permute.xlu0 %3279
        %3283 = vset.pattern.permute.xlu0 0
        %3284 = vperm.xlu0 %3283, %v3026
        %v3285 = vpop.permute.xlu0 %3284
        %3288 = vset.pattern.permute.xlu0 0
        %3289 = vperm.xlu0 %3288, %v3027
        %v3290 = vpop.permute.xlu0 %3289
        %3293 = vset.pattern.permute.xlu0 0
        %3294 = vperm.xlu0 %3293, %v3028
        %v3295 = vpop.permute.xlu0 %3294
        %3298 = vset.pattern.permute.xlu0 0
        %3299 = vperm.xlu0 %3298, %v3029
        %v3300 = vpop.permute.xlu0 %3299
        %v3302 = vmul.f32 %v3225, %v3190
        %v3303 = vmul.f32 %v3225, %v3191
        %v3304 = vmul.f32 %v3230, %v3192
        %v3305 = vmul.f32 %v3230, %v3193
        %v3306 = vmul.f32 %v3235, %v3194
        %v3307 = vmul.f32 %v3235, %v3195
        %v3308 = vmul.f32 %v3240, %v3196
        %v3309 = vmul.f32 %v3240, %v3197
        %v3310 = vmul.f32 %v3245, %v3198
        %v3311 = vmul.f32 %v3245, %v3199
        %v3312 = vmul.f32 %v3250, %v3200
        %v3313 = vmul.f32 %v3250, %v3201
        %v3314 = vmul.f32 %v3255, %v3202
        %v3315 = vmul.f32 %v3255, %v3203
        %v3316 = vmul.f32 %v3260, %v3204
        %v3317 = vmul.f32 %v3260, %v3205
        %v3318 = vmul.f32 %v3265, %v3206
        %v3319 = vmul.f32 %v3265, %v3207
        %v3320 = vmul.f32 %v3270, %v3208
        %v3321 = vmul.f32 %v3270, %v3209
        %v3322 = vmul.f32 %v3275, %v3210
        %v3323 = vmul.f32 %v3275, %v3211
        %v3324 = vmul.f32 %v3280, %v3212
        %v3325 = vmul.f32 %v3280, %v3213
        %v3326 = vmul.f32 %v3285, %v3214
        %v3327 = vmul.f32 %v3285, %v3215
        %v3328 = vmul.f32 %v3290, %v3216
        %v3329 = vmul.f32 %v3290, %v3217
        %v3330 = vmul.f32 %v3295, %v3218
        %v3331 = vmul.f32 %v3295, %v3219
        %v3332 = vmul.f32 %v3300, %v3220
        %v3333 = vmul.f32 %v3300, %v3221
        %v3334 = vadd.f32 %v2982, %v3302
        %v3335 = vadd.f32 %v2983, %v3303
        %v3336 = vadd.f32 %v2984, %v3304
        %v3337 = vadd.f32 %v2985, %v3305
        %v3338 = vadd.f32 %v2986, %v3306
        %v3339 = vadd.f32 %v2987, %v3307
        %v3340 = vadd.f32 %v2988, %v3308
        %v3341 = vadd.f32 %v2989, %v3309
        %v3342 = vadd.f32 %v2990, %v3310
        %v3343 = vadd.f32 %v2991, %v3311
        %v3344 = vadd.f32 %v2992, %v3312
        %v3345 = vadd.f32 %v2993, %v3313
        %v3346 = vadd.f32 %v2994, %v3314
        %v3347 = vadd.f32 %v2995, %v3315
        %v3348 = vadd.f32 %v2996, %v3316
        %v3349 = vadd.f32 %v2997, %v3317
        %v3350 = vadd.f32 %v2998, %v3318
        %v3351 = vadd.f32 %v2999, %v3319
        %v3352 = vadd.f32 %v3000, %v3320
        %v3353 = vadd.f32 %v3001, %v3321
        %v3354 = vadd.f32 %v3002, %v3322
        %v3355 = vadd.f32 %v3003, %v3323
        %v3356 = vadd.f32 %v3004, %v3324
        %v3357 = vadd.f32 %v3005, %v3325
        %v3358 = vadd.f32 %v3006, %v3326
        %v3359 = vadd.f32 %v3007, %v3327
        %v3360 = vadd.f32 %v3008, %v3328
        %v3361 = vadd.f32 %v3009, %v3329
        %v3362 = vadd.f32 %v3010, %v3330
        %v3363 = vadd.f32 %v3011, %v3331
        %v3364 = vadd.f32 %v3012, %v3332
        %v3365 = vadd.f32 %v3013, %v3333
        %3366 = vrot.lane.b32.xlu0 %v966, 127
        %v3367 = vpop.permute.xlu0 %3366
        %3368 = vrot.lane.b32.xlu0 %v967, 127
        %v3369 = vpop.permute.xlu0 %3368
        %3370 = vrot.lane.b32.xlu0 %v968, 127
        %v3371 = vpop.permute.xlu0 %3370
        %3372 = vrot.lane.b32.xlu0 %v969, 127
        %v3373 = vpop.permute.xlu0 %3372
        %3374 = vrot.lane.b32.xlu0 %v970, 127
        %v3375 = vpop.permute.xlu0 %3374
        %3376 = vrot.lane.b32.xlu0 %v971, 127
        %v3377 = vpop.permute.xlu0 %3376
        %3378 = vrot.lane.b32.xlu0 %v972, 127
        %v3379 = vpop.permute.xlu0 %3378
        %3380 = vrot.lane.b32.xlu0 %v973, 127
        %v3381 = vpop.permute.xlu0 %3380
        %3382 = vrot.lane.b32.xlu0 %v974, 127
        %v3383 = vpop.permute.xlu0 %3382
        %3384 = vrot.lane.b32.xlu0 %v975, 127
        %v3385 = vpop.permute.xlu0 %3384
        %3386 = vrot.lane.b32.xlu0 %v976, 127
        %v3387 = vpop.permute.xlu0 %3386
        %3388 = vrot.lane.b32.xlu0 %v977, 127
        %v3389 = vpop.permute.xlu0 %3388
        %3390 = vrot.lane.b32.xlu0 %v978, 127
        %v3391 = vpop.permute.xlu0 %3390
        %3392 = vrot.lane.b32.xlu0 %v979, 127
        %v3393 = vpop.permute.xlu0 %3392
        %3394 = vrot.lane.b32.xlu0 %v980, 127
        %v3395 = vpop.permute.xlu0 %3394
        %3396 = vrot.lane.b32.xlu0 %v981, 127
        %v3397 = vpop.permute.xlu0 %3396
        %v3414 = vmul.f32 %v1078, %v3367
        %v3415 = vmul.f32 %v1079, %v3369
        %v3416 = vmul.f32 %v1080, %v3371
        %v3417 = vmul.f32 %v1081, %v3373
        %v3418 = vmul.f32 %v1082, %v3375
        %v3419 = vmul.f32 %v1083, %v3377
        %v3420 = vmul.f32 %v1084, %v3379
        %v3421 = vmul.f32 %v1085, %v3381
        %v3422 = vmul.f32 %v1086, %v3383
        %v3423 = vmul.f32 %v1087, %v3385
        %v3424 = vmul.f32 %v1088, %v3387
        %v3425 = vmul.f32 %v1089, %v3389
        %v3426 = vmul.f32 %v1090, %v3391
        %v3427 = vmul.f32 %v1091, %v3393
        %v3428 = vmul.f32 %v1092, %v3395
        %v3429 = vmul.f32 %v1093, %v3397
        %v3430 = vadd.s32 %v1958, 64
        %v3431 = vadd.s32 %v1959, 64
        %v3432 = vadd.s32 %v1960, 64
        %v3433 = vadd.s32 %v1961, 64
        %v3434 = vadd.s32 %v1962, 64
        %v3435 = vadd.s32 %v1963, 64
        %v3436 = vadd.s32 %v1964, 64
        %v3437 = vadd.s32 %v1965, 64
        %v3438 = vadd.s32 %v1966, 64
        %v3439 = vadd.s32 %v1967, 64
        %v3440 = vadd.s32 %v1968, 64
        %v3441 = vadd.s32 %v1969, 64
        %v3442 = vadd.s32 %v1970, 64
        %v3443 = vadd.s32 %v1971, 64
        %v3444 = vadd.s32 %v1972, 64
        %v3445 = vadd.s32 %v1973, 64
        %v3446 = vadd.s32 %v3430, %v2679
        %v3447 = vadd.s32 %v3431, %v2681
        %v3448 = vadd.s32 %v3432, %v2683
        %v3449 = vadd.s32 %v3433, %v2685
        %v3450 = vadd.s32 %v3434, %v2687
        %v3451 = vadd.s32 %v3435, %v2689
        %v3452 = vadd.s32 %v3436, %v2691
        %v3453 = vadd.s32 %v3437, %v2693
        %v3454 = vadd.s32 %v3438, %v2695
        %v3455 = vadd.s32 %v3439, %v2697
        %v3456 = vadd.s32 %v3440, %v2699
        %v3457 = vadd.s32 %v3441, %v2701
        %v3458 = vadd.s32 %v3442, %v2703
        %v3459 = vadd.s32 %v3443, %v2705
        %v3460 = vadd.s32 %v3444, %v2707
        %v3461 = vadd.s32 %v3445, %v2709
        %3462 = vset.pattern.permute.xlu0 1
        %3463 = vperm.xlu0 %3462, %v3446
        %v3464 = vpop.permute.xlu0 %3463
        %3465 = vset.pattern.permute.xlu0 1
        %3466 = vperm.xlu0 %3465, %v3447
        %v3467 = vpop.permute.xlu0 %3466
        %3468 = vset.pattern.permute.xlu0 1
        %3469 = vperm.xlu0 %3468, %v3448
        %v3470 = vpop.permute.xlu0 %3469
        %3471 = vset.pattern.permute.xlu0 1
        %3472 = vperm.xlu0 %3471, %v3449
        %v3473 = vpop.permute.xlu0 %3472
        %3474 = vset.pattern.permute.xlu0 1
        %3475 = vperm.xlu0 %3474, %v3450
        %v3476 = vpop.permute.xlu0 %3475
        %3477 = vset.pattern.permute.xlu0 1
        %3478 = vperm.xlu0 %3477, %v3451
        %v3479 = vpop.permute.xlu0 %3478
        %3480 = vset.pattern.permute.xlu0 1
        %3481 = vperm.xlu0 %3480, %v3452
        %v3482 = vpop.permute.xlu0 %3481
        %3483 = vset.pattern.permute.xlu0 1
        %3484 = vperm.xlu0 %3483, %v3453
        %v3485 = vpop.permute.xlu0 %3484
        %3486 = vset.pattern.permute.xlu0 1
        %3487 = vperm.xlu0 %3486, %v3454
        %v3488 = vpop.permute.xlu0 %3487
        %3489 = vset.pattern.permute.xlu0 1
        %3490 = vperm.xlu0 %3489, %v3455
        %v3491 = vpop.permute.xlu0 %3490
        %3492 = vset.pattern.permute.xlu0 1
        %3493 = vperm.xlu0 %3492, %v3456
        %v3494 = vpop.permute.xlu0 %3493
        %3495 = vset.pattern.permute.xlu0 1
        %3496 = vperm.xlu0 %3495, %v3457
        %v3497 = vpop.permute.xlu0 %3496
        %3498 = vset.pattern.permute.xlu0 1
        %3499 = vperm.xlu0 %3498, %v3458
        %v3500 = vpop.permute.xlu0 %3499
        %3501 = vset.pattern.permute.xlu0 1
        %3502 = vperm.xlu0 %3501, %v3459
        %v3503 = vpop.permute.xlu0 %3502
        %3504 = vset.pattern.permute.xlu0 1
        %3505 = vperm.xlu0 %3504, %v3460
        %v3506 = vpop.permute.xlu0 %3505
        %3507 = vset.pattern.permute.xlu0 1
        %3508 = vperm.xlu0 %3507, %v3461
        %v3509 = vpop.permute.xlu0 %3508
        %vm3510 = vcmp.eq.s32.totalorder %v797, %v3464
        %vm3511 = vcmp.eq.s32.totalorder %v798, %v3464
        %vm3512 = vcmp.eq.s32.totalorder %v797, %v3467
        %vm3513 = vcmp.eq.s32.totalorder %v798, %v3467
        %vm3514 = vcmp.eq.s32.totalorder %v797, %v3470
        %vm3515 = vcmp.eq.s32.totalorder %v798, %v3470
        %vm3516 = vcmp.eq.s32.totalorder %v797, %v3473
        %vm3517 = vcmp.eq.s32.totalorder %v798, %v3473
        %vm3518 = vcmp.eq.s32.totalorder %v797, %v3476
        %vm3519 = vcmp.eq.s32.totalorder %v798, %v3476
        %vm3520 = vcmp.eq.s32.totalorder %v797, %v3479
        %vm3521 = vcmp.eq.s32.totalorder %v798, %v3479
        %vm3522 = vcmp.eq.s32.totalorder %v797, %v3482
        %vm3523 = vcmp.eq.s32.totalorder %v798, %v3482
        %vm3524 = vcmp.eq.s32.totalorder %v797, %v3485
        %vm3525 = vcmp.eq.s32.totalorder %v798, %v3485
        %vm3526 = vcmp.eq.s32.totalorder %v797, %v3488
        %vm3527 = vcmp.eq.s32.totalorder %v798, %v3488
        %vm3528 = vcmp.eq.s32.totalorder %v797, %v3491
        %vm3529 = vcmp.eq.s32.totalorder %v798, %v3491
        %vm3530 = vcmp.eq.s32.totalorder %v797, %v3494
        %vm3531 = vcmp.eq.s32.totalorder %v798, %v3494
        %vm3532 = vcmp.eq.s32.totalorder %v797, %v3497
        %vm3533 = vcmp.eq.s32.totalorder %v798, %v3497
        %vm3534 = vcmp.eq.s32.totalorder %v797, %v3500
        %vm3535 = vcmp.eq.s32.totalorder %v798, %v3500
        %vm3536 = vcmp.eq.s32.totalorder %v797, %v3503
        %vm3537 = vcmp.eq.s32.totalorder %v798, %v3503
        %vm3538 = vcmp.eq.s32.totalorder %v797, %v3506
        %vm3539 = vcmp.eq.s32.totalorder %v798, %v3506
        %vm3540 = vcmp.eq.s32.totalorder %v797, %v3509
        %vm3541 = vcmp.eq.s32.totalorder %v798, %v3509
        %v3542 = vsel %vm3510, 1, 0
        %v3543 = vsel %vm3511, 1, 0
        %v3544 = vsel %vm3512, 1, 0
        %v3545 = vsel %vm3513, 1, 0
        %v3546 = vsel %vm3514, 1, 0
        %v3547 = vsel %vm3515, 1, 0
        %v3548 = vsel %vm3516, 1, 0
        %v3549 = vsel %vm3517, 1, 0
        %v3550 = vsel %vm3518, 1, 0
        %v3551 = vsel %vm3519, 1, 0
        %v3552 = vsel %vm3520, 1, 0
        %v3553 = vsel %vm3521, 1, 0
        %v3554 = vsel %vm3522, 1, 0
        %v3555 = vsel %vm3523, 1, 0
        %v3556 = vsel %vm3524, 1, 0
        %v3557 = vsel %vm3525, 1, 0
        %v3558 = vsel %vm3526, 1, 0
        %v3559 = vsel %vm3527, 1, 0
        %v3560 = vsel %vm3528, 1, 0
        %v3561 = vsel %vm3529, 1, 0
        %v3562 = vsel %vm3530, 1, 0
        %v3563 = vsel %vm3531, 1, 0
        %v3564 = vsel %vm3532, 1, 0
        %v3565 = vsel %vm3533, 1, 0
        %v3566 = vsel %vm3534, 1, 0
        %v3567 = vsel %vm3535, 1, 0
        %v3568 = vsel %vm3536, 1, 0
        %v3569 = vsel %vm3537, 1, 0
        %v3570 = vsel %vm3538, 1, 0
        %v3571 = vsel %vm3539, 1, 0
        %v3572 = vsel %vm3540, 1, 0
        %v3573 = vsel %vm3541, 1, 0
        %v3574 = vcvt.s32.f32 %v3542
        %v3575 = vcvt.s32.f32 %v3543
        %v3576 = vcvt.s32.f32 %v3544
        %v3577 = vcvt.s32.f32 %v3545
        %v3578 = vcvt.s32.f32 %v3546
        %v3579 = vcvt.s32.f32 %v3547
        %v3580 = vcvt.s32.f32 %v3548
        %v3581 = vcvt.s32.f32 %v3549
        %v3582 = vcvt.s32.f32 %v3550
        %v3583 = vcvt.s32.f32 %v3551
        %v3584 = vcvt.s32.f32 %v3552
        %v3585 = vcvt.s32.f32 %v3553
        %v3586 = vcvt.s32.f32 %v3554
        %v3587 = vcvt.s32.f32 %v3555
        %v3588 = vcvt.s32.f32 %v3556
        %v3589 = vcvt.s32.f32 %v3557
        %v3590 = vcvt.s32.f32 %v3558
        %v3591 = vcvt.s32.f32 %v3559
        %v3592 = vcvt.s32.f32 %v3560
        %v3593 = vcvt.s32.f32 %v3561
        %v3594 = vcvt.s32.f32 %v3562
        %v3595 = vcvt.s32.f32 %v3563
        %v3596 = vcvt.s32.f32 %v3564
        %v3597 = vcvt.s32.f32 %v3565
        %v3598 = vcvt.s32.f32 %v3566
        %v3599 = vcvt.s32.f32 %v3567
        %v3600 = vcvt.s32.f32 %v3568
        %v3601 = vcvt.s32.f32 %v3569
        %v3602 = vcvt.s32.f32 %v3570
        %v3603 = vcvt.s32.f32 %v3571
        %v3604 = vcvt.s32.f32 %v3572
        %v3605 = vcvt.s32.f32 %v3573
        %3607 = vset.pattern.permute.xlu0 0
        %3608 = vperm.xlu0 %3607, %v3414
        %v3609 = vpop.permute.xlu0 %3608
        %3612 = vset.pattern.permute.xlu0 0
        %3613 = vperm.xlu0 %3612, %v3415
        %v3614 = vpop.permute.xlu0 %3613
        %3617 = vset.pattern.permute.xlu0 0
        %3618 = vperm.xlu0 %3617, %v3416
        %v3619 = vpop.permute.xlu0 %3618
        %3622 = vset.pattern.permute.xlu0 0
        %3623 = vperm.xlu0 %3622, %v3417
        %v3624 = vpop.permute.xlu0 %3623
        %3627 = vset.pattern.permute.xlu0 0
        %3628 = vperm.xlu0 %3627, %v3418
        %v3629 = vpop.permute.xlu0 %3628
        %3632 = vset.pattern.permute.xlu0 0
        %3633 = vperm.xlu0 %3632, %v3419
        %v3634 = vpop.permute.xlu0 %3633
        %3637 = vset.pattern.permute.xlu0 0
        %3638 = vperm.xlu0 %3637, %v3420
        %v3639 = vpop.permute.xlu0 %3638
        %3642 = vset.pattern.permute.xlu0 0
        %3643 = vperm.xlu0 %3642, %v3421
        %v3644 = vpop.permute.xlu0 %3643
        %3647 = vset.pattern.permute.xlu0 0
        %3648 = vperm.xlu0 %3647, %v3422
        %v3649 = vpop.permute.xlu0 %3648
        %3652 = vset.pattern.permute.xlu0 0
        %3653 = vperm.xlu0 %3652, %v3423
        %v3654 = vpop.permute.xlu0 %3653
        %3657 = vset.pattern.permute.xlu0 0
        %3658 = vperm.xlu0 %3657, %v3424
        %v3659 = vpop.permute.xlu0 %3658
        %3662 = vset.pattern.permute.xlu0 0
        %3663 = vperm.xlu0 %3662, %v3425
        %v3664 = vpop.permute.xlu0 %3663
        %3667 = vset.pattern.permute.xlu0 0
        %3668 = vperm.xlu0 %3667, %v3426
        %v3669 = vpop.permute.xlu0 %3668
        %3672 = vset.pattern.permute.xlu0 0
        %3673 = vperm.xlu0 %3672, %v3427
        %v3674 = vpop.permute.xlu0 %3673
        %3677 = vset.pattern.permute.xlu0 0
        %3678 = vperm.xlu0 %3677, %v3428
        %v3679 = vpop.permute.xlu0 %3678
        %3682 = vset.pattern.permute.xlu0 0
        %3683 = vperm.xlu0 %3682, %v3429
        %v3684 = vpop.permute.xlu0 %3683
        %v3686 = vmul.f32 %v3609, %v3574
        %v3687 = vmul.f32 %v3609, %v3575
        %v3688 = vmul.f32 %v3614, %v3576
        %v3689 = vmul.f32 %v3614, %v3577
        %v3690 = vmul.f32 %v3619, %v3578
        %v3691 = vmul.f32 %v3619, %v3579
        %v3692 = vmul.f32 %v3624, %v3580
        %v3693 = vmul.f32 %v3624, %v3581
        %v3694 = vmul.f32 %v3629, %v3582
        %v3695 = vmul.f32 %v3629, %v3583
        %v3696 = vmul.f32 %v3634, %v3584
        %v3697 = vmul.f32 %v3634, %v3585
        %v3698 = vmul.f32 %v3639, %v3586
        %v3699 = vmul.f32 %v3639, %v3587
        %v3700 = vmul.f32 %v3644, %v3588
        %v3701 = vmul.f32 %v3644, %v3589
        %v3702 = vmul.f32 %v3649, %v3590
        %v3703 = vmul.f32 %v3649, %v3591
        %v3704 = vmul.f32 %v3654, %v3592
        %v3705 = vmul.f32 %v3654, %v3593
        %v3706 = vmul.f32 %v3659, %v3594
        %v3707 = vmul.f32 %v3659, %v3595
        %v3708 = vmul.f32 %v3664, %v3596
        %v3709 = vmul.f32 %v3664, %v3597
        %v3710 = vmul.f32 %v3669, %v3598
        %v3711 = vmul.f32 %v3669, %v3599
        %v3712 = vmul.f32 %v3674, %v3600
        %v3713 = vmul.f32 %v3674, %v3601
        %v3714 = vmul.f32 %v3679, %v3602
        %v3715 = vmul.f32 %v3679, %v3603
        %v3716 = vmul.f32 %v3684, %v3604
        %v3717 = vmul.f32 %v3684, %v3605
        %v3718 = vadd.f32 %v3334, %v3686
        %v3719 = vadd.f32 %v3335, %v3687
        %v3720 = vadd.f32 %v3336, %v3688
        %v3721 = vadd.f32 %v3337, %v3689
        %v3722 = vadd.f32 %v3338, %v3690
        %v3723 = vadd.f32 %v3339, %v3691
        %v3724 = vadd.f32 %v3340, %v3692
        %v3725 = vadd.f32 %v3341, %v3693
        %v3726 = vadd.f32 %v3342, %v3694
        %v3727 = vadd.f32 %v3343, %v3695
        %v3728 = vadd.f32 %v3344, %v3696
        %v3729 = vadd.f32 %v3345, %v3697
        %v3730 = vadd.f32 %v3346, %v3698
        %v3731 = vadd.f32 %v3347, %v3699
        %v3732 = vadd.f32 %v3348, %v3700
        %v3733 = vadd.f32 %v3349, %v3701
        %v3734 = vadd.f32 %v3350, %v3702
        %v3735 = vadd.f32 %v3351, %v3703
        %v3736 = vadd.f32 %v3352, %v3704
        %v3737 = vadd.f32 %v3353, %v3705
        %v3738 = vadd.f32 %v3354, %v3706
        %v3739 = vadd.f32 %v3355, %v3707
        %v3740 = vadd.f32 %v3356, %v3708
        %v3741 = vadd.f32 %v3357, %v3709
        %v3742 = vadd.f32 %v3358, %v3710
        %v3743 = vadd.f32 %v3359, %v3711
        %v3744 = vadd.f32 %v3360, %v3712
        %v3745 = vadd.f32 %v3361, %v3713
        %v3746 = vadd.f32 %v3362, %v3714
        %v3747 = vadd.f32 %v3363, %v3715
        %v3748 = vadd.f32 %v3364, %v3716
        %v3749 = vadd.f32 %v3365, %v3717
        %v3750 = vmul.f32 %v966, %v3367
        %v3751 = vmul.f32 %v967, %v3369
        %v3752 = vmul.f32 %v968, %v3371
        %v3753 = vmul.f32 %v969, %v3373
        %v3754 = vmul.f32 %v970, %v3375
        %v3755 = vmul.f32 %v971, %v3377
        %v3756 = vmul.f32 %v972, %v3379
        %v3757 = vmul.f32 %v973, %v3381
        %v3758 = vmul.f32 %v974, %v3383
        %v3759 = vmul.f32 %v975, %v3385
        %v3760 = vmul.f32 %v976, %v3387
        %v3761 = vmul.f32 %v977, %v3389
        %v3762 = vmul.f32 %v978, %v3391
        %v3763 = vmul.f32 %v979, %v3393
        %v3764 = vmul.f32 %v980, %v3395
        %v3765 = vmul.f32 %v981, %v3397
        %v3766 = vadd.s32 %v3430, %v3031
        %v3767 = vadd.s32 %v3431, %v3033
        %v3768 = vadd.s32 %v3432, %v3035
        %v3769 = vadd.s32 %v3433, %v3037
        %v3770 = vadd.s32 %v3434, %v3039
        %v3771 = vadd.s32 %v3435, %v3041
        %v3772 = vadd.s32 %v3436, %v3043
        %v3773 = vadd.s32 %v3437, %v3045
        %v3774 = vadd.s32 %v3438, %v3047
        %v3775 = vadd.s32 %v3439, %v3049
        %v3776 = vadd.s32 %v3440, %v3051
        %v3777 = vadd.s32 %v3441, %v3053
        %v3778 = vadd.s32 %v3442, %v3055
        %v3779 = vadd.s32 %v3443, %v3057
        %v3780 = vadd.s32 %v3444, %v3059
        %v3781 = vadd.s32 %v3445, %v3061
        %3782 = vset.pattern.permute.xlu0 1
        %3783 = vperm.xlu0 %3782, %v3766
        %v3784 = vpop.permute.xlu0 %3783
        %3785 = vset.pattern.permute.xlu0 1
        %3786 = vperm.xlu0 %3785, %v3767
        %v3787 = vpop.permute.xlu0 %3786
        %3788 = vset.pattern.permute.xlu0 1
        %3789 = vperm.xlu0 %3788, %v3768
        %v3790 = vpop.permute.xlu0 %3789
        %3791 = vset.pattern.permute.xlu0 1
        %3792 = vperm.xlu0 %3791, %v3769
        %v3793 = vpop.permute.xlu0 %3792
        %3794 = vset.pattern.permute.xlu0 1
        %3795 = vperm.xlu0 %3794, %v3770
        %v3796 = vpop.permute.xlu0 %3795
        %3797 = vset.pattern.permute.xlu0 1
        %3798 = vperm.xlu0 %3797, %v3771
        %v3799 = vpop.permute.xlu0 %3798
        %3800 = vset.pattern.permute.xlu0 1
        %3801 = vperm.xlu0 %3800, %v3772
        %v3802 = vpop.permute.xlu0 %3801
        %3803 = vset.pattern.permute.xlu0 1
        %3804 = vperm.xlu0 %3803, %v3773
        %v3805 = vpop.permute.xlu0 %3804
        %3806 = vset.pattern.permute.xlu0 1
        %3807 = vperm.xlu0 %3806, %v3774
        %v3808 = vpop.permute.xlu0 %3807
        %3809 = vset.pattern.permute.xlu0 1
        %3810 = vperm.xlu0 %3809, %v3775
        %v3811 = vpop.permute.xlu0 %3810
        %3812 = vset.pattern.permute.xlu0 1
        %3813 = vperm.xlu0 %3812, %v3776
        %v3814 = vpop.permute.xlu0 %3813
        %3815 = vset.pattern.permute.xlu0 1
        %3816 = vperm.xlu0 %3815, %v3777
        %v3817 = vpop.permute.xlu0 %3816
        %3818 = vset.pattern.permute.xlu0 1
        %3819 = vperm.xlu0 %3818, %v3778
        %v3820 = vpop.permute.xlu0 %3819
        %3821 = vset.pattern.permute.xlu0 1
        %3822 = vperm.xlu0 %3821, %v3779
        %v3823 = vpop.permute.xlu0 %3822
        %3824 = vset.pattern.permute.xlu0 1
        %3825 = vperm.xlu0 %3824, %v3780
        %v3826 = vpop.permute.xlu0 %3825
        %3827 = vset.pattern.permute.xlu0 1
        %3828 = vperm.xlu0 %3827, %v3781
        %v3829 = vpop.permute.xlu0 %3828
        %vm3830 = vcmp.eq.s32.totalorder %v797, %v3784
        %vm3831 = vcmp.eq.s32.totalorder %v798, %v3784
        %vm3832 = vcmp.eq.s32.totalorder %v797, %v3787
        %vm3833 = vcmp.eq.s32.totalorder %v798, %v3787
        %vm3834 = vcmp.eq.s32.totalorder %v797, %v3790
        %vm3835 = vcmp.eq.s32.totalorder %v798, %v3790
        %vm3836 = vcmp.eq.s32.totalorder %v797, %v3793
        %vm3837 = vcmp.eq.s32.totalorder %v798, %v3793
        %vm3838 = vcmp.eq.s32.totalorder %v797, %v3796
        %vm3839 = vcmp.eq.s32.totalorder %v798, %v3796
        %vm3840 = vcmp.eq.s32.totalorder %v797, %v3799
        %vm3841 = vcmp.eq.s32.totalorder %v798, %v3799
        %vm3842 = vcmp.eq.s32.totalorder %v797, %v3802
        %vm3843 = vcmp.eq.s32.totalorder %v798, %v3802
        %vm3844 = vcmp.eq.s32.totalorder %v797, %v3805
        %vm3845 = vcmp.eq.s32.totalorder %v798, %v3805
        %vm3846 = vcmp.eq.s32.totalorder %v797, %v3808
        %vm3847 = vcmp.eq.s32.totalorder %v798, %v3808
        %vm3848 = vcmp.eq.s32.totalorder %v797, %v3811
        %vm3849 = vcmp.eq.s32.totalorder %v798, %v3811
        %vm3850 = vcmp.eq.s32.totalorder %v797, %v3814
        %vm3851 = vcmp.eq.s32.totalorder %v798, %v3814
        %vm3852 = vcmp.eq.s32.totalorder %v797, %v3817
        %vm3853 = vcmp.eq.s32.totalorder %v798, %v3817
        %vm3854 = vcmp.eq.s32.totalorder %v797, %v3820
        %vm3855 = vcmp.eq.s32.totalorder %v798, %v3820
        %vm3856 = vcmp.eq.s32.totalorder %v797, %v3823
        %vm3857 = vcmp.eq.s32.totalorder %v798, %v3823
        %vm3858 = vcmp.eq.s32.totalorder %v797, %v3826
        %vm3859 = vcmp.eq.s32.totalorder %v798, %v3826
        %vm3860 = vcmp.eq.s32.totalorder %v797, %v3829
        %vm3861 = vcmp.eq.s32.totalorder %v798, %v3829
        %v3862 = vsel %vm3830, 1, 0
        %v3863 = vsel %vm3831, 1, 0
        %v3864 = vsel %vm3832, 1, 0
        %v3865 = vsel %vm3833, 1, 0
        %v3866 = vsel %vm3834, 1, 0
        %v3867 = vsel %vm3835, 1, 0
        %v3868 = vsel %vm3836, 1, 0
        %v3869 = vsel %vm3837, 1, 0
        %v3870 = vsel %vm3838, 1, 0
        %v3871 = vsel %vm3839, 1, 0
        %v3872 = vsel %vm3840, 1, 0
        %v3873 = vsel %vm3841, 1, 0
        %v3874 = vsel %vm3842, 1, 0
        %v3875 = vsel %vm3843, 1, 0
        %v3876 = vsel %vm3844, 1, 0
        %v3877 = vsel %vm3845, 1, 0
        %v3878 = vsel %vm3846, 1, 0
        %v3879 = vsel %vm3847, 1, 0
        %v3880 = vsel %vm3848, 1, 0
        %v3881 = vsel %vm3849, 1, 0
        %v3882 = vsel %vm3850, 1, 0
        %v3883 = vsel %vm3851, 1, 0
        %v3884 = vsel %vm3852, 1, 0
        %v3885 = vsel %vm3853, 1, 0
        %v3886 = vsel %vm3854, 1, 0
        %v3887 = vsel %vm3855, 1, 0
        %v3888 = vsel %vm3856, 1, 0
        %v3889 = vsel %vm3857, 1, 0
        %v3890 = vsel %vm3858, 1, 0
        %v3891 = vsel %vm3859, 1, 0
        %v3892 = vsel %vm3860, 1, 0
        %v3893 = vsel %vm3861, 1, 0
        %v3894 = vcvt.s32.f32 %v3862
        %v3895 = vcvt.s32.f32 %v3863
        %v3896 = vcvt.s32.f32 %v3864
        %v3897 = vcvt.s32.f32 %v3865
        %v3898 = vcvt.s32.f32 %v3866
        %v3899 = vcvt.s32.f32 %v3867
        %v3900 = vcvt.s32.f32 %v3868
        %v3901 = vcvt.s32.f32 %v3869
        %v3902 = vcvt.s32.f32 %v3870
        %v3903 = vcvt.s32.f32 %v3871
        %v3904 = vcvt.s32.f32 %v3872
        %v3905 = vcvt.s32.f32 %v3873
        %v3906 = vcvt.s32.f32 %v3874
        %v3907 = vcvt.s32.f32 %v3875
        %v3908 = vcvt.s32.f32 %v3876
        %v3909 = vcvt.s32.f32 %v3877
        %v3910 = vcvt.s32.f32 %v3878
        %v3911 = vcvt.s32.f32 %v3879
        %v3912 = vcvt.s32.f32 %v3880
        %v3913 = vcvt.s32.f32 %v3881
        %v3914 = vcvt.s32.f32 %v3882
        %v3915 = vcvt.s32.f32 %v3883
        %v3916 = vcvt.s32.f32 %v3884
        %v3917 = vcvt.s32.f32 %v3885
        %v3918 = vcvt.s32.f32 %v3886
        %v3919 = vcvt.s32.f32 %v3887
        %v3920 = vcvt.s32.f32 %v3888
        %v3921 = vcvt.s32.f32 %v3889
        %v3922 = vcvt.s32.f32 %v3890
        %v3923 = vcvt.s32.f32 %v3891
        %v3924 = vcvt.s32.f32 %v3892
        %v3925 = vcvt.s32.f32 %v3893
        %3927 = vset.pattern.permute.xlu0 0
        %3928 = vperm.xlu0 %3927, %v3750
        %v3929 = vpop.permute.xlu0 %3928
        %3932 = vset.pattern.permute.xlu0 0
        %3933 = vperm.xlu0 %3932, %v3751
        %v3934 = vpop.permute.xlu0 %3933
        %3937 = vset.pattern.permute.xlu0 0
        %3938 = vperm.xlu0 %3937, %v3752
        %v3939 = vpop.permute.xlu0 %3938
        %3942 = vset.pattern.permute.xlu0 0
        %3943 = vperm.xlu0 %3942, %v3753
        %v3944 = vpop.permute.xlu0 %3943
        %3947 = vset.pattern.permute.xlu0 0
        %3948 = vperm.xlu0 %3947, %v3754
        %v3949 = vpop.permute.xlu0 %3948
        %3952 = vset.pattern.permute.xlu0 0
        %3953 = vperm.xlu0 %3952, %v3755
        %v3954 = vpop.permute.xlu0 %3953
        %3957 = vset.pattern.permute.xlu0 0
        %3958 = vperm.xlu0 %3957, %v3756
        %v3959 = vpop.permute.xlu0 %3958
        %3962 = vset.pattern.permute.xlu0 0
        %3963 = vperm.xlu0 %3962, %v3757
        %v3964 = vpop.permute.xlu0 %3963
        %3967 = vset.pattern.permute.xlu0 0
        %3968 = vperm.xlu0 %3967, %v3758
        %v3969 = vpop.permute.xlu0 %3968
        %3972 = vset.pattern.permute.xlu0 0
        %3973 = vperm.xlu0 %3972, %v3759
        %v3974 = vpop.permute.xlu0 %3973
        %3977 = vset.pattern.permute.xlu0 0
        %3978 = vperm.xlu0 %3977, %v3760
        %v3979 = vpop.permute.xlu0 %3978
        %3982 = vset.pattern.permute.xlu0 0
        %3983 = vperm.xlu0 %3982, %v3761
        %v3984 = vpop.permute.xlu0 %3983
        %3987 = vset.pattern.permute.xlu0 0
        %3988 = vperm.xlu0 %3987, %v3762
        %v3989 = vpop.permute.xlu0 %3988
        %3992 = vset.pattern.permute.xlu0 0
        %3993 = vperm.xlu0 %3992, %v3763
        %v3994 = vpop.permute.xlu0 %3993
        %3997 = vset.pattern.permute.xlu0 0
        %3998 = vperm.xlu0 %3997, %v3764
        %v3999 = vpop.permute.xlu0 %3998
        %4002 = vset.pattern.permute.xlu0 0
        %4003 = vperm.xlu0 %4002, %v3765
        %v4004 = vpop.permute.xlu0 %4003
        %v4006 = vmul.f32 %v3929, %v3894
        %v4007 = vmul.f32 %v3929, %v3895
        %v4008 = vmul.f32 %v3934, %v3896
        %v4009 = vmul.f32 %v3934, %v3897
        %v4010 = vmul.f32 %v3939, %v3898
        %v4011 = vmul.f32 %v3939, %v3899
        %v4012 = vmul.f32 %v3944, %v3900
        %v4013 = vmul.f32 %v3944, %v3901
        %v4014 = vmul.f32 %v3949, %v3902
        %v4015 = vmul.f32 %v3949, %v3903
        %v4016 = vmul.f32 %v3954, %v3904
        %v4017 = vmul.f32 %v3954, %v3905
        %v4018 = vmul.f32 %v3959, %v3906
        %v4019 = vmul.f32 %v3959, %v3907
        %v4020 = vmul.f32 %v3964, %v3908
        %v4021 = vmul.f32 %v3964, %v3909
        %v4022 = vmul.f32 %v3969, %v3910
        %v4023 = vmul.f32 %v3969, %v3911
        %v4024 = vmul.f32 %v3974, %v3912
        %v4025 = vmul.f32 %v3974, %v3913
        %v4026 = vmul.f32 %v3979, %v3914
        %v4027 = vmul.f32 %v3979, %v3915
        %v4028 = vmul.f32 %v3984, %v3916
        %v4029 = vmul.f32 %v3984, %v3917
        %v4030 = vmul.f32 %v3989, %v3918
        %v4031 = vmul.f32 %v3989, %v3919
        %v4032 = vmul.f32 %v3994, %v3920
        %v4033 = vmul.f32 %v3994, %v3921
        %v4034 = vmul.f32 %v3999, %v3922
        %v4035 = vmul.f32 %v3999, %v3923
        %v4036 = vmul.f32 %v4004, %v3924
        %v4037 = vmul.f32 %v4004, %v3925
        %v4038 = vadd.f32 %v3718, %v4006
        %v4039 = vadd.f32 %v3719, %v4007
        %v4040 = vadd.f32 %v3720, %v4008
        %v4041 = vadd.f32 %v3721, %v4009
        %v4042 = vadd.f32 %v3722, %v4010
        %v4043 = vadd.f32 %v3723, %v4011
        %v4044 = vadd.f32 %v3724, %v4012
        %v4045 = vadd.f32 %v3725, %v4013
        %v4046 = vadd.f32 %v3726, %v4014
        %v4047 = vadd.f32 %v3727, %v4015
        %v4048 = vadd.f32 %v3728, %v4016
        %v4049 = vadd.f32 %v3729, %v4017
        %v4050 = vadd.f32 %v3730, %v4018
        %v4051 = vadd.f32 %v3731, %v4019
        %v4052 = vadd.f32 %v3732, %v4020
        %v4053 = vadd.f32 %v3733, %v4021
        %v4054 = vadd.f32 %v3734, %v4022
        %v4055 = vadd.f32 %v3735, %v4023
        %v4056 = vadd.f32 %v3736, %v4024
        %v4057 = vadd.f32 %v3737, %v4025
        %v4058 = vadd.f32 %v3738, %v4026
        %v4059 = vadd.f32 %v3739, %v4027
        %v4060 = vadd.f32 %v3740, %v4028
        %v4061 = vadd.f32 %v3741, %v4029
        %v4062 = vadd.f32 %v3742, %v4030
        %v4063 = vadd.f32 %v3743, %v4031
        %v4064 = vadd.f32 %v3744, %v4032
        %v4065 = vadd.f32 %v3745, %v4033
        %v4066 = vadd.f32 %v3746, %v4034
        %v4067 = vadd.f32 %v3747, %v4035
        %v4068 = vadd.f32 %v3748, %v4036
        %v4069 = vadd.f32 %v3749, %v4037
        %v4070 = vadd.s32 %v1174, 128
        %v4071 = vadd.s32 %v1175, 128
        %v4072 = vadd.s32 %v1176, 128
        %v4073 = vadd.s32 %v1177, 128
        %v4074 = vadd.s32 %v1178, 128
        %v4075 = vadd.s32 %v1179, 128
        %v4076 = vadd.s32 %v1180, 128
        %v4077 = vadd.s32 %v1181, 128
        %v4078 = vadd.s32 %v1182, 128
        %v4079 = vadd.s32 %v1183, 128
        %v4080 = vadd.s32 %v1184, 128
        %v4081 = vadd.s32 %v1185, 128
        %v4082 = vadd.s32 %v1186, 128
        %v4083 = vadd.s32 %v1187, 128
        %v4084 = vadd.s32 %v1188, 128
        %v4085 = vadd.s32 %v1189, 128
        %v4086 = vadd.s32 %v4070, %v2679
        %v4087 = vadd.s32 %v4071, %v2681
        %v4088 = vadd.s32 %v4072, %v2683
        %v4089 = vadd.s32 %v4073, %v2685
        %v4090 = vadd.s32 %v4074, %v2687
        %v4091 = vadd.s32 %v4075, %v2689
        %v4092 = vadd.s32 %v4076, %v2691
        %v4093 = vadd.s32 %v4077, %v2693
        %v4094 = vadd.s32 %v4078, %v2695
        %v4095 = vadd.s32 %v4079, %v2697
        %v4096 = vadd.s32 %v4080, %v2699
        %v4097 = vadd.s32 %v4081, %v2701
        %v4098 = vadd.s32 %v4082, %v2703
        %v4099 = vadd.s32 %v4083, %v2705
        %v4100 = vadd.s32 %v4084, %v2707
        %v4101 = vadd.s32 %v4085, %v2709
        %4102 = vset.pattern.permute.xlu0 2
        %4103 = vperm.xlu0 %4102, %v4086
        %v4104 = vpop.permute.xlu0 %4103
        %4105 = vset.pattern.permute.xlu0 2
        %4106 = vperm.xlu0 %4105, %v4087
        %v4107 = vpop.permute.xlu0 %4106
        %4108 = vset.pattern.permute.xlu0 2
        %4109 = vperm.xlu0 %4108, %v4088
        %v4110 = vpop.permute.xlu0 %4109
        %4111 = vset.pattern.permute.xlu0 2
        %4112 = vperm.xlu0 %4111, %v4089
        %v4113 = vpop.permute.xlu0 %4112
        %4114 = vset.pattern.permute.xlu0 2
        %4115 = vperm.xlu0 %4114, %v4090
        %v4116 = vpop.permute.xlu0 %4115
        %4117 = vset.pattern.permute.xlu0 2
        %4118 = vperm.xlu0 %4117, %v4091
        %v4119 = vpop.permute.xlu0 %4118
        %4120 = vset.pattern.permute.xlu0 2
        %4121 = vperm.xlu0 %4120, %v4092
        %v4122 = vpop.permute.xlu0 %4121
        %4123 = vset.pattern.permute.xlu0 2
        %4124 = vperm.xlu0 %4123, %v4093
        %v4125 = vpop.permute.xlu0 %4124
        %4126 = vset.pattern.permute.xlu0 2
        %4127 = vperm.xlu0 %4126, %v4094
        %v4128 = vpop.permute.xlu0 %4127
        %4129 = vset.pattern.permute.xlu0 2
        %4130 = vperm.xlu0 %4129, %v4095
        %v4131 = vpop.permute.xlu0 %4130
        %4132 = vset.pattern.permute.xlu0 2
        %4133 = vperm.xlu0 %4132, %v4096
        %v4134 = vpop.permute.xlu0 %4133
        %4135 = vset.pattern.permute.xlu0 2
        %4136 = vperm.xlu0 %4135, %v4097
        %v4137 = vpop.permute.xlu0 %4136
        %4138 = vset.pattern.permute.xlu0 2
        %4139 = vperm.xlu0 %4138, %v4098
        %v4140 = vpop.permute.xlu0 %4139
        %4141 = vset.pattern.permute.xlu0 2
        %4142 = vperm.xlu0 %4141, %v4099
        %v4143 = vpop.permute.xlu0 %4142
        %4144 = vset.pattern.permute.xlu0 2
        %4145 = vperm.xlu0 %4144, %v4100
        %v4146 = vpop.permute.xlu0 %4145
        %4147 = vset.pattern.permute.xlu0 2
        %4148 = vperm.xlu0 %4147, %v4101
        %v4149 = vpop.permute.xlu0 %4148
        %vm4150 = vcmp.eq.s32.totalorder %v797, %v4104
        %vm4151 = vcmp.eq.s32.totalorder %v798, %v4104
        %vm4152 = vcmp.eq.s32.totalorder %v797, %v4107
        %vm4153 = vcmp.eq.s32.totalorder %v798, %v4107
        %vm4154 = vcmp.eq.s32.totalorder %v797, %v4110
        %vm4155 = vcmp.eq.s32.totalorder %v798, %v4110
        %vm4156 = vcmp.eq.s32.totalorder %v797, %v4113
        %vm4157 = vcmp.eq.s32.totalorder %v798, %v4113
        %vm4158 = vcmp.eq.s32.totalorder %v797, %v4116
        %vm4159 = vcmp.eq.s32.totalorder %v798, %v4116
        %vm4160 = vcmp.eq.s32.totalorder %v797, %v4119
        %vm4161 = vcmp.eq.s32.totalorder %v798, %v4119
        %vm4162 = vcmp.eq.s32.totalorder %v797, %v4122
        %vm4163 = vcmp.eq.s32.totalorder %v798, %v4122
        %vm4164 = vcmp.eq.s32.totalorder %v797, %v4125
        %vm4165 = vcmp.eq.s32.totalorder %v798, %v4125
        %vm4166 = vcmp.eq.s32.totalorder %v797, %v4128
        %vm4167 = vcmp.eq.s32.totalorder %v798, %v4128
        %vm4168 = vcmp.eq.s32.totalorder %v797, %v4131
        %vm4169 = vcmp.eq.s32.totalorder %v798, %v4131
        %vm4170 = vcmp.eq.s32.totalorder %v797, %v4134
        %vm4171 = vcmp.eq.s32.totalorder %v798, %v4134
        %vm4172 = vcmp.eq.s32.totalorder %v797, %v4137
        %vm4173 = vcmp.eq.s32.totalorder %v798, %v4137
        %vm4174 = vcmp.eq.s32.totalorder %v797, %v4140
        %vm4175 = vcmp.eq.s32.totalorder %v798, %v4140
        %vm4176 = vcmp.eq.s32.totalorder %v797, %v4143
        %vm4177 = vcmp.eq.s32.totalorder %v798, %v4143
        %vm4178 = vcmp.eq.s32.totalorder %v797, %v4146
        %vm4179 = vcmp.eq.s32.totalorder %v798, %v4146
        %vm4180 = vcmp.eq.s32.totalorder %v797, %v4149
        %vm4181 = vcmp.eq.s32.totalorder %v798, %v4149
        %v4182 = vsel %vm4150, 1, 0
        %v4183 = vsel %vm4151, 1, 0
        %v4184 = vsel %vm4152, 1, 0
        %v4185 = vsel %vm4153, 1, 0
        %v4186 = vsel %vm4154, 1, 0
        %v4187 = vsel %vm4155, 1, 0
        %v4188 = vsel %vm4156, 1, 0
        %v4189 = vsel %vm4157, 1, 0
        %v4190 = vsel %vm4158, 1, 0
        %v4191 = vsel %vm4159, 1, 0
        %v4192 = vsel %vm4160, 1, 0
        %v4193 = vsel %vm4161, 1, 0
        %v4194 = vsel %vm4162, 1, 0
        %v4195 = vsel %vm4163, 1, 0
        %v4196 = vsel %vm4164, 1, 0
        %v4197 = vsel %vm4165, 1, 0
        %v4198 = vsel %vm4166, 1, 0
        %v4199 = vsel %vm4167, 1, 0
        %v4200 = vsel %vm4168, 1, 0
        %v4201 = vsel %vm4169, 1, 0
        %v4202 = vsel %vm4170, 1, 0
        %v4203 = vsel %vm4171, 1, 0
        %v4204 = vsel %vm4172, 1, 0
        %v4205 = vsel %vm4173, 1, 0
        %v4206 = vsel %vm4174, 1, 0
        %v4207 = vsel %vm4175, 1, 0
        %v4208 = vsel %vm4176, 1, 0
        %v4209 = vsel %vm4177, 1, 0
        %v4210 = vsel %vm4178, 1, 0
        %v4211 = vsel %vm4179, 1, 0
        %v4212 = vsel %vm4180, 1, 0
        %v4213 = vsel %vm4181, 1, 0
        %v4214 = vcvt.s32.f32 %v4182
        %v4215 = vcvt.s32.f32 %v4183
        %v4216 = vcvt.s32.f32 %v4184
        %v4217 = vcvt.s32.f32 %v4185
        %v4218 = vcvt.s32.f32 %v4186
        %v4219 = vcvt.s32.f32 %v4187
        %v4220 = vcvt.s32.f32 %v4188
        %v4221 = vcvt.s32.f32 %v4189
        %v4222 = vcvt.s32.f32 %v4190
        %v4223 = vcvt.s32.f32 %v4191
        %v4224 = vcvt.s32.f32 %v4192
        %v4225 = vcvt.s32.f32 %v4193
        %v4226 = vcvt.s32.f32 %v4194
        %v4227 = vcvt.s32.f32 %v4195
        %v4228 = vcvt.s32.f32 %v4196
        %v4229 = vcvt.s32.f32 %v4197
        %v4230 = vcvt.s32.f32 %v4198
        %v4231 = vcvt.s32.f32 %v4199
        %v4232 = vcvt.s32.f32 %v4200
        %v4233 = vcvt.s32.f32 %v4201
        %v4234 = vcvt.s32.f32 %v4202
        %v4235 = vcvt.s32.f32 %v4203
        %v4236 = vcvt.s32.f32 %v4204
        %v4237 = vcvt.s32.f32 %v4205
        %v4238 = vcvt.s32.f32 %v4206
        %v4239 = vcvt.s32.f32 %v4207
        %v4240 = vcvt.s32.f32 %v4208
        %v4241 = vcvt.s32.f32 %v4209
        %v4242 = vcvt.s32.f32 %v4210
        %v4243 = vcvt.s32.f32 %v4211
        %v4244 = vcvt.s32.f32 %v4212
        %v4245 = vcvt.s32.f32 %v4213
        %4246 = vset.pattern.permute.xlu0 1
        %4247 = vperm.xlu0 %4246, %v2646
        %v4248 = vpop.permute.xlu0 %4247
        %4250 = vset.pattern.permute.xlu0 1
        %4251 = vperm.xlu0 %4250, %v2647
        %v4252 = vpop.permute.xlu0 %4251
        %4254 = vset.pattern.permute.xlu0 1
        %4255 = vperm.xlu0 %4254, %v2648
        %v4256 = vpop.permute.xlu0 %4255
        %4258 = vset.pattern.permute.xlu0 1
        %4259 = vperm.xlu0 %4258, %v2649
        %v4260 = vpop.permute.xlu0 %4259
        %4262 = vset.pattern.permute.xlu0 1
        %4263 = vperm.xlu0 %4262, %v2650
        %v4264 = vpop.permute.xlu0 %4263
        %4266 = vset.pattern.permute.xlu0 1
        %4267 = vperm.xlu0 %4266, %v2651
        %v4268 = vpop.permute.xlu0 %4267
        %4270 = vset.pattern.permute.xlu0 1
        %4271 = vperm.xlu0 %4270, %v2652
        %v4272 = vpop.permute.xlu0 %4271
        %4274 = vset.pattern.permute.xlu0 1
        %4275 = vperm.xlu0 %4274, %v2653
        %v4276 = vpop.permute.xlu0 %4275
        %4278 = vset.pattern.permute.xlu0 1
        %4279 = vperm.xlu0 %4278, %v2654
        %v4280 = vpop.permute.xlu0 %4279
        %4282 = vset.pattern.permute.xlu0 1
        %4283 = vperm.xlu0 %4282, %v2655
        %v4284 = vpop.permute.xlu0 %4283
        %4286 = vset.pattern.permute.xlu0 1
        %4287 = vperm.xlu0 %4286, %v2656
        %v4288 = vpop.permute.xlu0 %4287
        %4290 = vset.pattern.permute.xlu0 1
        %4291 = vperm.xlu0 %4290, %v2657
        %v4292 = vpop.permute.xlu0 %4291
        %4294 = vset.pattern.permute.xlu0 1
        %4295 = vperm.xlu0 %4294, %v2658
        %v4296 = vpop.permute.xlu0 %4295
        %4298 = vset.pattern.permute.xlu0 1
        %4299 = vperm.xlu0 %4298, %v2659
        %v4300 = vpop.permute.xlu0 %4299
        %4302 = vset.pattern.permute.xlu0 1
        %4303 = vperm.xlu0 %4302, %v2660
        %v4304 = vpop.permute.xlu0 %4303
        %4306 = vset.pattern.permute.xlu0 1
        %4307 = vperm.xlu0 %4306, %v2661
        %v4308 = vpop.permute.xlu0 %4307
        %v4310 = vmul.f32 %v4248, %v4214
        %v4311 = vmul.f32 %v4248, %v4215
        %v4312 = vmul.f32 %v4252, %v4216
        %v4313 = vmul.f32 %v4252, %v4217
        %v4314 = vmul.f32 %v4256, %v4218
        %v4315 = vmul.f32 %v4256, %v4219
        %v4316 = vmul.f32 %v4260, %v4220
        %v4317 = vmul.f32 %v4260, %v4221
        %v4318 = vmul.f32 %v4264, %v4222
        %v4319 = vmul.f32 %v4264, %v4223
        %v4320 = vmul.f32 %v4268, %v4224
        %v4321 = vmul.f32 %v4268, %v4225
        %v4322 = vmul.f32 %v4272, %v4226
        %v4323 = vmul.f32 %v4272, %v4227
        %v4324 = vmul.f32 %v4276, %v4228
        %v4325 = vmul.f32 %v4276, %v4229
        %v4326 = vmul.f32 %v4280, %v4230
        %v4327 = vmul.f32 %v4280, %v4231
        %v4328 = vmul.f32 %v4284, %v4232
        %v4329 = vmul.f32 %v4284, %v4233
        %v4330 = vmul.f32 %v4288, %v4234
        %v4331 = vmul.f32 %v4288, %v4235
        %v4332 = vmul.f32 %v4292, %v4236
        %v4333 = vmul.f32 %v4292, %v4237
        %v4334 = vmul.f32 %v4296, %v4238
        %v4335 = vmul.f32 %v4296, %v4239
        %v4336 = vmul.f32 %v4300, %v4240
        %v4337 = vmul.f32 %v4300, %v4241
        %v4338 = vmul.f32 %v4304, %v4242
        %v4339 = vmul.f32 %v4304, %v4243
        %v4340 = vmul.f32 %v4308, %v4244
        %v4341 = vmul.f32 %v4308, %v4245
        %v4342 = vadd.f32 %v4038, %v4310
        %v4343 = vadd.f32 %v4039, %v4311
        %v4344 = vadd.f32 %v4040, %v4312
        %v4345 = vadd.f32 %v4041, %v4313
        %v4346 = vadd.f32 %v4042, %v4314
        %v4347 = vadd.f32 %v4043, %v4315
        %v4348 = vadd.f32 %v4044, %v4316
        %v4349 = vadd.f32 %v4045, %v4317
        %v4350 = vadd.f32 %v4046, %v4318
        %v4351 = vadd.f32 %v4047, %v4319
        %v4352 = vadd.f32 %v4048, %v4320
        %v4353 = vadd.f32 %v4049, %v4321
        %v4354 = vadd.f32 %v4050, %v4322
        %v4355 = vadd.f32 %v4051, %v4323
        %v4356 = vadd.f32 %v4052, %v4324
        %v4357 = vadd.f32 %v4053, %v4325
        %v4358 = vadd.f32 %v4054, %v4326
        %v4359 = vadd.f32 %v4055, %v4327
        %v4360 = vadd.f32 %v4056, %v4328
        %v4361 = vadd.f32 %v4057, %v4329
        %v4362 = vadd.f32 %v4058, %v4330
        %v4363 = vadd.f32 %v4059, %v4331
        %v4364 = vadd.f32 %v4060, %v4332
        %v4365 = vadd.f32 %v4061, %v4333
        %v4366 = vadd.f32 %v4062, %v4334
        %v4367 = vadd.f32 %v4063, %v4335
        %v4368 = vadd.f32 %v4064, %v4336
        %v4369 = vadd.f32 %v4065, %v4337
        %v4370 = vadd.f32 %v4066, %v4338
        %v4371 = vadd.f32 %v4067, %v4339
        %v4372 = vadd.f32 %v4068, %v4340
        %v4373 = vadd.f32 %v4069, %v4341
        %v4374 = vadd.s32 %v4070, %v3031
        %v4375 = vadd.s32 %v4071, %v3033
        %v4376 = vadd.s32 %v4072, %v3035
        %v4377 = vadd.s32 %v4073, %v3037
        %v4378 = vadd.s32 %v4074, %v3039
        %v4379 = vadd.s32 %v4075, %v3041
        %v4380 = vadd.s32 %v4076, %v3043
        %v4381 = vadd.s32 %v4077, %v3045
        %v4382 = vadd.s32 %v4078, %v3047
        %v4383 = vadd.s32 %v4079, %v3049
        %v4384 = vadd.s32 %v4080, %v3051
        %v4385 = vadd.s32 %v4081, %v3053
        %v4386 = vadd.s32 %v4082, %v3055
        %v4387 = vadd.s32 %v4083, %v3057
        %v4388 = vadd.s32 %v4084, %v3059
        %v4389 = vadd.s32 %v4085, %v3061
        %4390 = vset.pattern.permute.xlu0 2
        %4391 = vperm.xlu0 %4390, %v4374
        %v4392 = vpop.permute.xlu0 %4391
        %4393 = vset.pattern.permute.xlu0 2
        %4394 = vperm.xlu0 %4393, %v4375
        %v4395 = vpop.permute.xlu0 %4394
        %4396 = vset.pattern.permute.xlu0 2
        %4397 = vperm.xlu0 %4396, %v4376
        %v4398 = vpop.permute.xlu0 %4397
        %4399 = vset.pattern.permute.xlu0 2
        %4400 = vperm.xlu0 %4399, %v4377
        %v4401 = vpop.permute.xlu0 %4400
        %4402 = vset.pattern.permute.xlu0 2
        %4403 = vperm.xlu0 %4402, %v4378
        %v4404 = vpop.permute.xlu0 %4403
        %4405 = vset.pattern.permute.xlu0 2
        %4406 = vperm.xlu0 %4405, %v4379
        %v4407 = vpop.permute.xlu0 %4406
        %4408 = vset.pattern.permute.xlu0 2
        %4409 = vperm.xlu0 %4408, %v4380
        %v4410 = vpop.permute.xlu0 %4409
        %4411 = vset.pattern.permute.xlu0 2
        %4412 = vperm.xlu0 %4411, %v4381
        %v4413 = vpop.permute.xlu0 %4412
        %4414 = vset.pattern.permute.xlu0 2
        %4415 = vperm.xlu0 %4414, %v4382
        %v4416 = vpop.permute.xlu0 %4415
        %4417 = vset.pattern.permute.xlu0 2
        %4418 = vperm.xlu0 %4417, %v4383
        %v4419 = vpop.permute.xlu0 %4418
        %4420 = vset.pattern.permute.xlu0 2
        %4421 = vperm.xlu0 %4420, %v4384
        %v4422 = vpop.permute.xlu0 %4421
        %4423 = vset.pattern.permute.xlu0 2
        %4424 = vperm.xlu0 %4423, %v4385
        %v4425 = vpop.permute.xlu0 %4424
        %4426 = vset.pattern.permute.xlu0 2
        %4427 = vperm.xlu0 %4426, %v4386
        %v4428 = vpop.permute.xlu0 %4427
        %4429 = vset.pattern.permute.xlu0 2
        %4430 = vperm.xlu0 %4429, %v4387
        %v4431 = vpop.permute.xlu0 %4430
        %4432 = vset.pattern.permute.xlu0 2
        %4433 = vperm.xlu0 %4432, %v4388
        %v4434 = vpop.permute.xlu0 %4433
        %4435 = vset.pattern.permute.xlu0 2
        %4436 = vperm.xlu0 %4435, %v4389
        %v4437 = vpop.permute.xlu0 %4436
        %vm4438 = vcmp.eq.s32.totalorder %v797, %v4392
        %vm4439 = vcmp.eq.s32.totalorder %v798, %v4392
        %vm4440 = vcmp.eq.s32.totalorder %v797, %v4395
        %vm4441 = vcmp.eq.s32.totalorder %v798, %v4395
        %vm4442 = vcmp.eq.s32.totalorder %v797, %v4398
        %vm4443 = vcmp.eq.s32.totalorder %v798, %v4398
        %vm4444 = vcmp.eq.s32.totalorder %v797, %v4401
        %vm4445 = vcmp.eq.s32.totalorder %v798, %v4401
        %vm4446 = vcmp.eq.s32.totalorder %v797, %v4404
        %vm4447 = vcmp.eq.s32.totalorder %v798, %v4404
        %vm4448 = vcmp.eq.s32.totalorder %v797, %v4407
        %vm4449 = vcmp.eq.s32.totalorder %v798, %v4407
        %vm4450 = vcmp.eq.s32.totalorder %v797, %v4410
        %vm4451 = vcmp.eq.s32.totalorder %v798, %v4410
        %vm4452 = vcmp.eq.s32.totalorder %v797, %v4413
        %vm4453 = vcmp.eq.s32.totalorder %v798, %v4413
        %vm4454 = vcmp.eq.s32.totalorder %v797, %v4416
        %vm4455 = vcmp.eq.s32.totalorder %v798, %v4416
        %vm4456 = vcmp.eq.s32.totalorder %v797, %v4419
        %vm4457 = vcmp.eq.s32.totalorder %v798, %v4419
        %vm4458 = vcmp.eq.s32.totalorder %v797, %v4422
        %vm4459 = vcmp.eq.s32.totalorder %v798, %v4422
        %vm4460 = vcmp.eq.s32.totalorder %v797, %v4425
        %vm4461 = vcmp.eq.s32.totalorder %v798, %v4425
        %vm4462 = vcmp.eq.s32.totalorder %v797, %v4428
        %vm4463 = vcmp.eq.s32.totalorder %v798, %v4428
        %vm4464 = vcmp.eq.s32.totalorder %v797, %v4431
        %vm4465 = vcmp.eq.s32.totalorder %v798, %v4431
        %vm4466 = vcmp.eq.s32.totalorder %v797, %v4434
        %vm4467 = vcmp.eq.s32.totalorder %v798, %v4434
        %vm4468 = vcmp.eq.s32.totalorder %v797, %v4437
        %vm4469 = vcmp.eq.s32.totalorder %v798, %v4437
        %v4470 = vsel %vm4438, 1, 0
        %v4471 = vsel %vm4439, 1, 0
        %v4472 = vsel %vm4440, 1, 0
        %v4473 = vsel %vm4441, 1, 0
        %v4474 = vsel %vm4442, 1, 0
        %v4475 = vsel %vm4443, 1, 0
        %v4476 = vsel %vm4444, 1, 0
        %v4477 = vsel %vm4445, 1, 0
        %v4478 = vsel %vm4446, 1, 0
        %v4479 = vsel %vm4447, 1, 0
        %v4480 = vsel %vm4448, 1, 0
        %v4481 = vsel %vm4449, 1, 0
        %v4482 = vsel %vm4450, 1, 0
        %v4483 = vsel %vm4451, 1, 0
        %v4484 = vsel %vm4452, 1, 0
        %v4485 = vsel %vm4453, 1, 0
        %v4486 = vsel %vm4454, 1, 0
        %v4487 = vsel %vm4455, 1, 0
        %v4488 = vsel %vm4456, 1, 0
        %v4489 = vsel %vm4457, 1, 0
        %v4490 = vsel %vm4458, 1, 0
        %v4491 = vsel %vm4459, 1, 0
        %v4492 = vsel %vm4460, 1, 0
        %v4493 = vsel %vm4461, 1, 0
        %v4494 = vsel %vm4462, 1, 0
        %v4495 = vsel %vm4463, 1, 0
        %v4496 = vsel %vm4464, 1, 0
        %v4497 = vsel %vm4465, 1, 0
        %v4498 = vsel %vm4466, 1, 0
        %v4499 = vsel %vm4467, 1, 0
        %v4500 = vsel %vm4468, 1, 0
        %v4501 = vsel %vm4469, 1, 0
        %v4502 = vcvt.s32.f32 %v4470
        %v4503 = vcvt.s32.f32 %v4471
        %v4504 = vcvt.s32.f32 %v4472
        %v4505 = vcvt.s32.f32 %v4473
        %v4506 = vcvt.s32.f32 %v4474
        %v4507 = vcvt.s32.f32 %v4475
        %v4508 = vcvt.s32.f32 %v4476
        %v4509 = vcvt.s32.f32 %v4477
        %v4510 = vcvt.s32.f32 %v4478
        %v4511 = vcvt.s32.f32 %v4479
        %v4512 = vcvt.s32.f32 %v4480
        %v4513 = vcvt.s32.f32 %v4481
        %v4514 = vcvt.s32.f32 %v4482
        %v4515 = vcvt.s32.f32 %v4483
        %v4516 = vcvt.s32.f32 %v4484
        %v4517 = vcvt.s32.f32 %v4485
        %v4518 = vcvt.s32.f32 %v4486
        %v4519 = vcvt.s32.f32 %v4487
        %v4520 = vcvt.s32.f32 %v4488
        %v4521 = vcvt.s32.f32 %v4489
        %v4522 = vcvt.s32.f32 %v4490
        %v4523 = vcvt.s32.f32 %v4491
        %v4524 = vcvt.s32.f32 %v4492
        %v4525 = vcvt.s32.f32 %v4493
        %v4526 = vcvt.s32.f32 %v4494
        %v4527 = vcvt.s32.f32 %v4495
        %v4528 = vcvt.s32.f32 %v4496
        %v4529 = vcvt.s32.f32 %v4497
        %v4530 = vcvt.s32.f32 %v4498
        %v4531 = vcvt.s32.f32 %v4499
        %v4532 = vcvt.s32.f32 %v4500
        %v4533 = vcvt.s32.f32 %v4501
        %4534 = vset.pattern.permute.xlu0 1
        %4535 = vperm.xlu0 %4534, %v3014
        %v4536 = vpop.permute.xlu0 %4535
        %4538 = vset.pattern.permute.xlu0 1
        %4539 = vperm.xlu0 %4538, %v3015
        %v4540 = vpop.permute.xlu0 %4539
        %4542 = vset.pattern.permute.xlu0 1
        %4543 = vperm.xlu0 %4542, %v3016
        %v4544 = vpop.permute.xlu0 %4543
        %4546 = vset.pattern.permute.xlu0 1
        %4547 = vperm.xlu0 %4546, %v3017
        %v4548 = vpop.permute.xlu0 %4547
        %4550 = vset.pattern.permute.xlu0 1
        %4551 = vperm.xlu0 %4550, %v3018
        %v4552 = vpop.permute.xlu0 %4551
        %4554 = vset.pattern.permute.xlu0 1
        %4555 = vperm.xlu0 %4554, %v3019
        %v4556 = vpop.permute.xlu0 %4555
        %4558 = vset.pattern.permute.xlu0 1
        %4559 = vperm.xlu0 %4558, %v3020
        %v4560 = vpop.permute.xlu0 %4559
        %4562 = vset.pattern.permute.xlu0 1
        %4563 = vperm.xlu0 %4562, %v3021
        %v4564 = vpop.permute.xlu0 %4563
        %4566 = vset.pattern.permute.xlu0 1
        %4567 = vperm.xlu0 %4566, %v3022
        %v4568 = vpop.permute.xlu0 %4567
        %4570 = vset.pattern.permute.xlu0 1
        %4571 = vperm.xlu0 %4570, %v3023
        %v4572 = vpop.permute.xlu0 %4571
        %4574 = vset.pattern.permute.xlu0 1
        %4575 = vperm.xlu0 %4574, %v3024
        %v4576 = vpop.permute.xlu0 %4575
        %4578 = vset.pattern.permute.xlu0 1
        %4579 = vperm.xlu0 %4578, %v3025
        %v4580 = vpop.permute.xlu0 %4579
        %4582 = vset.pattern.permute.xlu0 1
        %4583 = vperm.xlu0 %4582, %v3026
        %v4584 = vpop.permute.xlu0 %4583
        %4586 = vset.pattern.permute.xlu0 1
        %4587 = vperm.xlu0 %4586, %v3027
        %v4588 = vpop.permute.xlu0 %4587
        %4590 = vset.pattern.permute.xlu0 1
        %4591 = vperm.xlu0 %4590, %v3028
        %v4592 = vpop.permute.xlu0 %4591
        %4594 = vset.pattern.permute.xlu0 1
        %4595 = vperm.xlu0 %4594, %v3029
        %v4596 = vpop.permute.xlu0 %4595
        %v4598 = vmul.f32 %v4536, %v4502
        %v4599 = vmul.f32 %v4536, %v4503
        %v4600 = vmul.f32 %v4540, %v4504
        %v4601 = vmul.f32 %v4540, %v4505
        %v4602 = vmul.f32 %v4544, %v4506
        %v4603 = vmul.f32 %v4544, %v4507
        %v4604 = vmul.f32 %v4548, %v4508
        %v4605 = vmul.f32 %v4548, %v4509
        %v4606 = vmul.f32 %v4552, %v4510
        %v4607 = vmul.f32 %v4552, %v4511
        %v4608 = vmul.f32 %v4556, %v4512
        %v4609 = vmul.f32 %v4556, %v4513
        %v4610 = vmul.f32 %v4560, %v4514
        %v4611 = vmul.f32 %v4560, %v4515
        %v4612 = vmul.f32 %v4564, %v4516
        %v4613 = vmul.f32 %v4564, %v4517
        %v4614 = vmul.f32 %v4568, %v4518
        %v4615 = vmul.f32 %v4568, %v4519
        %v4616 = vmul.f32 %v4572, %v4520
        %v4617 = vmul.f32 %v4572, %v4521
        %v4618 = vmul.f32 %v4576, %v4522
        %v4619 = vmul.f32 %v4576, %v4523
        %v4620 = vmul.f32 %v4580, %v4524
        %v4621 = vmul.f32 %v4580, %v4525
        %v4622 = vmul.f32 %v4584, %v4526
        %v4623 = vmul.f32 %v4584, %v4527
        %v4624 = vmul.f32 %v4588, %v4528
        %v4625 = vmul.f32 %v4588, %v4529
        %v4626 = vmul.f32 %v4592, %v4530
        %v4627 = vmul.f32 %v4592, %v4531
        %v4628 = vmul.f32 %v4596, %v4532
        %v4629 = vmul.f32 %v4596, %v4533
        %v4630 = vadd.f32 %v4342, %v4598
        %v4631 = vadd.f32 %v4343, %v4599
        %v4632 = vadd.f32 %v4344, %v4600
        %v4633 = vadd.f32 %v4345, %v4601
        %v4634 = vadd.f32 %v4346, %v4602
        %v4635 = vadd.f32 %v4347, %v4603
        %v4636 = vadd.f32 %v4348, %v4604
        %v4637 = vadd.f32 %v4349, %v4605
        %v4638 = vadd.f32 %v4350, %v4606
        %v4639 = vadd.f32 %v4351, %v4607
        %v4640 = vadd.f32 %v4352, %v4608
        %v4641 = vadd.f32 %v4353, %v4609
        %v4642 = vadd.f32 %v4354, %v4610
        %v4643 = vadd.f32 %v4355, %v4611
        %v4644 = vadd.f32 %v4356, %v4612
        %v4645 = vadd.f32 %v4357, %v4613
        %v4646 = vadd.f32 %v4358, %v4614
        %v4647 = vadd.f32 %v4359, %v4615
        %v4648 = vadd.f32 %v4360, %v4616
        %v4649 = vadd.f32 %v4361, %v4617
        %v4650 = vadd.f32 %v4362, %v4618
        %v4651 = vadd.f32 %v4363, %v4619
        %v4652 = vadd.f32 %v4364, %v4620
        %v4653 = vadd.f32 %v4365, %v4621
        %v4654 = vadd.f32 %v4366, %v4622
        %v4655 = vadd.f32 %v4367, %v4623
        %v4656 = vadd.f32 %v4368, %v4624
        %v4657 = vadd.f32 %v4369, %v4625
        %v4658 = vadd.f32 %v4370, %v4626
        %v4659 = vadd.f32 %v4371, %v4627
        %v4660 = vadd.f32 %v4372, %v4628
        %v4661 = vadd.f32 %v4373, %v4629
        %v4662 = vadd.s32 %v1958, 128
        %v4663 = vadd.s32 %v1959, 128
        %v4664 = vadd.s32 %v1960, 128
        %v4665 = vadd.s32 %v1961, 128
        %v4666 = vadd.s32 %v1962, 128
        %v4667 = vadd.s32 %v1963, 128
        %v4668 = vadd.s32 %v1964, 128
        %v4669 = vadd.s32 %v1965, 128
        %v4670 = vadd.s32 %v1966, 128
        %v4671 = vadd.s32 %v1967, 128
        %v4672 = vadd.s32 %v1968, 128
        %v4673 = vadd.s32 %v1969, 128
        %v4674 = vadd.s32 %v1970, 128
        %v4675 = vadd.s32 %v1971, 128
        %v4676 = vadd.s32 %v1972, 128
        %v4677 = vadd.s32 %v1973, 128
        %v4678 = vadd.s32 %v4662, %v2679
        %v4679 = vadd.s32 %v4663, %v2681
        %v4680 = vadd.s32 %v4664, %v2683
        %v4681 = vadd.s32 %v4665, %v2685
        %v4682 = vadd.s32 %v4666, %v2687
        %v4683 = vadd.s32 %v4667, %v2689
        %v4684 = vadd.s32 %v4668, %v2691
        %v4685 = vadd.s32 %v4669, %v2693
        %v4686 = vadd.s32 %v4670, %v2695
        %v4687 = vadd.s32 %v4671, %v2697
        %v4688 = vadd.s32 %v4672, %v2699
        %v4689 = vadd.s32 %v4673, %v2701
        %v4690 = vadd.s32 %v4674, %v2703
        %v4691 = vadd.s32 %v4675, %v2705
        %v4692 = vadd.s32 %v4676, %v2707
        %v4693 = vadd.s32 %v4677, %v2709
        %4694 = vset.pattern.permute.xlu0 2
        %4695 = vperm.xlu0 %4694, %v4678
        %v4696 = vpop.permute.xlu0 %4695
        %4697 = vset.pattern.permute.xlu0 2
        %4698 = vperm.xlu0 %4697, %v4679
        %v4699 = vpop.permute.xlu0 %4698
        %4700 = vset.pattern.permute.xlu0 2
        %4701 = vperm.xlu0 %4700, %v4680
        %v4702 = vpop.permute.xlu0 %4701
        %4703 = vset.pattern.permute.xlu0 2
        %4704 = vperm.xlu0 %4703, %v4681
        %v4705 = vpop.permute.xlu0 %4704
        %4706 = vset.pattern.permute.xlu0 2
        %4707 = vperm.xlu0 %4706, %v4682
        %v4708 = vpop.permute.xlu0 %4707
        %4709 = vset.pattern.permute.xlu0 2
        %4710 = vperm.xlu0 %4709, %v4683
        %v4711 = vpop.permute.xlu0 %4710
        %4712 = vset.pattern.permute.xlu0 2
        %4713 = vperm.xlu0 %4712, %v4684
        %v4714 = vpop.permute.xlu0 %4713
        %4715 = vset.pattern.permute.xlu0 2
        %4716 = vperm.xlu0 %4715, %v4685
        %v4717 = vpop.permute.xlu0 %4716
        %4718 = vset.pattern.permute.xlu0 2
        %4719 = vperm.xlu0 %4718, %v4686
        %v4720 = vpop.permute.xlu0 %4719
        %4721 = vset.pattern.permute.xlu0 2
        %4722 = vperm.xlu0 %4721, %v4687
        %v4723 = vpop.permute.xlu0 %4722
        %4724 = vset.pattern.permute.xlu0 2
        %4725 = vperm.xlu0 %4724, %v4688
        %v4726 = vpop.permute.xlu0 %4725
        %4727 = vset.pattern.permute.xlu0 2
        %4728 = vperm.xlu0 %4727, %v4689
        %v4729 = vpop.permute.xlu0 %4728
        %4730 = vset.pattern.permute.xlu0 2
        %4731 = vperm.xlu0 %4730, %v4690
        %v4732 = vpop.permute.xlu0 %4731
        %4733 = vset.pattern.permute.xlu0 2
        %4734 = vperm.xlu0 %4733, %v4691
        %v4735 = vpop.permute.xlu0 %4734
        %4736 = vset.pattern.permute.xlu0 2
        %4737 = vperm.xlu0 %4736, %v4692
        %v4738 = vpop.permute.xlu0 %4737
        %4739 = vset.pattern.permute.xlu0 2
        %4740 = vperm.xlu0 %4739, %v4693
        %v4741 = vpop.permute.xlu0 %4740
        %vm4742 = vcmp.eq.s32.totalorder %v797, %v4696
        %vm4743 = vcmp.eq.s32.totalorder %v798, %v4696
        %vm4744 = vcmp.eq.s32.totalorder %v797, %v4699
        %vm4745 = vcmp.eq.s32.totalorder %v798, %v4699
        %vm4746 = vcmp.eq.s32.totalorder %v797, %v4702
        %vm4747 = vcmp.eq.s32.totalorder %v798, %v4702
        %vm4748 = vcmp.eq.s32.totalorder %v797, %v4705
        %vm4749 = vcmp.eq.s32.totalorder %v798, %v4705
        %vm4750 = vcmp.eq.s32.totalorder %v797, %v4708
        %vm4751 = vcmp.eq.s32.totalorder %v798, %v4708
        %vm4752 = vcmp.eq.s32.totalorder %v797, %v4711
        %vm4753 = vcmp.eq.s32.totalorder %v798, %v4711
        %vm4754 = vcmp.eq.s32.totalorder %v797, %v4714
        %vm4755 = vcmp.eq.s32.totalorder %v798, %v4714
        %vm4756 = vcmp.eq.s32.totalorder %v797, %v4717
        %vm4757 = vcmp.eq.s32.totalorder %v798, %v4717
        %vm4758 = vcmp.eq.s32.totalorder %v797, %v4720
        %vm4759 = vcmp.eq.s32.totalorder %v798, %v4720
        %vm4760 = vcmp.eq.s32.totalorder %v797, %v4723
        %vm4761 = vcmp.eq.s32.totalorder %v798, %v4723
        %vm4762 = vcmp.eq.s32.totalorder %v797, %v4726
        %vm4763 = vcmp.eq.s32.totalorder %v798, %v4726
        %vm4764 = vcmp.eq.s32.totalorder %v797, %v4729
        %vm4765 = vcmp.eq.s32.totalorder %v798, %v4729
        %vm4766 = vcmp.eq.s32.totalorder %v797, %v4732
        %vm4767 = vcmp.eq.s32.totalorder %v798, %v4732
        %vm4768 = vcmp.eq.s32.totalorder %v797, %v4735
        %vm4769 = vcmp.eq.s32.totalorder %v798, %v4735
        %vm4770 = vcmp.eq.s32.totalorder %v797, %v4738
        %vm4771 = vcmp.eq.s32.totalorder %v798, %v4738
        %vm4772 = vcmp.eq.s32.totalorder %v797, %v4741
        %vm4773 = vcmp.eq.s32.totalorder %v798, %v4741
        %v4774 = vsel %vm4742, 1, 0
        %v4775 = vsel %vm4743, 1, 0
        %v4776 = vsel %vm4744, 1, 0
        %v4777 = vsel %vm4745, 1, 0
        %v4778 = vsel %vm4746, 1, 0
        %v4779 = vsel %vm4747, 1, 0
        %v4780 = vsel %vm4748, 1, 0
        %v4781 = vsel %vm4749, 1, 0
        %v4782 = vsel %vm4750, 1, 0
        %v4783 = vsel %vm4751, 1, 0
        %v4784 = vsel %vm4752, 1, 0
        %v4785 = vsel %vm4753, 1, 0
        %v4786 = vsel %vm4754, 1, 0
        %v4787 = vsel %vm4755, 1, 0
        %v4788 = vsel %vm4756, 1, 0
        %v4789 = vsel %vm4757, 1, 0
        %v4790 = vsel %vm4758, 1, 0
        %v4791 = vsel %vm4759, 1, 0
        %v4792 = vsel %vm4760, 1, 0
        %v4793 = vsel %vm4761, 1, 0
        %v4794 = vsel %vm4762, 1, 0
        %v4795 = vsel %vm4763, 1, 0
        %v4796 = vsel %vm4764, 1, 0
        %v4797 = vsel %vm4765, 1, 0
        %v4798 = vsel %vm4766, 1, 0
        %v4799 = vsel %vm4767, 1, 0
        %v4800 = vsel %vm4768, 1, 0
        %v4801 = vsel %vm4769, 1, 0
        %v4802 = vsel %vm4770, 1, 0
        %v4803 = vsel %vm4771, 1, 0
        %v4804 = vsel %vm4772, 1, 0
        %v4805 = vsel %vm4773, 1, 0
        %v4806 = vcvt.s32.f32 %v4774
        %v4807 = vcvt.s32.f32 %v4775
        %v4808 = vcvt.s32.f32 %v4776
        %v4809 = vcvt.s32.f32 %v4777
        %v4810 = vcvt.s32.f32 %v4778
        %v4811 = vcvt.s32.f32 %v4779
        %v4812 = vcvt.s32.f32 %v4780
        %v4813 = vcvt.s32.f32 %v4781
        %v4814 = vcvt.s32.f32 %v4782
        %v4815 = vcvt.s32.f32 %v4783
        %v4816 = vcvt.s32.f32 %v4784
        %v4817 = vcvt.s32.f32 %v4785
        %v4818 = vcvt.s32.f32 %v4786
        %v4819 = vcvt.s32.f32 %v4787
        %v4820 = vcvt.s32.f32 %v4788
        %v4821 = vcvt.s32.f32 %v4789
        %v4822 = vcvt.s32.f32 %v4790
        %v4823 = vcvt.s32.f32 %v4791
        %v4824 = vcvt.s32.f32 %v4792
        %v4825 = vcvt.s32.f32 %v4793
        %v4826 = vcvt.s32.f32 %v4794
        %v4827 = vcvt.s32.f32 %v4795
        %v4828 = vcvt.s32.f32 %v4796
        %v4829 = vcvt.s32.f32 %v4797
        %v4830 = vcvt.s32.f32 %v4798
        %v4831 = vcvt.s32.f32 %v4799
        %v4832 = vcvt.s32.f32 %v4800
        %v4833 = vcvt.s32.f32 %v4801
        %v4834 = vcvt.s32.f32 %v4802
        %v4835 = vcvt.s32.f32 %v4803
        %v4836 = vcvt.s32.f32 %v4804
        %v4837 = vcvt.s32.f32 %v4805
        %4838 = vset.pattern.permute.xlu0 1
        %4839 = vperm.xlu0 %4838, %v3414
        %v4840 = vpop.permute.xlu0 %4839
        %4842 = vset.pattern.permute.xlu0 1
        %4843 = vperm.xlu0 %4842, %v3415
        %v4844 = vpop.permute.xlu0 %4843
        %4846 = vset.pattern.permute.xlu0 1
        %4847 = vperm.xlu0 %4846, %v3416
        %v4848 = vpop.permute.xlu0 %4847
        %4850 = vset.pattern.permute.xlu0 1
        %4851 = vperm.xlu0 %4850, %v3417
        %v4852 = vpop.permute.xlu0 %4851
        %4854 = vset.pattern.permute.xlu0 1
        %4855 = vperm.xlu0 %4854, %v3418
        %v4856 = vpop.permute.xlu0 %4855
        %4858 = vset.pattern.permute.xlu0 1
        %4859 = vperm.xlu0 %4858, %v3419
        %v4860 = vpop.permute.xlu0 %4859
        %4862 = vset.pattern.permute.xlu0 1
        %4863 = vperm.xlu0 %4862, %v3420
        %v4864 = vpop.permute.xlu0 %4863
        %4866 = vset.pattern.permute.xlu0 1
        %4867 = vperm.xlu0 %4866, %v3421
        %v4868 = vpop.permute.xlu0 %4867
        %4870 = vset.pattern.permute.xlu0 1
        %4871 = vperm.xlu0 %4870, %v3422
        %v4872 = vpop.permute.xlu0 %4871
        %4874 = vset.pattern.permute.xlu0 1
        %4875 = vperm.xlu0 %4874, %v3423
        %v4876 = vpop.permute.xlu0 %4875
        %4878 = vset.pattern.permute.xlu0 1
        %4879 = vperm.xlu0 %4878, %v3424
        %v4880 = vpop.permute.xlu0 %4879
        %4882 = vset.pattern.permute.xlu0 1
        %4883 = vperm.xlu0 %4882, %v3425
        %v4884 = vpop.permute.xlu0 %4883
        %4886 = vset.pattern.permute.xlu0 1
        %4887 = vperm.xlu0 %4886, %v3426
        %v4888 = vpop.permute.xlu0 %4887
        %4890 = vset.pattern.permute.xlu0 1
        %4891 = vperm.xlu0 %4890, %v3427
        %v4892 = vpop.permute.xlu0 %4891
        %4894 = vset.pattern.permute.xlu0 1
        %4895 = vperm.xlu0 %4894, %v3428
        %v4896 = vpop.permute.xlu0 %4895
        %4898 = vset.pattern.permute.xlu0 1
        %4899 = vperm.xlu0 %4898, %v3429
        %v4900 = vpop.permute.xlu0 %4899
        %v4902 = vmul.f32 %v4840, %v4806
        %v4903 = vmul.f32 %v4840, %v4807
        %v4904 = vmul.f32 %v4844, %v4808
        %v4905 = vmul.f32 %v4844, %v4809
        %v4906 = vmul.f32 %v4848, %v4810
        %v4907 = vmul.f32 %v4848, %v4811
        %v4908 = vmul.f32 %v4852, %v4812
        %v4909 = vmul.f32 %v4852, %v4813
        %v4910 = vmul.f32 %v4856, %v4814
        %v4911 = vmul.f32 %v4856, %v4815
        %v4912 = vmul.f32 %v4860, %v4816
        %v4913 = vmul.f32 %v4860, %v4817
        %v4914 = vmul.f32 %v4864, %v4818
        %v4915 = vmul.f32 %v4864, %v4819
        %v4916 = vmul.f32 %v4868, %v4820
        %v4917 = vmul.f32 %v4868, %v4821
        %v4918 = vmul.f32 %v4872, %v4822
        %v4919 = vmul.f32 %v4872, %v4823
        %v4920 = vmul.f32 %v4876, %v4824
        %v4921 = vmul.f32 %v4876, %v4825
        %v4922 = vmul.f32 %v4880, %v4826
        %v4923 = vmul.f32 %v4880, %v4827
        %v4924 = vmul.f32 %v4884, %v4828
        %v4925 = vmul.f32 %v4884, %v4829
        %v4926 = vmul.f32 %v4888, %v4830
        %v4927 = vmul.f32 %v4888, %v4831
        %v4928 = vmul.f32 %v4892, %v4832
        %v4929 = vmul.f32 %v4892, %v4833
        %v4930 = vmul.f32 %v4896, %v4834
        %v4931 = vmul.f32 %v4896, %v4835
        %v4932 = vmul.f32 %v4900, %v4836
        %v4933 = vmul.f32 %v4900, %v4837
        %v4934 = vadd.f32 %v4630, %v4902
        %v4935 = vadd.f32 %v4631, %v4903
        %v4936 = vadd.f32 %v4632, %v4904
        %v4937 = vadd.f32 %v4633, %v4905
        %v4938 = vadd.f32 %v4634, %v4906
        %v4939 = vadd.f32 %v4635, %v4907
        %v4940 = vadd.f32 %v4636, %v4908
        %v4941 = vadd.f32 %v4637, %v4909
        %v4942 = vadd.f32 %v4638, %v4910
        %v4943 = vadd.f32 %v4639, %v4911
        %v4944 = vadd.f32 %v4640, %v4912
        %v4945 = vadd.f32 %v4641, %v4913
        %v4946 = vadd.f32 %v4642, %v4914
        %v4947 = vadd.f32 %v4643, %v4915
        %v4948 = vadd.f32 %v4644, %v4916
        %v4949 = vadd.f32 %v4645, %v4917
        %v4950 = vadd.f32 %v4646, %v4918
        %v4951 = vadd.f32 %v4647, %v4919
        %v4952 = vadd.f32 %v4648, %v4920
        %v4953 = vadd.f32 %v4649, %v4921
        %v4954 = vadd.f32 %v4650, %v4922
        %v4955 = vadd.f32 %v4651, %v4923
        %v4956 = vadd.f32 %v4652, %v4924
        %v4957 = vadd.f32 %v4653, %v4925
        %v4958 = vadd.f32 %v4654, %v4926
        %v4959 = vadd.f32 %v4655, %v4927
        %v4960 = vadd.f32 %v4656, %v4928
        %v4961 = vadd.f32 %v4657, %v4929
        %v4962 = vadd.f32 %v4658, %v4930
        %v4963 = vadd.f32 %v4659, %v4931
        %v4964 = vadd.f32 %v4660, %v4932
        %v4965 = vadd.f32 %v4661, %v4933
        %v4966 = vadd.s32 %v4662, %v3031
        %v4967 = vadd.s32 %v4663, %v3033
        %v4968 = vadd.s32 %v4664, %v3035
        %v4969 = vadd.s32 %v4665, %v3037
        %v4970 = vadd.s32 %v4666, %v3039
        %v4971 = vadd.s32 %v4667, %v3041
        %v4972 = vadd.s32 %v4668, %v3043
        %v4973 = vadd.s32 %v4669, %v3045
        %v4974 = vadd.s32 %v4670, %v3047
        %v4975 = vadd.s32 %v4671, %v3049
        %v4976 = vadd.s32 %v4672, %v3051
        %v4977 = vadd.s32 %v4673, %v3053
        %v4978 = vadd.s32 %v4674, %v3055
        %v4979 = vadd.s32 %v4675, %v3057
        %v4980 = vadd.s32 %v4676, %v3059
        %v4981 = vadd.s32 %v4677, %v3061
        %4982 = vset.pattern.permute.xlu0 2
        %4983 = vperm.xlu0 %4982, %v4966
        %v4984 = vpop.permute.xlu0 %4983
        %4985 = vset.pattern.permute.xlu0 2
        %4986 = vperm.xlu0 %4985, %v4967
        %v4987 = vpop.permute.xlu0 %4986
        %4988 = vset.pattern.permute.xlu0 2
        %4989 = vperm.xlu0 %4988, %v4968
        %v4990 = vpop.permute.xlu0 %4989
        %4991 = vset.pattern.permute.xlu0 2
        %4992 = vperm.xlu0 %4991, %v4969
        %v4993 = vpop.permute.xlu0 %4992
        %4994 = vset.pattern.permute.xlu0 2
        %4995 = vperm.xlu0 %4994, %v4970
        %v4996 = vpop.permute.xlu0 %4995
        %4997 = vset.pattern.permute.xlu0 2
        %4998 = vperm.xlu0 %4997, %v4971
        %v4999 = vpop.permute.xlu0 %4998
        %5000 = vset.pattern.permute.xlu0 2
        %5001 = vperm.xlu0 %5000, %v4972
        %v5002 = vpop.permute.xlu0 %5001
        %5003 = vset.pattern.permute.xlu0 2
        %5004 = vperm.xlu0 %5003, %v4973
        %v5005 = vpop.permute.xlu0 %5004
        %5006 = vset.pattern.permute.xlu0 2
        %5007 = vperm.xlu0 %5006, %v4974
        %v5008 = vpop.permute.xlu0 %5007
        %5009 = vset.pattern.permute.xlu0 2
        %5010 = vperm.xlu0 %5009, %v4975
        %v5011 = vpop.permute.xlu0 %5010
        %5012 = vset.pattern.permute.xlu0 2
        %5013 = vperm.xlu0 %5012, %v4976
        %v5014 = vpop.permute.xlu0 %5013
        %5015 = vset.pattern.permute.xlu0 2
        %5016 = vperm.xlu0 %5015, %v4977
        %v5017 = vpop.permute.xlu0 %5016
        %5018 = vset.pattern.permute.xlu0 2
        %5019 = vperm.xlu0 %5018, %v4978
        %v5020 = vpop.permute.xlu0 %5019
        %5021 = vset.pattern.permute.xlu0 2
        %5022 = vperm.xlu0 %5021, %v4979
        %v5023 = vpop.permute.xlu0 %5022
        %5024 = vset.pattern.permute.xlu0 2
        %5025 = vperm.xlu0 %5024, %v4980
        %v5026 = vpop.permute.xlu0 %5025
        %5027 = vset.pattern.permute.xlu0 2
        %5028 = vperm.xlu0 %5027, %v4981
        %v5029 = vpop.permute.xlu0 %5028
        %vm5030 = vcmp.eq.s32.totalorder %v797, %v4984
        %vm5031 = vcmp.eq.s32.totalorder %v798, %v4984
        %vm5032 = vcmp.eq.s32.totalorder %v797, %v4987
        %vm5033 = vcmp.eq.s32.totalorder %v798, %v4987
        %vm5034 = vcmp.eq.s32.totalorder %v797, %v4990
        %vm5035 = vcmp.eq.s32.totalorder %v798, %v4990
        %vm5036 = vcmp.eq.s32.totalorder %v797, %v4993
        %vm5037 = vcmp.eq.s32.totalorder %v798, %v4993
        %vm5038 = vcmp.eq.s32.totalorder %v797, %v4996
        %vm5039 = vcmp.eq.s32.totalorder %v798, %v4996
        %vm5040 = vcmp.eq.s32.totalorder %v797, %v4999
        %vm5041 = vcmp.eq.s32.totalorder %v798, %v4999
        %vm5042 = vcmp.eq.s32.totalorder %v797, %v5002
        %vm5043 = vcmp.eq.s32.totalorder %v798, %v5002
        %vm5044 = vcmp.eq.s32.totalorder %v797, %v5005
        %vm5045 = vcmp.eq.s32.totalorder %v798, %v5005
        %vm5046 = vcmp.eq.s32.totalorder %v797, %v5008
        %vm5047 = vcmp.eq.s32.totalorder %v798, %v5008
        %vm5048 = vcmp.eq.s32.totalorder %v797, %v5011
        %vm5049 = vcmp.eq.s32.totalorder %v798, %v5011
        %vm5050 = vcmp.eq.s32.totalorder %v797, %v5014
        %vm5051 = vcmp.eq.s32.totalorder %v798, %v5014
        %vm5052 = vcmp.eq.s32.totalorder %v797, %v5017
        %vm5053 = vcmp.eq.s32.totalorder %v798, %v5017
        %vm5054 = vcmp.eq.s32.totalorder %v797, %v5020
        %vm5055 = vcmp.eq.s32.totalorder %v798, %v5020
        %vm5056 = vcmp.eq.s32.totalorder %v797, %v5023
        %vm5057 = vcmp.eq.s32.totalorder %v798, %v5023
        %vm5058 = vcmp.eq.s32.totalorder %v797, %v5026
        %vm5059 = vcmp.eq.s32.totalorder %v798, %v5026
        %vm5060 = vcmp.eq.s32.totalorder %v797, %v5029
        %vm5061 = vcmp.eq.s32.totalorder %v798, %v5029
        %v5062 = vsel %vm5030, 1, 0
        %v5063 = vsel %vm5031, 1, 0
        %v5064 = vsel %vm5032, 1, 0
        %v5065 = vsel %vm5033, 1, 0
        %v5066 = vsel %vm5034, 1, 0
        %v5067 = vsel %vm5035, 1, 0
        %v5068 = vsel %vm5036, 1, 0
        %v5069 = vsel %vm5037, 1, 0
        %v5070 = vsel %vm5038, 1, 0
        %v5071 = vsel %vm5039, 1, 0
        %v5072 = vsel %vm5040, 1, 0
        %v5073 = vsel %vm5041, 1, 0
        %v5074 = vsel %vm5042, 1, 0
        %v5075 = vsel %vm5043, 1, 0
        %v5076 = vsel %vm5044, 1, 0
        %v5077 = vsel %vm5045, 1, 0
        %v5078 = vsel %vm5046, 1, 0
        %v5079 = vsel %vm5047, 1, 0
        %v5080 = vsel %vm5048, 1, 0
        %v5081 = vsel %vm5049, 1, 0
        %v5082 = vsel %vm5050, 1, 0
        %v5083 = vsel %vm5051, 1, 0
        %v5084 = vsel %vm5052, 1, 0
        %v5085 = vsel %vm5053, 1, 0
        %v5086 = vsel %vm5054, 1, 0
        %v5087 = vsel %vm5055, 1, 0
        %v5088 = vsel %vm5056, 1, 0
        %v5089 = vsel %vm5057, 1, 0
        %v5090 = vsel %vm5058, 1, 0
        %v5091 = vsel %vm5059, 1, 0
        %v5092 = vsel %vm5060, 1, 0
        %v5093 = vsel %vm5061, 1, 0
        %v5094 = vcvt.s32.f32 %v5062
        %v5095 = vcvt.s32.f32 %v5063
        %v5096 = vcvt.s32.f32 %v5064
        %v5097 = vcvt.s32.f32 %v5065
        %v5098 = vcvt.s32.f32 %v5066
        %v5099 = vcvt.s32.f32 %v5067
        %v5100 = vcvt.s32.f32 %v5068
        %v5101 = vcvt.s32.f32 %v5069
        %v5102 = vcvt.s32.f32 %v5070
        %v5103 = vcvt.s32.f32 %v5071
        %v5104 = vcvt.s32.f32 %v5072
        %v5105 = vcvt.s32.f32 %v5073
        %v5106 = vcvt.s32.f32 %v5074
        %v5107 = vcvt.s32.f32 %v5075
        %v5108 = vcvt.s32.f32 %v5076
        %v5109 = vcvt.s32.f32 %v5077
        %v5110 = vcvt.s32.f32 %v5078
        %v5111 = vcvt.s32.f32 %v5079
        %v5112 = vcvt.s32.f32 %v5080
        %v5113 = vcvt.s32.f32 %v5081
        %v5114 = vcvt.s32.f32 %v5082
        %v5115 = vcvt.s32.f32 %v5083
        %v5116 = vcvt.s32.f32 %v5084
        %v5117 = vcvt.s32.f32 %v5085
        %v5118 = vcvt.s32.f32 %v5086
        %v5119 = vcvt.s32.f32 %v5087
        %v5120 = vcvt.s32.f32 %v5088
        %v5121 = vcvt.s32.f32 %v5089
        %v5122 = vcvt.s32.f32 %v5090
        %v5123 = vcvt.s32.f32 %v5091
        %v5124 = vcvt.s32.f32 %v5092
        %v5125 = vcvt.s32.f32 %v5093
        %5126 = vset.pattern.permute.xlu0 1
        %5127 = vperm.xlu0 %5126, %v3750
        %v5128 = vpop.permute.xlu0 %5127
        %5130 = vset.pattern.permute.xlu0 1
        %5131 = vperm.xlu0 %5130, %v3751
        %v5132 = vpop.permute.xlu0 %5131
        %5134 = vset.pattern.permute.xlu0 1
        %5135 = vperm.xlu0 %5134, %v3752
        %v5136 = vpop.permute.xlu0 %5135
        %5138 = vset.pattern.permute.xlu0 1
        %5139 = vperm.xlu0 %5138, %v3753
        %v5140 = vpop.permute.xlu0 %5139
        %5142 = vset.pattern.permute.xlu0 1
        %5143 = vperm.xlu0 %5142, %v3754
        %v5144 = vpop.permute.xlu0 %5143
        %5146 = vset.pattern.permute.xlu0 1
        %5147 = vperm.xlu0 %5146, %v3755
        %v5148 = vpop.permute.xlu0 %5147
        %5150 = vset.pattern.permute.xlu0 1
        %5151 = vperm.xlu0 %5150, %v3756
        %v5152 = vpop.permute.xlu0 %5151
        %5154 = vset.pattern.permute.xlu0 1
        %5155 = vperm.xlu0 %5154, %v3757
        %v5156 = vpop.permute.xlu0 %5155
        %5158 = vset.pattern.permute.xlu0 1
        %5159 = vperm.xlu0 %5158, %v3758
        %v5160 = vpop.permute.xlu0 %5159
        %5162 = vset.pattern.permute.xlu0 1
        %5163 = vperm.xlu0 %5162, %v3759
        %v5164 = vpop.permute.xlu0 %5163
        %5166 = vset.pattern.permute.xlu0 1
        %5167 = vperm.xlu0 %5166, %v3760
        %v5168 = vpop.permute.xlu0 %5167
        %5170 = vset.pattern.permute.xlu0 1
        %5171 = vperm.xlu0 %5170, %v3761
        %v5172 = vpop.permute.xlu0 %5171
        %5174 = vset.pattern.permute.xlu0 1
        %5175 = vperm.xlu0 %5174, %v3762
        %v5176 = vpop.permute.xlu0 %5175
        %5178 = vset.pattern.permute.xlu0 1
        %5179 = vperm.xlu0 %5178, %v3763
        %v5180 = vpop.permute.xlu0 %5179
        %5182 = vset.pattern.permute.xlu0 1
        %5183 = vperm.xlu0 %5182, %v3764
        %v5184 = vpop.permute.xlu0 %5183
        %5186 = vset.pattern.permute.xlu0 1
        %5187 = vperm.xlu0 %5186, %v3765
        %v5188 = vpop.permute.xlu0 %5187
        %v5190 = vmul.f32 %v5128, %v5094
        %v5191 = vmul.f32 %v5128, %v5095
        %v5192 = vmul.f32 %v5132, %v5096
        %v5193 = vmul.f32 %v5132, %v5097
        %v5194 = vmul.f32 %v5136, %v5098
        %v5195 = vmul.f32 %v5136, %v5099
        %v5196 = vmul.f32 %v5140, %v5100
        %v5197 = vmul.f32 %v5140, %v5101
        %v5198 = vmul.f32 %v5144, %v5102
        %v5199 = vmul.f32 %v5144, %v5103
        %v5200 = vmul.f32 %v5148, %v5104
        %v5201 = vmul.f32 %v5148, %v5105
        %v5202 = vmul.f32 %v5152, %v5106
        %v5203 = vmul.f32 %v5152, %v5107
        %v5204 = vmul.f32 %v5156, %v5108
        %v5205 = vmul.f32 %v5156, %v5109
        %v5206 = vmul.f32 %v5160, %v5110
        %v5207 = vmul.f32 %v5160, %v5111
        %v5208 = vmul.f32 %v5164, %v5112
        %v5209 = vmul.f32 %v5164, %v5113
        %v5210 = vmul.f32 %v5168, %v5114
        %v5211 = vmul.f32 %v5168, %v5115
        %v5212 = vmul.f32 %v5172, %v5116
        %v5213 = vmul.f32 %v5172, %v5117
        %v5214 = vmul.f32 %v5176, %v5118
        %v5215 = vmul.f32 %v5176, %v5119
        %v5216 = vmul.f32 %v5180, %v5120
        %v5217 = vmul.f32 %v5180, %v5121
        %v5218 = vmul.f32 %v5184, %v5122
        %v5219 = vmul.f32 %v5184, %v5123
        %v5220 = vmul.f32 %v5188, %v5124
        %v5221 = vmul.f32 %v5188, %v5125
        %v5222 = vadd.f32 %v4934, %v5190
        %v5223 = vadd.f32 %v4935, %v5191
        %v5224 = vadd.f32 %v4936, %v5192
        %v5225 = vadd.f32 %v4937, %v5193
        %v5226 = vadd.f32 %v4938, %v5194
        %v5227 = vadd.f32 %v4939, %v5195
        %v5228 = vadd.f32 %v4940, %v5196
        %v5229 = vadd.f32 %v4941, %v5197
        %v5230 = vadd.f32 %v4942, %v5198
        %v5231 = vadd.f32 %v4943, %v5199
        %v5232 = vadd.f32 %v4944, %v5200
        %v5233 = vadd.f32 %v4945, %v5201
        %v5234 = vadd.f32 %v4946, %v5202
        %v5235 = vadd.f32 %v4947, %v5203
        %v5236 = vadd.f32 %v4948, %v5204
        %v5237 = vadd.f32 %v4949, %v5205
        %v5238 = vadd.f32 %v4950, %v5206
        %v5239 = vadd.f32 %v4951, %v5207
        %v5240 = vadd.f32 %v4952, %v5208
        %v5241 = vadd.f32 %v4953, %v5209
        %v5242 = vadd.f32 %v4954, %v5210
        %v5243 = vadd.f32 %v4955, %v5211
        %v5244 = vadd.f32 %v4956, %v5212
        %v5245 = vadd.f32 %v4957, %v5213
        %v5246 = vadd.f32 %v4958, %v5214
        %v5247 = vadd.f32 %v4959, %v5215
        %v5248 = vadd.f32 %v4960, %v5216
        %v5249 = vadd.f32 %v4961, %v5217
        %v5250 = vadd.f32 %v4962, %v5218
        %v5251 = vadd.f32 %v4963, %v5219
        %v5252 = vadd.f32 %v4964, %v5220
        %v5253 = vadd.f32 %v4965, %v5221
        %v5254 = vld [vmem:[%s779] sm:$0xff]
        %v5255 = vld [vmem:[%s779 + $0x8] sm:$0xff]
        %v5256 = vld [vmem:[%s779 + $0x10] sm:$0xff]
        %v5257 = vld [vmem:[%s779 + $0x18] sm:$0xff]
        %v5258 = vld [vmem:[%s779 + $0x20] sm:$0xff]
        %v5259 = vld [vmem:[%s779 + $0x28] sm:$0xff]
        %v5260 = vld [vmem:[%s779 + $0x30] sm:$0xff]
        %v5261 = vld [vmem:[%s779 + $0x38] sm:$0xff]
        %v5262 = vld [vmem:[%s779 + $0x40] sm:$0xff]
        %v5263 = vld [vmem:[%s779 + $0x48] sm:$0xff]
        %v5264 = vld [vmem:[%s779 + $0x50] sm:$0xff]
        %v5265 = vld [vmem:[%s779 + $0x58] sm:$0xff]
        %v5266 = vld [vmem:[%s779 + $0x60] sm:$0xff]
        %v5267 = vld [vmem:[%s779 + $0x68] sm:$0xff]
        %v5268 = vld [vmem:[%s779 + $0x70] sm:$0xff]
        %v5269 = vld [vmem:[%s779 + $0x78] sm:$0xff]
        %v5270 = vld [vmem:[%s779 + $0x80] sm:$0xff]
        %v5271 = vld [vmem:[%s779 + $0x88] sm:$0xff]
        %v5272 = vld [vmem:[%s779 + $0x90] sm:$0xff]
        %v5273 = vld [vmem:[%s779 + $0x98] sm:$0xff]
        %v5274 = vld [vmem:[%s779 + $0xa0] sm:$0xff]
        %v5275 = vld [vmem:[%s779 + $0xa8] sm:$0xff]
        %v5276 = vld [vmem:[%s779 + $0xb0] sm:$0xff]
        %v5277 = vld [vmem:[%s779 + $0xb8] sm:$0xff]
        %vm5278 = vcmask 523264
        %v5280 = vsel %vm5278, %v5223, 0
        %v5283 = vsel %vm5278, %v5225, 0
        %v5286 = vsel %vm5278, %v5227, 0
        %v5289 = vsel %vm5278, %v5229, 0
        %v5292 = vsel %vm5278, %v5231, 0
        %v5295 = vsel %vm5278, %v5233, 0
        %v5298 = vsel %vm5278, %v5235, 0
        %v5301 = vsel %vm5278, %v5237, 0
        %v5304 = vsel %vm5278, %v5239, 0
        %v5307 = vsel %vm5278, %v5241, 0
        %v5310 = vsel %vm5278, %v5243, 0
        %v5313 = vsel %vm5278, %v5245, 0
        %v5316 = vsel %vm5278, %v5247, 0
        %v5319 = vsel %vm5278, %v5249, 0
        %v5322 = vsel %vm5278, %v5251, 0
        %v5325 = vsel %vm5278, %v5253, 0
        %5327 = vmatpush.msra.mxu0 %v5269
        %5328 = vmatpush.msra.mxu0 %v5268
        %5329 = vmatpush.msra.mxu0 %v5267
        %5330 = vmatpush.msra.mxu0 %v5266
        %5331 = vmatpush.msra.mxu0 %v5265
        %5332 = vmatpush.msra.mxu0 %v5264
        %5333 = vmatpush.msra.mxu0 %v5263
        %5334 = vmatpush.msra.mxu0 %v5262
        %5335 = vmatpush.msra.mxu0 %v5261
        %5336 = vmatpush.msra.mxu0 %v5260
        %5337 = vmatpush.msra.mxu0 %v5259
        %5338 = vmatpush.msra.mxu0 %v5258
        %5339 = vmatpush.msra.mxu0 %v5257
        %5340 = vmatpush.msra.mxu0 %v5256
        %5341 = vmatpush.msra.mxu0 %v5255
        %5342 = vmatpush.msra.mxu0 %v5254
        %5343 = vmatmul.f32.gmra.mxu0 %v5222
        %v5344 = vpop.f32.mrf.mxu0
        %v5345 = vadd.f32 0.0, %v5344
        %5346 = vmatmul.f32.gmra.mxu0 %v5224
        %v5347 = vpop.f32.mrf.mxu0
        %v5348 = vadd.f32 0.0, %v5347
        %5349 = vmatmul.f32.gmra.mxu0 %v5226
        %v5350 = vpop.f32.mrf.mxu0
        %v5351 = vadd.f32 0.0, %v5350
        %5352 = vmatmul.f32.gmra.mxu0 %v5228
        %v5353 = vpop.f32.mrf.mxu0
        %v5354 = vadd.f32 0.0, %v5353
        %5355 = vmatmul.f32.gmra.mxu0 %v5230
        %v5356 = vpop.f32.mrf.mxu0
        %v5357 = vadd.f32 0.0, %v5356
        %5358 = vmatmul.f32.gmra.mxu0 %v5232
        %v5359 = vpop.f32.mrf.mxu0
        %v5360 = vadd.f32 0.0, %v5359
        %5361 = vmatmul.f32.gmra.mxu0 %v5234
        %v5362 = vpop.f32.mrf.mxu0
        %v5363 = vadd.f32 0.0, %v5362
        %5364 = vmatmul.f32.gmra.mxu0 %v5236
        %v5365 = vpop.f32.mrf.mxu0
        %v5366 = vadd.f32 0.0, %v5365
        %5367 = vmatmul.f32.gmra.mxu0 %v5238
        %v5368 = vpop.f32.mrf.mxu0
        %v5369 = vadd.f32 0.0, %v5368
        %5370 = vmatmul.f32.gmra.mxu0 %v5240
        %v5371 = vpop.f32.mrf.mxu0
        %v5372 = vadd.f32 0.0, %v5371
        %5373 = vmatmul.f32.gmra.mxu0 %v5242
        %v5374 = vpop.f32.mrf.mxu0
        %v5375 = vadd.f32 0.0, %v5374
        %5376 = vmatmul.f32.gmra.mxu0 %v5244
        %v5377 = vpop.f32.mrf.mxu0
        %v5378 = vadd.f32 0.0, %v5377
        %5379 = vmatmul.f32.gmra.mxu0 %v5246
        %v5380 = vpop.f32.mrf.mxu0
        %v5381 = vadd.f32 0.0, %v5380
        %5382 = vmatmul.f32.gmra.mxu0 %v5248
        %v5383 = vpop.f32.mrf.mxu0
        %v5384 = vadd.f32 0.0, %v5383
        %5385 = vmatmul.f32.gmra.mxu0 %v5250
        %v5386 = vpop.f32.mrf.mxu0
        %v5387 = vadd.f32 0.0, %v5386
        %5388 = vmatmul.f32.gmra.mxu0 %v5252
        %v5389 = vpop.f32.mrf.mxu0
        %v5390 = vadd.f32 0.0, %v5389
        %5391 = vdwg.mxu0
        %5392 = vmatpush.msra.mxu0 0.0
        %5393 = vmatpush.msra.mxu0 0.0
        %5394 = vmatpush.msra.mxu0 0.0
        %5395 = vmatpush.msra.mxu0 0.0
        %5396 = vmatpush.msra.mxu0 0.0
        %5397 = vmatpush.msra.mxu0 0.0
        %5398 = vmatpush.msra.mxu0 0.0
        %5399 = vmatpush.msra.mxu0 0.0
        %5400 = vmatpush.msra.mxu0 %v5277
        %5401 = vmatpush.msra.mxu0 %v5276
        %5402 = vmatpush.msra.mxu0 %v5275
        %5403 = vmatpush.msra.mxu0 %v5274
        %5404 = vmatpush.msra.mxu0 %v5273
        %5405 = vmatpush.msra.mxu0 %v5272
        %5406 = vmatpush.msra.mxu0 %v5271
        %5407 = vmatpush.msra.mxu0 %v5270
        %5408 = vmatmul.f32.gmra.mxu0 %v5280
        %v5409 = vpop.f32.mrf.mxu0
        %v5410 = vadd.f32 %v5345, %v5409
        %5411 = vmatmul.f32.gmra.mxu0 %v5283
        %v5412 = vpop.f32.mrf.mxu0
        %v5413 = vadd.f32 %v5348, %v5412
        %5414 = vmatmul.f32.gmra.mxu0 %v5286
        %v5415 = vpop.f32.mrf.mxu0
        %v5416 = vadd.f32 %v5351, %v5415
        %5417 = vmatmul.f32.gmra.mxu0 %v5289
        %v5418 = vpop.f32.mrf.mxu0
        %v5419 = vadd.f32 %v5354, %v5418
        %5420 = vmatmul.f32.gmra.mxu0 %v5292
        %v5421 = vpop.f32.mrf.mxu0
        %v5422 = vadd.f32 %v5357, %v5421
        %5423 = vmatmul.f32.gmra.mxu0 %v5295
        %v5424 = vpop.f32.mrf.mxu0
        %v5425 = vadd.f32 %v5360, %v5424
        %5426 = vmatmul.f32.gmra.mxu0 %v5298
        %v5427 = vpop.f32.mrf.mxu0
        %v5428 = vadd.f32 %v5363, %v5427
        %5429 = vmatmul.f32.gmra.mxu0 %v5301
        %v5430 = vpop.f32.mrf.mxu0
        %v5431 = vadd.f32 %v5366, %v5430
        %5432 = vmatmul.f32.gmra.mxu0 %v5304
        %v5433 = vpop.f32.mrf.mxu0
        %v5434 = vadd.f32 %v5369, %v5433
        %5435 = vmatmul.f32.gmra.mxu0 %v5307
        %v5436 = vpop.f32.mrf.mxu0
        %v5437 = vadd.f32 %v5372, %v5436
        %5438 = vmatmul.f32.gmra.mxu0 %v5310
        %v5439 = vpop.f32.mrf.mxu0
        %v5440 = vadd.f32 %v5375, %v5439
        %5441 = vmatmul.f32.gmra.mxu0 %v5313
        %v5442 = vpop.f32.mrf.mxu0
        %v5443 = vadd.f32 %v5378, %v5442
        %5444 = vmatmul.f32.gmra.mxu0 %v5316
        %v5445 = vpop.f32.mrf.mxu0
        %v5446 = vadd.f32 %v5381, %v5445
        %5447 = vmatmul.f32.gmra.mxu0 %v5319
        %v5448 = vpop.f32.mrf.mxu0
        %v5449 = vadd.f32 %v5384, %v5448
        %5450 = vmatmul.f32.gmra.mxu0 %v5322
        %v5451 = vpop.f32.mrf.mxu0
        %v5452 = vadd.f32 %v5387, %v5451
        %5453 = vmatmul.f32.gmra.mxu0 %v5325
        %v5454 = vpop.f32.mrf.mxu0
        %v5455 = vadd.f32 %v5390, %v5454
        %5456 = vdwg.mxu0
        %v5457 = vld [vmem:[%s2] sm:$0x7]
        %v5458 = vld [vmem:[%s3] sm:$0xff]
        %v5459 = vld [vmem:[%s3 + $0x8] sm:$0xff]
        %v5460 = vld [vmem:[%s3 + $0x10] sm:$0xff]
        %v5461 = vld [vmem:[%s3 + $0x18] sm:$0xff]
        %vm5462 = vcmask 261120
        %v5464 = vsel %vm5462, %v5410, 0
        %v5467 = vsel %vm5462, %v5413, 0
        %v5470 = vsel %vm5462, %v5416, 0
        %v5473 = vsel %vm5462, %v5419, 0
        %v5476 = vsel %vm5462, %v5422, 0
        %v5479 = vsel %vm5462, %v5425, 0
        %v5482 = vsel %vm5462, %v5428, 0
        %v5485 = vsel %vm5462, %v5431, 0
        %v5488 = vsel %vm5462, %v5434, 0
        %v5491 = vsel %vm5462, %v5437, 0
        %v5494 = vsel %vm5462, %v5440, 0
        %v5497 = vsel %vm5462, %v5443, 0
        %v5500 = vsel %vm5462, %v5446, 0
        %v5503 = vsel %vm5462, %v5449, 0
        %v5506 = vsel %vm5462, %v5452, 0
        %v5509 = vsel %vm5462, %v5455, 0
        %5511 = vmatpush.msra.mxu0 0.0
        %5512 = vmatpush.msra.mxu0 0.0
        %5513 = vmatpush.msra.mxu0 0.0
        %5514 = vmatpush.msra.mxu0 0.0
        %5515 = vmatpush.msra.mxu0 0.0
        %5516 = vmatpush.msra.mxu0 0.0
        %5517 = vmatpush.msra.mxu0 0.0
        %5518 = vmatpush.msra.mxu0 0.0
        %5519 = vmatpush.msra.mxu0 0.0
        %5520 = vmatpush.msra.mxu0 0.0
        %5521 = vmatpush.msra.mxu0 0.0
        %5522 = vmatpush.msra.mxu0 0.0
        %5523 = vmatpush.msra.mxu0 %v5461
        %5524 = vmatpush.msra.mxu0 %v5460
        %5525 = vmatpush.msra.mxu0 %v5459
        %5526 = vmatpush.msra.mxu0 %v5458
        %5527 = vmatmul.f32.gmra.mxu0 %v5464
        %v5528 = vpop.f32.mrf.mxu0
        %v5529 = vadd.f32 0.0, %v5528
        %5530 = vmatmul.f32.gmra.mxu0 %v5467
        %v5531 = vpop.f32.mrf.mxu0
        %v5532 = vadd.f32 0.0, %v5531
        %5533 = vmatmul.f32.gmra.mxu0 %v5470
        %v5534 = vpop.f32.mrf.mxu0
        %v5535 = vadd.f32 0.0, %v5534
        %5536 = vmatmul.f32.gmra.mxu0 %v5473
        %v5537 = vpop.f32.mrf.mxu0
        %v5538 = vadd.f32 0.0, %v5537
        %5539 = vmatmul.f32.gmra.mxu0 %v5476
        %v5540 = vpop.f32.mrf.mxu0
        %v5541 = vadd.f32 0.0, %v5540
        %5542 = vmatmul.f32.gmra.mxu0 %v5479
        %v5543 = vpop.f32.mrf.mxu0
        %v5544 = vadd.f32 0.0, %v5543
        %5545 = vmatmul.f32.gmra.mxu0 %v5482
        %v5546 = vpop.f32.mrf.mxu0
        %v5547 = vadd.f32 0.0, %v5546
        %5548 = vmatmul.f32.gmra.mxu0 %v5485
        %v5549 = vpop.f32.mrf.mxu0
        %v5550 = vadd.f32 0.0, %v5549
        %5551 = vmatmul.f32.gmra.mxu0 %v5488
        %v5552 = vpop.f32.mrf.mxu0
        %v5553 = vadd.f32 0.0, %v5552
        %5554 = vmatmul.f32.gmra.mxu0 %v5491
        %v5555 = vpop.f32.mrf.mxu0
        %v5556 = vadd.f32 0.0, %v5555
        %5557 = vmatmul.f32.gmra.mxu0 %v5494
        %v5558 = vpop.f32.mrf.mxu0
        %v5559 = vadd.f32 0.0, %v5558
        %5560 = vmatmul.f32.gmra.mxu0 %v5497
        %v5561 = vpop.f32.mrf.mxu0
        %v5562 = vadd.f32 0.0, %v5561
        %5563 = vmatmul.f32.gmra.mxu0 %v5500
        %v5564 = vpop.f32.mrf.mxu0
        %v5565 = vadd.f32 0.0, %v5564
        %5566 = vmatmul.f32.gmra.mxu0 %v5503
        %v5567 = vpop.f32.mrf.mxu0
        %v5568 = vadd.f32 0.0, %v5567
        %5569 = vmatmul.f32.gmra.mxu0 %v5506
        %v5570 = vpop.f32.mrf.mxu0
        %v5571 = vadd.f32 0.0, %v5570
        %5572 = vmatmul.f32.gmra.mxu0 %v5509
        %v5573 = vpop.f32.mrf.mxu0
        %v5574 = vadd.f32 0.0, %v5573
        %5575 = vdwg.mxu0
        %vm5576 = vcmask 23552
        %v5578 = vsel %vm5576, %v780, 0
        %v5581 = vsel %vm5576, %v781, 0
        %v5584 = vsel %vm5576, %v782, 0
        %v5587 = vsel %vm5576, %v783, 0
        %v5590 = vsel %vm5576, %v784, 0
        %v5593 = vsel %vm5576, %v785, 0
        %v5596 = vsel %vm5576, %v786, 0
        %v5599 = vsel %vm5576, %v787, 0
        %v5602 = vsel %vm5576, %v788, 0
        %v5605 = vsel %vm5576, %v789, 0
        %v5608 = vsel %vm5576, %v790, 0
        %v5611 = vsel %vm5576, %v791, 0
        %v5614 = vsel %vm5576, %v792, 0
        %v5617 = vsel %vm5576, %v793, 0
        %v5620 = vsel %vm5576, %v794, 0
        %v5623 = vsel %vm5576, %v795, 0
        %vm5625 = vcmask 1042432
        %v5627 = vsel %vm5625, %v5457, 0
        %5629 = vmatpush.msra.mxu0 0.0
        %5630 = vmatpush.msra.mxu0 0.0
        %5631 = vmatpush.msra.mxu0 0.0
        %5632 = vmatpush.msra.mxu0 0.0
        %5633 = vmatpush.msra.mxu0 0.0
        %5634 = vmatpush.msra.mxu0 0.0
        %5635 = vmatpush.msra.mxu0 0.0
        %5636 = vmatpush.msra.mxu0 0.0
        %5637 = vmatpush.msra.mxu0 0.0
        %5638 = vmatpush.msra.mxu0 0.0
        %5639 = vmatpush.msra.mxu0 0.0
        %5640 = vmatpush.msra.mxu0 0.0
        %5641 = vmatpush.msra.mxu0 0.0
        %5642 = vmatpush.msra.mxu0 0.0
        %5643 = vmatpush.msra.mxu0 0.0
        %5644 = vmatpush.msra.mxu0 %v5627
        %5645 = vmatmul.f32.gmra.mxu0 %v5578
        %v5646 = vpop.f32.mrf.mxu0
        %v5647 = vadd.f32 %v5529, %v5646
        %5648 = vmatmul.f32.gmra.mxu0 %v5581
        %v5649 = vpop.f32.mrf.mxu0
        %v5650 = vadd.f32 %v5532, %v5649
        %5651 = vmatmul.f32.gmra.mxu0 %v5584
        %v5652 = vpop.f32.mrf.mxu0
        %v5653 = vadd.f32 %v5535, %v5652
        %5654 = vmatmul.f32.gmra.mxu0 %v5587
        %v5655 = vpop.f32.mrf.mxu0
        %v5656 = vadd.f32 %v5538, %v5655
        %5657 = vmatmul.f32.gmra.mxu0 %v5590
        %v5658 = vpop.f32.mrf.mxu0
        %v5659 = vadd.f32 %v5541, %v5658
        %5660 = vmatmul.f32.gmra.mxu0 %v5593
        %v5661 = vpop.f32.mrf.mxu0
        %v5662 = vadd.f32 %v5544, %v5661
        %5663 = vmatmul.f32.gmra.mxu0 %v5596
        %v5664 = vpop.f32.mrf.mxu0
        %v5665 = vadd.f32 %v5547, %v5664
        %5666 = vmatmul.f32.gmra.mxu0 %v5599
        %v5667 = vpop.f32.mrf.mxu0
        %v5668 = vadd.f32 %v5550, %v5667
        %5669 = vmatmul.f32.gmra.mxu0 %v5602
        %v5670 = vpop.f32.mrf.mxu0
        %v5671 = vadd.f32 %v5553, %v5670
        %5672 = vmatmul.f32.gmra.mxu0 %v5605
        %v5673 = vpop.f32.mrf.mxu0
        %v5674 = vadd.f32 %v5556, %v5673
        %5675 = vmatmul.f32.gmra.mxu0 %v5608
        %v5676 = vpop.f32.mrf.mxu0
        %v5677 = vadd.f32 %v5559, %v5676
        %5678 = vmatmul.f32.gmra.mxu0 %v5611
        %v5679 = vpop.f32.mrf.mxu0
        %v5680 = vadd.f32 %v5562, %v5679
        %5681 = vmatmul.f32.gmra.mxu0 %v5614
        %v5682 = vpop.f32.mrf.mxu0
        %v5683 = vadd.f32 %v5565, %v5682
        %5684 = vmatmul.f32.gmra.mxu0 %v5617
        %v5685 = vpop.f32.mrf.mxu0
        %v5686 = vadd.f32 %v5568, %v5685
        %5687 = vmatmul.f32.gmra.mxu0 %v5620
        %v5688 = vpop.f32.mrf.mxu0
        %v5689 = vadd.f32 %v5571, %v5688
        %5690 = vmatmul.f32.gmra.mxu0 %v5623
        %v5691 = vpop.f32.mrf.mxu0
        %v5692 = vadd.f32 %v5574, %v5691
        %5693 = vdwg.mxu0
        %v5694 = vld [vmem:[#allocation3] sm:$0x1]
        %v5696 = vperm.slane %v5694, 0
        %v5698 = vadd.f32 %v5647, %v5696
        %v5699 = vadd.f32 %v5650, %v5696
        %v5700 = vadd.f32 %v5653, %v5696
        %v5701 = vadd.f32 %v5656, %v5696
        %v5702 = vadd.f32 %v5659, %v5696
        %v5703 = vadd.f32 %v5662, %v5696
        %v5704 = vadd.f32 %v5665, %v5696
        %v5705 = vadd.f32 %v5668, %v5696
        %v5706 = vadd.f32 %v5671, %v5696
        %v5707 = vadd.f32 %v5674, %v5696
        %v5708 = vadd.f32 %v5677, %v5696
        %v5709 = vadd.f32 %v5680, %v5696
        %v5710 = vadd.f32 %v5683, %v5696
        %v5711 = vadd.f32 %v5686, %v5696
        %v5712 = vadd.f32 %v5689, %v5696
        %v5713 = vadd.f32 %v5692, %v5696
        %v5714 = vmax.f32 %v5698, 0.0
        %v5715 = vmax.f32 %v5699, 0.0
        %v5716 = vmax.f32 %v5700, 0.0
        %v5717 = vmax.f32 %v5701, 0.0
        %v5718 = vmax.f32 %v5702, 0.0
        %v5719 = vmax.f32 %v5703, 0.0
        %v5720 = vmax.f32 %v5704, 0.0
        %v5721 = vmax.f32 %v5705, 0.0
        %v5722 = vmax.f32 %v5706, 0.0
        %v5723 = vmax.f32 %v5707, 0.0
        %v5724 = vmax.f32 %v5708, 0.0
        %v5725 = vmax.f32 %v5709, 0.0
        %v5726 = vmax.f32 %v5710, 0.0
        %v5727 = vmax.f32 %v5711, 0.0
        %v5728 = vmax.f32 %v5712, 0.0
        %v5729 = vmax.f32 %v5713, 0.0
        %v5730 = vld [vmem:[#allocation6] sm:$0xff]
        %v5731 = vld [vmem:[#allocation6 + $0x8] sm:$0xff]
        %v5732 = vld [vmem:[#allocation6 + $0x10] sm:$0xff]
        %v5733 = vld [vmem:[#allocation6 + $0x18] sm:$0xff]
        %v5734 = vld [vmem:[#allocation6 + $0x20] sm:$0xff]
        %v5735 = vld [vmem:[#allocation6 + $0x28] sm:$0xff]
        %v5736 = vld [vmem:[#allocation6 + $0x30] sm:$0xff]
        %v5737 = vld [vmem:[#allocation6 + $0x38] sm:$0xff]
        %v5738 = vld [vmem:[%s8] sm:$0x1]
        %v5740 = vperm.slane %v5738, 0
        %v5743 = vsel %vm5278, %v5714, 0
        %v5746 = vsel %vm5278, %v5715, 0
        %v5749 = vsel %vm5278, %v5716, 0
        %v5752 = vsel %vm5278, %v5717, 0
        %v5755 = vsel %vm5278, %v5718, 0
        %v5758 = vsel %vm5278, %v5719, 0
        %v5761 = vsel %vm5278, %v5720, 0
        %v5764 = vsel %vm5278, %v5721, 0
        %v5767 = vsel %vm5278, %v5722, 0
        %v5770 = vsel %vm5278, %v5723, 0
        %v5773 = vsel %vm5278, %v5724, 0
        %v5776 = vsel %vm5278, %v5725, 0
        %v5779 = vsel %vm5278, %v5726, 0
        %v5782 = vsel %vm5278, %v5727, 0
        %v5785 = vsel %vm5278, %v5728, 0
        %v5788 = vsel %vm5278, %v5729, 0
        %5790 = vmatpush.msra.mxu0 0.0
        %5791 = vmatpush.msra.mxu0 0.0
        %5792 = vmatpush.msra.mxu0 0.0
        %5793 = vmatpush.msra.mxu0 0.0
        %5794 = vmatpush.msra.mxu0 0.0
        %5795 = vmatpush.msra.mxu0 0.0
        %5796 = vmatpush.msra.mxu0 0.0
        %5797 = vmatpush.msra.mxu0 0.0
        %5798 = vmatpush.msra.mxu0 %v5737
        %5799 = vmatpush.msra.mxu0 %v5736
        %5800 = vmatpush.msra.mxu0 %v5735
        %5801 = vmatpush.msra.mxu0 %v5734
        %5802 = vmatpush.msra.mxu0 %v5733
        %5803 = vmatpush.msra.mxu0 %v5732
        %5804 = vmatpush.msra.mxu0 %v5731
        %5805 = vmatpush.msra.mxu0 %v5730
        %5806 = vmatmul.f32.gmra.mxu0 %v5743
        %v5807 = vpop.f32.mrf.mxu0
        %v5808 = vadd.f32 %v5740, %v5807
        %5809 = vmatmul.f32.gmra.mxu0 %v5746
        %v5810 = vpop.f32.mrf.mxu0
        %v5811 = vadd.f32 %v5740, %v5810
        %5812 = vmatmul.f32.gmra.mxu0 %v5749
        %v5813 = vpop.f32.mrf.mxu0
        %v5814 = vadd.f32 %v5740, %v5813
        %5815 = vmatmul.f32.gmra.mxu0 %v5752
        %v5816 = vpop.f32.mrf.mxu0
        %v5817 = vadd.f32 %v5740, %v5816
        %5818 = vmatmul.f32.gmra.mxu0 %v5755
        %v5819 = vpop.f32.mrf.mxu0
        %v5820 = vadd.f32 %v5740, %v5819
        %5821 = vmatmul.f32.gmra.mxu0 %v5758
        %v5822 = vpop.f32.mrf.mxu0
        %v5823 = vadd.f32 %v5740, %v5822
        %5824 = vmatmul.f32.gmra.mxu0 %v5761
        %v5825 = vpop.f32.mrf.mxu0
        %v5826 = vadd.f32 %v5740, %v5825
        %5827 = vmatmul.f32.gmra.mxu0 %v5764
        %v5828 = vpop.f32.mrf.mxu0
        %v5829 = vadd.f32 %v5740, %v5828
        %5830 = vmatmul.f32.gmra.mxu0 %v5767
        %v5831 = vpop.f32.mrf.mxu0
        %v5832 = vadd.f32 %v5740, %v5831
        %5833 = vmatmul.f32.gmra.mxu0 %v5770
        %v5834 = vpop.f32.mrf.mxu0
        %v5835 = vadd.f32 %v5740, %v5834
        %5836 = vmatmul.f32.gmra.mxu0 %v5773
        %v5837 = vpop.f32.mrf.mxu0
        %v5838 = vadd.f32 %v5740, %v5837
        %5839 = vmatmul.f32.gmra.mxu0 %v5776
        %v5840 = vpop.f32.mrf.mxu0
        %v5841 = vadd.f32 %v5740, %v5840
        %5842 = vmatmul.f32.gmra.mxu0 %v5779
        %v5843 = vpop.f32.mrf.mxu0
        %v5844 = vadd.f32 %v5740, %v5843
        %5845 = vmatmul.f32.gmra.mxu0 %v5782
        %v5846 = vpop.f32.mrf.mxu0
        %v5847 = vadd.f32 %v5740, %v5846
        %5848 = vmatmul.f32.gmra.mxu0 %v5785
        %v5849 = vpop.f32.mrf.mxu0
        %v5850 = vadd.f32 %v5740, %v5849
        %5851 = vmatmul.f32.gmra.mxu0 %v5788
        %v5852 = vpop.f32.mrf.mxu0
        %v5853 = vadd.f32 %v5740, %v5852
        %5854 = vdwg.mxu0
        %v5855 = vmax.f32 %v5808, 0.0
        %v5856 = vmax.f32 %v5811, 0.0
        %v5857 = vmax.f32 %v5814, 0.0
        %v5858 = vmax.f32 %v5817, 0.0
        %v5859 = vmax.f32 %v5820, 0.0
        %v5860 = vmax.f32 %v5823, 0.0
        %v5861 = vmax.f32 %v5826, 0.0
        %v5862 = vmax.f32 %v5829, 0.0
        %v5863 = vmax.f32 %v5832, 0.0
        %v5864 = vmax.f32 %v5835, 0.0
        %v5865 = vmax.f32 %v5838, 0.0
        %v5866 = vmax.f32 %v5841, 0.0
        %v5867 = vmax.f32 %v5844, 0.0
        %v5868 = vmax.f32 %v5847, 0.0
        %v5869 = vmax.f32 %v5850, 0.0
        %v5870 = vmax.f32 %v5853, 0.0
        %v5871 = vld [vmem:[#allocation8] sm:$0xff]
        %v5872 = vld [vmem:[#allocation8 + $0x8] sm:$0xff]
        %v5873 = vld [vmem:[#allocation8 + $0x10] sm:$0xff]
        %v5874 = vld [vmem:[#allocation8 + $0x18] sm:$0xff]
        %v5875 = vld [vmem:[#allocation8 + $0x20] sm:$0xff]
        %v5876 = vld [vmem:[#allocation8 + $0x28] sm:$0xff]
        %v5877 = vld [vmem:[#allocation8 + $0x30] sm:$0xff]
        %v5878 = vld [vmem:[#allocation8 + $0x38] sm:$0xff]
        %v5879 = vld [vmem:[%s10] sm:$0x1]
        %v5881 = vperm.slane %v5879, 0
        %v5884 = vsel %vm5278, %v5855, 0
        %v5887 = vsel %vm5278, %v5856, 0
        %v5890 = vsel %vm5278, %v5857, 0
        %v5893 = vsel %vm5278, %v5858, 0
        %v5896 = vsel %vm5278, %v5859, 0
        %v5899 = vsel %vm5278, %v5860, 0
        %v5902 = vsel %vm5278, %v5861, 0
        %v5905 = vsel %vm5278, %v5862, 0
        %v5908 = vsel %vm5278, %v5863, 0
        %v5911 = vsel %vm5278, %v5864, 0
        %v5914 = vsel %vm5278, %v5865, 0
        %v5917 = vsel %vm5278, %v5866, 0
        %v5920 = vsel %vm5278, %v5867, 0
        %v5923 = vsel %vm5278, %v5868, 0
        %v5926 = vsel %vm5278, %v5869, 0
        %v5929 = vsel %vm5278, %v5870, 0
        %5931 = vmatpush.msra.mxu0 0.0
        %5932 = vmatpush.msra.mxu0 0.0
        %5933 = vmatpush.msra.mxu0 0.0
        %5934 = vmatpush.msra.mxu0 0.0
        %5935 = vmatpush.msra.mxu0 0.0
        %5936 = vmatpush.msra.mxu0 0.0
        %5937 = vmatpush.msra.mxu0 0.0
        %5938 = vmatpush.msra.mxu0 0.0
        %5939 = vmatpush.msra.mxu0 %v5878
        %5940 = vmatpush.msra.mxu0 %v5877
        %5941 = vmatpush.msra.mxu0 %v5876
        %5942 = vmatpush.msra.mxu0 %v5875
        %5943 = vmatpush.msra.mxu0 %v5874
        %5944 = vmatpush.msra.mxu0 %v5873
        %5945 = vmatpush.msra.mxu0 %v5872
        %5946 = vmatpush.msra.mxu0 %v5871
        %5947 = vmatmul.f32.gmra.mxu0 %v5884
        %v5948 = vpop.f32.mrf.mxu0
        %v5949 = vadd.f32 %v5881, %v5948
        %5950 = vmatmul.f32.gmra.mxu0 %v5887
        %v5951 = vpop.f32.mrf.mxu0
        %v5952 = vadd.f32 %v5881, %v5951
        %5953 = vmatmul.f32.gmra.mxu0 %v5890
        %v5954 = vpop.f32.mrf.mxu0
        %v5955 = vadd.f32 %v5881, %v5954
        %5956 = vmatmul.f32.gmra.mxu0 %v5893
        %v5957 = vpop.f32.mrf.mxu0
        %v5958 = vadd.f32 %v5881, %v5957
        %5959 = vmatmul.f32.gmra.mxu0 %v5896
        %v5960 = vpop.f32.mrf.mxu0
        %v5961 = vadd.f32 %v5881, %v5960
        %5962 = vmatmul.f32.gmra.mxu0 %v5899
        %v5963 = vpop.f32.mrf.mxu0
        %v5964 = vadd.f32 %v5881, %v5963
        %5965 = vmatmul.f32.gmra.mxu0 %v5902
        %v5966 = vpop.f32.mrf.mxu0
        %v5967 = vadd.f32 %v5881, %v5966
        %5968 = vmatmul.f32.gmra.mxu0 %v5905
        %v5969 = vpop.f32.mrf.mxu0
        %v5970 = vadd.f32 %v5881, %v5969
        %5971 = vmatmul.f32.gmra.mxu0 %v5908
        %v5972 = vpop.f32.mrf.mxu0
        %v5973 = vadd.f32 %v5881, %v5972
        %5974 = vmatmul.f32.gmra.mxu0 %v5911
        %v5975 = vpop.f32.mrf.mxu0
        %v5976 = vadd.f32 %v5881, %v5975
        %5977 = vmatmul.f32.gmra.mxu0 %v5914
        %v5978 = vpop.f32.mrf.mxu0
        %v5979 = vadd.f32 %v5881, %v5978
        %5980 = vmatmul.f32.gmra.mxu0 %v5917
        %v5981 = vpop.f32.mrf.mxu0
        %v5982 = vadd.f32 %v5881, %v5981
        %5983 = vmatmul.f32.gmra.mxu0 %v5920
        %v5984 = vpop.f32.mrf.mxu0
        %v5985 = vadd.f32 %v5881, %v5984
        %5986 = vmatmul.f32.gmra.mxu0 %v5923
        %v5987 = vpop.f32.mrf.mxu0
        %v5988 = vadd.f32 %v5881, %v5987
        %5989 = vmatmul.f32.gmra.mxu0 %v5926
        %v5990 = vpop.f32.mrf.mxu0
        %v5991 = vadd.f32 %v5881, %v5990
        %5992 = vmatmul.f32.gmra.mxu0 %v5929
        %v5993 = vpop.f32.mrf.mxu0
        %v5994 = vadd.f32 %v5881, %v5993
        %5995 = vdwg.mxu0
        %v5996 = vadd.f32 %v5698, %v5949
        %v5997 = vadd.f32 %v5699, %v5952
        %v5998 = vadd.f32 %v5700, %v5955
        %v5999 = vadd.f32 %v5701, %v5958
        %v6000 = vadd.f32 %v5702, %v5961
        %v6001 = vadd.f32 %v5703, %v5964
        %v6002 = vadd.f32 %v5704, %v5967
        %v6003 = vadd.f32 %v5705, %v5970
        %v6004 = vadd.f32 %v5706, %v5973
        %v6005 = vadd.f32 %v5707, %v5976
        %v6006 = vadd.f32 %v5708, %v5979
        %v6007 = vadd.f32 %v5709, %v5982
        %v6008 = vadd.f32 %v5710, %v5985
        %v6009 = vadd.f32 %v5711, %v5988
        %v6010 = vadd.f32 %v5712, %v5991
        %v6011 = vadd.f32 %v5713, %v5994
        %v6012 = vld [vmem:[%s5] sm:$0xff]
        %v6013 = vld [vmem:[%s5 + $0x8] sm:$0xff]
        %v6014 = vld [vmem:[%s5 + $0x10] sm:$0xff]
        %v6015 = vld [vmem:[%s5 + $0x18] sm:$0xff]
        %6016 = vmatpush.msra.mxu0 0.0
        %6017 = vmatpush.msra.mxu0 0.0
        %6018 = vmatpush.msra.mxu0 0.0
        %6019 = vmatpush.msra.mxu0 0.0
        %6020 = vmatpush.msra.mxu0 0.0
        %6021 = vmatpush.msra.mxu0 0.0
        %6022 = vmatpush.msra.mxu0 0.0
        %6023 = vmatpush.msra.mxu0 0.0
        %6024 = vmatpush.msra.mxu0 0.0
        %6025 = vmatpush.msra.mxu0 0.0
        %6026 = vmatpush.msra.mxu0 0.0
        %6027 = vmatpush.msra.mxu0 0.0
        %6028 = vmatpush.msra.mxu0 %v6015
        %6029 = vmatpush.msra.mxu0 %v6014
        %6030 = vmatpush.msra.mxu0 %v6013
        %6031 = vmatpush.msra.mxu0 %v6012
        %6032 = vmatmul.f32.gmra.mxu0 %v5464
        %v6033 = vpop.f32.mrf.mxu0
        %v6034 = vadd.f32 0.0, %v6033
        %6035 = vmatmul.f32.gmra.mxu0 %v5467
        %v6036 = vpop.f32.mrf.mxu0
        %v6037 = vadd.f32 0.0, %v6036
        %6038 = vmatmul.f32.gmra.mxu0 %v5470
        %v6039 = vpop.f32.mrf.mxu0
        %v6040 = vadd.f32 0.0, %v6039
        %6041 = vmatmul.f32.gmra.mxu0 %v5473
        %v6042 = vpop.f32.mrf.mxu0
        %v6043 = vadd.f32 0.0, %v6042
        %6044 = vmatmul.f32.gmra.mxu0 %v5476
        %v6045 = vpop.f32.mrf.mxu0
        %v6046 = vadd.f32 0.0, %v6045
        %6047 = vmatmul.f32.gmra.mxu0 %v5479
        %v6048 = vpop.f32.mrf.mxu0
        %v6049 = vadd.f32 0.0, %v6048
        %6050 = vmatmul.f32.gmra.mxu0 %v5482
        %v6051 = vpop.f32.mrf.mxu0
        %v6052 = vadd.f32 0.0, %v6051
        %6053 = vmatmul.f32.gmra.mxu0 %v5485
        %v6054 = vpop.f32.mrf.mxu0
        %v6055 = vadd.f32 0.0, %v6054
        %6056 = vmatmul.f32.gmra.mxu0 %v5488
        %v6057 = vpop.f32.mrf.mxu0
        %v6058 = vadd.f32 0.0, %v6057
        %6059 = vmatmul.f32.gmra.mxu0 %v5491
        %v6060 = vpop.f32.mrf.mxu0
        %v6061 = vadd.f32 0.0, %v6060
        %6062 = vmatmul.f32.gmra.mxu0 %v5494
        %v6063 = vpop.f32.mrf.mxu0
        %v6064 = vadd.f32 0.0, %v6063
        %6065 = vmatmul.f32.gmra.mxu0 %v5497
        %v6066 = vpop.f32.mrf.mxu0
        %v6067 = vadd.f32 0.0, %v6066
        %6068 = vmatmul.f32.gmra.mxu0 %v5500
        %v6069 = vpop.f32.mrf.mxu0
        %v6070 = vadd.f32 0.0, %v6069
        %6071 = vmatmul.f32.gmra.mxu0 %v5503
        %v6072 = vpop.f32.mrf.mxu0
        %v6073 = vadd.f32 0.0, %v6072
        %6074 = vmatmul.f32.gmra.mxu0 %v5506
        %v6075 = vpop.f32.mrf.mxu0
        %v6076 = vadd.f32 0.0, %v6075
        %6077 = vmatmul.f32.gmra.mxu0 %v5509
        %v6078 = vpop.f32.mrf.mxu0
        %v6079 = vadd.f32 0.0, %v6078
        %6080 = vdwg.mxu0
        %v6081 = vadd.f32 %v5996, %v6034
        %v6082 = vadd.f32 %v5997, %v6037
        %v6083 = vadd.f32 %v5998, %v6040
        %v6084 = vadd.f32 %v5999, %v6043
        %v6085 = vadd.f32 %v6000, %v6046
        %v6086 = vadd.f32 %v6001, %v6049
        %v6087 = vadd.f32 %v6002, %v6052
        %v6088 = vadd.f32 %v6003, %v6055
        %v6089 = vadd.f32 %v6004, %v6058
        %v6090 = vadd.f32 %v6005, %v6061
        %v6091 = vadd.f32 %v6006, %v6064
        %v6092 = vadd.f32 %v6007, %v6067
        %v6093 = vadd.f32 %v6008, %v6070
        %v6094 = vadd.f32 %v6009, %v6073
        %v6095 = vadd.f32 %v6010, %v6076
        %v6096 = vadd.f32 %v6011, %v6079
        %v6097 = vld [vmem:[%s6] sm:$0x1]
        %v6099 = vperm.slane %v6097, 0
        %v6101 = vadd.f32 %v6081, %v6099
        %v6102 = vadd.f32 %v6082, %v6099
        %v6103 = vadd.f32 %v6083, %v6099
        %v6104 = vadd.f32 %v6084, %v6099
        %v6105 = vadd.f32 %v6085, %v6099
        %v6106 = vadd.f32 %v6086, %v6099
        %v6107 = vadd.f32 %v6087, %v6099
        %v6108 = vadd.f32 %v6088, %v6099
        %v6109 = vadd.f32 %v6089, %v6099
        %v6110 = vadd.f32 %v6090, %v6099
        %v6111 = vadd.f32 %v6091, %v6099
        %v6112 = vadd.f32 %v6092, %v6099
        %v6113 = vadd.f32 %v6093, %v6099
        %v6114 = vadd.f32 %v6094, %v6099
        %v6115 = vadd.f32 %v6095, %v6099
        %v6116 = vadd.f32 %v6096, %v6099
        %v6117 = vsel %vm5278, %v6101, -inf
        %v6118 = vsel %vm5278, %v6102, -inf
        %v6119 = vmax.f32 %v6117, %v6118
        %v6120 = vrot.slane %v6119, 4
        %v6121 = vmax.f32 %v6119, %v6120
        %v6122 = vrot.slane %v6121, 2
        %v6123 = vmax.f32 %v6121, %v6122
        %v6124 = vrot.slane %v6123, 1
        %v6125 = vmax.f32 %v6123, %v6124
        %v6126 = vsel %vm5278, %v6103, -inf
        %v6127 = vsel %vm5278, %v6104, -inf
        %v6128 = vmax.f32 %v6126, %v6127
        %v6129 = vrot.slane %v6128, 4
        %v6130 = vmax.f32 %v6128, %v6129
        %v6131 = vrot.slane %v6130, 2
        %v6132 = vmax.f32 %v6130, %v6131
        %v6133 = vrot.slane %v6132, 1
        %v6134 = vmax.f32 %v6132, %v6133
        %v6135 = vsel %vm5278, %v6105, -inf
        %v6136 = vsel %vm5278, %v6106, -inf
        %v6137 = vmax.f32 %v6135, %v6136
        %v6138 = vrot.slane %v6137, 4
        %v6139 = vmax.f32 %v6137, %v6138
        %v6140 = vrot.slane %v6139, 2
        %v6141 = vmax.f32 %v6139, %v6140
        %v6142 = vrot.slane %v6141, 1
        %v6143 = vmax.f32 %v6141, %v6142
        %v6144 = vsel %vm5278, %v6107, -inf
        %v6145 = vsel %vm5278, %v6108, -inf
        %v6146 = vmax.f32 %v6144, %v6145
        %v6147 = vrot.slane %v6146, 4
        %v6148 = vmax.f32 %v6146, %v6147
        %v6149 = vrot.slane %v6148, 2
        %v6150 = vmax.f32 %v6148, %v6149
        %v6151 = vrot.slane %v6150, 1
        %v6152 = vmax.f32 %v6150, %v6151
        %v6153 = vsel %vm5278, %v6109, -inf
        %v6154 = vsel %vm5278, %v6110, -inf
        %v6155 = vmax.f32 %v6153, %v6154
        %v6156 = vrot.slane %v6155, 4
        %v6157 = vmax.f32 %v6155, %v6156
        %v6158 = vrot.slane %v6157, 2
        %v6159 = vmax.f32 %v6157, %v6158
        %v6160 = vrot.slane %v6159, 1
        %v6161 = vmax.f32 %v6159, %v6160
        %v6162 = vsel %vm5278, %v6111, -inf
        %v6163 = vsel %vm5278, %v6112, -inf
        %v6164 = vmax.f32 %v6162, %v6163
        %v6165 = vrot.slane %v6164, 4
        %v6166 = vmax.f32 %v6164, %v6165
        %v6167 = vrot.slane %v6166, 2
        %v6168 = vmax.f32 %v6166, %v6167
        %v6169 = vrot.slane %v6168, 1
        %v6170 = vmax.f32 %v6168, %v6169
        %v6171 = vsel %vm5278, %v6113, -inf
        %v6172 = vsel %vm5278, %v6114, -inf
        %v6173 = vmax.f32 %v6171, %v6172
        %v6174 = vrot.slane %v6173, 4
        %v6175 = vmax.f32 %v6173, %v6174
        %v6176 = vrot.slane %v6175, 2
        %v6177 = vmax.f32 %v6175, %v6176
        %v6178 = vrot.slane %v6177, 1
        %v6179 = vmax.f32 %v6177, %v6178
        %v6180 = vsel %vm5278, %v6115, -inf
        %v6181 = vsel %vm5278, %v6116, -inf
        %v6182 = vmax.f32 %v6180, %v6181
        %v6183 = vrot.slane %v6182, 4
        %v6184 = vmax.f32 %v6182, %v6183
        %v6185 = vrot.slane %v6184, 2
        %v6186 = vmax.f32 %v6184, %v6185
        %v6187 = vrot.slane %v6186, 1
        %v6188 = vmax.f32 %v6186, %v6187
        %v6189 = vmax.f32 %v6101, 0.0
        %v6190 = vmax.f32 %v6102, 0.0
        %v6191 = vmax.f32 %v6103, 0.0
        %v6192 = vmax.f32 %v6104, 0.0
        %v6193 = vmax.f32 %v6105, 0.0
        %v6194 = vmax.f32 %v6106, 0.0
        %v6195 = vmax.f32 %v6107, 0.0
        %v6196 = vmax.f32 %v6108, 0.0
        %v6197 = vmax.f32 %v6109, 0.0
        %v6198 = vmax.f32 %v6110, 0.0
        %v6199 = vmax.f32 %v6111, 0.0
        %v6200 = vmax.f32 %v6112, 0.0
        %v6201 = vmax.f32 %v6113, 0.0
        %v6202 = vmax.f32 %v6114, 0.0
        %v6203 = vmax.f32 %v6115, 0.0
        %v6204 = vmax.f32 %v6116, 0.0
        %v6205 = vld [vmem:[%s11] sm:$0xff]
        %v6206 = vld [vmem:[%s11 + $0x8] sm:$0xff]
        %v6207 = vld [vmem:[%s11 + $0x10] sm:$0xff]
        %v6208 = vld [vmem:[%s11 + $0x18] sm:$0xff]
        %v6209 = vld [vmem:[%s11 + $0x20] sm:$0xff]
        %v6210 = vld [vmem:[%s11 + $0x28] sm:$0xff]
        %v6211 = vld [vmem:[%s11 + $0x30] sm:$0xff]
        %v6212 = vld [vmem:[%s11 + $0x38] sm:$0xff]
        %v6213 = vld [vmem:[%s13] sm:$0x1]
        %v6215 = vperm.slane %v6213, 0
        %v6218 = vsel %vm5278, %v6189, 0
        %v6221 = vsel %vm5278, %v6190, 0
        %v6224 = vsel %vm5278, %v6191, 0
        %v6227 = vsel %vm5278, %v6192, 0
        %v6230 = vsel %vm5278, %v6193, 0
        %v6233 = vsel %vm5278, %v6194, 0
        %v6236 = vsel %vm5278, %v6195, 0
        %v6239 = vsel %vm5278, %v6196, 0
        %v6242 = vsel %vm5278, %v6197, 0
        %v6245 = vsel %vm5278, %v6198, 0
        %v6248 = vsel %vm5278, %v6199, 0
        %v6251 = vsel %vm5278, %v6200, 0
        %v6254 = vsel %vm5278, %v6201, 0
        %v6257 = vsel %vm5278, %v6202, 0
        %v6260 = vsel %vm5278, %v6203, 0
        %v6263 = vsel %vm5278, %v6204, 0
        %6265 = vmatpush.msra.mxu0 0.0
        %6266 = vmatpush.msra.mxu0 0.0
        %6267 = vmatpush.msra.mxu0 0.0
        %6268 = vmatpush.msra.mxu0 0.0
        %6269 = vmatpush.msra.mxu0 0.0
        %6270 = vmatpush.msra.mxu0 0.0
        %6271 = vmatpush.msra.mxu0 0.0
        %6272 = vmatpush.msra.mxu0 0.0
        %6273 = vmatpush.msra.mxu0 %v6212
        %6274 = vmatpush.msra.mxu0 %v6211
        %6275 = vmatpush.msra.mxu0 %v6210
        %6276 = vmatpush.msra.mxu0 %v6209
        %6277 = vmatpush.msra.mxu0 %v6208
        %6278 = vmatpush.msra.mxu0 %v6207
        %6279 = vmatpush.msra.mxu0 %v6206
        %6280 = vmatpush.msra.mxu0 %v6205
        %6281 = vmatmul.f32.gmra.mxu0 %v6218
        %v6282 = vpop.f32.mrf.mxu0
        %v6283 = vadd.f32 %v6215, %v6282
        %6284 = vmatmul.f32.gmra.mxu0 %v6221
        %v6285 = vpop.f32.mrf.mxu0
        %v6286 = vadd.f32 %v6215, %v6285
        %6287 = vmatmul.f32.gmra.mxu0 %v6224
        %v6288 = vpop.f32.mrf.mxu0
        %v6289 = vadd.f32 %v6215, %v6288
        %6290 = vmatmul.f32.gmra.mxu0 %v6227
        %v6291 = vpop.f32.mrf.mxu0
        %v6292 = vadd.f32 %v6215, %v6291
        %6293 = vmatmul.f32.gmra.mxu0 %v6230
        %v6294 = vpop.f32.mrf.mxu0
        %v6295 = vadd.f32 %v6215, %v6294
        %6296 = vmatmul.f32.gmra.mxu0 %v6233
        %v6297 = vpop.f32.mrf.mxu0
        %v6298 = vadd.f32 %v6215, %v6297
        %6299 = vmatmul.f32.gmra.mxu0 %v6236
        %v6300 = vpop.f32.mrf.mxu0
        %v6301 = vadd.f32 %v6215, %v6300
        %6302 = vmatmul.f32.gmra.mxu0 %v6239
        %v6303 = vpop.f32.mrf.mxu0
        %v6304 = vadd.f32 %v6215, %v6303
        %6305 = vmatmul.f32.gmra.mxu0 %v6242
        %v6306 = vpop.f32.mrf.mxu0
        %v6307 = vadd.f32 %v6215, %v6306
        %6308 = vmatmul.f32.gmra.mxu0 %v6245
        %v6309 = vpop.f32.mrf.mxu0
        %v6310 = vadd.f32 %v6215, %v6309
        %6311 = vmatmul.f32.gmra.mxu0 %v6248
        %v6312 = vpop.f32.mrf.mxu0
        %v6313 = vadd.f32 %v6215, %v6312
        %6314 = vmatmul.f32.gmra.mxu0 %v6251
        %v6315 = vpop.f32.mrf.mxu0
        %v6316 = vadd.f32 %v6215, %v6315
        %6317 = vmatmul.f32.gmra.mxu0 %v6254
        %v6318 = vpop.f32.mrf.mxu0
        %v6319 = vadd.f32 %v6215, %v6318
        %6320 = vmatmul.f32.gmra.mxu0 %v6257
        %v6321 = vpop.f32.mrf.mxu0
        %v6322 = vadd.f32 %v6215, %v6321
        %6323 = vmatmul.f32.gmra.mxu0 %v6260
        %v6324 = vpop.f32.mrf.mxu0
        %v6325 = vadd.f32 %v6215, %v6324
        %6326 = vmatmul.f32.gmra.mxu0 %v6263
        %v6327 = vpop.f32.mrf.mxu0
        %v6328 = vadd.f32 %v6215, %v6327
        %6329 = vdwg.mxu0
        %v6330 = vmax.f32 %v6125, 0.0
        %v6331 = vmax.f32 %v6134, 0.0
        %v6332 = vmax.f32 %v6143, 0.0
        %v6333 = vmax.f32 %v6152, 0.0
        %v6334 = vmax.f32 %v6161, 0.0
        %v6335 = vmax.f32 %v6170, 0.0
        %v6336 = vmax.f32 %v6179, 0.0
        %v6337 = vmax.f32 %v6188, 0.0
        %v6338 = vld [vmem:[%s12] sm:$0xff]
        %v6339 = vld [vmem:[%s12 + $0x8] sm:$0xff]
        %v6340 = vld [vmem:[%s12 + $0x10] sm:$0xff]
        %v6341 = vld [vmem:[%s12 + $0x18] sm:$0xff]
        %v6342 = vld [vmem:[%s12 + $0x20] sm:$0xff]
        %v6343 = vld [vmem:[%s12 + $0x28] sm:$0xff]
        %v6344 = vld [vmem:[%s12 + $0x30] sm:$0xff]
        %v6345 = vld [vmem:[%s12 + $0x38] sm:$0xff]
        %vm6354 = vcmask 1041409
        %v6355 = vsel %vm6354, %v6331, %v6330
        %vm6356 = vcmask 1042434
        %v6357 = vsel %vm6356, %v6332, %v6355
        %vm6358 = vcmask 1043459
        %v6359 = vsel %vm6358, %v6333, %v6357
        %vm6360 = vcmask 1044484
        %v6361 = vsel %vm6360, %v6334, %v6359
        %vm6362 = vcmask 1045509
        %v6363 = vsel %vm6362, %v6335, %v6361
        %vm6364 = vcmask 1046534
        %v6365 = vsel %vm6364, %v6336, %v6363
        %vm6366 = vcmask 1047559
        %v6367 = vsel %vm6366, %v6337, %v6365
        %v6368 = vsel %vm5278, %v6367, 0
        %6370 = vmatpush.msra.mxu0 0.0
        %6371 = vmatpush.msra.mxu0 0.0
        %6372 = vmatpush.msra.mxu0 0.0
        %6373 = vmatpush.msra.mxu0 0.0
        %6374 = vmatpush.msra.mxu0 0.0
        %6375 = vmatpush.msra.mxu0 0.0
        %6376 = vmatpush.msra.mxu0 0.0
        %6377 = vmatpush.msra.mxu0 0.0
        %6378 = vmatpush.msra.mxu0 %v6345
        %6379 = vmatpush.msra.mxu0 %v6344
        %6380 = vmatpush.msra.mxu0 %v6343
        %6381 = vmatpush.msra.mxu0 %v6342
        %6382 = vmatpush.msra.mxu0 %v6341
        %6383 = vmatpush.msra.mxu0 %v6340
        %6384 = vmatpush.msra.mxu0 %v6339
        %6385 = vmatpush.msra.mxu0 %v6338
        %6386 = vmatmul.f32.gmra.mxu0 %v6368
        %v6387 = vpop.f32.mrf.mxu0
        %v6388 = vadd.f32 0.0, %v6387
        %6389 = vdwg.mxu0
        %v6391 = vrot.slane %v6388, 1
        %v6392 = vrot.slane %v6388, 2
        %v6393 = vrot.slane %v6388, 3
        %v6394 = vrot.slane %v6388, 4
        %v6395 = vrot.slane %v6388, 5
        %v6396 = vrot.slane %v6388, 6
        %v6397 = vrot.slane %v6388, 7
        %v6398 = vperm.slane %v6388, 0
        %v6399 = vperm.slane %v6391, 0
        %v6400 = vperm.slane %v6392, 0
        %v6401 = vperm.slane %v6393, 0
        %v6402 = vperm.slane %v6394, 0
        %v6403 = vperm.slane %v6395, 0
        %v6404 = vperm.slane %v6396, 0
        %v6405 = vperm.slane %v6397, 0
        %v6414 = vadd.f32 %v6283, %v6398
        %v6415 = vadd.f32 %v6286, %v6398
        %v6416 = vadd.f32 %v6289, %v6399
        %v6417 = vadd.f32 %v6292, %v6399
        %v6418 = vadd.f32 %v6295, %v6400
        %v6419 = vadd.f32 %v6298, %v6400
        %v6420 = vadd.f32 %v6301, %v6401
        %v6421 = vadd.f32 %v6304, %v6401
        %v6422 = vadd.f32 %v6307, %v6402
        %v6423 = vadd.f32 %v6310, %v6402
        %v6424 = vadd.f32 %v6313, %v6403
        %v6425 = vadd.f32 %v6316, %v6403
        %v6426 = vadd.f32 %v6319, %v6404
        %v6427 = vadd.f32 %v6322, %v6404
        %v6428 = vadd.f32 %v6325, %v6405
        %v6429 = vadd.f32 %v6328, %v6405
        %v6430 = vmax.f32 %v6414, 0.0
        %v6431 = vmax.f32 %v6415, 0.0
        %v6432 = vmax.f32 %v6416, 0.0
        %v6433 = vmax.f32 %v6417, 0.0
        %v6434 = vmax.f32 %v6418, 0.0
        %v6435 = vmax.f32 %v6419, 0.0
        %v6436 = vmax.f32 %v6420, 0.0
        %v6437 = vmax.f32 %v6421, 0.0
        %v6438 = vmax.f32 %v6422, 0.0
        %v6439 = vmax.f32 %v6423, 0.0
        %v6440 = vmax.f32 %v6424, 0.0
        %v6441 = vmax.f32 %v6425, 0.0
        %v6442 = vmax.f32 %v6426, 0.0
        %v6443 = vmax.f32 %v6427, 0.0
        %v6444 = vmax.f32 %v6428, 0.0
        %v6445 = vmax.f32 %v6429, 0.0
        %v6446 = vld [vmem:[#allocation9] sm:$0xff]
        %v6447 = vld [vmem:[#allocation9 + $0x8] sm:$0xff]
        %v6448 = vld [vmem:[#allocation9 + $0x10] sm:$0xff]
        %v6449 = vld [vmem:[#allocation9 + $0x18] sm:$0xff]
        %v6450 = vld [vmem:[#allocation9 + $0x20] sm:$0xff]
        %v6451 = vld [vmem:[#allocation9 + $0x28] sm:$0xff]
        %v6452 = vld [vmem:[#allocation9 + $0x30] sm:$0xff]
        %v6453 = vld [vmem:[#allocation9 + $0x38] sm:$0xff]
        %v6454 = vld [vmem:[%s15] sm:$0x1]
        %v6456 = vperm.slane %v6454, 0
        %v6459 = vsel %vm5278, %v6430, 0
        %v6462 = vsel %vm5278, %v6431, 0
        %v6465 = vsel %vm5278, %v6432, 0
        %v6468 = vsel %vm5278, %v6433, 0
        %v6471 = vsel %vm5278, %v6434, 0
        %v6474 = vsel %vm5278, %v6435, 0
        %v6477 = vsel %vm5278, %v6436, 0
        %v6480 = vsel %vm5278, %v6437, 0
        %v6483 = vsel %vm5278, %v6438, 0
        %v6486 = vsel %vm5278, %v6439, 0
        %v6489 = vsel %vm5278, %v6440, 0
        %v6492 = vsel %vm5278, %v6441, 0
        %v6495 = vsel %vm5278, %v6442, 0
        %v6498 = vsel %vm5278, %v6443, 0
        %v6501 = vsel %vm5278, %v6444, 0
        %v6504 = vsel %vm5278, %v6445, 0
        %6506 = vmatpush.msra.mxu0 0.0
        %6507 = vmatpush.msra.mxu0 0.0
        %6508 = vmatpush.msra.mxu0 0.0
        %6509 = vmatpush.msra.mxu0 0.0
        %6510 = vmatpush.msra.mxu0 0.0
        %6511 = vmatpush.msra.mxu0 0.0
        %6512 = vmatpush.msra.mxu0 0.0
        %6513 = vmatpush.msra.mxu0 0.0
        %6514 = vmatpush.msra.mxu0 %v6453
        %6515 = vmatpush.msra.mxu0 %v6452
        %6516 = vmatpush.msra.mxu0 %v6451
        %6517 = vmatpush.msra.mxu0 %v6450
        %6518 = vmatpush.msra.mxu0 %v6449
        %6519 = vmatpush.msra.mxu0 %v6448
        %6520 = vmatpush.msra.mxu0 %v6447
        %6521 = vmatpush.msra.mxu0 %v6446
        %6522 = vmatmul.f32.gmra.mxu0 %v6459
        %v6523 = vpop.f32.mrf.mxu0
        %v6524 = vadd.f32 %v6456, %v6523
        %6525 = vmatmul.f32.gmra.mxu0 %v6462
        %v6526 = vpop.f32.mrf.mxu0
        %v6527 = vadd.f32 %v6456, %v6526
        %6528 = vmatmul.f32.gmra.mxu0 %v6465
        %v6529 = vpop.f32.mrf.mxu0
        %v6530 = vadd.f32 %v6456, %v6529
        %6531 = vmatmul.f32.gmra.mxu0 %v6468
        %v6532 = vpop.f32.mrf.mxu0
        %v6533 = vadd.f32 %v6456, %v6532
        %6534 = vmatmul.f32.gmra.mxu0 %v6471
        %v6535 = vpop.f32.mrf.mxu0
        %v6536 = vadd.f32 %v6456, %v6535
        %6537 = vmatmul.f32.gmra.mxu0 %v6474
        %v6538 = vpop.f32.mrf.mxu0
        %v6539 = vadd.f32 %v6456, %v6538
        %6540 = vmatmul.f32.gmra.mxu0 %v6477
        %v6541 = vpop.f32.mrf.mxu0
        %v6542 = vadd.f32 %v6456, %v6541
        %6543 = vmatmul.f32.gmra.mxu0 %v6480
        %v6544 = vpop.f32.mrf.mxu0
        %v6545 = vadd.f32 %v6456, %v6544
        %6546 = vmatmul.f32.gmra.mxu0 %v6483
        %v6547 = vpop.f32.mrf.mxu0
        %v6548 = vadd.f32 %v6456, %v6547
        %6549 = vmatmul.f32.gmra.mxu0 %v6486
        %v6550 = vpop.f32.mrf.mxu0
        %v6551 = vadd.f32 %v6456, %v6550
        %6552 = vmatmul.f32.gmra.mxu0 %v6489
        %v6553 = vpop.f32.mrf.mxu0
        %v6554 = vadd.f32 %v6456, %v6553
        %6555 = vmatmul.f32.gmra.mxu0 %v6492
        %v6556 = vpop.f32.mrf.mxu0
        %v6557 = vadd.f32 %v6456, %v6556
        %6558 = vmatmul.f32.gmra.mxu0 %v6495
        %v6559 = vpop.f32.mrf.mxu0
        %v6560 = vadd.f32 %v6456, %v6559
        %6561 = vmatmul.f32.gmra.mxu0 %v6498
        %v6562 = vpop.f32.mrf.mxu0
        %v6563 = vadd.f32 %v6456, %v6562
        %6564 = vmatmul.f32.gmra.mxu0 %v6501
        %v6565 = vpop.f32.mrf.mxu0
        %v6566 = vadd.f32 %v6456, %v6565
        %6567 = vmatmul.f32.gmra.mxu0 %v6504
        %v6568 = vpop.f32.mrf.mxu0
        %v6569 = vadd.f32 %v6456, %v6568
        %6570 = vdwg.mxu0
        %v6571 = vld [vmem:[#allocation11] sm:$0xff]
        %v6572 = vld [vmem:[#allocation11 + $0x8] sm:$0xff]
        %v6573 = vld [vmem:[#allocation11 + $0x10] sm:$0xff]
        %v6574 = vld [vmem:[#allocation11 + $0x18] sm:$0xff]
        %v6575 = vld [vmem:[#allocation11 + $0x20] sm:$0xff]
        %v6576 = vld [vmem:[#allocation11 + $0x28] sm:$0xff]
        %v6577 = vld [vmem:[#allocation11 + $0x30] sm:$0xff]
        %v6578 = vld [vmem:[#allocation11 + $0x38] sm:$0xff]
        %v6579 = vld [vmem:[#allocation12] sm:$0xff]
        %v6580 = vld [vmem:[#allocation12 + $0x8] sm:$0xff]
        %v6581 = vld [vmem:[#allocation12 + $0x10] sm:$0xff]
        %v6582 = vld [vmem:[#allocation12 + $0x18] sm:$0xff]
        %v6583 = vld [vmem:[#allocation12 + $0x20] sm:$0xff]
        %v6584 = vld [vmem:[#allocation12 + $0x28] sm:$0xff]
        %v6585 = vld [vmem:[#allocation12 + $0x30] sm:$0xff]
        %v6586 = vld [vmem:[#allocation12 + $0x38] sm:$0xff]
        %v6595 = vsel %vm6354, %v6134, %v6125
        %v6596 = vsel %vm6356, %v6143, %v6595
        %v6597 = vsel %vm6358, %v6152, %v6596
        %v6598 = vsel %vm6360, %v6161, %v6597
        %v6599 = vsel %vm6362, %v6170, %v6598
        %v6600 = vsel %vm6364, %v6179, %v6599
        %v6601 = vsel %vm6366, %v6188, %v6600
        %v6602 = vsel %vm5278, %v6601, 0
        %6604 = vmatpush.msra.mxu0 0.0
        %6605 = vmatpush.msra.mxu0 0.0
        %6606 = vmatpush.msra.mxu0 0.0
        %6607 = vmatpush.msra.mxu0 0.0
        %6608 = vmatpush.msra.mxu0 0.0
        %6609 = vmatpush.msra.mxu0 0.0
        %6610 = vmatpush.msra.mxu0 0.0
        %6611 = vmatpush.msra.mxu0 0.0
        %6612 = vmatpush.msra.mxu0 %v6586
        %6613 = vmatpush.msra.mxu0 %v6585
        %6614 = vmatpush.msra.mxu0 %v6584
        %6615 = vmatpush.msra.mxu0 %v6583
        %6616 = vmatpush.msra.mxu0 %v6582
        %6617 = vmatpush.msra.mxu0 %v6581
        %6618 = vmatpush.msra.mxu0 %v6580
        %6619 = vmatpush.msra.mxu0 %v6579
        %6620 = vmatmul.f32.gmra.mxu0 %v6602
        %v6621 = vpop.f32.mrf.mxu0
        %v6622 = vadd.f32 0.0, %v6621
        %6623 = vdwg.mxu0
        %v6625 = vsel %vm5278, %v6101, 0
        %v6628 = vsel %vm5278, %v6102, 0
        %v6631 = vsel %vm5278, %v6103, 0
        %v6634 = vsel %vm5278, %v6104, 0
        %v6637 = vsel %vm5278, %v6105, 0
        %v6640 = vsel %vm5278, %v6106, 0
        %v6643 = vsel %vm5278, %v6107, 0
        %v6646 = vsel %vm5278, %v6108, 0
        %v6649 = vsel %vm5278, %v6109, 0
        %v6652 = vsel %vm5278, %v6110, 0
        %v6655 = vsel %vm5278, %v6111, 0
        %v6658 = vsel %vm5278, %v6112, 0
        %v6661 = vsel %vm5278, %v6113, 0
        %v6664 = vsel %vm5278, %v6114, 0
        %v6667 = vsel %vm5278, %v6115, 0
        %v6670 = vsel %vm5278, %v6116, 0
        %6672 = vmatpush.msra.mxu0 0.0
        %6673 = vmatpush.msra.mxu0 0.0
        %6674 = vmatpush.msra.mxu0 0.0
        %6675 = vmatpush.msra.mxu0 0.0
        %6676 = vmatpush.msra.mxu0 0.0
        %6677 = vmatpush.msra.mxu0 0.0
        %6678 = vmatpush.msra.mxu0 0.0
        %6679 = vmatpush.msra.mxu0 0.0
        %6680 = vmatpush.msra.mxu0 %v6578
        %6681 = vmatpush.msra.mxu0 %v6577
        %6682 = vmatpush.msra.mxu0 %v6576
        %6683 = vmatpush.msra.mxu0 %v6575
        %6684 = vmatpush.msra.mxu0 %v6574
        %6685 = vmatpush.msra.mxu0 %v6573
        %6686 = vmatpush.msra.mxu0 %v6572
        %6687 = vmatpush.msra.mxu0 %v6571
        %6688 = vmatmul.f32.gmra.mxu0 %v6625
        %v6689 = vpop.f32.mrf.mxu0
        %v6690 = vadd.f32 %v6524, %v6689
        %6691 = vmatmul.f32.gmra.mxu0 %v6628
        %v6692 = vpop.f32.mrf.mxu0
        %v6693 = vadd.f32 %v6527, %v6692
        %6694 = vmatmul.f32.gmra.mxu0 %v6631
        %v6695 = vpop.f32.mrf.mxu0
        %v6696 = vadd.f32 %v6530, %v6695
        %6697 = vmatmul.f32.gmra.mxu0 %v6634
        %v6698 = vpop.f32.mrf.mxu0
        %v6699 = vadd.f32 %v6533, %v6698
        %6700 = vmatmul.f32.gmra.mxu0 %v6637
        %v6701 = vpop.f32.mrf.mxu0
        %v6702 = vadd.f32 %v6536, %v6701
        %6703 = vmatmul.f32.gmra.mxu0 %v6640
        %v6704 = vpop.f32.mrf.mxu0
        %v6705 = vadd.f32 %v6539, %v6704
        %6706 = vmatmul.f32.gmra.mxu0 %v6643
        %v6707 = vpop.f32.mrf.mxu0
        %v6708 = vadd.f32 %v6542, %v6707
        %6709 = vmatmul.f32.gmra.mxu0 %v6646
        %v6710 = vpop.f32.mrf.mxu0
        %v6711 = vadd.f32 %v6545, %v6710
        %6712 = vmatmul.f32.gmra.mxu0 %v6649
        %v6713 = vpop.f32.mrf.mxu0
        %v6714 = vadd.f32 %v6548, %v6713
        %6715 = vmatmul.f32.gmra.mxu0 %v6652
        %v6716 = vpop.f32.mrf.mxu0
        %v6717 = vadd.f32 %v6551, %v6716
        %6718 = vmatmul.f32.gmra.mxu0 %v6655
        %v6719 = vpop.f32.mrf.mxu0
        %v6720 = vadd.f32 %v6554, %v6719
        %6721 = vmatmul.f32.gmra.mxu0 %v6658
        %v6722 = vpop.f32.mrf.mxu0
        %v6723 = vadd.f32 %v6557, %v6722
        %6724 = vmatmul.f32.gmra.mxu0 %v6661
        %v6725 = vpop.f32.mrf.mxu0
        %v6726 = vadd.f32 %v6560, %v6725
        %6727 = vmatmul.f32.gmra.mxu0 %v6664
        %v6728 = vpop.f32.mrf.mxu0
        %v6729 = vadd.f32 %v6563, %v6728
        %6730 = vmatmul.f32.gmra.mxu0 %v6667
        %v6731 = vpop.f32.mrf.mxu0
        %v6732 = vadd.f32 %v6566, %v6731
        %6733 = vmatmul.f32.gmra.mxu0 %v6670
        %v6734 = vpop.f32.mrf.mxu0
        %v6735 = vadd.f32 %v6569, %v6734
        %6736 = vdwg.mxu0
        %v6738 = vrot.slane %v6622, 1
        %v6739 = vrot.slane %v6622, 2
        %v6740 = vrot.slane %v6622, 3
        %v6741 = vrot.slane %v6622, 4
        %v6742 = vrot.slane %v6622, 5
        %v6743 = vrot.slane %v6622, 6
        %v6744 = vrot.slane %v6622, 7
        %v6745 = vperm.slane %v6622, 0
        %v6746 = vperm.slane %v6738, 0
        %v6747 = vperm.slane %v6739, 0
        %v6748 = vperm.slane %v6740, 0
        %v6749 = vperm.slane %v6741, 0
        %v6750 = vperm.slane %v6742, 0
        %v6751 = vperm.slane %v6743, 0
        %v6752 = vperm.slane %v6744, 0
        %v6761 = vadd.f32 %v6690, %v6745
        %v6762 = vadd.f32 %v6693, %v6745
        %v6763 = vadd.f32 %v6696, %v6746
        %v6764 = vadd.f32 %v6699, %v6746
        %v6765 = vadd.f32 %v6702, %v6747
        %v6766 = vadd.f32 %v6705, %v6747
        %v6767 = vadd.f32 %v6708, %v6748
        %v6768 = vadd.f32 %v6711, %v6748
        %v6769 = vadd.f32 %v6714, %v6749
        %v6770 = vadd.f32 %v6717, %v6749
        %v6771 = vadd.f32 %v6720, %v6750
        %v6772 = vadd.f32 %v6723, %v6750
        %v6773 = vadd.f32 %v6726, %v6751
        %v6774 = vadd.f32 %v6729, %v6751
        %v6775 = vadd.f32 %v6732, %v6752
        %v6776 = vadd.f32 %v6735, %v6752
        %s6777 = scalar_lea.vmem %s5, 32
        %v6778 = vld [vmem:[%s6777] sm:$0xff]
        %v6779 = vld [vmem:[%s6777 + $0x8] sm:$0xff]
        %v6780 = vld [vmem:[%s6777 + $0x10] sm:$0xff]
        %v6781 = vld [vmem:[%s6777 + $0x18] sm:$0xff]
        %6782 = vmatpush.msra.mxu0 0.0
        %6783 = vmatpush.msra.mxu0 0.0
        %6784 = vmatpush.msra.mxu0 0.0
        %6785 = vmatpush.msra.mxu0 0.0
        %6786 = vmatpush.msra.mxu0 0.0
        %6787 = vmatpush.msra.mxu0 0.0
        %6788 = vmatpush.msra.mxu0 0.0
        %6789 = vmatpush.msra.mxu0 0.0
        %6790 = vmatpush.msra.mxu0 0.0
        %6791 = vmatpush.msra.mxu0 0.0
        %6792 = vmatpush.msra.mxu0 0.0
        %6793 = vmatpush.msra.mxu0 0.0
        %6794 = vmatpush.msra.mxu0 %v6781
        %6795 = vmatpush.msra.mxu0 %v6780
        %6796 = vmatpush.msra.mxu0 %v6779
        %6797 = vmatpush.msra.mxu0 %v6778
        %6798 = vmatmul.f32.gmra.mxu0 %v5464
        %v6799 = vpop.f32.mrf.mxu0
        %v6800 = vadd.f32 0.0, %v6799
        %6801 = vmatmul.f32.gmra.mxu0 %v5467
        %v6802 = vpop.f32.mrf.mxu0
        %v6803 = vadd.f32 0.0, %v6802
        %6804 = vmatmul.f32.gmra.mxu0 %v5470
        %v6805 = vpop.f32.mrf.mxu0
        %v6806 = vadd.f32 0.0, %v6805
        %6807 = vmatmul.f32.gmra.mxu0 %v5473
        %v6808 = vpop.f32.mrf.mxu0
        %v6809 = vadd.f32 0.0, %v6808
        %6810 = vmatmul.f32.gmra.mxu0 %v5476
        %v6811 = vpop.f32.mrf.mxu0
        %v6812 = vadd.f32 0.0, %v6811
        %6813 = vmatmul.f32.gmra.mxu0 %v5479
        %v6814 = vpop.f32.mrf.mxu0
        %v6815 = vadd.f32 0.0, %v6814
        %6816 = vmatmul.f32.gmra.mxu0 %v5482
        %v6817 = vpop.f32.mrf.mxu0
        %v6818 = vadd.f32 0.0, %v6817
        %6819 = vmatmul.f32.gmra.mxu0 %v5485
        %v6820 = vpop.f32.mrf.mxu0
        %v6821 = vadd.f32 0.0, %v6820
        %6822 = vmatmul.f32.gmra.mxu0 %v5488
        %v6823 = vpop.f32.mrf.mxu0
        %v6824 = vadd.f32 0.0, %v6823
        %6825 = vmatmul.f32.gmra.mxu0 %v5491
        %v6826 = vpop.f32.mrf.mxu0
        %v6827 = vadd.f32 0.0, %v6826
        %6828 = vmatmul.f32.gmra.mxu0 %v5494
        %v6829 = vpop.f32.mrf.mxu0
        %v6830 = vadd.f32 0.0, %v6829
        %6831 = vmatmul.f32.gmra.mxu0 %v5497
        %v6832 = vpop.f32.mrf.mxu0
        %v6833 = vadd.f32 0.0, %v6832
        %6834 = vmatmul.f32.gmra.mxu0 %v5500
        %v6835 = vpop.f32.mrf.mxu0
        %v6836 = vadd.f32 0.0, %v6835
        %6837 = vmatmul.f32.gmra.mxu0 %v5503
        %v6838 = vpop.f32.mrf.mxu0
        %v6839 = vadd.f32 0.0, %v6838
        %6840 = vmatmul.f32.gmra.mxu0 %v5506
        %v6841 = vpop.f32.mrf.mxu0
        %v6842 = vadd.f32 0.0, %v6841
        %6843 = vmatmul.f32.gmra.mxu0 %v5509
        %v6844 = vpop.f32.mrf.mxu0
        %v6845 = vadd.f32 0.0, %v6844
        %6846 = vdwg.mxu0
        %v6847 = vadd.f32 %v6761, %v6800
        %v6848 = vadd.f32 %v6762, %v6803
        %v6849 = vadd.f32 %v6763, %v6806
        %v6850 = vadd.f32 %v6764, %v6809
        %v6851 = vadd.f32 %v6765, %v6812
        %v6852 = vadd.f32 %v6766, %v6815
        %v6853 = vadd.f32 %v6767, %v6818
        %v6854 = vadd.f32 %v6768, %v6821
        %v6855 = vadd.f32 %v6769, %v6824
        %v6856 = vadd.f32 %v6770, %v6827
        %v6857 = vadd.f32 %v6771, %v6830
        %v6858 = vadd.f32 %v6772, %v6833
        %v6859 = vadd.f32 %v6773, %v6836
        %v6860 = vadd.f32 %v6774, %v6839
        %v6861 = vadd.f32 %v6775, %v6842
        %v6862 = vadd.f32 %v6776, %v6845
        %s6863 = scalar_lea.vmem %s6, 1
        %v6864 = vld [vmem:[%s6863] sm:$0x1]
        %v6866 = vperm.slane %v6864, 0
        %v6868 = vadd.f32 %v6847, %v6866
        %v6869 = vadd.f32 %v6848, %v6866
        %v6870 = vadd.f32 %v6849, %v6866
        %v6871 = vadd.f32 %v6850, %v6866
        %v6872 = vadd.f32 %v6851, %v6866
        %v6873 = vadd.f32 %v6852, %v6866
        %v6874 = vadd.f32 %v6853, %v6866
        %v6875 = vadd.f32 %v6854, %v6866
        %v6876 = vadd.f32 %v6855, %v6866
        %v6877 = vadd.f32 %v6856, %v6866
        %v6878 = vadd.f32 %v6857, %v6866
        %v6879 = vadd.f32 %v6858, %v6866
        %v6880 = vadd.f32 %v6859, %v6866
        %v6881 = vadd.f32 %v6860, %v6866
        %v6882 = vadd.f32 %v6861, %v6866
        %v6883 = vadd.f32 %v6862, %v6866
        %v6884 = vsel %vm5278, %v6868, -inf
        %v6885 = vsel %vm5278, %v6869, -inf
        %v6886 = vmax.f32 %v6884, %v6885
        %v6887 = vrot.slane %v6886, 4
        %v6888 = vmax.f32 %v6886, %v6887
        %v6889 = vrot.slane %v6888, 2
        %v6890 = vmax.f32 %v6888, %v6889
        %v6891 = vrot.slane %v6890, 1
        %v6892 = vmax.f32 %v6890, %v6891
        %v6893 = vsel %vm5278, %v6870, -inf
        %v6894 = vsel %vm5278, %v6871, -inf
        %v6895 = vmax.f32 %v6893, %v6894
        %v6896 = vrot.slane %v6895, 4
        %v6897 = vmax.f32 %v6895, %v6896
        %v6898 = vrot.slane %v6897, 2
        %v6899 = vmax.f32 %v6897, %v6898
        %v6900 = vrot.slane %v6899, 1
        %v6901 = vmax.f32 %v6899, %v6900
        %v6902 = vsel %vm5278, %v6872, -inf
        %v6903 = vsel %vm5278, %v6873, -inf
        %v6904 = vmax.f32 %v6902, %v6903
        %v6905 = vrot.slane %v6904, 4
        %v6906 = vmax.f32 %v6904, %v6905
        %v6907 = vrot.slane %v6906, 2
        %v6908 = vmax.f32 %v6906, %v6907
        %v6909 = vrot.slane %v6908, 1
        %v6910 = vmax.f32 %v6908, %v6909
        %v6911 = vsel %vm5278, %v6874, -inf
        %v6912 = vsel %vm5278, %v6875, -inf
        %v6913 = vmax.f32 %v6911, %v6912
        %v6914 = vrot.slane %v6913, 4
        %v6915 = vmax.f32 %v6913, %v6914
        %v6916 = vrot.slane %v6915, 2
        %v6917 = vmax.f32 %v6915, %v6916
        %v6918 = vrot.slane %v6917, 1
        %v6919 = vmax.f32 %v6917, %v6918
        %v6920 = vsel %vm5278, %v6876, -inf
        %v6921 = vsel %vm5278, %v6877, -inf
        %v6922 = vmax.f32 %v6920, %v6921
        %v6923 = vrot.slane %v6922, 4
        %v6924 = vmax.f32 %v6922, %v6923
        %v6925 = vrot.slane %v6924, 2
        %v6926 = vmax.f32 %v6924, %v6925
        %v6927 = vrot.slane %v6926, 1
        %v6928 = vmax.f32 %v6926, %v6927
        %v6929 = vsel %vm5278, %v6878, -inf
        %v6930 = vsel %vm5278, %v6879, -inf
        %v6931 = vmax.f32 %v6929, %v6930
        %v6932 = vrot.slane %v6931, 4
        %v6933 = vmax.f32 %v6931, %v6932
        %v6934 = vrot.slane %v6933, 2
        %v6935 = vmax.f32 %v6933, %v6934
        %v6936 = vrot.slane %v6935, 1
        %v6937 = vmax.f32 %v6935, %v6936
        %v6938 = vsel %vm5278, %v6880, -inf
        %v6939 = vsel %vm5278, %v6881, -inf
        %v6940 = vmax.f32 %v6938, %v6939
        %v6941 = vrot.slane %v6940, 4
        %v6942 = vmax.f32 %v6940, %v6941
        %v6943 = vrot.slane %v6942, 2
        %v6944 = vmax.f32 %v6942, %v6943
        %v6945 = vrot.slane %v6944, 1
        %v6946 = vmax.f32 %v6944, %v6945
        %v6947 = vsel %vm5278, %v6882, -inf
        %v6948 = vsel %vm5278, %v6883, -inf
        %v6949 = vmax.f32 %v6947, %v6948
        %v6950 = vrot.slane %v6949, 4
        %v6951 = vmax.f32 %v6949, %v6950
        %v6952 = vrot.slane %v6951, 2
        %v6953 = vmax.f32 %v6951, %v6952
        %v6954 = vrot.slane %v6953, 1
        %v6955 = vmax.f32 %v6953, %v6954
        %v6956 = vmax.f32 %v6868, 0.0
        %v6957 = vmax.f32 %v6869, 0.0
        %v6958 = vmax.f32 %v6870, 0.0
        %v6959 = vmax.f32 %v6871, 0.0
        %v6960 = vmax.f32 %v6872, 0.0
        %v6961 = vmax.f32 %v6873, 0.0
        %v6962 = vmax.f32 %v6874, 0.0
        %v6963 = vmax.f32 %v6875, 0.0
        %v6964 = vmax.f32 %v6876, 0.0
        %v6965 = vmax.f32 %v6877, 0.0
        %v6966 = vmax.f32 %v6878, 0.0
        %v6967 = vmax.f32 %v6879, 0.0
        %v6968 = vmax.f32 %v6880, 0.0
        %v6969 = vmax.f32 %v6881, 0.0
        %v6970 = vmax.f32 %v6882, 0.0
        %v6971 = vmax.f32 %v6883, 0.0
        %s6972 = scalar_lea.vmem %s11, 64
        %v6973 = vld [vmem:[%s6972] sm:$0xff]
        %v6974 = vld [vmem:[%s6972 + $0x8] sm:$0xff]
        %v6975 = vld [vmem:[%s6972 + $0x10] sm:$0xff]
        %v6976 = vld [vmem:[%s6972 + $0x18] sm:$0xff]
        %v6977 = vld [vmem:[%s6972 + $0x20] sm:$0xff]
        %v6978 = vld [vmem:[%s6972 + $0x28] sm:$0xff]
        %v6979 = vld [vmem:[%s6972 + $0x30] sm:$0xff]
        %v6980 = vld [vmem:[%s6972 + $0x38] sm:$0xff]
        %s6981 = scalar_lea.vmem %s13, 1
        %v6982 = vld [vmem:[%s6981] sm:$0x1]
        %v6984 = vperm.slane %v6982, 0
        %v6987 = vsel %vm5278, %v6956, 0
        %v6990 = vsel %vm5278, %v6957, 0
        %v6993 = vsel %vm5278, %v6958, 0
        %v6996 = vsel %vm5278, %v6959, 0
        %v6999 = vsel %vm5278, %v6960, 0
        %v7002 = vsel %vm5278, %v6961, 0
        %v7005 = vsel %vm5278, %v6962, 0
        %v7008 = vsel %vm5278, %v6963, 0
        %v7011 = vsel %vm5278, %v6964, 0
        %v7014 = vsel %vm5278, %v6965, 0
        %v7017 = vsel %vm5278, %v6966, 0
        %v7020 = vsel %vm5278, %v6967, 0
        %v7023 = vsel %vm5278, %v6968, 0
        %v7026 = vsel %vm5278, %v6969, 0
        %v7029 = vsel %vm5278, %v6970, 0
        %v7032 = vsel %vm5278, %v6971, 0
        %7034 = vmatpush.msra.mxu0 0.0
        %7035 = vmatpush.msra.mxu0 0.0
        %7036 = vmatpush.msra.mxu0 0.0
        %7037 = vmatpush.msra.mxu0 0.0
        %7038 = vmatpush.msra.mxu0 0.0
        %7039 = vmatpush.msra.mxu0 0.0
        %7040 = vmatpush.msra.mxu0 0.0
        %7041 = vmatpush.msra.mxu0 0.0
        %7042 = vmatpush.msra.mxu0 %v6980
        %7043 = vmatpush.msra.mxu0 %v6979
        %7044 = vmatpush.msra.mxu0 %v6978
        %7045 = vmatpush.msra.mxu0 %v6977
        %7046 = vmatpush.msra.mxu0 %v6976
        %7047 = vmatpush.msra.mxu0 %v6975
        %7048 = vmatpush.msra.mxu0 %v6974
        %7049 = vmatpush.msra.mxu0 %v6973
        %7050 = vmatmul.f32.gmra.mxu0 %v6987
        %v7051 = vpop.f32.mrf.mxu0
        %v7052 = vadd.f32 %v6984, %v7051
        %7053 = vmatmul.f32.gmra.mxu0 %v6990
        %v7054 = vpop.f32.mrf.mxu0
        %v7055 = vadd.f32 %v6984, %v7054
        %7056 = vmatmul.f32.gmra.mxu0 %v6993
        %v7057 = vpop.f32.mrf.mxu0
        %v7058 = vadd.f32 %v6984, %v7057
        %7059 = vmatmul.f32.gmra.mxu0 %v6996
        %v7060 = vpop.f32.mrf.mxu0
        %v7061 = vadd.f32 %v6984, %v7060
        %7062 = vmatmul.f32.gmra.mxu0 %v6999
        %v7063 = vpop.f32.mrf.mxu0
        %v7064 = vadd.f32 %v6984, %v7063
        %7065 = vmatmul.f32.gmra.mxu0 %v7002
        %v7066 = vpop.f32.mrf.mxu0
        %v7067 = vadd.f32 %v6984, %v7066
        %7068 = vmatmul.f32.gmra.mxu0 %v7005
        %v7069 = vpop.f32.mrf.mxu0
        %v7070 = vadd.f32 %v6984, %v7069
        %7071 = vmatmul.f32.gmra.mxu0 %v7008
        %v7072 = vpop.f32.mrf.mxu0
        %v7073 = vadd.f32 %v6984, %v7072
        %7074 = vmatmul.f32.gmra.mxu0 %v7011
        %v7075 = vpop.f32.mrf.mxu0
        %v7076 = vadd.f32 %v6984, %v7075
        %7077 = vmatmul.f32.gmra.mxu0 %v7014
        %v7078 = vpop.f32.mrf.mxu0
        %v7079 = vadd.f32 %v6984, %v7078
        %7080 = vmatmul.f32.gmra.mxu0 %v7017
        %v7081 = vpop.f32.mrf.mxu0
        %v7082 = vadd.f32 %v6984, %v7081
        %7083 = vmatmul.f32.gmra.mxu0 %v7020
        %v7084 = vpop.f32.mrf.mxu0
        %v7085 = vadd.f32 %v6984, %v7084
        %7086 = vmatmul.f32.gmra.mxu0 %v7023
        %v7087 = vpop.f32.mrf.mxu0
        %v7088 = vadd.f32 %v6984, %v7087
        %7089 = vmatmul.f32.gmra.mxu0 %v7026
        %v7090 = vpop.f32.mrf.mxu0
        %v7091 = vadd.f32 %v6984, %v7090
        %7092 = vmatmul.f32.gmra.mxu0 %v7029
        %v7093 = vpop.f32.mrf.mxu0
        %v7094 = vadd.f32 %v6984, %v7093
        %7095 = vmatmul.f32.gmra.mxu0 %v7032
        %v7096 = vpop.f32.mrf.mxu0
        %v7097 = vadd.f32 %v6984, %v7096
        %7098 = vdwg.mxu0
        %v7099 = vmax.f32 %v6892, 0.0
        %v7100 = vmax.f32 %v6901, 0.0
        %v7101 = vmax.f32 %v6910, 0.0
        %v7102 = vmax.f32 %v6919, 0.0
        %v7103 = vmax.f32 %v6928, 0.0
        %v7104 = vmax.f32 %v6937, 0.0
        %v7105 = vmax.f32 %v6946, 0.0
        %v7106 = vmax.f32 %v6955, 0.0
        %s7107 = scalar_lea.vmem %s12, 64
        %v7108 = vld [vmem:[%s7107] sm:$0xff]
        %v7109 = vld [vmem:[%s7107 + $0x8] sm:$0xff]
        %v7110 = vld [vmem:[%s7107 + $0x10] sm:$0xff]
        %v7111 = vld [vmem:[%s7107 + $0x18] sm:$0xff]
        %v7112 = vld [vmem:[%s7107 + $0x20] sm:$0xff]
        %v7113 = vld [vmem:[%s7107 + $0x28] sm:$0xff]
        %v7114 = vld [vmem:[%s7107 + $0x30] sm:$0xff]
        %v7115 = vld [vmem:[%s7107 + $0x38] sm:$0xff]
        %v7124 = vsel %vm6354, %v7100, %v7099
        %v7125 = vsel %vm6356, %v7101, %v7124
        %v7126 = vsel %vm6358, %v7102, %v7125
        %v7127 = vsel %vm6360, %v7103, %v7126
        %v7128 = vsel %vm6362, %v7104, %v7127
        %v7129 = vsel %vm6364, %v7105, %v7128
        %v7130 = vsel %vm6366, %v7106, %v7129
        %v7131 = vsel %vm5278, %v7130, 0
        %7133 = vmatpush.msra.mxu0 0.0
        %7134 = vmatpush.msra.mxu0 0.0
        %7135 = vmatpush.msra.mxu0 0.0
        %7136 = vmatpush.msra.mxu0 0.0
        %7137 = vmatpush.msra.mxu0 0.0
        %7138 = vmatpush.msra.mxu0 0.0
        %7139 = vmatpush.msra.mxu0 0.0
        %7140 = vmatpush.msra.mxu0 0.0
        %7141 = vmatpush.msra.mxu0 %v7115
        %7142 = vmatpush.msra.mxu0 %v7114
        %7143 = vmatpush.msra.mxu0 %v7113
        %7144 = vmatpush.msra.mxu0 %v7112
        %7145 = vmatpush.msra.mxu0 %v7111
        %7146 = vmatpush.msra.mxu0 %v7110
        %7147 = vmatpush.msra.mxu0 %v7109
        %7148 = vmatpush.msra.mxu0 %v7108
        %7149 = vmatmul.f32.gmra.mxu0 %v7131
        %v7150 = vpop.f32.mrf.mxu0
        %v7151 = vadd.f32 0.0, %v7150
        %7152 = vdwg.mxu0
        %v7154 = vrot.slane %v7151, 1
        %v7155 = vrot.slane %v7151, 2
        %v7156 = vrot.slane %v7151, 3
        %v7157 = vrot.slane %v7151, 4
        %v7158 = vrot.slane %v7151, 5
        %v7159 = vrot.slane %v7151, 6
        %v7160 = vrot.slane %v7151, 7
        %v7161 = vperm.slane %v7151, 0
        %v7162 = vperm.slane %v7154, 0
        %v7163 = vperm.slane %v7155, 0
        %v7164 = vperm.slane %v7156, 0
        %v7165 = vperm.slane %v7157, 0
        %v7166 = vperm.slane %v7158, 0
        %v7167 = vperm.slane %v7159, 0
        %v7168 = vperm.slane %v7160, 0
        %v7177 = vadd.f32 %v7052, %v7161
        %v7178 = vadd.f32 %v7055, %v7161
        %v7179 = vadd.f32 %v7058, %v7162
        %v7180 = vadd.f32 %v7061, %v7162
        %v7181 = vadd.f32 %v7064, %v7163
        %v7182 = vadd.f32 %v7067, %v7163
        %v7183 = vadd.f32 %v7070, %v7164
        %v7184 = vadd.f32 %v7073, %v7164
        %v7185 = vadd.f32 %v7076, %v7165
        %v7186 = vadd.f32 %v7079, %v7165
        %v7187 = vadd.f32 %v7082, %v7166
        %v7188 = vadd.f32 %v7085, %v7166
        %v7189 = vadd.f32 %v7088, %v7167
        %v7190 = vadd.f32 %v7091, %v7167
        %v7191 = vadd.f32 %v7094, %v7168
        %v7192 = vadd.f32 %v7097, %v7168
        %v7193 = vmax.f32 %v7177, 0.0
        %v7194 = vmax.f32 %v7178, 0.0
        %v7195 = vmax.f32 %v7179, 0.0
        %v7196 = vmax.f32 %v7180, 0.0
        %v7197 = vmax.f32 %v7181, 0.0
        %v7198 = vmax.f32 %v7182, 0.0
        %v7199 = vmax.f32 %v7183, 0.0
        %v7200 = vmax.f32 %v7184, 0.0
        %v7201 = vmax.f32 %v7185, 0.0
        %v7202 = vmax.f32 %v7186, 0.0
        %v7203 = vmax.f32 %v7187, 0.0
        %v7204 = vmax.f32 %v7188, 0.0
        %v7205 = vmax.f32 %v7189, 0.0
        %v7206 = vmax.f32 %v7190, 0.0
        %v7207 = vmax.f32 %v7191, 0.0
        %v7208 = vmax.f32 %v7192, 0.0
        %s7209 = scalar_lea.vmem [#allocation9], 64
        %v7210 = vld [vmem:[%s7209] sm:$0xff]
        %v7211 = vld [vmem:[%s7209 + $0x8] sm:$0xff]
        %v7212 = vld [vmem:[%s7209 + $0x10] sm:$0xff]
        %v7213 = vld [vmem:[%s7209 + $0x18] sm:$0xff]
        %v7214 = vld [vmem:[%s7209 + $0x20] sm:$0xff]
        %v7215 = vld [vmem:[%s7209 + $0x28] sm:$0xff]
        %v7216 = vld [vmem:[%s7209 + $0x30] sm:$0xff]
        %v7217 = vld [vmem:[%s7209 + $0x38] sm:$0xff]
        %s7218 = scalar_lea.vmem %s15, 1
        %v7219 = vld [vmem:[%s7218] sm:$0x1]
        %v7221 = vperm.slane %v7219, 0
        %v7224 = vsel %vm5278, %v7193, 0
        %v7227 = vsel %vm5278, %v7194, 0
        %v7230 = vsel %vm5278, %v7195, 0
        %v7233 = vsel %vm5278, %v7196, 0
        %v7236 = vsel %vm5278, %v7197, 0
        %v7239 = vsel %vm5278, %v7198, 0
        %v7242 = vsel %vm5278, %v7199, 0
        %v7245 = vsel %vm5278, %v7200, 0
        %v7248 = vsel %vm5278, %v7201, 0
        %v7251 = vsel %vm5278, %v7202, 0
        %v7254 = vsel %vm5278, %v7203, 0
        %v7257 = vsel %vm5278, %v7204, 0
        %v7260 = vsel %vm5278, %v7205, 0
        %v7263 = vsel %vm5278, %v7206, 0
        %v7266 = vsel %vm5278, %v7207, 0
        %v7269 = vsel %vm5278, %v7208, 0
        %7271 = vmatpush.msra.mxu0 0.0
        %7272 = vmatpush.msra.mxu0 0.0
        %7273 = vmatpush.msra.mxu0 0.0
        %7274 = vmatpush.msra.mxu0 0.0
        %7275 = vmatpush.msra.mxu0 0.0
        %7276 = vmatpush.msra.mxu0 0.0
        %7277 = vmatpush.msra.mxu0 0.0
        %7278 = vmatpush.msra.mxu0 0.0
        %7279 = vmatpush.msra.mxu0 %v7217
        %7280 = vmatpush.msra.mxu0 %v7216
        %7281 = vmatpush.msra.mxu0 %v7215
        %7282 = vmatpush.msra.mxu0 %v7214
        %7283 = vmatpush.msra.mxu0 %v7213
        %7284 = vmatpush.msra.mxu0 %v7212
        %7285 = vmatpush.msra.mxu0 %v7211
        %7286 = vmatpush.msra.mxu0 %v7210
        %7287 = vmatmul.f32.gmra.mxu0 %v7224
        %v7288 = vpop.f32.mrf.mxu0
        %v7289 = vadd.f32 %v7221, %v7288
        %7290 = vmatmul.f32.gmra.mxu0 %v7227
        %v7291 = vpop.f32.mrf.mxu0
        %v7292 = vadd.f32 %v7221, %v7291
        %7293 = vmatmul.f32.gmra.mxu0 %v7230
        %v7294 = vpop.f32.mrf.mxu0
        %v7295 = vadd.f32 %v7221, %v7294
        %7296 = vmatmul.f32.gmra.mxu0 %v7233
        %v7297 = vpop.f32.mrf.mxu0
        %v7298 = vadd.f32 %v7221, %v7297
        %7299 = vmatmul.f32.gmra.mxu0 %v7236
        %v7300 = vpop.f32.mrf.mxu0
        %v7301 = vadd.f32 %v7221, %v7300
        %7302 = vmatmul.f32.gmra.mxu0 %v7239
        %v7303 = vpop.f32.mrf.mxu0
        %v7304 = vadd.f32 %v7221, %v7303
        %7305 = vmatmul.f32.gmra.mxu0 %v7242
        %v7306 = vpop.f32.mrf.mxu0
        %v7307 = vadd.f32 %v7221, %v7306
        %7308 = vmatmul.f32.gmra.mxu0 %v7245
        %v7309 = vpop.f32.mrf.mxu0
        %v7310 = vadd.f32 %v7221, %v7309
        %7311 = vmatmul.f32.gmra.mxu0 %v7248
        %v7312 = vpop.f32.mrf.mxu0
        %v7313 = vadd.f32 %v7221, %v7312
        %7314 = vmatmul.f32.gmra.mxu0 %v7251
        %v7315 = vpop.f32.mrf.mxu0
        %v7316 = vadd.f32 %v7221, %v7315
        %7317 = vmatmul.f32.gmra.mxu0 %v7254
        %v7318 = vpop.f32.mrf.mxu0
        %v7319 = vadd.f32 %v7221, %v7318
        %7320 = vmatmul.f32.gmra.mxu0 %v7257
        %v7321 = vpop.f32.mrf.mxu0
        %v7322 = vadd.f32 %v7221, %v7321
        %7323 = vmatmul.f32.gmra.mxu0 %v7260
        %v7324 = vpop.f32.mrf.mxu0
        %v7325 = vadd.f32 %v7221, %v7324
        %7326 = vmatmul.f32.gmra.mxu0 %v7263
        %v7327 = vpop.f32.mrf.mxu0
        %v7328 = vadd.f32 %v7221, %v7327
        %7329 = vmatmul.f32.gmra.mxu0 %v7266
        %v7330 = vpop.f32.mrf.mxu0
        %v7331 = vadd.f32 %v7221, %v7330
        %7332 = vmatmul.f32.gmra.mxu0 %v7269
        %v7333 = vpop.f32.mrf.mxu0
        %v7334 = vadd.f32 %v7221, %v7333
        %7335 = vdwg.mxu0
        %s7336 = scalar_lea.vmem [#allocation11], 64
        %v7337 = vld [vmem:[%s7336] sm:$0xff]
        %v7338 = vld [vmem:[%s7336 + $0x8] sm:$0xff]
        %v7339 = vld [vmem:[%s7336 + $0x10] sm:$0xff]
        %v7340 = vld [vmem:[%s7336 + $0x18] sm:$0xff]
        %v7341 = vld [vmem:[%s7336 + $0x20] sm:$0xff]
        %v7342 = vld [vmem:[%s7336 + $0x28] sm:$0xff]
        %v7343 = vld [vmem:[%s7336 + $0x30] sm:$0xff]
        %v7344 = vld [vmem:[%s7336 + $0x38] sm:$0xff]
        %s7345 = scalar_lea.vmem [#allocation12], 64
        %v7346 = vld [vmem:[%s7345] sm:$0xff]
        %v7347 = vld [vmem:[%s7345 + $0x8] sm:$0xff]
        %v7348 = vld [vmem:[%s7345 + $0x10] sm:$0xff]
        %v7349 = vld [vmem:[%s7345 + $0x18] sm:$0xff]
        %v7350 = vld [vmem:[%s7345 + $0x20] sm:$0xff]
        %v7351 = vld [vmem:[%s7345 + $0x28] sm:$0xff]
        %v7352 = vld [vmem:[%s7345 + $0x30] sm:$0xff]
        %v7353 = vld [vmem:[%s7345 + $0x38] sm:$0xff]
        %v7362 = vsel %vm6354, %v6901, %v6892
        %v7363 = vsel %vm6356, %v6910, %v7362
        %v7364 = vsel %vm6358, %v6919, %v7363
        %v7365 = vsel %vm6360, %v6928, %v7364
        %v7366 = vsel %vm6362, %v6937, %v7365
        %v7367 = vsel %vm6364, %v6946, %v7366
        %v7368 = vsel %vm6366, %v6955, %v7367
        %v7369 = vsel %vm5278, %v7368, 0
        %7371 = vmatpush.msra.mxu0 0.0
        %7372 = vmatpush.msra.mxu0 0.0
        %7373 = vmatpush.msra.mxu0 0.0
        %7374 = vmatpush.msra.mxu0 0.0
        %7375 = vmatpush.msra.mxu0 0.0
        %7376 = vmatpush.msra.mxu0 0.0
        %7377 = vmatpush.msra.mxu0 0.0
        %7378 = vmatpush.msra.mxu0 0.0
        %7379 = vmatpush.msra.mxu0 %v7353
        %7380 = vmatpush.msra.mxu0 %v7352
        %7381 = vmatpush.msra.mxu0 %v7351
        %7382 = vmatpush.msra.mxu0 %v7350
        %7383 = vmatpush.msra.mxu0 %v7349
        %7384 = vmatpush.msra.mxu0 %v7348
        %7385 = vmatpush.msra.mxu0 %v7347
        %7386 = vmatpush.msra.mxu0 %v7346
        %7387 = vmatmul.f32.gmra.mxu0 %v7369
        %v7388 = vpop.f32.mrf.mxu0
        %v7389 = vadd.f32 0.0, %v7388
        %7390 = vdwg.mxu0
        %v7392 = vsel %vm5278, %v6868, 0
        %v7395 = vsel %vm5278, %v6869, 0
        %v7398 = vsel %vm5278, %v6870, 0
        %v7401 = vsel %vm5278, %v6871, 0
        %v7404 = vsel %vm5278, %v6872, 0
        %v7407 = vsel %vm5278, %v6873, 0
        %v7410 = vsel %vm5278, %v6874, 0
        %v7413 = vsel %vm5278, %v6875, 0
        %v7416 = vsel %vm5278, %v6876, 0
        %v7419 = vsel %vm5278, %v6877, 0
        %v7422 = vsel %vm5278, %v6878, 0
        %v7425 = vsel %vm5278, %v6879, 0
        %v7428 = vsel %vm5278, %v6880, 0
        %v7431 = vsel %vm5278, %v6881, 0
        %v7434 = vsel %vm5278, %v6882, 0
        %v7437 = vsel %vm5278, %v6883, 0
        %7439 = vmatpush.msra.mxu0 0.0
        %7440 = vmatpush.msra.mxu0 0.0
        %7441 = vmatpush.msra.mxu0 0.0
        %7442 = vmatpush.msra.mxu0 0.0
        %7443 = vmatpush.msra.mxu0 0.0
        %7444 = vmatpush.msra.mxu0 0.0
        %7445 = vmatpush.msra.mxu0 0.0
        %7446 = vmatpush.msra.mxu0 0.0
        %7447 = vmatpush.msra.mxu0 %v7344
        %7448 = vmatpush.msra.mxu0 %v7343
        %7449 = vmatpush.msra.mxu0 %v7342
        %7450 = vmatpush.msra.mxu0 %v7341
        %7451 = vmatpush.msra.mxu0 %v7340
        %7452 = vmatpush.msra.mxu0 %v7339
        %7453 = vmatpush.msra.mxu0 %v7338
        %7454 = vmatpush.msra.mxu0 %v7337
        %7455 = vmatmul.f32.gmra.mxu0 %v7392
        %v7456 = vpop.f32.mrf.mxu0
        %v7457 = vadd.f32 %v7289, %v7456
        %7458 = vmatmul.f32.gmra.mxu0 %v7395
        %v7459 = vpop.f32.mrf.mxu0
        %v7460 = vadd.f32 %v7292, %v7459
        %7461 = vmatmul.f32.gmra.mxu0 %v7398
        %v7462 = vpop.f32.mrf.mxu0
        %v7463 = vadd.f32 %v7295, %v7462
        %7464 = vmatmul.f32.gmra.mxu0 %v7401
        %v7465 = vpop.f32.mrf.mxu0
        %v7466 = vadd.f32 %v7298, %v7465
        %7467 = vmatmul.f32.gmra.mxu0 %v7404
        %v7468 = vpop.f32.mrf.mxu0
        %v7469 = vadd.f32 %v7301, %v7468
        %7470 = vmatmul.f32.gmra.mxu0 %v7407
        %v7471 = vpop.f32.mrf.mxu0
        %v7472 = vadd.f32 %v7304, %v7471
        %7473 = vmatmul.f32.gmra.mxu0 %v7410
        %v7474 = vpop.f32.mrf.mxu0
        %v7475 = vadd.f32 %v7307, %v7474
        %7476 = vmatmul.f32.gmra.mxu0 %v7413
        %v7477 = vpop.f32.mrf.mxu0
        %v7478 = vadd.f32 %v7310, %v7477
        %7479 = vmatmul.f32.gmra.mxu0 %v7416
        %v7480 = vpop.f32.mrf.mxu0
        %v7481 = vadd.f32 %v7313, %v7480
        %7482 = vmatmul.f32.gmra.mxu0 %v7419
        %v7483 = vpop.f32.mrf.mxu0
        %v7484 = vadd.f32 %v7316, %v7483
        %7485 = vmatmul.f32.gmra.mxu0 %v7422
        %v7486 = vpop.f32.mrf.mxu0
        %v7487 = vadd.f32 %v7319, %v7486
        %7488 = vmatmul.f32.gmra.mxu0 %v7425
        %v7489 = vpop.f32.mrf.mxu0
        %v7490 = vadd.f32 %v7322, %v7489
        %7491 = vmatmul.f32.gmra.mxu0 %v7428
        %v7492 = vpop.f32.mrf.mxu0
        %v7493 = vadd.f32 %v7325, %v7492
        %7494 = vmatmul.f32.gmra.mxu0 %v7431
        %v7495 = vpop.f32.mrf.mxu0
        %v7496 = vadd.f32 %v7328, %v7495
        %7497 = vmatmul.f32.gmra.mxu0 %v7434
        %v7498 = vpop.f32.mrf.mxu0
        %v7499 = vadd.f32 %v7331, %v7498
        %7500 = vmatmul.f32.gmra.mxu0 %v7437
        %v7501 = vpop.f32.mrf.mxu0
        %v7502 = vadd.f32 %v7334, %v7501
        %7503 = vdwg.mxu0
        %v7505 = vrot.slane %v7389, 1
        %v7506 = vrot.slane %v7389, 2
        %v7507 = vrot.slane %v7389, 3
        %v7508 = vrot.slane %v7389, 4
        %v7509 = vrot.slane %v7389, 5
        %v7510 = vrot.slane %v7389, 6
        %v7511 = vrot.slane %v7389, 7
        %v7512 = vperm.slane %v7389, 0
        %v7513 = vperm.slane %v7505, 0
        %v7514 = vperm.slane %v7506, 0
        %v7515 = vperm.slane %v7507, 0
        %v7516 = vperm.slane %v7508, 0
        %v7517 = vperm.slane %v7509, 0
        %v7518 = vperm.slane %v7510, 0
        %v7519 = vperm.slane %v7511, 0
        %v7528 = vadd.f32 %v7457, %v7512
        %v7529 = vadd.f32 %v7460, %v7512
        %v7530 = vadd.f32 %v7463, %v7513
        %v7531 = vadd.f32 %v7466, %v7513
        %v7532 = vadd.f32 %v7469, %v7514
        %v7533 = vadd.f32 %v7472, %v7514
        %v7534 = vadd.f32 %v7475, %v7515
        %v7535 = vadd.f32 %v7478, %v7515
        %v7536 = vadd.f32 %v7481, %v7516
        %v7537 = vadd.f32 %v7484, %v7516
        %v7538 = vadd.f32 %v7487, %v7517
        %v7539 = vadd.f32 %v7490, %v7517
        %v7540 = vadd.f32 %v7493, %v7518
        %v7541 = vadd.f32 %v7496, %v7518
        %v7542 = vadd.f32 %v7499, %v7519
        %v7543 = vadd.f32 %v7502, %v7519
        %s7544 = scalar_lea.vmem %s5, 64
        %v7545 = vld [vmem:[%s7544] sm:$0xff]
        %v7546 = vld [vmem:[%s7544 + $0x8] sm:$0xff]
        %v7547 = vld [vmem:[%s7544 + $0x10] sm:$0xff]
        %v7548 = vld [vmem:[%s7544 + $0x18] sm:$0xff]
        %7549 = vmatpush.msra.mxu0 0.0
        %7550 = vmatpush.msra.mxu0 0.0
        %7551 = vmatpush.msra.mxu0 0.0
        %7552 = vmatpush.msra.mxu0 0.0
        %7553 = vmatpush.msra.mxu0 0.0
        %7554 = vmatpush.msra.mxu0 0.0
        %7555 = vmatpush.msra.mxu0 0.0
        %7556 = vmatpush.msra.mxu0 0.0
        %7557 = vmatpush.msra.mxu0 0.0
        %7558 = vmatpush.msra.mxu0 0.0
        %7559 = vmatpush.msra.mxu0 0.0
        %7560 = vmatpush.msra.mxu0 0.0
        %7561 = vmatpush.msra.mxu0 %v7548
        %7562 = vmatpush.msra.mxu0 %v7547
        %7563 = vmatpush.msra.mxu0 %v7546
        %7564 = vmatpush.msra.mxu0 %v7545
        %7565 = vmatmul.f32.gmra.mxu0 %v5464
        %v7566 = vpop.f32.mrf.mxu0
        %v7567 = vadd.f32 0.0, %v7566
        %7568 = vmatmul.f32.gmra.mxu0 %v5467
        %v7569 = vpop.f32.mrf.mxu0
        %v7570 = vadd.f32 0.0, %v7569
        %7571 = vmatmul.f32.gmra.mxu0 %v5470
        %v7572 = vpop.f32.mrf.mxu0
        %v7573 = vadd.f32 0.0, %v7572
        %7574 = vmatmul.f32.gmra.mxu0 %v5473
        %v7575 = vpop.f32.mrf.mxu0
        %v7576 = vadd.f32 0.0, %v7575
        %7577 = vmatmul.f32.gmra.mxu0 %v5476
        %v7578 = vpop.f32.mrf.mxu0
        %v7579 = vadd.f32 0.0, %v7578
        %7580 = vmatmul.f32.gmra.mxu0 %v5479
        %v7581 = vpop.f32.mrf.mxu0
        %v7582 = vadd.f32 0.0, %v7581
        %7583 = vmatmul.f32.gmra.mxu0 %v5482
        %v7584 = vpop.f32.mrf.mxu0
        %v7585 = vadd.f32 0.0, %v7584
        %7586 = vmatmul.f32.gmra.mxu0 %v5485
        %v7587 = vpop.f32.mrf.mxu0
        %v7588 = vadd.f32 0.0, %v7587
        %7589 = vmatmul.f32.gmra.mxu0 %v5488
        %v7590 = vpop.f32.mrf.mxu0
        %v7591 = vadd.f32 0.0, %v7590
        %7592 = vmatmul.f32.gmra.mxu0 %v5491
        %v7593 = vpop.f32.mrf.mxu0
        %v7594 = vadd.f32 0.0, %v7593
        %7595 = vmatmul.f32.gmra.mxu0 %v5494
        %v7596 = vpop.f32.mrf.mxu0
        %v7597 = vadd.f32 0.0, %v7596
        %7598 = vmatmul.f32.gmra.mxu0 %v5497
        %v7599 = vpop.f32.mrf.mxu0
        %v7600 = vadd.f32 0.0, %v7599
        %7601 = vmatmul.f32.gmra.mxu0 %v5500
        %v7602 = vpop.f32.mrf.mxu0
        %v7603 = vadd.f32 0.0, %v7602
        %7604 = vmatmul.f32.gmra.mxu0 %v5503
        %v7605 = vpop.f32.mrf.mxu0
        %v7606 = vadd.f32 0.0, %v7605
        %7607 = vmatmul.f32.gmra.mxu0 %v5506
        %v7608 = vpop.f32.mrf.mxu0
        %v7609 = vadd.f32 0.0, %v7608
        %7610 = vmatmul.f32.gmra.mxu0 %v5509
        %v7611 = vpop.f32.mrf.mxu0
        %v7612 = vadd.f32 0.0, %v7611
        %7613 = vdwg.mxu0
        %v7614 = vadd.f32 %v7528, %v7567
        %v7615 = vadd.f32 %v7529, %v7570
        %v7616 = vadd.f32 %v7530, %v7573
        %v7617 = vadd.f32 %v7531, %v7576
        %v7618 = vadd.f32 %v7532, %v7579
        %v7619 = vadd.f32 %v7533, %v7582
        %v7620 = vadd.f32 %v7534, %v7585
        %v7621 = vadd.f32 %v7535, %v7588
        %v7622 = vadd.f32 %v7536, %v7591
        %v7623 = vadd.f32 %v7537, %v7594
        %v7624 = vadd.f32 %v7538, %v7597
        %v7625 = vadd.f32 %v7539, %v7600
        %v7626 = vadd.f32 %v7540, %v7603
        %v7627 = vadd.f32 %v7541, %v7606
        %v7628 = vadd.f32 %v7542, %v7609
        %v7629 = vadd.f32 %v7543, %v7612
        %s7630 = scalar_lea.vmem %s6, 2
        %v7631 = vld [vmem:[%s7630] sm:$0x1]
        %v7633 = vperm.slane %v7631, 0
        %v7635 = vadd.f32 %v7614, %v7633
        %v7636 = vadd.f32 %v7615, %v7633
        %v7637 = vadd.f32 %v7616, %v7633
        %v7638 = vadd.f32 %v7617, %v7633
        %v7639 = vadd.f32 %v7618, %v7633
        %v7640 = vadd.f32 %v7619, %v7633
        %v7641 = vadd.f32 %v7620, %v7633
        %v7642 = vadd.f32 %v7621, %v7633
        %v7643 = vadd.f32 %v7622, %v7633
        %v7644 = vadd.f32 %v7623, %v7633
        %v7645 = vadd.f32 %v7624, %v7633
        %v7646 = vadd.f32 %v7625, %v7633
        %v7647 = vadd.f32 %v7626, %v7633
        %v7648 = vadd.f32 %v7627, %v7633
        %v7649 = vadd.f32 %v7628, %v7633
        %v7650 = vadd.f32 %v7629, %v7633
        %v7651 = vsel %vm5278, %v7635, -inf
        %v7652 = vsel %vm5278, %v7636, -inf
        %v7653 = vmax.f32 %v7651, %v7652
        %v7654 = vrot.slane %v7653, 4
        %v7655 = vmax.f32 %v7653, %v7654
        %v7656 = vrot.slane %v7655, 2
        %v7657 = vmax.f32 %v7655, %v7656
        %v7658 = vrot.slane %v7657, 1
        %v7659 = vmax.f32 %v7657, %v7658
        %v7660 = vsel %vm5278, %v7637, -inf
        %v7661 = vsel %vm5278, %v7638, -inf
        %v7662 = vmax.f32 %v7660, %v7661
        %v7663 = vrot.slane %v7662, 4
        %v7664 = vmax.f32 %v7662, %v7663
        %v7665 = vrot.slane %v7664, 2
        %v7666 = vmax.f32 %v7664, %v7665
        %v7667 = vrot.slane %v7666, 1
        %v7668 = vmax.f32 %v7666, %v7667
        %v7669 = vsel %vm5278, %v7639, -inf
        %v7670 = vsel %vm5278, %v7640, -inf
        %v7671 = vmax.f32 %v7669, %v7670
        %v7672 = vrot.slane %v7671, 4
        %v7673 = vmax.f32 %v7671, %v7672
        %v7674 = vrot.slane %v7673, 2
        %v7675 = vmax.f32 %v7673, %v7674
        %v7676 = vrot.slane %v7675, 1
        %v7677 = vmax.f32 %v7675, %v7676
        %v7678 = vsel %vm5278, %v7641, -inf
        %v7679 = vsel %vm5278, %v7642, -inf
        %v7680 = vmax.f32 %v7678, %v7679
        %v7681 = vrot.slane %v7680, 4
        %v7682 = vmax.f32 %v7680, %v7681
        %v7683 = vrot.slane %v7682, 2
        %v7684 = vmax.f32 %v7682, %v7683
        %v7685 = vrot.slane %v7684, 1
        %v7686 = vmax.f32 %v7684, %v7685
        %v7687 = vsel %vm5278, %v7643, -inf
        %v7688 = vsel %vm5278, %v7644, -inf
        %v7689 = vmax.f32 %v7687, %v7688
        %v7690 = vrot.slane %v7689, 4
        %v7691 = vmax.f32 %v7689, %v7690
        %v7692 = vrot.slane %v7691, 2
        %v7693 = vmax.f32 %v7691, %v7692
        %v7694 = vrot.slane %v7693, 1
        %v7695 = vmax.f32 %v7693, %v7694
        %v7696 = vsel %vm5278, %v7645, -inf
        %v7697 = vsel %vm5278, %v7646, -inf
        %v7698 = vmax.f32 %v7696, %v7697
        %v7699 = vrot.slane %v7698, 4
        %v7700 = vmax.f32 %v7698, %v7699
        %v7701 = vrot.slane %v7700, 2
        %v7702 = vmax.f32 %v7700, %v7701
        %v7703 = vrot.slane %v7702, 1
        %v7704 = vmax.f32 %v7702, %v7703
        %v7705 = vsel %vm5278, %v7647, -inf
        %v7706 = vsel %vm5278, %v7648, -inf
        %v7707 = vmax.f32 %v7705, %v7706
        %v7708 = vrot.slane %v7707, 4
        %v7709 = vmax.f32 %v7707, %v7708
        %v7710 = vrot.slane %v7709, 2
        %v7711 = vmax.f32 %v7709, %v7710
        %v7712 = vrot.slane %v7711, 1
        %v7713 = vmax.f32 %v7711, %v7712
        %v7714 = vsel %vm5278, %v7649, -inf
        %v7715 = vsel %vm5278, %v7650, -inf
        %v7716 = vmax.f32 %v7714, %v7715
        %v7717 = vrot.slane %v7716, 4
        %v7718 = vmax.f32 %v7716, %v7717
        %v7719 = vrot.slane %v7718, 2
        %v7720 = vmax.f32 %v7718, %v7719
        %v7721 = vrot.slane %v7720, 1
        %v7722 = vmax.f32 %v7720, %v7721
        %v7723 = vmax.f32 %v7635, 0.0
        %v7724 = vmax.f32 %v7636, 0.0
        %v7725 = vmax.f32 %v7637, 0.0
        %v7726 = vmax.f32 %v7638, 0.0
        %v7727 = vmax.f32 %v7639, 0.0
        %v7728 = vmax.f32 %v7640, 0.0
        %v7729 = vmax.f32 %v7641, 0.0
        %v7730 = vmax.f32 %v7642, 0.0
        %v7731 = vmax.f32 %v7643, 0.0
        %v7732 = vmax.f32 %v7644, 0.0
        %v7733 = vmax.f32 %v7645, 0.0
        %v7734 = vmax.f32 %v7646, 0.0
        %v7735 = vmax.f32 %v7647, 0.0
        %v7736 = vmax.f32 %v7648, 0.0
        %v7737 = vmax.f32 %v7649, 0.0
        %v7738 = vmax.f32 %v7650, 0.0
        %s7739 = scalar_lea.vmem %s11, 128
        %v7740 = vld [vmem:[%s7739] sm:$0xff]
        %v7741 = vld [vmem:[%s7739 + $0x8] sm:$0xff]
        %v7742 = vld [vmem:[%s7739 + $0x10] sm:$0xff]
        %v7743 = vld [vmem:[%s7739 + $0x18] sm:$0xff]
        %v7744 = vld [vmem:[%s7739 + $0x20] sm:$0xff]
        %v7745 = vld [vmem:[%s7739 + $0x28] sm:$0xff]
        %v7746 = vld [vmem:[%s7739 + $0x30] sm:$0xff]
        %v7747 = vld [vmem:[%s7739 + $0x38] sm:$0xff]
        %s7748 = scalar_lea.vmem %s13, 2
        %v7749 = vld [vmem:[%s7748] sm:$0x1]
        %v7751 = vperm.slane %v7749, 0
        %v7754 = vsel %vm5278, %v7723, 0
        %v7757 = vsel %vm5278, %v7724, 0
        %v7760 = vsel %vm5278, %v7725, 0
        %v7763 = vsel %vm5278, %v7726, 0
        %v7766 = vsel %vm5278, %v7727, 0
        %v7769 = vsel %vm5278, %v7728, 0
        %v7772 = vsel %vm5278, %v7729, 0
        %v7775 = vsel %vm5278, %v7730, 0
        %v7778 = vsel %vm5278, %v7731, 0
        %v7781 = vsel %vm5278, %v7732, 0
        %v7784 = vsel %vm5278, %v7733, 0
        %v7787 = vsel %vm5278, %v7734, 0
        %v7790 = vsel %vm5278, %v7735, 0
        %v7793 = vsel %vm5278, %v7736, 0
        %v7796 = vsel %vm5278, %v7737, 0
        %v7799 = vsel %vm5278, %v7738, 0
        %7801 = vmatpush.msra.mxu0 0.0
        %7802 = vmatpush.msra.mxu0 0.0
        %7803 = vmatpush.msra.mxu0 0.0
        %7804 = vmatpush.msra.mxu0 0.0
        %7805 = vmatpush.msra.mxu0 0.0
        %7806 = vmatpush.msra.mxu0 0.0
        %7807 = vmatpush.msra.mxu0 0.0
        %7808 = vmatpush.msra.mxu0 0.0
        %7809 = vmatpush.msra.mxu0 %v7747
        %7810 = vmatpush.msra.mxu0 %v7746
        %7811 = vmatpush.msra.mxu0 %v7745
        %7812 = vmatpush.msra.mxu0 %v7744
        %7813 = vmatpush.msra.mxu0 %v7743
        %7814 = vmatpush.msra.mxu0 %v7742
        %7815 = vmatpush.msra.mxu0 %v7741
        %7816 = vmatpush.msra.mxu0 %v7740
        %7817 = vmatmul.f32.gmra.mxu0 %v7754
        %v7818 = vpop.f32.mrf.mxu0
        %v7819 = vadd.f32 %v7751, %v7818
        %7820 = vmatmul.f32.gmra.mxu0 %v7757
        %v7821 = vpop.f32.mrf.mxu0
        %v7822 = vadd.f32 %v7751, %v7821
        %7823 = vmatmul.f32.gmra.mxu0 %v7760
        %v7824 = vpop.f32.mrf.mxu0
        %v7825 = vadd.f32 %v7751, %v7824
        %7826 = vmatmul.f32.gmra.mxu0 %v7763
        %v7827 = vpop.f32.mrf.mxu0
        %v7828 = vadd.f32 %v7751, %v7827
        %7829 = vmatmul.f32.gmra.mxu0 %v7766
        %v7830 = vpop.f32.mrf.mxu0
        %v7831 = vadd.f32 %v7751, %v7830
        %7832 = vmatmul.f32.gmra.mxu0 %v7769
        %v7833 = vpop.f32.mrf.mxu0
        %v7834 = vadd.f32 %v7751, %v7833
        %7835 = vmatmul.f32.gmra.mxu0 %v7772
        %v7836 = vpop.f32.mrf.mxu0
        %v7837 = vadd.f32 %v7751, %v7836
        %7838 = vmatmul.f32.gmra.mxu0 %v7775
        %v7839 = vpop.f32.mrf.mxu0
        %v7840 = vadd.f32 %v7751, %v7839
        %7841 = vmatmul.f32.gmra.mxu0 %v7778
        %v7842 = vpop.f32.mrf.mxu0
        %v7843 = vadd.f32 %v7751, %v7842
        %7844 = vmatmul.f32.gmra.mxu0 %v7781
        %v7845 = vpop.f32.mrf.mxu0
        %v7846 = vadd.f32 %v7751, %v7845
        %7847 = vmatmul.f32.gmra.mxu0 %v7784
        %v7848 = vpop.f32.mrf.mxu0
        %v7849 = vadd.f32 %v7751, %v7848
        %7850 = vmatmul.f32.gmra.mxu0 %v7787
        %v7851 = vpop.f32.mrf.mxu0
        %v7852 = vadd.f32 %v7751, %v7851
        %7853 = vmatmul.f32.gmra.mxu0 %v7790
        %v7854 = vpop.f32.mrf.mxu0
        %v7855 = vadd.f32 %v7751, %v7854
        %7856 = vmatmul.f32.gmra.mxu0 %v7793
        %v7857 = vpop.f32.mrf.mxu0
        %v7858 = vadd.f32 %v7751, %v7857
        %7859 = vmatmul.f32.gmra.mxu0 %v7796
        %v7860 = vpop.f32.mrf.mxu0
        %v7861 = vadd.f32 %v7751, %v7860
        %7862 = vmatmul.f32.gmra.mxu0 %v7799
        %v7863 = vpop.f32.mrf.mxu0
        %v7864 = vadd.f32 %v7751, %v7863
        %7865 = vdwg.mxu0
        %v7866 = vmax.f32 %v7659, 0.0
        %v7867 = vmax.f32 %v7668, 0.0
        %v7868 = vmax.f32 %v7677, 0.0
        %v7869 = vmax.f32 %v7686, 0.0
        %v7870 = vmax.f32 %v7695, 0.0
        %v7871 = vmax.f32 %v7704, 0.0
        %v7872 = vmax.f32 %v7713, 0.0
        %v7873 = vmax.f32 %v7722, 0.0
        %s7874 = scalar_lea.vmem %s12, 128
        %v7875 = vld [vmem:[%s7874] sm:$0xff]
        %v7876 = vld [vmem:[%s7874 + $0x8] sm:$0xff]
        %v7877 = vld [vmem:[%s7874 + $0x10] sm:$0xff]
        %v7878 = vld [vmem:[%s7874 + $0x18] sm:$0xff]
        %v7879 = vld [vmem:[%s7874 + $0x20] sm:$0xff]
        %v7880 = vld [vmem:[%s7874 + $0x28] sm:$0xff]
        %v7881 = vld [vmem:[%s7874 + $0x30] sm:$0xff]
        %v7882 = vld [vmem:[%s7874 + $0x38] sm:$0xff]
        %v7891 = vsel %vm6354, %v7867, %v7866
        %v7892 = vsel %vm6356, %v7868, %v7891
        %v7893 = vsel %vm6358, %v7869, %v7892
        %v7894 = vsel %vm6360, %v7870, %v7893
        %v7895 = vsel %vm6362, %v7871, %v7894
        %v7896 = vsel %vm6364, %v7872, %v7895
        %v7897 = vsel %vm6366, %v7873, %v7896
        %v7898 = vsel %vm5278, %v7897, 0
        %7900 = vmatpush.msra.mxu0 0.0
        %7901 = vmatpush.msra.mxu0 0.0
        %7902 = vmatpush.msra.mxu0 0.0
        %7903 = vmatpush.msra.mxu0 0.0
        %7904 = vmatpush.msra.mxu0 0.0
        %7905 = vmatpush.msra.mxu0 0.0
        %7906 = vmatpush.msra.mxu0 0.0
        %7907 = vmatpush.msra.mxu0 0.0
        %7908 = vmatpush.msra.mxu0 %v7882
        %7909 = vmatpush.msra.mxu0 %v7881
        %7910 = vmatpush.msra.mxu0 %v7880
        %7911 = vmatpush.msra.mxu0 %v7879
        %7912 = vmatpush.msra.mxu0 %v7878
        %7913 = vmatpush.msra.mxu0 %v7877
        %7914 = vmatpush.msra.mxu0 %v7876
        %7915 = vmatpush.msra.mxu0 %v7875
        %7916 = vmatmul.f32.gmra.mxu0 %v7898
        %v7917 = vpop.f32.mrf.mxu0
        %v7918 = vadd.f32 0.0, %v7917
        %7919 = vdwg.mxu0
        %v7921 = vrot.slane %v7918, 1
        %v7922 = vrot.slane %v7918, 2
        %v7923 = vrot.slane %v7918, 3
        %v7924 = vrot.slane %v7918, 4
        %v7925 = vrot.slane %v7918, 5
        %v7926 = vrot.slane %v7918, 6
        %v7927 = vrot.slane %v7918, 7
        %v7928 = vperm.slane %v7918, 0
        %v7929 = vperm.slane %v7921, 0
        %v7930 = vperm.slane %v7922, 0
        %v7931 = vperm.slane %v7923, 0
        %v7932 = vperm.slane %v7924, 0
        %v7933 = vperm.slane %v7925, 0
        %v7934 = vperm.slane %v7926, 0
        %v7935 = vperm.slane %v7927, 0
        %v7944 = vadd.f32 %v7819, %v7928
        %v7945 = vadd.f32 %v7822, %v7928
        %v7946 = vadd.f32 %v7825, %v7929
        %v7947 = vadd.f32 %v7828, %v7929
        %v7948 = vadd.f32 %v7831, %v7930
        %v7949 = vadd.f32 %v7834, %v7930
        %v7950 = vadd.f32 %v7837, %v7931
        %v7951 = vadd.f32 %v7840, %v7931
        %v7952 = vadd.f32 %v7843, %v7932
        %v7953 = vadd.f32 %v7846, %v7932
        %v7954 = vadd.f32 %v7849, %v7933
        %v7955 = vadd.f32 %v7852, %v7933
        %v7956 = vadd.f32 %v7855, %v7934
        %v7957 = vadd.f32 %v7858, %v7934
        %v7958 = vadd.f32 %v7861, %v7935
        %v7959 = vadd.f32 %v7864, %v7935
        %v7960 = vmax.f32 %v7944, 0.0
        %v7961 = vmax.f32 %v7945, 0.0
        %v7962 = vmax.f32 %v7946, 0.0
        %v7963 = vmax.f32 %v7947, 0.0
        %v7964 = vmax.f32 %v7948, 0.0
        %v7965 = vmax.f32 %v7949, 0.0
        %v7966 = vmax.f32 %v7950, 0.0
        %v7967 = vmax.f32 %v7951, 0.0
        %v7968 = vmax.f32 %v7952, 0.0
        %v7969 = vmax.f32 %v7953, 0.0
        %v7970 = vmax.f32 %v7954, 0.0
        %v7971 = vmax.f32 %v7955, 0.0
        %v7972 = vmax.f32 %v7956, 0.0
        %v7973 = vmax.f32 %v7957, 0.0
        %v7974 = vmax.f32 %v7958, 0.0
        %v7975 = vmax.f32 %v7959, 0.0
        %s7976 = scalar_lea.vmem [#allocation9], 128
        %v7977 = vld [vmem:[%s7976] sm:$0xff]
        %v7978 = vld [vmem:[%s7976 + $0x8] sm:$0xff]
        %v7979 = vld [vmem:[%s7976 + $0x10] sm:$0xff]
        %v7980 = vld [vmem:[%s7976 + $0x18] sm:$0xff]
        %v7981 = vld [vmem:[%s7976 + $0x20] sm:$0xff]
        %v7982 = vld [vmem:[%s7976 + $0x28] sm:$0xff]
        %v7983 = vld [vmem:[%s7976 + $0x30] sm:$0xff]
        %v7984 = vld [vmem:[%s7976 + $0x38] sm:$0xff]
        %s7985 = scalar_lea.vmem %s15, 2
        %v7986 = vld [vmem:[%s7985] sm:$0x1]
        %v7988 = vperm.slane %v7986, 0
        %v7991 = vsel %vm5278, %v7960, 0
        %v7994 = vsel %vm5278, %v7961, 0
        %v7997 = vsel %vm5278, %v7962, 0
        %v8000 = vsel %vm5278, %v7963, 0
        %v8003 = vsel %vm5278, %v7964, 0
        %v8006 = vsel %vm5278, %v7965, 0
        %v8009 = vsel %vm5278, %v7966, 0
        %v8012 = vsel %vm5278, %v7967, 0
        %v8015 = vsel %vm5278, %v7968, 0
        %v8018 = vsel %vm5278, %v7969, 0
        %v8021 = vsel %vm5278, %v7970, 0
        %v8024 = vsel %vm5278, %v7971, 0
        %v8027 = vsel %vm5278, %v7972, 0
        %v8030 = vsel %vm5278, %v7973, 0
        %v8033 = vsel %vm5278, %v7974, 0
        %v8036 = vsel %vm5278, %v7975, 0
        %8038 = vmatpush.msra.mxu0 0.0
        %8039 = vmatpush.msra.mxu0 0.0
        %8040 = vmatpush.msra.mxu0 0.0
        %8041 = vmatpush.msra.mxu0 0.0
        %8042 = vmatpush.msra.mxu0 0.0
        %8043 = vmatpush.msra.mxu0 0.0
        %8044 = vmatpush.msra.mxu0 0.0
        %8045 = vmatpush.msra.mxu0 0.0
        %8046 = vmatpush.msra.mxu0 %v7984
        %8047 = vmatpush.msra.mxu0 %v7983
        %8048 = vmatpush.msra.mxu0 %v7982
        %8049 = vmatpush.msra.mxu0 %v7981
        %8050 = vmatpush.msra.mxu0 %v7980
        %8051 = vmatpush.msra.mxu0 %v7979
        %8052 = vmatpush.msra.mxu0 %v7978
        %8053 = vmatpush.msra.mxu0 %v7977
        %8054 = vmatmul.f32.gmra.mxu0 %v7991
        %v8055 = vpop.f32.mrf.mxu0
        %v8056 = vadd.f32 %v7988, %v8055
        %8057 = vmatmul.f32.gmra.mxu0 %v7994
        %v8058 = vpop.f32.mrf.mxu0
        %v8059 = vadd.f32 %v7988, %v8058
        %8060 = vmatmul.f32.gmra.mxu0 %v7997
        %v8061 = vpop.f32.mrf.mxu0
        %v8062 = vadd.f32 %v7988, %v8061
        %8063 = vmatmul.f32.gmra.mxu0 %v8000
        %v8064 = vpop.f32.mrf.mxu0
        %v8065 = vadd.f32 %v7988, %v8064
        %8066 = vmatmul.f32.gmra.mxu0 %v8003
        %v8067 = vpop.f32.mrf.mxu0
        %v8068 = vadd.f32 %v7988, %v8067
        %8069 = vmatmul.f32.gmra.mxu0 %v8006
        %v8070 = vpop.f32.mrf.mxu0
        %v8071 = vadd.f32 %v7988, %v8070
        %8072 = vmatmul.f32.gmra.mxu0 %v8009
        %v8073 = vpop.f32.mrf.mxu0
        %v8074 = vadd.f32 %v7988, %v8073
        %8075 = vmatmul.f32.gmra.mxu0 %v8012
        %v8076 = vpop.f32.mrf.mxu0
        %v8077 = vadd.f32 %v7988, %v8076
        %8078 = vmatmul.f32.gmra.mxu0 %v8015
        %v8079 = vpop.f32.mrf.mxu0
        %v8080 = vadd.f32 %v7988, %v8079
        %8081 = vmatmul.f32.gmra.mxu0 %v8018
        %v8082 = vpop.f32.mrf.mxu0
        %v8083 = vadd.f32 %v7988, %v8082
        %8084 = vmatmul.f32.gmra.mxu0 %v8021
        %v8085 = vpop.f32.mrf.mxu0
        %v8086 = vadd.f32 %v7988, %v8085
        %8087 = vmatmul.f32.gmra.mxu0 %v8024
        %v8088 = vpop.f32.mrf.mxu0
        %v8089 = vadd.f32 %v7988, %v8088
        %8090 = vmatmul.f32.gmra.mxu0 %v8027
        %v8091 = vpop.f32.mrf.mxu0
        %v8092 = vadd.f32 %v7988, %v8091
        %8093 = vmatmul.f32.gmra.mxu0 %v8030
        %v8094 = vpop.f32.mrf.mxu0
        %v8095 = vadd.f32 %v7988, %v8094
        %8096 = vmatmul.f32.gmra.mxu0 %v8033
        %v8097 = vpop.f32.mrf.mxu0
        %v8098 = vadd.f32 %v7988, %v8097
        %8099 = vmatmul.f32.gmra.mxu0 %v8036
        %v8100 = vpop.f32.mrf.mxu0
        %v8101 = vadd.f32 %v7988, %v8100
        %8102 = vdwg.mxu0
        %s8103 = scalar_lea.vmem [#allocation11], 128
        %v8104 = vld [vmem:[%s8103] sm:$0xff]
        %v8105 = vld [vmem:[%s8103 + $0x8] sm:$0xff]
        %v8106 = vld [vmem:[%s8103 + $0x10] sm:$0xff]
        %v8107 = vld [vmem:[%s8103 + $0x18] sm:$0xff]
        %v8108 = vld [vmem:[%s8103 + $0x20] sm:$0xff]
        %v8109 = vld [vmem:[%s8103 + $0x28] sm:$0xff]
        %v8110 = vld [vmem:[%s8103 + $0x30] sm:$0xff]
        %v8111 = vld [vmem:[%s8103 + $0x38] sm:$0xff]
        %s8112 = scalar_lea.vmem [#allocation12], 128
        %v8113 = vld [vmem:[%s8112] sm:$0xff]
        %v8114 = vld [vmem:[%s8112 + $0x8] sm:$0xff]
        %v8115 = vld [vmem:[%s8112 + $0x10] sm:$0xff]
        %v8116 = vld [vmem:[%s8112 + $0x18] sm:$0xff]
        %v8117 = vld [vmem:[%s8112 + $0x20] sm:$0xff]
        %v8118 = vld [vmem:[%s8112 + $0x28] sm:$0xff]
        %v8119 = vld [vmem:[%s8112 + $0x30] sm:$0xff]
        %v8120 = vld [vmem:[%s8112 + $0x38] sm:$0xff]
        %v8129 = vsel %vm6354, %v7668, %v7659
        %v8130 = vsel %vm6356, %v7677, %v8129
        %v8131 = vsel %vm6358, %v7686, %v8130
        %v8132 = vsel %vm6360, %v7695, %v8131
        %v8133 = vsel %vm6362, %v7704, %v8132
        %v8134 = vsel %vm6364, %v7713, %v8133
        %v8135 = vsel %vm6366, %v7722, %v8134
        %v8136 = vsel %vm5278, %v8135, 0
        %8138 = vmatpush.msra.mxu0 0.0
        %8139 = vmatpush.msra.mxu0 0.0
        %8140 = vmatpush.msra.mxu0 0.0
        %8141 = vmatpush.msra.mxu0 0.0
        %8142 = vmatpush.msra.mxu0 0.0
        %8143 = vmatpush.msra.mxu0 0.0
        %8144 = vmatpush.msra.mxu0 0.0
        %8145 = vmatpush.msra.mxu0 0.0
        %8146 = vmatpush.msra.mxu0 %v8120
        %8147 = vmatpush.msra.mxu0 %v8119
        %8148 = vmatpush.msra.mxu0 %v8118
        %8149 = vmatpush.msra.mxu0 %v8117
        %8150 = vmatpush.msra.mxu0 %v8116
        %8151 = vmatpush.msra.mxu0 %v8115
        %8152 = vmatpush.msra.mxu0 %v8114
        %8153 = vmatpush.msra.mxu0 %v8113
        %8154 = vmatmul.f32.gmra.mxu0 %v8136
        %v8155 = vpop.f32.mrf.mxu0
        %v8156 = vadd.f32 0.0, %v8155
        %8157 = vdwg.mxu0
        %v8159 = vsel %vm5278, %v7635, 0
        %v8162 = vsel %vm5278, %v7636, 0
        %v8165 = vsel %vm5278, %v7637, 0
        %v8168 = vsel %vm5278, %v7638, 0
        %v8171 = vsel %vm5278, %v7639, 0
        %v8174 = vsel %vm5278, %v7640, 0
        %v8177 = vsel %vm5278, %v7641, 0
        %v8180 = vsel %vm5278, %v7642, 0
        %v8183 = vsel %vm5278, %v7643, 0
        %v8186 = vsel %vm5278, %v7644, 0
        %v8189 = vsel %vm5278, %v7645, 0
        %v8192 = vsel %vm5278, %v7646, 0
        %v8195 = vsel %vm5278, %v7647, 0
        %v8198 = vsel %vm5278, %v7648, 0
        %v8201 = vsel %vm5278, %v7649, 0
        %v8204 = vsel %vm5278, %v7650, 0
        %8206 = vmatpush.msra.mxu0 0.0
        %8207 = vmatpush.msra.mxu0 0.0
        %8208 = vmatpush.msra.mxu0 0.0
        %8209 = vmatpush.msra.mxu0 0.0
        %8210 = vmatpush.msra.mxu0 0.0
        %8211 = vmatpush.msra.mxu0 0.0
        %8212 = vmatpush.msra.mxu0 0.0
        %8213 = vmatpush.msra.mxu0 0.0
        %8214 = vmatpush.msra.mxu0 %v8111
        %8215 = vmatpush.msra.mxu0 %v8110
        %8216 = vmatpush.msra.mxu0 %v8109
        %8217 = vmatpush.msra.mxu0 %v8108
        %8218 = vmatpush.msra.mxu0 %v8107
        %8219 = vmatpush.msra.mxu0 %v8106
        %8220 = vmatpush.msra.mxu0 %v8105
        %8221 = vmatpush.msra.mxu0 %v8104
        %8222 = vmatmul.f32.gmra.mxu0 %v8159
        %v8223 = vpop.f32.mrf.mxu0
        %v8224 = vadd.f32 %v8056, %v8223
        %8225 = vmatmul.f32.gmra.mxu0 %v8162
        %v8226 = vpop.f32.mrf.mxu0
        %v8227 = vadd.f32 %v8059, %v8226
        %8228 = vmatmul.f32.gmra.mxu0 %v8165
        %v8229 = vpop.f32.mrf.mxu0
        %v8230 = vadd.f32 %v8062, %v8229
        %8231 = vmatmul.f32.gmra.mxu0 %v8168
        %v8232 = vpop.f32.mrf.mxu0
        %v8233 = vadd.f32 %v8065, %v8232
        %8234 = vmatmul.f32.gmra.mxu0 %v8171
        %v8235 = vpop.f32.mrf.mxu0
        %v8236 = vadd.f32 %v8068, %v8235
        %8237 = vmatmul.f32.gmra.mxu0 %v8174
        %v8238 = vpop.f32.mrf.mxu0
        %v8239 = vadd.f32 %v8071, %v8238
        %8240 = vmatmul.f32.gmra.mxu0 %v8177
        %v8241 = vpop.f32.mrf.mxu0
        %v8242 = vadd.f32 %v8074, %v8241
        %8243 = vmatmul.f32.gmra.mxu0 %v8180
        %v8244 = vpop.f32.mrf.mxu0
        %v8245 = vadd.f32 %v8077, %v8244
        %8246 = vmatmul.f32.gmra.mxu0 %v8183
        %v8247 = vpop.f32.mrf.mxu0
        %v8248 = vadd.f32 %v8080, %v8247
        %8249 = vmatmul.f32.gmra.mxu0 %v8186
        %v8250 = vpop.f32.mrf.mxu0
        %v8251 = vadd.f32 %v8083, %v8250
        %8252 = vmatmul.f32.gmra.mxu0 %v8189
        %v8253 = vpop.f32.mrf.mxu0
        %v8254 = vadd.f32 %v8086, %v8253
        %8255 = vmatmul.f32.gmra.mxu0 %v8192
        %v8256 = vpop.f32.mrf.mxu0
        %v8257 = vadd.f32 %v8089, %v8256
        %8258 = vmatmul.f32.gmra.mxu0 %v8195
        %v8259 = vpop.f32.mrf.mxu0
        %v8260 = vadd.f32 %v8092, %v8259
        %8261 = vmatmul.f32.gmra.mxu0 %v8198
        %v8262 = vpop.f32.mrf.mxu0
        %v8263 = vadd.f32 %v8095, %v8262
        %8264 = vmatmul.f32.gmra.mxu0 %v8201
        %v8265 = vpop.f32.mrf.mxu0
        %v8266 = vadd.f32 %v8098, %v8265
        %8267 = vmatmul.f32.gmra.mxu0 %v8204
        %v8268 = vpop.f32.mrf.mxu0
        %v8269 = vadd.f32 %v8101, %v8268
        %8270 = vdwg.mxu0
        %v8272 = vrot.slane %v8156, 1
        %v8273 = vrot.slane %v8156, 2
        %v8274 = vrot.slane %v8156, 3
        %v8275 = vrot.slane %v8156, 4
        %v8276 = vrot.slane %v8156, 5
        %v8277 = vrot.slane %v8156, 6
        %v8278 = vrot.slane %v8156, 7
        %v8279 = vperm.slane %v8156, 0
        %v8280 = vperm.slane %v8272, 0
        %v8281 = vperm.slane %v8273, 0
        %v8282 = vperm.slane %v8274, 0
        %v8283 = vperm.slane %v8275, 0
        %v8284 = vperm.slane %v8276, 0
        %v8285 = vperm.slane %v8277, 0
        %v8286 = vperm.slane %v8278, 0
        %v8295 = vadd.f32 %v8224, %v8279
        %v8296 = vadd.f32 %v8227, %v8279
        %v8297 = vadd.f32 %v8230, %v8280
        %v8298 = vadd.f32 %v8233, %v8280
        %v8299 = vadd.f32 %v8236, %v8281
        %v8300 = vadd.f32 %v8239, %v8281
        %v8301 = vadd.f32 %v8242, %v8282
        %v8302 = vadd.f32 %v8245, %v8282
        %v8303 = vadd.f32 %v8248, %v8283
        %v8304 = vadd.f32 %v8251, %v8283
        %v8305 = vadd.f32 %v8254, %v8284
        %v8306 = vadd.f32 %v8257, %v8284
        %v8307 = vadd.f32 %v8260, %v8285
        %v8308 = vadd.f32 %v8263, %v8285
        %v8309 = vadd.f32 %v8266, %v8286
        %v8310 = vadd.f32 %v8269, %v8286
        %s8311 = scalar_lea.vmem %s5, 96
        %v8312 = vld [vmem:[%s8311] sm:$0xff]
        %v8313 = vld [vmem:[%s8311 + $0x8] sm:$0xff]
        %v8314 = vld [vmem:[%s8311 + $0x10] sm:$0xff]
        %v8315 = vld [vmem:[%s8311 + $0x18] sm:$0xff]
        %8316 = vmatpush.msra.mxu0 0.0
        %8317 = vmatpush.msra.mxu0 0.0
        %8318 = vmatpush.msra.mxu0 0.0
        %8319 = vmatpush.msra.mxu0 0.0
        %8320 = vmatpush.msra.mxu0 0.0
        %8321 = vmatpush.msra.mxu0 0.0
        %8322 = vmatpush.msra.mxu0 0.0
        %8323 = vmatpush.msra.mxu0 0.0
        %8324 = vmatpush.msra.mxu0 0.0
        %8325 = vmatpush.msra.mxu0 0.0
        %8326 = vmatpush.msra.mxu0 0.0
        %8327 = vmatpush.msra.mxu0 0.0
        %8328 = vmatpush.msra.mxu0 %v8315
        %8329 = vmatpush.msra.mxu0 %v8314
        %8330 = vmatpush.msra.mxu0 %v8313
        %8331 = vmatpush.msra.mxu0 %v8312
        %8332 = vmatmul.f32.gmra.mxu0 %v5464
        %v8333 = vpop.f32.mrf.mxu0
        %v8334 = vadd.f32 0.0, %v8333
        %8335 = vmatmul.f32.gmra.mxu0 %v5467
        %v8336 = vpop.f32.mrf.mxu0
        %v8337 = vadd.f32 0.0, %v8336
        %8338 = vmatmul.f32.gmra.mxu0 %v5470
        %v8339 = vpop.f32.mrf.mxu0
        %v8340 = vadd.f32 0.0, %v8339
        %8341 = vmatmul.f32.gmra.mxu0 %v5473
        %v8342 = vpop.f32.mrf.mxu0
        %v8343 = vadd.f32 0.0, %v8342
        %8344 = vmatmul.f32.gmra.mxu0 %v5476
        %v8345 = vpop.f32.mrf.mxu0
        %v8346 = vadd.f32 0.0, %v8345
        %8347 = vmatmul.f32.gmra.mxu0 %v5479
        %v8348 = vpop.f32.mrf.mxu0
        %v8349 = vadd.f32 0.0, %v8348
        %8350 = vmatmul.f32.gmra.mxu0 %v5482
        %v8351 = vpop.f32.mrf.mxu0
        %v8352 = vadd.f32 0.0, %v8351
        %8353 = vmatmul.f32.gmra.mxu0 %v5485
        %v8354 = vpop.f32.mrf.mxu0
        %v8355 = vadd.f32 0.0, %v8354
        %8356 = vmatmul.f32.gmra.mxu0 %v5488
        %v8357 = vpop.f32.mrf.mxu0
        %v8358 = vadd.f32 0.0, %v8357
        %8359 = vmatmul.f32.gmra.mxu0 %v5491
        %v8360 = vpop.f32.mrf.mxu0
        %v8361 = vadd.f32 0.0, %v8360
        %8362 = vmatmul.f32.gmra.mxu0 %v5494
        %v8363 = vpop.f32.mrf.mxu0
        %v8364 = vadd.f32 0.0, %v8363
        %8365 = vmatmul.f32.gmra.mxu0 %v5497
        %v8366 = vpop.f32.mrf.mxu0
        %v8367 = vadd.f32 0.0, %v8366
        %8368 = vmatmul.f32.gmra.mxu0 %v5500
        %v8369 = vpop.f32.mrf.mxu0
        %v8370 = vadd.f32 0.0, %v8369
        %8371 = vmatmul.f32.gmra.mxu0 %v5503
        %v8372 = vpop.f32.mrf.mxu0
        %v8373 = vadd.f32 0.0, %v8372
        %8374 = vmatmul.f32.gmra.mxu0 %v5506
        %v8375 = vpop.f32.mrf.mxu0
        %v8376 = vadd.f32 0.0, %v8375
        %8377 = vmatmul.f32.gmra.mxu0 %v5509
        %v8378 = vpop.f32.mrf.mxu0
        %v8379 = vadd.f32 0.0, %v8378
        %8380 = vdwg.mxu0
        %v8381 = vadd.f32 %v8295, %v8334
        %v8382 = vadd.f32 %v8296, %v8337
        %v8383 = vadd.f32 %v8297, %v8340
        %v8384 = vadd.f32 %v8298, %v8343
        %v8385 = vadd.f32 %v8299, %v8346
        %v8386 = vadd.f32 %v8300, %v8349
        %v8387 = vadd.f32 %v8301, %v8352
        %v8388 = vadd.f32 %v8302, %v8355
        %v8389 = vadd.f32 %v8303, %v8358
        %v8390 = vadd.f32 %v8304, %v8361
        %v8391 = vadd.f32 %v8305, %v8364
        %v8392 = vadd.f32 %v8306, %v8367
        %v8393 = vadd.f32 %v8307, %v8370
        %v8394 = vadd.f32 %v8308, %v8373
        %v8395 = vadd.f32 %v8309, %v8376
        %v8396 = vadd.f32 %v8310, %v8379
        %s8397 = scalar_lea.vmem %s6, 3
        %v8398 = vld [vmem:[%s8397] sm:$0x1]
        %v8400 = vperm.slane %v8398, 0
        %v8402 = vadd.f32 %v8381, %v8400
        %v8403 = vadd.f32 %v8382, %v8400
        %v8404 = vadd.f32 %v8383, %v8400
        %v8405 = vadd.f32 %v8384, %v8400
        %v8406 = vadd.f32 %v8385, %v8400
        %v8407 = vadd.f32 %v8386, %v8400
        %v8408 = vadd.f32 %v8387, %v8400
        %v8409 = vadd.f32 %v8388, %v8400
        %v8410 = vadd.f32 %v8389, %v8400
        %v8411 = vadd.f32 %v8390, %v8400
        %v8412 = vadd.f32 %v8391, %v8400
        %v8413 = vadd.f32 %v8392, %v8400
        %v8414 = vadd.f32 %v8393, %v8400
        %v8415 = vadd.f32 %v8394, %v8400
        %v8416 = vadd.f32 %v8395, %v8400
        %v8417 = vadd.f32 %v8396, %v8400
        %v8418 = vsel %vm5278, %v8402, -inf
        %v8419 = vsel %vm5278, %v8403, -inf
        %v8420 = vmax.f32 %v8418, %v8419
        %v8421 = vrot.slane %v8420, 4
        %v8422 = vmax.f32 %v8420, %v8421
        %v8423 = vrot.slane %v8422, 2
        %v8424 = vmax.f32 %v8422, %v8423
        %v8425 = vrot.slane %v8424, 1
        %v8426 = vmax.f32 %v8424, %v8425
        %v8427 = vsel %vm5278, %v8404, -inf
        %v8428 = vsel %vm5278, %v8405, -inf
        %v8429 = vmax.f32 %v8427, %v8428
        %v8430 = vrot.slane %v8429, 4
        %v8431 = vmax.f32 %v8429, %v8430
        %v8432 = vrot.slane %v8431, 2
        %v8433 = vmax.f32 %v8431, %v8432
        %v8434 = vrot.slane %v8433, 1
        %v8435 = vmax.f32 %v8433, %v8434
        %v8436 = vsel %vm5278, %v8406, -inf
        %v8437 = vsel %vm5278, %v8407, -inf
        %v8438 = vmax.f32 %v8436, %v8437
        %v8439 = vrot.slane %v8438, 4
        %v8440 = vmax.f32 %v8438, %v8439
        %v8441 = vrot.slane %v8440, 2
        %v8442 = vmax.f32 %v8440, %v8441
        %v8443 = vrot.slane %v8442, 1
        %v8444 = vmax.f32 %v8442, %v8443
        %v8445 = vsel %vm5278, %v8408, -inf
        %v8446 = vsel %vm5278, %v8409, -inf
        %v8447 = vmax.f32 %v8445, %v8446
        %v8448 = vrot.slane %v8447, 4
        %v8449 = vmax.f32 %v8447, %v8448
        %v8450 = vrot.slane %v8449, 2
        %v8451 = vmax.f32 %v8449, %v8450
        %v8452 = vrot.slane %v8451, 1
        %v8453 = vmax.f32 %v8451, %v8452
        %v8454 = vsel %vm5278, %v8410, -inf
        %v8455 = vsel %vm5278, %v8411, -inf
        %v8456 = vmax.f32 %v8454, %v8455
        %v8457 = vrot.slane %v8456, 4
        %v8458 = vmax.f32 %v8456, %v8457
        %v8459 = vrot.slane %v8458, 2
        %v8460 = vmax.f32 %v8458, %v8459
        %v8461 = vrot.slane %v8460, 1
        %v8462 = vmax.f32 %v8460, %v8461
        %v8463 = vsel %vm5278, %v8412, -inf
        %v8464 = vsel %vm5278, %v8413, -inf
        %v8465 = vmax.f32 %v8463, %v8464
        %v8466 = vrot.slane %v8465, 4
        %v8467 = vmax.f32 %v8465, %v8466
        %v8468 = vrot.slane %v8467, 2
        %v8469 = vmax.f32 %v8467, %v8468
        %v8470 = vrot.slane %v8469, 1
        %v8471 = vmax.f32 %v8469, %v8470
        %v8472 = vsel %vm5278, %v8414, -inf
        %v8473 = vsel %vm5278, %v8415, -inf
        %v8474 = vmax.f32 %v8472, %v8473
        %v8475 = vrot.slane %v8474, 4
        %v8476 = vmax.f32 %v8474, %v8475
        %v8477 = vrot.slane %v8476, 2
        %v8478 = vmax.f32 %v8476, %v8477
        %v8479 = vrot.slane %v8478, 1
        %v8480 = vmax.f32 %v8478, %v8479
        %v8481 = vsel %vm5278, %v8416, -inf
        %v8482 = vsel %vm5278, %v8417, -inf
        %v8483 = vmax.f32 %v8481, %v8482
        %v8484 = vrot.slane %v8483, 4
        %v8485 = vmax.f32 %v8483, %v8484
        %v8486 = vrot.slane %v8485, 2
        %v8487 = vmax.f32 %v8485, %v8486
        %v8488 = vrot.slane %v8487, 1
        %v8489 = vmax.f32 %v8487, %v8488
        %v8490 = vmax.f32 %v8402, 0.0
        %v8491 = vmax.f32 %v8403, 0.0
        %v8492 = vmax.f32 %v8404, 0.0
        %v8493 = vmax.f32 %v8405, 0.0
        %v8494 = vmax.f32 %v8406, 0.0
        %v8495 = vmax.f32 %v8407, 0.0
        %v8496 = vmax.f32 %v8408, 0.0
        %v8497 = vmax.f32 %v8409, 0.0
        %v8498 = vmax.f32 %v8410, 0.0
        %v8499 = vmax.f32 %v8411, 0.0
        %v8500 = vmax.f32 %v8412, 0.0
        %v8501 = vmax.f32 %v8413, 0.0
        %v8502 = vmax.f32 %v8414, 0.0
        %v8503 = vmax.f32 %v8415, 0.0
        %v8504 = vmax.f32 %v8416, 0.0
        %v8505 = vmax.f32 %v8417, 0.0
        %s8506 = scalar_lea.vmem %s11, 192
        %v8507 = vld [vmem:[%s8506] sm:$0xff]
        %v8508 = vld [vmem:[%s8506 + $0x8] sm:$0xff]
        %v8509 = vld [vmem:[%s8506 + $0x10] sm:$0xff]
        %v8510 = vld [vmem:[%s8506 + $0x18] sm:$0xff]
        %v8511 = vld [vmem:[%s8506 + $0x20] sm:$0xff]
        %v8512 = vld [vmem:[%s8506 + $0x28] sm:$0xff]
        %v8513 = vld [vmem:[%s8506 + $0x30] sm:$0xff]
        %v8514 = vld [vmem:[%s8506 + $0x38] sm:$0xff]
        %s8515 = scalar_lea.vmem %s13, 3
        %v8516 = vld [vmem:[%s8515] sm:$0x1]
        %v8518 = vperm.slane %v8516, 0
        %v8521 = vsel %vm5278, %v8490, 0
        %v8524 = vsel %vm5278, %v8491, 0
        %v8527 = vsel %vm5278, %v8492, 0
        %v8530 = vsel %vm5278, %v8493, 0
        %v8533 = vsel %vm5278, %v8494, 0
        %v8536 = vsel %vm5278, %v8495, 0
        %v8539 = vsel %vm5278, %v8496, 0
        %v8542 = vsel %vm5278, %v8497, 0
        %v8545 = vsel %vm5278, %v8498, 0
        %v8548 = vsel %vm5278, %v8499, 0
        %v8551 = vsel %vm5278, %v8500, 0
        %v8554 = vsel %vm5278, %v8501, 0
        %v8557 = vsel %vm5278, %v8502, 0
        %v8560 = vsel %vm5278, %v8503, 0
        %v8563 = vsel %vm5278, %v8504, 0
        %v8566 = vsel %vm5278, %v8505, 0
        %8568 = vmatpush.msra.mxu0 0.0
        %8569 = vmatpush.msra.mxu0 0.0
        %8570 = vmatpush.msra.mxu0 0.0
        %8571 = vmatpush.msra.mxu0 0.0
        %8572 = vmatpush.msra.mxu0 0.0
        %8573 = vmatpush.msra.mxu0 0.0
        %8574 = vmatpush.msra.mxu0 0.0
        %8575 = vmatpush.msra.mxu0 0.0
        %8576 = vmatpush.msra.mxu0 %v8514
        %8577 = vmatpush.msra.mxu0 %v8513
        %8578 = vmatpush.msra.mxu0 %v8512
        %8579 = vmatpush.msra.mxu0 %v8511
        %8580 = vmatpush.msra.mxu0 %v8510
        %8581 = vmatpush.msra.mxu0 %v8509
        %8582 = vmatpush.msra.mxu0 %v8508
        %8583 = vmatpush.msra.mxu0 %v8507
        %8584 = vmatmul.f32.gmra.mxu0 %v8521
        %v8585 = vpop.f32.mrf.mxu0
        %v8586 = vadd.f32 %v8518, %v8585
        %8587 = vmatmul.f32.gmra.mxu0 %v8524
        %v8588 = vpop.f32.mrf.mxu0
        %v8589 = vadd.f32 %v8518, %v8588
        %8590 = vmatmul.f32.gmra.mxu0 %v8527
        %v8591 = vpop.f32.mrf.mxu0
        %v8592 = vadd.f32 %v8518, %v8591
        %8593 = vmatmul.f32.gmra.mxu0 %v8530
        %v8594 = vpop.f32.mrf.mxu0
        %v8595 = vadd.f32 %v8518, %v8594
        %8596 = vmatmul.f32.gmra.mxu0 %v8533
        %v8597 = vpop.f32.mrf.mxu0
        %v8598 = vadd.f32 %v8518, %v8597
        %8599 = vmatmul.f32.gmra.mxu0 %v8536
        %v8600 = vpop.f32.mrf.mxu0
        %v8601 = vadd.f32 %v8518, %v8600
        %8602 = vmatmul.f32.gmra.mxu0 %v8539
        %v8603 = vpop.f32.mrf.mxu0
        %v8604 = vadd.f32 %v8518, %v8603
        %8605 = vmatmul.f32.gmra.mxu0 %v8542
        %v8606 = vpop.f32.mrf.mxu0
        %v8607 = vadd.f32 %v8518, %v8606
        %8608 = vmatmul.f32.gmra.mxu0 %v8545
        %v8609 = vpop.f32.mrf.mxu0
        %v8610 = vadd.f32 %v8518, %v8609
        %8611 = vmatmul.f32.gmra.mxu0 %v8548
        %v8612 = vpop.f32.mrf.mxu0
        %v8613 = vadd.f32 %v8518, %v8612
        %8614 = vmatmul.f32.gmra.mxu0 %v8551
        %v8615 = vpop.f32.mrf.mxu0
        %v8616 = vadd.f32 %v8518, %v8615
        %8617 = vmatmul.f32.gmra.mxu0 %v8554
        %v8618 = vpop.f32.mrf.mxu0
        %v8619 = vadd.f32 %v8518, %v8618
        %8620 = vmatmul.f32.gmra.mxu0 %v8557
        %v8621 = vpop.f32.mrf.mxu0
        %v8622 = vadd.f32 %v8518, %v8621
        %8623 = vmatmul.f32.gmra.mxu0 %v8560
        %v8624 = vpop.f32.mrf.mxu0
        %v8625 = vadd.f32 %v8518, %v8624
        %8626 = vmatmul.f32.gmra.mxu0 %v8563
        %v8627 = vpop.f32.mrf.mxu0
        %v8628 = vadd.f32 %v8518, %v8627
        %8629 = vmatmul.f32.gmra.mxu0 %v8566
        %v8630 = vpop.f32.mrf.mxu0
        %v8631 = vadd.f32 %v8518, %v8630
        %8632 = vdwg.mxu0
        %v8633 = vmax.f32 %v8426, 0.0
        %v8634 = vmax.f32 %v8435, 0.0
        %v8635 = vmax.f32 %v8444, 0.0
        %v8636 = vmax.f32 %v8453, 0.0
        %v8637 = vmax.f32 %v8462, 0.0
        %v8638 = vmax.f32 %v8471, 0.0
        %v8639 = vmax.f32 %v8480, 0.0
        %v8640 = vmax.f32 %v8489, 0.0
        %s8641 = scalar_lea.vmem %s12, 192
        %v8642 = vld [vmem:[%s8641] sm:$0xff]
        %v8643 = vld [vmem:[%s8641 + $0x8] sm:$0xff]
        %v8644 = vld [vmem:[%s8641 + $0x10] sm:$0xff]
        %v8645 = vld [vmem:[%s8641 + $0x18] sm:$0xff]
        %v8646 = vld [vmem:[%s8641 + $0x20] sm:$0xff]
        %v8647 = vld [vmem:[%s8641 + $0x28] sm:$0xff]
        %v8648 = vld [vmem:[%s8641 + $0x30] sm:$0xff]
        %v8649 = vld [vmem:[%s8641 + $0x38] sm:$0xff]
        %v8658 = vsel %vm6354, %v8634, %v8633
        %v8659 = vsel %vm6356, %v8635, %v8658
        %v8660 = vsel %vm6358, %v8636, %v8659
        %v8661 = vsel %vm6360, %v8637, %v8660
        %v8662 = vsel %vm6362, %v8638, %v8661
        %v8663 = vsel %vm6364, %v8639, %v8662
        %v8664 = vsel %vm6366, %v8640, %v8663
        %v8665 = vsel %vm5278, %v8664, 0
        %8667 = vmatpush.msra.mxu0 0.0
        %8668 = vmatpush.msra.mxu0 0.0
        %8669 = vmatpush.msra.mxu0 0.0
        %8670 = vmatpush.msra.mxu0 0.0
        %8671 = vmatpush.msra.mxu0 0.0
        %8672 = vmatpush.msra.mxu0 0.0
        %8673 = vmatpush.msra.mxu0 0.0
        %8674 = vmatpush.msra.mxu0 0.0
        %8675 = vmatpush.msra.mxu0 %v8649
        %8676 = vmatpush.msra.mxu0 %v8648
        %8677 = vmatpush.msra.mxu0 %v8647
        %8678 = vmatpush.msra.mxu0 %v8646
        %8679 = vmatpush.msra.mxu0 %v8645
        %8680 = vmatpush.msra.mxu0 %v8644
        %8681 = vmatpush.msra.mxu0 %v8643
        %8682 = vmatpush.msra.mxu0 %v8642
        %8683 = vmatmul.f32.gmra.mxu0 %v8665
        %v8684 = vpop.f32.mrf.mxu0
        %v8685 = vadd.f32 0.0, %v8684
        %8686 = vdwg.mxu0
        %v8688 = vrot.slane %v8685, 1
        %v8689 = vrot.slane %v8685, 2
        %v8690 = vrot.slane %v8685, 3
        %v8691 = vrot.slane %v8685, 4
        %v8692 = vrot.slane %v8685, 5
        %v8693 = vrot.slane %v8685, 6
        %v8694 = vrot.slane %v8685, 7
        %v8695 = vperm.slane %v8685, 0
        %v8696 = vperm.slane %v8688, 0
        %v8697 = vperm.slane %v8689, 0
        %v8698 = vperm.slane %v8690, 0
        %v8699 = vperm.slane %v8691, 0
        %v8700 = vperm.slane %v8692, 0
        %v8701 = vperm.slane %v8693, 0
        %v8702 = vperm.slane %v8694, 0
        %v8711 = vadd.f32 %v8586, %v8695
        %v8712 = vadd.f32 %v8589, %v8695
        %v8713 = vadd.f32 %v8592, %v8696
        %v8714 = vadd.f32 %v8595, %v8696
        %v8715 = vadd.f32 %v8598, %v8697
        %v8716 = vadd.f32 %v8601, %v8697
        %v8717 = vadd.f32 %v8604, %v8698
        %v8718 = vadd.f32 %v8607, %v8698
        %v8719 = vadd.f32 %v8610, %v8699
        %v8720 = vadd.f32 %v8613, %v8699
        %v8721 = vadd.f32 %v8616, %v8700
        %v8722 = vadd.f32 %v8619, %v8700
        %v8723 = vadd.f32 %v8622, %v8701
        %v8724 = vadd.f32 %v8625, %v8701
        %v8725 = vadd.f32 %v8628, %v8702
        %v8726 = vadd.f32 %v8631, %v8702
        %v8727 = vmax.f32 %v8711, 0.0
        %v8728 = vmax.f32 %v8712, 0.0
        %v8729 = vmax.f32 %v8713, 0.0
        %v8730 = vmax.f32 %v8714, 0.0
        %v8731 = vmax.f32 %v8715, 0.0
        %v8732 = vmax.f32 %v8716, 0.0
        %v8733 = vmax.f32 %v8717, 0.0
        %v8734 = vmax.f32 %v8718, 0.0
        %v8735 = vmax.f32 %v8719, 0.0
        %v8736 = vmax.f32 %v8720, 0.0
        %v8737 = vmax.f32 %v8721, 0.0
        %v8738 = vmax.f32 %v8722, 0.0
        %v8739 = vmax.f32 %v8723, 0.0
        %v8740 = vmax.f32 %v8724, 0.0
        %v8741 = vmax.f32 %v8725, 0.0
        %v8742 = vmax.f32 %v8726, 0.0
        %s8743 = scalar_lea.vmem [#allocation9], 192
        %v8744 = vld [vmem:[%s8743] sm:$0xff]
        %v8745 = vld [vmem:[%s8743 + $0x8] sm:$0xff]
        %v8746 = vld [vmem:[%s8743 + $0x10] sm:$0xff]
        %v8747 = vld [vmem:[%s8743 + $0x18] sm:$0xff]
        %v8748 = vld [vmem:[%s8743 + $0x20] sm:$0xff]
        %v8749 = vld [vmem:[%s8743 + $0x28] sm:$0xff]
        %v8750 = vld [vmem:[%s8743 + $0x30] sm:$0xff]
        %v8751 = vld [vmem:[%s8743 + $0x38] sm:$0xff]
        %s8752 = scalar_lea.vmem %s15, 3
        %v8753 = vld [vmem:[%s8752] sm:$0x1]
        %v8755 = vperm.slane %v8753, 0
        %v8758 = vsel %vm5278, %v8727, 0
        %v8761 = vsel %vm5278, %v8728, 0
        %v8764 = vsel %vm5278, %v8729, 0
        %v8767 = vsel %vm5278, %v8730, 0
        %v8770 = vsel %vm5278, %v8731, 0
        %v8773 = vsel %vm5278, %v8732, 0
        %v8776 = vsel %vm5278, %v8733, 0
        %v8779 = vsel %vm5278, %v8734, 0
        %v8782 = vsel %vm5278, %v8735, 0
        %v8785 = vsel %vm5278, %v8736, 0
        %v8788 = vsel %vm5278, %v8737, 0
        %v8791 = vsel %vm5278, %v8738, 0
        %v8794 = vsel %vm5278, %v8739, 0
        %v8797 = vsel %vm5278, %v8740, 0
        %v8800 = vsel %vm5278, %v8741, 0
        %v8803 = vsel %vm5278, %v8742, 0
        %8805 = vmatpush.msra.mxu0 0.0
        %8806 = vmatpush.msra.mxu0 0.0
        %8807 = vmatpush.msra.mxu0 0.0
        %8808 = vmatpush.msra.mxu0 0.0
        %8809 = vmatpush.msra.mxu0 0.0
        %8810 = vmatpush.msra.mxu0 0.0
        %8811 = vmatpush.msra.mxu0 0.0
        %8812 = vmatpush.msra.mxu0 0.0
        %8813 = vmatpush.msra.mxu0 %v8751
        %8814 = vmatpush.msra.mxu0 %v8750
        %8815 = vmatpush.msra.mxu0 %v8749
        %8816 = vmatpush.msra.mxu0 %v8748
        %8817 = vmatpush.msra.mxu0 %v8747
        %8818 = vmatpush.msra.mxu0 %v8746
        %8819 = vmatpush.msra.mxu0 %v8745
        %8820 = vmatpush.msra.mxu0 %v8744
        %8821 = vmatmul.f32.gmra.mxu0 %v8758
        %v8822 = vpop.f32.mrf.mxu0
        %v8823 = vadd.f32 %v8755, %v8822
        %8824 = vmatmul.f32.gmra.mxu0 %v8761
        %v8825 = vpop.f32.mrf.mxu0
        %v8826 = vadd.f32 %v8755, %v8825
        %8827 = vmatmul.f32.gmra.mxu0 %v8764
        %v8828 = vpop.f32.mrf.mxu0
        %v8829 = vadd.f32 %v8755, %v8828
        %8830 = vmatmul.f32.gmra.mxu0 %v8767
        %v8831 = vpop.f32.mrf.mxu0
        %v8832 = vadd.f32 %v8755, %v8831
        %8833 = vmatmul.f32.gmra.mxu0 %v8770
        %v8834 = vpop.f32.mrf.mxu0
        %v8835 = vadd.f32 %v8755, %v8834
        %8836 = vmatmul.f32.gmra.mxu0 %v8773
        %v8837 = vpop.f32.mrf.mxu0
        %v8838 = vadd.f32 %v8755, %v8837
        %8839 = vmatmul.f32.gmra.mxu0 %v8776
        %v8840 = vpop.f32.mrf.mxu0
        %v8841 = vadd.f32 %v8755, %v8840
        %8842 = vmatmul.f32.gmra.mxu0 %v8779
        %v8843 = vpop.f32.mrf.mxu0
        %v8844 = vadd.f32 %v8755, %v8843
        %8845 = vmatmul.f32.gmra.mxu0 %v8782
        %v8846 = vpop.f32.mrf.mxu0
        %v8847 = vadd.f32 %v8755, %v8846
        %8848 = vmatmul.f32.gmra.mxu0 %v8785
        %v8849 = vpop.f32.mrf.mxu0
        %v8850 = vadd.f32 %v8755, %v8849
        %8851 = vmatmul.f32.gmra.mxu0 %v8788
        %v8852 = vpop.f32.mrf.mxu0
        %v8853 = vadd.f32 %v8755, %v8852
        %8854 = vmatmul.f32.gmra.mxu0 %v8791
        %v8855 = vpop.f32.mrf.mxu0
        %v8856 = vadd.f32 %v8755, %v8855
        %8857 = vmatmul.f32.gmra.mxu0 %v8794
        %v8858 = vpop.f32.mrf.mxu0
        %v8859 = vadd.f32 %v8755, %v8858
        %8860 = vmatmul.f32.gmra.mxu0 %v8797
        %v8861 = vpop.f32.mrf.mxu0
        %v8862 = vadd.f32 %v8755, %v8861
        %8863 = vmatmul.f32.gmra.mxu0 %v8800
        %v8864 = vpop.f32.mrf.mxu0
        %v8865 = vadd.f32 %v8755, %v8864
        %8866 = vmatmul.f32.gmra.mxu0 %v8803
        %v8867 = vpop.f32.mrf.mxu0
        %v8868 = vadd.f32 %v8755, %v8867
        %8869 = vdwg.mxu0
        %s8870 = scalar_lea.vmem [#allocation11], 192
        %v8871 = vld [vmem:[%s8870] sm:$0xff]
        %v8872 = vld [vmem:[%s8870 + $0x8] sm:$0xff]
        %v8873 = vld [vmem:[%s8870 + $0x10] sm:$0xff]
        %v8874 = vld [vmem:[%s8870 + $0x18] sm:$0xff]
        %v8875 = vld [vmem:[%s8870 + $0x20] sm:$0xff]
        %v8876 = vld [vmem:[%s8870 + $0x28] sm:$0xff]
        %v8877 = vld [vmem:[%s8870 + $0x30] sm:$0xff]
        %v8878 = vld [vmem:[%s8870 + $0x38] sm:$0xff]
        %s8879 = scalar_lea.vmem [#allocation12], 192
        %v8880 = vld [vmem:[%s8879] sm:$0xff]
        %v8881 = vld [vmem:[%s8879 + $0x8] sm:$0xff]
        %v8882 = vld [vmem:[%s8879 + $0x10] sm:$0xff]
        %v8883 = vld [vmem:[%s8879 + $0x18] sm:$0xff]
        %v8884 = vld [vmem:[%s8879 + $0x20] sm:$0xff]
        %v8885 = vld [vmem:[%s8879 + $0x28] sm:$0xff]
        %v8886 = vld [vmem:[%s8879 + $0x30] sm:$0xff]
        %v8887 = vld [vmem:[%s8879 + $0x38] sm:$0xff]
        %v8896 = vsel %vm6354, %v8435, %v8426
        %v8897 = vsel %vm6356, %v8444, %v8896
        %v8898 = vsel %vm6358, %v8453, %v8897
        %v8899 = vsel %vm6360, %v8462, %v8898
        %v8900 = vsel %vm6362, %v8471, %v8899
        %v8901 = vsel %vm6364, %v8480, %v8900
        %v8902 = vsel %vm6366, %v8489, %v8901
        %v8903 = vsel %vm5278, %v8902, 0
        %8905 = vmatpush.msra.mxu0 0.0
        %8906 = vmatpush.msra.mxu0 0.0
        %8907 = vmatpush.msra.mxu0 0.0
        %8908 = vmatpush.msra.mxu0 0.0
        %8909 = vmatpush.msra.mxu0 0.0
        %8910 = vmatpush.msra.mxu0 0.0
        %8911 = vmatpush.msra.mxu0 0.0
        %8912 = vmatpush.msra.mxu0 0.0
        %8913 = vmatpush.msra.mxu0 %v8887
        %8914 = vmatpush.msra.mxu0 %v8886
        %8915 = vmatpush.msra.mxu0 %v8885
        %8916 = vmatpush.msra.mxu0 %v8884
        %8917 = vmatpush.msra.mxu0 %v8883
        %8918 = vmatpush.msra.mxu0 %v8882
        %8919 = vmatpush.msra.mxu0 %v8881
        %8920 = vmatpush.msra.mxu0 %v8880
        %8921 = vmatmul.f32.gmra.mxu0 %v8903
        %v8922 = vpop.f32.mrf.mxu0
        %v8923 = vadd.f32 0.0, %v8922
        %8924 = vdwg.mxu0
        %v8926 = vsel %vm5278, %v8402, 0
        %v8929 = vsel %vm5278, %v8403, 0
        %v8932 = vsel %vm5278, %v8404, 0
        %v8935 = vsel %vm5278, %v8405, 0
        %v8938 = vsel %vm5278, %v8406, 0
        %v8941 = vsel %vm5278, %v8407, 0
        %v8944 = vsel %vm5278, %v8408, 0
        %v8947 = vsel %vm5278, %v8409, 0
        %v8950 = vsel %vm5278, %v8410, 0
        %v8953 = vsel %vm5278, %v8411, 0
        %v8956 = vsel %vm5278, %v8412, 0
        %v8959 = vsel %vm5278, %v8413, 0
        %v8962 = vsel %vm5278, %v8414, 0
        %v8965 = vsel %vm5278, %v8415, 0
        %v8968 = vsel %vm5278, %v8416, 0
        %v8971 = vsel %vm5278, %v8417, 0
        %8973 = vmatpush.msra.mxu0 0.0
        %8974 = vmatpush.msra.mxu0 0.0
        %8975 = vmatpush.msra.mxu0 0.0
        %8976 = vmatpush.msra.mxu0 0.0
        %8977 = vmatpush.msra.mxu0 0.0
        %8978 = vmatpush.msra.mxu0 0.0
        %8979 = vmatpush.msra.mxu0 0.0
        %8980 = vmatpush.msra.mxu0 0.0
        %8981 = vmatpush.msra.mxu0 %v8878
        %8982 = vmatpush.msra.mxu0 %v8877
        %8983 = vmatpush.msra.mxu0 %v8876
        %8984 = vmatpush.msra.mxu0 %v8875
        %8985 = vmatpush.msra.mxu0 %v8874
        %8986 = vmatpush.msra.mxu0 %v8873
        %8987 = vmatpush.msra.mxu0 %v8872
        %8988 = vmatpush.msra.mxu0 %v8871
        %8989 = vmatmul.f32.gmra.mxu0 %v8926
        %v8990 = vpop.f32.mrf.mxu0
        %v8991 = vadd.f32 %v8823, %v8990
        %8992 = vmatmul.f32.gmra.mxu0 %v8929
        %v8993 = vpop.f32.mrf.mxu0
        %v8994 = vadd.f32 %v8826, %v8993
        %8995 = vmatmul.f32.gmra.mxu0 %v8932
        %v8996 = vpop.f32.mrf.mxu0
        %v8997 = vadd.f32 %v8829, %v8996
        %8998 = vmatmul.f32.gmra.mxu0 %v8935
        %v8999 = vpop.f32.mrf.mxu0
        %v9000 = vadd.f32 %v8832, %v8999
        %9001 = vmatmul.f32.gmra.mxu0 %v8938
        %v9002 = vpop.f32.mrf.mxu0
        %v9003 = vadd.f32 %v8835, %v9002
        %9004 = vmatmul.f32.gmra.mxu0 %v8941
        %v9005 = vpop.f32.mrf.mxu0
        %v9006 = vadd.f32 %v8838, %v9005
        %9007 = vmatmul.f32.gmra.mxu0 %v8944
        %v9008 = vpop.f32.mrf.mxu0
        %v9009 = vadd.f32 %v8841, %v9008
        %9010 = vmatmul.f32.gmra.mxu0 %v8947
        %v9011 = vpop.f32.mrf.mxu0
        %v9012 = vadd.f32 %v8844, %v9011
        %9013 = vmatmul.f32.gmra.mxu0 %v8950
        %v9014 = vpop.f32.mrf.mxu0
        %v9015 = vadd.f32 %v8847, %v9014
        %9016 = vmatmul.f32.gmra.mxu0 %v8953
        %v9017 = vpop.f32.mrf.mxu0
        %v9018 = vadd.f32 %v8850, %v9017
        %9019 = vmatmul.f32.gmra.mxu0 %v8956
        %v9020 = vpop.f32.mrf.mxu0
        %v9021 = vadd.f32 %v8853, %v9020
        %9022 = vmatmul.f32.gmra.mxu0 %v8959
        %v9023 = vpop.f32.mrf.mxu0
        %v9024 = vadd.f32 %v8856, %v9023
        %9025 = vmatmul.f32.gmra.mxu0 %v8962
        %v9026 = vpop.f32.mrf.mxu0
        %v9027 = vadd.f32 %v8859, %v9026
        %9028 = vmatmul.f32.gmra.mxu0 %v8965
        %v9029 = vpop.f32.mrf.mxu0
        %v9030 = vadd.f32 %v8862, %v9029
        %9031 = vmatmul.f32.gmra.mxu0 %v8968
        %v9032 = vpop.f32.mrf.mxu0
        %v9033 = vadd.f32 %v8865, %v9032
        %9034 = vmatmul.f32.gmra.mxu0 %v8971
        %v9035 = vpop.f32.mrf.mxu0
        %v9036 = vadd.f32 %v8868, %v9035
        %9037 = vdwg.mxu0
        %v9039 = vrot.slane %v8923, 1
        %v9040 = vrot.slane %v8923, 2
        %v9041 = vrot.slane %v8923, 3
        %v9042 = vrot.slane %v8923, 4
        %v9043 = vrot.slane %v8923, 5
        %v9044 = vrot.slane %v8923, 6
        %v9045 = vrot.slane %v8923, 7
        %v9046 = vperm.slane %v8923, 0
        %v9047 = vperm.slane %v9039, 0
        %v9048 = vperm.slane %v9040, 0
        %v9049 = vperm.slane %v9041, 0
        %v9050 = vperm.slane %v9042, 0
        %v9051 = vperm.slane %v9043, 0
        %v9052 = vperm.slane %v9044, 0
        %v9053 = vperm.slane %v9045, 0
        %v9062 = vadd.f32 %v8991, %v9046
        %v9063 = vadd.f32 %v8994, %v9046
        %v9064 = vadd.f32 %v8997, %v9047
        %v9065 = vadd.f32 %v9000, %v9047
        %v9066 = vadd.f32 %v9003, %v9048
        %v9067 = vadd.f32 %v9006, %v9048
        %v9068 = vadd.f32 %v9009, %v9049
        %v9069 = vadd.f32 %v9012, %v9049
        %v9070 = vadd.f32 %v9015, %v9050
        %v9071 = vadd.f32 %v9018, %v9050
        %v9072 = vadd.f32 %v9021, %v9051
        %v9073 = vadd.f32 %v9024, %v9051
        %v9074 = vadd.f32 %v9027, %v9052
        %v9075 = vadd.f32 %v9030, %v9052
        %v9076 = vadd.f32 %v9033, %v9053
        %v9077 = vadd.f32 %v9036, %v9053
        %v9078 = vsel %vm5278, %v9062, -inf
        %v9079 = vsel %vm5278, %v9063, -inf
        %v9080 = vmax.f32 %v9078, %v9079
        %v9081 = vrot.slane %v9080, 4
        %v9082 = vmax.f32 %v9080, %v9081
        %v9083 = vrot.slane %v9082, 2
        %v9084 = vmax.f32 %v9082, %v9083
        %v9085 = vrot.slane %v9084, 1
        %v9086 = vmax.f32 %v9084, %v9085
        %v9087 = vsel %vm5278, %v9064, -inf
        %v9088 = vsel %vm5278, %v9065, -inf
        %v9089 = vmax.f32 %v9087, %v9088
        %v9090 = vrot.slane %v9089, 4
        %v9091 = vmax.f32 %v9089, %v9090
        %v9092 = vrot.slane %v9091, 2
        %v9093 = vmax.f32 %v9091, %v9092
        %v9094 = vrot.slane %v9093, 1
        %v9095 = vmax.f32 %v9093, %v9094
        %v9096 = vsel %vm5278, %v9066, -inf
        %v9097 = vsel %vm5278, %v9067, -inf
        %v9098 = vmax.f32 %v9096, %v9097
        %v9099 = vrot.slane %v9098, 4
        %v9100 = vmax.f32 %v9098, %v9099
        %v9101 = vrot.slane %v9100, 2
        %v9102 = vmax.f32 %v9100, %v9101
        %v9103 = vrot.slane %v9102, 1
        %v9104 = vmax.f32 %v9102, %v9103
        %v9105 = vsel %vm5278, %v9068, -inf
        %v9106 = vsel %vm5278, %v9069, -inf
        %v9107 = vmax.f32 %v9105, %v9106
        %v9108 = vrot.slane %v9107, 4
        %v9109 = vmax.f32 %v9107, %v9108
        %v9110 = vrot.slane %v9109, 2
        %v9111 = vmax.f32 %v9109, %v9110
        %v9112 = vrot.slane %v9111, 1
        %v9113 = vmax.f32 %v9111, %v9112
        %v9114 = vsel %vm5278, %v9070, -inf
        %v9115 = vsel %vm5278, %v9071, -inf
        %v9116 = vmax.f32 %v9114, %v9115
        %v9117 = vrot.slane %v9116, 4
        %v9118 = vmax.f32 %v9116, %v9117
        %v9119 = vrot.slane %v9118, 2
        %v9120 = vmax.f32 %v9118, %v9119
        %v9121 = vrot.slane %v9120, 1
        %v9122 = vmax.f32 %v9120, %v9121
        %v9123 = vsel %vm5278, %v9072, -inf
        %v9124 = vsel %vm5278, %v9073, -inf
        %v9125 = vmax.f32 %v9123, %v9124
        %v9126 = vrot.slane %v9125, 4
        %v9127 = vmax.f32 %v9125, %v9126
        %v9128 = vrot.slane %v9127, 2
        %v9129 = vmax.f32 %v9127, %v9128
        %v9130 = vrot.slane %v9129, 1
        %v9131 = vmax.f32 %v9129, %v9130
        %v9132 = vsel %vm5278, %v9074, -inf
        %v9133 = vsel %vm5278, %v9075, -inf
        %v9134 = vmax.f32 %v9132, %v9133
        %v9135 = vrot.slane %v9134, 4
        %v9136 = vmax.f32 %v9134, %v9135
        %v9137 = vrot.slane %v9136, 2
        %v9138 = vmax.f32 %v9136, %v9137
        %v9139 = vrot.slane %v9138, 1
        %v9140 = vmax.f32 %v9138, %v9139
        %v9141 = vsel %vm5278, %v9076, -inf
        %v9142 = vsel %vm5278, %v9077, -inf
        %v9143 = vmax.f32 %v9141, %v9142
        %v9144 = vrot.slane %v9143, 4
        %v9145 = vmax.f32 %v9143, %v9144
        %v9146 = vrot.slane %v9145, 2
        %v9147 = vmax.f32 %v9145, %v9146
        %v9148 = vrot.slane %v9147, 1
        %v9149 = vmax.f32 %v9147, %v9148
        %v9150 = vld [vmem:[%s18] sm:$0x1]
        %v9151 = vmax.f32 %v9086, 0.0
        %v9152 = vmax.f32 %v9095, 0.0
        %v9153 = vmax.f32 %v9104, 0.0
        %v9154 = vmax.f32 %v9113, 0.0
        %v9155 = vmax.f32 %v9122, 0.0
        %v9156 = vmax.f32 %v9131, 0.0
        %v9157 = vmax.f32 %v9140, 0.0
        %v9158 = vmax.f32 %v9149, 0.0
        %v9159 = vld [vmem:[#allocation2] sm:$0x1]
        %9161 = vset.pattern.permute.xlu0 0
        %9162 = vperm.xlu0 %9161, %v9159
        %v9163 = vpop.permute.xlu0 %9162
        %v9165 = vperm.slane %v9163, 0
        %v9174 = vsel %vm6354, %v9152, %v9151
        %v9175 = vsel %vm6356, %v9153, %v9174
        %v9176 = vsel %vm6358, %v9154, %v9175
        %v9177 = vsel %vm6360, %v9155, %v9176
        %v9178 = vsel %vm6362, %v9156, %v9177
        %v9179 = vsel %vm6364, %v9157, %v9178
        %v9180 = vsel %vm6366, %v9158, %v9179
        %v9182 = vsel %vm5278, %v9150, 0
        %v9184 = vsel %vm5278, %v9180, 0
        %9186 = vmatpush.xpose.msra.mxu0 0.0
        %9187 = vmatpush.xpose.msra.mxu0 0.0
        %9188 = vmatpush.xpose.msra.mxu0 0.0
        %9189 = vmatpush.xpose.msra.mxu0 0.0
        %9190 = vmatpush.xpose.msra.mxu0 0.0
        %9191 = vmatpush.xpose.msra.mxu0 0.0
        %9192 = vmatpush.xpose.msra.mxu0 0.0
        %9193 = vmatpush.xpose.msra.mxu0 0.0
        %9194 = vmatpush.xpose.msra.mxu0 0.0
        %9195 = vmatpush.xpose.msra.mxu0 0.0
        %9196 = vmatpush.xpose.msra.mxu0 0.0
        %9197 = vmatpush.xpose.msra.mxu0 0.0
        %9198 = vmatpush.xpose.msra.mxu0 0.0
        %9199 = vmatpush.xpose.msra.mxu0 0.0
        %9200 = vmatpush.xpose.msra.mxu0 0.0
        %9201 = vmatpush.xpose.msra.mxu0 %v9184
        %9202 = vmatmul.f32.gmra.mxu0 %v9182
        %v9203 = vpop.f32.mrf.mxu0
        %v9204 = vadd.f32 %v9165, %v9203
        %9205 = vdwg.mxu0
        %v9206 = vtanh.pop %v9204
        %vm9207 = vcmask 57344
        %9208 = vst.msk [vmem:[%s763] sm:$0x1] %vm9207, %v9206
        %s9209 = sand.u32 %s494, 1
        %s9210 = scalar_lea.sflag [#allocation5], %s9209
        %s9211 = sand.u32 %s494, 1
        %s9212 = scalar_lea.vmem [#allocation14], %s9211
        // Predicated region
        $region125: #{tpu_custom_call.1} parent=99 // pred_check
          %p9213 = pneg %p504
        $region126: #{tpu_custom_call.1} parent=99 // pred_check_branch
          %9215 = sbr.rel (%p9213) target = $region128
        $region127: #{tpu_custom_call.1} parent=99 // pred_region
          %9217 = vsyncadd %s9210, 0
          %s9218 = sadd.s32 %s45, %s44
          %s9219 = scalar_lea.hbm %s20, %s9218
          %s9221 = sshll.u32 %s9212, 4
          %s9222 = int_to_ptr.vmem [resolvable:$true] %s9221
          %s9223 = sshll.u32 %s9219, 4
          %s9224 = int_to_ptr.hbm [resolvable:$true] %s9223
          %9226 = dma.vmem_to_hbm [thread:$0]  %s9222, 16, %s9224, %s9210
        $region128: #{tpu_custom_call.1} parent=99 // pred_fallthru
          _
      $region100: #{tpu_custom_call.1} parent=5 // pred_fallthru
        _
      %p9227 = scmp.le.s32.totalorder 2, %s35
      // Predicated region
      $region129: #{tpu_custom_call.1} parent=5 // pred_check
        %p9228 = pneg %p9227
      $region130: #{tpu_custom_call.1} parent=5 // pred_check_branch
        %9230 = sbr.rel (%p9228) target = $region132
      $region131: #{tpu_custom_call.1} parent=5 // pred_region
        %s9231 = ssub.s32 %s35, 2
        // Predicated region
        $region133: #{tpu_custom_call.1} parent=131 // pred_check
          %p9232 = pneg %p510
        $region134: #{tpu_custom_call.1} parent=131 // pred_check_branch
          %9234 = sbr.rel (%p9232) target = $region136
        $region135: #{tpu_custom_call.1} parent=131 // pred_region
          %s9235 = sand.u32 %s495, 1
          %s9236 = scalar_lea.sflag [#allocation5], %s9235
          %s9237 = sand.u32 %s495, 1
          %s9238 = scalar_lea.vmem [#allocation14], %s9237
          %9240 = dma.done %s9236, 16
        $region136: #{tpu_custom_call.1} parent=131 // pred_fallthru
          _
      $region132: #{tpu_custom_call.1} parent=5 // pred_fallthru
        _
    $region6: #{tpu_custom_call.1} parent=1 // loop_footer
      %s39 = sadd.s32 1, %s35
    $region7: #{tpu_custom_call.1} parent=1 // loop_footer_branch
      %34 = sbr.rel target = $region3
    $region8: #{tpu_custom_call.1} parent=1 // loop_exit
      _
    %9241 = vsyncpa [#allocation4], 1
    %s9242 = scalar_lea.sflag [#allocation4], 1
    %9243 = vsyncpa %s9242, 1
    %9244 = vsyncpa [#allocation7], 1
    %9245 = vsyncpa [#allocation10], 1
    %9246 = vsyncpa [#allocation13], 1
    %9247 = vsyncpa [#allocation5], 1
    %s9248 = scalar_lea.sflag [#allocation5], 1
    %9249 = vsyncpa %s9248, 1

</llo_original>
